<compile_context>
chip_gen: v5e
topology: v5e:2x2
jax: 0.10.0
libtpu: 0.0.40
codegen_flags: <defaults>
</compile_context>

<pallas_src>
import functools
import math

import jax
import jax.numpy as jnp
from jax.experimental import pallas as pl
from jax.experimental.pallas import tpu as pltpu

F32 = jnp.float32
BF16 = jnp.bfloat16


# ----------------------------------------------------------------------------
# small helpers
# ----------------------------------------------------------------------------
def _round_up(x, m):
    return (x + m - 1) // m * m


def _mdot(a, b):
    """MXU matmul: bf16 operands, f32 accumulation."""
    return jnp.dot(a.astype(BF16), b.astype(BF16), preferred_element_type=F32)


def _mdot_nt(a, b):
    """a (M,K) contracted with b (N,K) on the last dim (bf16 in, f32 acc)."""
    return jax.lax.dot_general(
        a.astype(BF16), b.astype(BF16),
        dimension_numbers=(((1,), (1,)), ((), ())),
        preferred_element_type=F32)


def lin_apply(x, p):
    return jnp.dot(x, p["W"], preferred_element_type=F32) + p["b"]


def layernorm_ref(x, ln, eps=1e-5):
    mu = jnp.mean(x, axis=-1, keepdims=True)
    c = x - mu
    var = jnp.mean(c * c, axis=-1, keepdims=True)
    return c * jax.lax.rsqrt(var + eps) * ln["w"] + ln["b"]


def _safe_div(a, b):
    # TODO(synk): torch produces NaN/Inf when a mask is entirely empty; clamp instead.
    return a / jnp.maximum(b, 1e-9)


def _edge_tile_cfg(n, de, H, dffE):
    """Row tile + VMEM limit derived from the chip's VMEM capacity."""
    try:
        cap = pltpu.get_tpu_info().vmem_capacity_bytes
    except Exception:
        cap = 64 * 1024 * 1024
    limit = int(min(cap * 3 // 4, 100 * 1024 * 1024))
    # rough f32 bytes held live per tile row (Y/Enew/dist1/dist1_p/dm/dmp/E1/FFN/...)
    per_row = 4 * n * (18 * de + 2 * dffE + 8 * H + 64)
    ti = (limit // 3) // max(per_row, 1)
    ti = max(8, min(64, (ti // 8) * 8))
    ti = min(ti, _round_up(n, 8))
    return ti, limit


# ----------------------------------------------------------------------------
# Pallas kernel 1: fused linear  (y = x @ W + b, optional relu)
# ----------------------------------------------------------------------------
def _linear_kernel(x_ref, w_ref, b_ref, o_ref, *, act):
    y = _mdot(x_ref[...], w_ref[...]) + b_ref[...]
    if act == "relu":
        y = jnp.maximum(y, 0.0)
    o_ref[...] = y


def pallas_linear(x, params, act="none"):
    W, b = params["W"], params["b"]
    K, N = W.shape
    orig = x.shape
    x2 = x.reshape(-1, K).astype(F32)
    M = x2.shape[0]
    TM = 512 if M > 512 else max(_round_up(M, 8), 8)
    Mp = _round_up(M, TM)
    if Mp != M:
        x2 = jnp.pad(x2, ((0, Mp - M), (0, 0)))
    out = pl.pallas_call(
        functools.partial(_linear_kernel, act=act),
        out_shape=jax.ShapeDtypeStruct((Mp, N), F32),
        grid=(Mp // TM,),
        in_specs=[
            pl.BlockSpec((TM, K), lambda i: (i, 0)),
            pl.BlockSpec((K, N), lambda i: (0, 0)),
            pl.BlockSpec((1, N), lambda i: (0, 0)),
        ],
        out_specs=pl.BlockSpec((TM, N), lambda i: (i, 0)),
        compiler_params=pltpu.CompilerParams(dimension_semantics=("parallel",)),
    )(x2, W.astype(F32), b.reshape(1, N).astype(F32))
    if Mp != M:
        out = out[:M]
    return out.reshape(*orig[:-1], N)


# ----------------------------------------------------------------------------
# Pallas kernel 2: fused FFN + residual + LayerNorm   (X feed-forward)
# ----------------------------------------------------------------------------
def _ffn_ln_kernel(x_ref, w1_ref, b1_ref, w2_ref, b2_ref, g_ref, be_ref, o_ref):
    eps = 1e-5
    x = x_ref[...]
    h = jnp.maximum(_mdot(x, w1_ref[...]) + b1_ref[...], 0.0)
    f = _mdot(h, w2_ref[...]) + b2_ref[...]
    r = x + f
    mu = jnp.mean(r, axis=-1, keepdims=True)
    c = r - mu
    var = jnp.mean(c * c, axis=-1, keepdims=True)
    o_ref[...] = c * jax.lax.rsqrt(var + eps) * g_ref[...] + be_ref[...]


def pallas_ffn_ln(x, lin1, lin2, ln):
    D = x.shape[-1]
    dff = lin1["W"].shape[1]
    orig = x.shape
    x2 = x.reshape(-1, D).astype(F32)
    M = x2.shape[0]
    TM = 512 if M > 512 else max(_round_up(M, 8), 8)
    Mp = _round_up(M, TM)
    if Mp != M:
        x2 = jnp.pad(x2, ((0, Mp - M), (0, 0)))
    out = pl.pallas_call(
        _ffn_ln_kernel,
        out_shape=jax.ShapeDtypeStruct((Mp, D), F32),
        grid=(Mp // TM,),
        in_specs=[
            pl.BlockSpec((TM, D), lambda i: (i, 0)),
            pl.BlockSpec((D, dff), lambda i: (0, 0)),
            pl.BlockSpec((1, dff), lambda i: (0, 0)),
            pl.BlockSpec((dff, D), lambda i: (0, 0)),
            pl.BlockSpec((1, D), lambda i: (0, 0)),
            pl.BlockSpec((1, D), lambda i: (0, 0)),
            pl.BlockSpec((1, D), lambda i: (0, 0)),
        ],
        out_specs=pl.BlockSpec((TM, D), lambda i: (i, 0)),
        compiler_params=pltpu.CompilerParams(
            dimension_semantics=("parallel",),
            vmem_limit_bytes=48 * 1024 * 1024),
    )(x2, lin1["W"], lin1["b"].reshape(1, dff), lin2["W"], lin2["b"].reshape(1, D),
      ln["w"].reshape(1, D), ln["b"].reshape(1, D))
    if Mp != M:
        out = out[:M]
    return out.reshape(orig)


# ----------------------------------------------------------------------------
# Pallas kernel 3: fused edge update + feature attention + messages + stats
#                  + in-kernel dist1/dist1_p + E-FFN/normE2 epilogue
# ----------------------------------------------------------------------------
def _edge_kernel(e_ref, row_ref, col_ref, cm_ref, yv_ref,
                 w_ine, b_ine, w_g, w_gp, w_d, b_d, w_dp, b_dp,
                 w_en, b_en, w_a_t, w_af_t, w_m1, w_m2,
                 ln1_g, ln1_b, w_f1, b_f1, w_f2, b_f2, ln2_g, ln2_b,
                 e2_ref, out_ref):
    _, ti, n, de = e_ref.shape
    H, dx = w_a_t.shape
    df = w_af_t.shape[1]
    eps = 1e-5
    scale = 1.0 / math.sqrt(de)
    tin = ti * n

    row = row_ref[0]                 # (ti, Crow) packed per-query-node features
    col = col_ref[0]                 # (n,  Ccol) packed per-key-node features
    cm = cm_ref[0]                   # (2, n)  lane-major column masks
    yv = yv_ref[0]                   # (1, 2*de)

    o = 0
    xe2 = row[:, o:o + de]; o += de
    fe2 = row[:, o:o + de]; o += de
    q = row[:, o:o + dx]; o += dx
    qf = row[:, o:o + df]; o += df
    nm_r = row[:, o:o + 1]; o += 1
    pm_r = row[:, o:o + 1]; o += 1
    pos_r = row[:, o:o + 3]; o += 3
    pp_r = row[:, o:o + 3]

    o = 0
    xe1 = col[:, o:o + de]; o += de
    fe1 = col[:, o:o + de]; o += de
    k = col[:, o:o + dx]; o += dx
    v = col[:, o:o + dx]; o += dx
    nm_c = col[:, o:o + 1]; o += 1
    pm_c = col[:, o:o + 1]; o += 1
    pos_c = col[:, o:o + 3]; o += 3
    pp_c = col[:, o:o + 3]

    nm_c_l = cm[0:1, :]              # (1, n) node mask, keys on lanes
    pm_c_l = cm[1:2, :]

    em3 = nm_r.reshape(ti, 1, 1) * nm_c.reshape(1, n, 1)     # (ti, n, 1)
    pm3 = pm_r.reshape(ti, 1, 1) * pm_c.reshape(1, n, 1)
    cm3 = nm_c.reshape(1, n, 1)
    pmc3 = pm_c.reshape(1, n, 1)

    # ---- dist1 / dist1_p built in-kernel (never touch HBM) ----
    def make_dist(coord_r, coord_c, wg, mask3):
        nrm_r = jnp.sqrt(jnp.sum(coord_r * coord_r, axis=-1, keepdims=True))   # (ti,1)
        nrm_c = jnp.sqrt(jnp.sum(coord_c * coord_c, axis=-1, keepdims=True))   # (n,1)
        np_r = coord_r / (nrm_r + 1e-7)
        np_c = coord_c / (nrm_c + 1e-7)
        diff = coord_r[:, None, :] - coord_c[None, :, :]                        # (ti,n,3)
        pdist = jnp.sqrt(jnp.sum(diff * diff, axis=-1, keepdims=True))          # (ti,n,1)
        cosv = jnp.sum(np_r[:, None, :] * np_c[None, :, :], axis=-1, keepdims=True)
        n1 = nrm_r * wg[3:4, :] + wg[4:5, :]                                    # (ti,de)
        n2 = nrm_c * wg[5:6, :] + wg[6:7, :]                                    # (n, de)
        d = jnp.maximum(pdist * wg[0:1, :][None] + cosv * wg[1:2, :][None]
                        + wg[2:3, :][None] + n1[:, None, :] + n2[None, :, :], 0.0)
        return d * mask3

    wg = w_g[...]
    wgp = w_gp[...]
    d1 = make_dist(pos_r, pos_c, wg, em3)
    d1p = make_dist(pp_r, pp_c, wgp, pm3)

    # per-row statistics (EtoX with column masks / Etoy with pair mask)
    d1x = jnp.concatenate(
        [jnp.sum(d1, 1), jnp.min(d1 + 1e5 * (1.0 - cm3), 1),
         jnp.max(d1 - 1e5 * (1.0 - cm3), 1), jnp.sum(d1 * d1, 1)], axis=-1)
    d1px = jnp.concatenate(
        [jnp.sum(d1p, 1), jnp.min(d1p + 1e5 * (1.0 - pmc3), 1),
         jnp.max(d1p - 1e5 * (1.0 - pmc3), 1), jnp.sum(d1p * d1p, 1)], axis=-1)
    d1y = jnp.concatenate(
        [jnp.sum(d1, 1), jnp.sum(d1 * d1, 1),
         jnp.min(d1 + 1e5 * (1.0 - em3), 1), jnp.max(d1 - 1e5 * (1.0 - em3), 1)], axis=-1)

    dm = (_mdot(d1.reshape(tin, de), w_d[...]) + b_d[...]).reshape(ti, n, 2 * de + H)
    dmp = (_mdot(d1p.reshape(tin, de), w_dp[...]) + b_dp[...]).reshape(ti, n, 2 * de + H)
    pos_att = dm[..., 2 * de:]
    p_att = dmp[..., 2 * de:]

    # ---- edge feature update (Y / E_new / Eout kept in VMEM) ----
    e_in = e_ref[0].astype(F32)
    Y = (_mdot(e_in.reshape(tin, de), w_ine[...]) + b_ine[...]).reshape(ti, n, de)
    Y = (Y * xe1[None, :, :] * xe2[:, None, :] * em3
         + Y * fe1[None, :, :] * fe2[:, None, :] * pm3)
    Y = ((Y + dm[..., :de] + Y * dm[..., de:2 * de]) * em3
         + (Y + dmp[..., :de] + Y * dmp[..., de:2 * de]) * pm3)

    # Etoy row statistics of Y (emitted now so Y dies after the messages)
    ys = jnp.concatenate(
        [jnp.sum(Y, 1), jnp.sum(Y * em3, 1), jnp.sum(Y * Y * em3, 1),
         jnp.min(Y + 1e5 * (1.0 - em3), 1), jnp.max(Y - 1e5 * (1.0 - em3), 1)], axis=-1)

    # ---- equivariant messages -> per-node velocity contributions ----
    hmsg = jnp.maximum(_mdot(Y.reshape(tin, de), w_m1[...]), 0.0).reshape(ti, n, 2 * de)
    mm = hmsg * w_m2[...]
    m_pos = jnp.sum(mm[..., :de], axis=-1, keepdims=True)          # (ti, n, 1)
    m_p = jnp.sum(mm[..., de:], axis=-1, keepdims=True)
    vel = (pos_r * jnp.sum(m_pos, axis=1) - jnp.sum(m_pos * pos_c, axis=1)) * nm_r
    velp = (pp_r * jnp.sum(m_p, axis=1) - jnp.sum(m_p * pp_c, axis=1)) * pm_r

    # ---- y-FiLM -> E_new -> e_out / attention multiplier ----
    y_add = yv[:, :de]
    y_mul = yv[:, de:]
    Enew = (Y + y_add + Y * y_mul) * em3
    enm = (_mdot(Enew.reshape(tin, de), w_en[...]) + b_en[...]).reshape(ti, n, de + H)
    Eout = enm[..., :de] * em3
    e_att = enm[..., de:]
    es = jnp.concatenate(
        [jnp.sum(Enew, 1), jnp.min(Enew + 1e5 * (1.0 - cm3), 1),
         jnp.max(Enew - 1e5 * (1.0 - cm3), 1), jnp.sum(Enew * Enew, 1)], axis=-1)

    # ---- fused E epilogue: residual + normE1 + FFN + residual + normE2 ----
    r = e_in + Eout
    mu = jnp.mean(r, axis=-1, keepdims=True)
    c = r - mu
    var = jnp.mean(c * c, axis=-1, keepdims=True)
    E1 = c * jax.lax.rsqrt(var + eps) * ln1_g[...] + ln1_b[...]
    hh = jnp.maximum(_mdot(E1.reshape(tin, de), w_f1[...]) + b_f1[...], 0.0)
    ff = (_mdot(hh, w_f2[...]) + b_f2[...]).reshape(ti, n, de)
    r2 = E1 + ff
    mu2 = jnp.mean(r2, axis=-1, keepdims=True)
    c2 = r2 - mu2
    var2 = jnp.mean(c2 * c2, axis=-1, keepdims=True)
    e2_ref[0] = c2 * jax.lax.rsqrt(var2 + eps) * ln2_g[...] + ln2_b[...]

    # ---- feature attention: per head, keys on the lane axis ----
    # a = base*em*(1+e_att)(1+pos_att)*(1 + (1+p_att)*pm) + a_f(prod_f)*pm
    M = em3 * (1.0 + e_att) * (1.0 + pos_att) * (1.0 + (1.0 + p_att) * pm3)    # (ti,n,H)
    pm2 = pm_r * pm_c_l                                                         # (ti,n)
    neg = (1.0 - nm_c_l) * (-1e9)                                               # (1,n)
    wa = w_a_t[...]
    waf = w_af_t[...]
    wv_heads = []
    for h in range(H):
        base = _mdot_nt(q * wa[h:h + 1, :], k) * scale          # (ti, n), folded w_a
        basef = _mdot_nt(qf * waf[h:h + 1, :], k) * scale
        logit = base * M[:, :, h] + basef * pm2 + neg
        mx = jnp.max(logit, axis=-1, keepdims=True)
        p = jnp.exp(logit - mx) * nm_c_l
        den = jnp.sum(p, axis=-1, keepdims=True)
        # TODO(synk): fully-masked rows give 0 output here (torch masked_softmax -> NaN).
        den = den + (den == 0.0).astype(F32)
        wv_heads.append(_mdot(p / den, v))                       # (ti, dx)
    wv = jnp.concatenate(wv_heads, axis=-1)                      # (ti, H*dx), head-major

    # ---- single lane-dense packed per-row output ----
    cpad = out_ref.shape[-1]
    used = H * dx + 6 + 21 * de
    pieces = [wv, vel, velp, es, ys, d1x, d1px, d1y]
    if cpad > used:
        pieces.append(jnp.zeros((ti, cpad - used), F32))
    out_ref[0] = jnp.concatenate(pieces, axis=-1)


def pallas_edge_block(E, row_feats, col_feats, col_mask_t, y_feats, sa, P):
    bs, n, _, de = E.shape
    H, dx = sa["w_a_t"].shape
    Crow = row_feats.shape[-1]
    Ccol = col_feats.shape[-1]
    dffE = P["linE1"]["W"].shape[1]

    TI, vmem_limit = _edge_tile_cfg(n, de, H, dffE)
    n_pad = _round_up(n, TI)
    if n_pad != n:
        E = jnp.pad(E, ((0, 0), (0, n_pad - n), (0, 0), (0, 0)))
        row_feats = jnp.pad(row_feats, ((0, 0), (0, n_pad - n), (0, 0)))

    C = H * dx + 6 + 21 * de
    Cpad = _round_up(C, 128)

    weights = [sa["w_ine"], sa["b_ine"], sa["w_g"], sa["w_gp"],
               sa["w_d"], sa["b_d"], sa["w_dp"], sa["b_dp"],
               sa["w_en"], sa["b_en"], sa["w_a_t"], sa["w_af_t"],
               sa["w_m1"], sa["w_m2"],
               P["normE1"]["w"].reshape(1, de), P["normE1"]["b"].reshape(1, de),
               P["linE1"]["W"], P["linE1"]["b"].reshape(1, dffE),
               P["linE2"]["W"], P["linE2"]["b"].reshape(1, de),
               P["normE2"]["w"].reshape(1, de), P["normE2"]["b"].reshape(1, de)]

    def b4(b, i): return (b, i, 0, 0)
    def br(b, i): return (b, i, 0)
    def bc(b, i): return (b, 0, 0)

    in_specs = ([pl.BlockSpec((1, TI, n, de), b4),
                 pl.BlockSpec((1, TI, Crow), br),
                 pl.BlockSpec((1, n, Ccol), bc),
                 pl.BlockSpec((1, 2, n), bc),
                 pl.BlockSpec((1, 1, 2 * de), bc)] +
                [pl.BlockSpec(w.shape, lambda b, i: (0, 0)) for w in weights])

    out_shape = (
        jax.ShapeDtypeStruct((bs, n_pad, n, de), F32),   # normE2(normE1(E+newE)+FFN)
        jax.ShapeDtypeStruct((bs, n_pad, Cpad), F32),    # packed per-row outputs
    )
    out_specs = (
        pl.BlockSpec((1, TI, n, de), b4),
        pl.BlockSpec((1, TI, Cpad), br),
    )
    E2, packed = pl.pallas_call(
        _edge_kernel,
        grid=(bs, n_pad // TI),
        in_specs=in_specs,
        out_specs=out_specs,
        out_shape=out_shape,
        compiler_params=pltpu.CompilerParams(
            dimension_semantics=("parallel", "parallel"),
            vmem_limit_bytes=vmem_limit),
    )(E.astype(BF16), row_feats.astype(F32), col_feats.astype(F32),
      col_mask_t.astype(F32), y_feats.astype(F32), *weights)

    if n_pad != n:
        E2 = E2[:, :n]
        packed = packed[:, :n]
    return E2, packed


# ----------------------------------------------------------------------------
# Pallas kernel 4: fused position attention (logits built in-kernel, per-head)
# ----------------------------------------------------------------------------
def _pos_attn_kernel(row_ref, col_ref, cm_ref, wa_ref, wd_ref, bd_ref, o_ref):
    _, ti, _ = row_ref.shape
    n = col_ref.shape[1]
    H, de = wa_ref.shape
    scale = 1.0 / math.sqrt(de)

    row = row_ref[0]
    col = col_ref[0]
    cm = cm_ref[0]
    o = 0
    qp = row[:, o:o + de]; o += de
    pp_r = row[:, o:o + 3]; o += 3
    nm_r = row[:, o:o + 1]; o += 1
    pm_r = row[:, o:o + 1]
    o = 0
    kp = col[:, o:o + de]; o += de
    vp = col[:, o:o + de]; o += de
    pp_c = col[:, o:o + 3]; o += 3
    nm_c = col[:, o:o + 1]; o += 1
    pm_c = col[:, o:o + 1]

    nm_c_l = cm[0:1, :]
    pm_c_l = cm[1:2, :]
    em2 = nm_r * nm_c_l        # (ti, n)
    pm2 = pm_r * pm_c_l

    diff = pp_r[:, None, :] - pp_c[None, :, :]
    dnorm = jnp.sqrt(jnp.sum(diff * diff, axis=-1)) * pm2       # (ti, n)
    neg = (1.0 - nm_c_l) * (-1e9)

    wa = wa_ref[...]
    wd = wd_ref[...]
    bd = bd_ref[...]
    heads = []
    for h in range(H):
        base = _mdot_nt(qp * wa[h:h + 1, :], kp) * scale * em2
        d = (dnorm * wd[h:h + 1, :] + bd[h:h + 1, :]) * pm2     # Linear(1, H): VPU only
        logit = base - d + neg
        mx = jnp.max(logit, axis=-1, keepdims=True)
        p = jnp.exp(logit - mx) * nm_c_l
        den = jnp.sum(p, axis=-1, keepdims=True)
        den = den + (den == 0.0).astype(F32)
        heads.append(_mdot(p / den, vp))
    o_ref[0] = jnp.concatenate(heads, axis=-1)


def pallas_pos_attention(row_feats, col_feats, col_mask_t, sa):
    bs, n, dr = row_feats.shape
    dc = col_feats.shape[-1]
    H, de = sa["w_apos_t"].shape
    TI = min(32, _round_up(n, 8))
    n_pad = _round_up(n, TI)
    rf = row_feats
    if n_pad != n:
        rf = jnp.pad(rf, ((0, 0), (0, n_pad - n), (0, 0)))

    def br(b, i): return (b, i, 0)
    def bc(b, i): return (b, 0, 0)

    out = pl.pallas_call(
        _pos_attn_kernel,
        grid=(bs, n_pad // TI),
        in_specs=[pl.BlockSpec((1, TI, dr), br),
                  pl.BlockSpec((1, n, dc), bc),
                  pl.BlockSpec((1, 2, n), bc),
                  pl.BlockSpec(sa["w_apos_t"].shape, lambda b, i: (0, 0)),
                  pl.BlockSpec(sa["w_dpos"].shape, lambda b, i: (0, 0)),
                  pl.BlockSpec(sa["b_dpos"].shape, lambda b, i: (0, 0))],
        out_specs=pl.BlockSpec((1, TI, H * de), br),
        out_shape=jax.ShapeDtypeStruct((bs, n_pad, H * de), F32),
        compiler_params=pltpu.CompilerParams(
            dimension_semantics=("parallel", "parallel")),
    )(rf.astype(F32), col_feats.astype(F32), col_mask_t.astype(F32),
      sa["w_apos_t"], sa["w_dpos"], sa["b_dpos"])
    if n_pad != n:
        out = out[:, :n]
    return out


# ----------------------------------------------------------------------------
# JAX glue matching the PyTorch helper modules
# ----------------------------------------------------------------------------
def remove_mean_with_mask(x, mask):
    nm = mask[..., None]
    N = jnp.sum(nm, axis=1, keepdims=True)
    mean = _safe_div(jnp.sum(x, axis=1, keepdims=True), N)
    return x - mean * nm


def se3_norm(vel, x_mask, weight, eps=1e-5):
    norm = jnp.linalg.norm(vel, axis=-1, keepdims=True)
    mean_norm = _safe_div(jnp.sum(norm, axis=1, keepdims=True),
                          jnp.sum(x_mask, axis=1, keepdims=True))
    return weight * vel / (mean_norm + eps)


def x_to_y(X, x_mask, lin):
    mask = jnp.broadcast_to(x_mask, X.shape)
    imask = 1.0 - mask
    denom = jnp.sum(mask, axis=1)
    m = _safe_div(jnp.sum(X, axis=1), denom)
    mi = jnp.min(X + 1e5 * imask, axis=1)
    ma = jnp.max(X - 1e5 * imask, axis=1)
    std = _safe_div(jnp.sum(((X - m[:, None, :]) * mask) ** 2, axis=1), denom)
    return lin_apply(jnp.concatenate([m, mi, ma, std], axis=-1), lin)


def eto_x_from_stats(stats, count, lin):
    """EtoX from per-row [sum, min, max, sumsq] produced by the edge kernel."""
    s1, mn, mx, s2 = jnp.split(stats, 4, axis=-1)
    m = _safe_div(s1, count)
    std = _safe_div(s2, count) - m * m
    return lin_apply(jnp.concatenate([m, mn, mx, std], axis=-1), lin)


def eto_y_from_stats(stats, divide, lin):
    """Etoy from per-row [sum, masked-sum, masked-sumsq, min, max] (Y tensor)."""
    s_un, s_m, s2_m, mn, mx = jnp.split(stats, 5, axis=-1)
    S_un = jnp.sum(s_un, axis=1)
    S_m = jnp.sum(s_m, axis=1)
    S2 = jnp.sum(s2_m, axis=1)
    MN = jnp.min(mn, axis=1)
    MX = jnp.max(mx, axis=1)
    m = _safe_div(S_un, divide)
    std = _safe_div(S2 - 2.0 * m * S_m + m * m * divide, divide)
    return lin_apply(jnp.concatenate([m, MN, MX, std], axis=-1), lin)


def eto_y_from_stats4(stats, divide, lin):
    """Etoy from per-row [sum, sumsq, min, max] (dist1 is zero outside its mask)."""
    s, s2, mn, mx = jnp.split(stats, 4, axis=-1)
    S = jnp.sum(s, axis=1)
    S2 = jnp.sum(s2, axis=1)
    MN = jnp.min(mn, axis=1)
    MX = jnp.max(mx, axis=1)
    m = _safe_div(S, divide)
    std = _safe_div(S2 - 2.0 * m * S + m * m * divide, divide)
    return lin_apply(jnp.concatenate([m, MN, MX, std], axis=-1), lin)


# ----------------------------------------------------------------------------
# XEyTransformerLayer forward
# ----------------------------------------------------------------------------
def xey_transformer_layer(P, X, E, y, pos, node_mask, pharma_coord, pharma_feat, pharma_mask):
    sa = P["self_attn"]
    bs, n, dx = X.shape
    de = E.shape[-1]
    df = pharma_feat.shape[-1]           # NOTE: df == dx required by the Q_f * K broadcast
    H = sa["w_a_t"].shape[0]

    x_mask = node_mask[..., None]
    p_mask = pharma_mask[..., None]
    e_mask1 = x_mask[:, :, None, :]
    e_mask2 = x_mask[:, None, :, :]

    pos_m = pos * x_mask
    p_m = pharma_coord * p_mask

    # ---- fused node / pharma / global projections ----
    xproj = pallas_linear(X, sa["x_proj"])
    q_x, k_x, v_x, xe1, xe2 = jnp.split(xproj, [dx, 2 * dx, 3 * dx, 3 * dx + de], axis=-1)
    q_x = q_x * x_mask; k_x = k_x * x_mask; v_x = v_x * x_mask
    xe1 = xe1 * x_mask; xe2 = xe2 * x_mask

    fproj = pallas_linear(pharma_feat, sa["f_proj"])
    q_f, fe1, fe2, fx_add, fx_mul = jnp.split(
        fproj, [df, df + de, df + 2 * de, df + 2 * de + dx], axis=-1)
    q_f = q_f * p_mask; fe1 = fe1 * p_mask; fe2 = fe2 * p_mask

    yproj = lin_apply(y, sa["y_proj"])                     # tiny -> XLA
    y_e_add, y_e_mul, y_x_add, y_x_mul, y_y = jnp.split(
        yproj, [de, 2 * de, 2 * de + dx, 2 * de + 2 * dx], axis=-1)

    # ---- packed per-node features for the fused edge kernel ----
    row_feats = jnp.concatenate([xe2, fe2, q_x, q_f, x_mask, p_mask, pos_m, p_m], axis=-1)
    col_feats = jnp.concatenate([xe1, fe1, k_x, v_x, x_mask, p_mask, pos_m, p_m], axis=-1)
    col_mask_t = jnp.stack([node_mask, pharma_mask], axis=1)   # (bs, 2, n) lane-major masks
    y_feats = jnp.concatenate([y_e_add, y_e_mul], axis=-1)[:, None, :]

    E2_pre, packed = pallas_edge_block(E, row_feats, col_feats, col_mask_t, y_feats, sa, P)

    o = 0
    attn_flat = packed[..., o:o + H * dx]; o += H * dx
    vel_raw = packed[..., o:o + 3]; o += 3
    velp_raw = packed[..., o:o + 3]; o += 3     # vel_p computed by NodeEdgeBlock but unused by the layer
    enew_stats = packed[..., o:o + 4 * de]; o += 4 * de
    y_stats = packed[..., o:o + 5 * de]; o += 5 * de
    d1x_stats = packed[..., o:o + 4 * de]; o += 4 * de
    d1px_stats = packed[..., o:o + 4 * de]; o += 4 * de
    d1y_stats = packed[..., o:o + 4 * de]
    del velp_raw

    # ---- node feature update ----
    weighted_V = pallas_linear(attn_flat, sa["out"]) * x_mask
    n_nodes = jnp.sum(node_mask, axis=1)[:, None, None]
    n_pharm = jnp.sum(pharma_mask, axis=1)[:, None, None]
    e_x = eto_x_from_stats(enew_stats, n_nodes, sa["e_x_mul"])
    weighted_V = weighted_V + e_x * weighted_V
    pos_x = eto_x_from_stats(d1x_stats, n_nodes, sa["pos_x_mul"])
    weighted_V = weighted_V + pos_x * weighted_V
    weighted_V = weighted_V * (fx_mul + 1.0) + fx_add
    p_x = eto_x_from_stats(d1px_stats, n_pharm, sa["p_x_mul"])
    weighted_V = weighted_V + p_x * weighted_V
    newX = weighted_V * (y_x_mul[:, None, :] + 1.0) + y_x_add[:, None, :]
    Xout = lin_apply(newX, sa["x_out"]) * x_mask

    # ---- global feature update (not last_layer) ----
    divide = (jnp.sum(node_mask, axis=1) ** 2)[:, None]
    e_y = eto_y_from_stats(y_stats, divide, sa["e_y"])
    x_y = x_to_y(newX, x_mask, sa["x_y"])
    dist_y = eto_y_from_stats4(d1y_stats, divide, sa["dist_y"])
    new_y = y_y + x_y + e_y + dist_y
    y_blk = lin_apply(jax.nn.relu(lin_apply(new_y, sa["y_out_0"])), sa["y_out_1"])

    # ---- velocities / position attention ----
    q_pos = lin_apply(vel_raw, sa["q_pos"]) * x_mask
    k_pos = lin_apply(vel_raw, sa["k_pos"]) * x_mask
    v_pos = lin_apply(vel_raw, sa["v_pos"]) * x_mask
    rowp = jnp.concatenate([q_pos, p_m, x_mask, p_mask], axis=-1)
    colp = jnp.concatenate([k_pos, v_pos, p_m, x_mask, p_mask], axis=-1)
    wpos_flat = pallas_pos_attention(rowp, colp, col_mask_t, sa)
    wV_pos = lin_apply(wpos_flat, sa["out_pos"]) * x_mask
    vel = remove_mean_with_mask(wV_pos, node_mask)

    # ---- transformer-layer epilogue (dropouts = identity, eval mode) ----
    X1 = layernorm_ref(X + Xout, P["normX1"])
    new_pos = se3_norm(vel, x_mask, P["norm_pos1_weight"]) + pos
    y1 = layernorm_ref(y + y_blk, P["norm_y1"])

    X2 = pallas_ffn_ln(X1, P["linX1"], P["linX2"], P["normX2"])
    # E FFN + normE2 already fused into the edge kernel; only symmetrize here.
    E2 = 0.5 * (E2_pre + jnp.transpose(E2_pre, (0, 2, 1, 3)))
    ffy = lin_apply(jax.nn.relu(lin_apply(y1, P["lin_y1"])), P["lin_y2"])
    y2 = layernorm_ref(y1 + ffy, P["norm_y2"])

    # utils.PlaceHolder(...).mask()
    # TODO(synk): PlaceHolder.mask() assumed to follow the MiDi convention
    # (mask X, mask E + zero diagonal, mask pos); pharma fields pass through unchanged.
    diag_mask = 1.0 - jnp.eye(n, dtype=F32)[None, :, :, None]
    X_out = X2 * x_mask
    E_out = E2 * e_mask1 * e_mask2 * diag_mask
    pos_out = new_pos * x_mask
    return X_out, E_out, y2, pos_out


# ----------------------------------------------------------------------------
# Deterministic parameter initialization (shapes from __init__)
# ----------------------------------------------------------------------------
def init_params(key, dx, de, dy, df, n_head, dim_ffX, dim_ffE, dim_ffy):
    keys = iter(jax.random.split(key, 128))

    def lin(din, dout, bias=True):
        k1, k2 = jax.random.split(next(keys))
        bound = 1.0 / math.sqrt(din)
        W = jax.random.uniform(k1, (din, dout), F32, -bound, bound)
        b = (jax.random.uniform(k2, (dout,), F32, -bound, bound)
             if bias else jnp.zeros((dout,), F32))
        return {"W": W, "b": b}

    def ln(d):
        return {"w": jnp.ones((d,), F32), "b": jnp.zeros((d,), F32)}

    sa = {
        "in_E": lin(de, de), "x_e_mul1": lin(dx, de), "x_e_mul2": lin(dx, de),
        "f_e_mul1": lin(df, de), "f_e_mul2": lin(df, de),
        "lin_dist1": lin(2, de), "lin_norm_pos1": lin(1, de), "lin_norm_pos2": lin(1, de),
        "dist_add_e": lin(de, de), "dist_mul_e": lin(de, de),
        "lin_dist1_p": lin(2, de), "lin_norm_p": lin(1, de), "lin_norm_p2": lin(1, de),
        "dist_add_e_p": lin(de, de), "dist_mul_e_p": lin(de, de),
        "k": lin(dx, dx), "q": lin(dx, dx), "v": lin(dx, dx),
        "a": lin(dx, n_head, bias=False), "out": lin(dx * n_head, dx),
        "q_f": lin(df, df), "a_f": lin(df, n_head, bias=False),
        "k_pos": lin(3, de), "q_pos": lin(3, de), "v_pos": lin(3, de),
        "a_pos": lin(de, n_head, bias=False), "d_pos": lin(1, n_head),
        "out_pos": lin(de * n_head, 3),
        "e_att_mul": lin(de, n_head), "pos_att_mul": lin(de, n_head), "p_att_mul": lin(de, n_head),
        "e_x_mul": lin(4 * de, dx), "pos_x_mul": lin(4 * de, dx), "p_x_mul": lin(4 * de, dx),
        "y_e_mul": lin(dy, de), "y_e_add": lin(dy, de),
        "y_x_mul": lin(dy, dx), "y_x_add": lin(dy, dx),
        "f_x_mul": lin(df, dx), "f_x_add": lin(df, dx),
        "y_y": lin(dy, dy), "x_y": lin(4 * dx, dy), "e_y": lin(4 * de, dy), "dist_y": lin(4 * de, dy),
        "e_pos1": lin(de, de, bias=False), "e_pos2": lin(de, 1, bias=False),
        "e_p1": lin(de, de, bias=False), "e_p2": lin(de, 1, bias=False),
        "x_out": lin(dx, dx), "e_out": lin(de, de),
        "y_out_0": lin(dy, dy), "y_out_1": lin(dy, dy),
    }
    P = {
        "self_attn": sa,
        "linX1": lin(dx, dim_ffX), "linX2": lin(dim_ffX, dx),
        "normX1": ln(dx), "normX2": ln(dx),
        "norm_pos1_weight": jnp.ones((1,), F32),
        "linE1": lin(de, dim_ffE), "linE2": lin(dim_ffE, de),
        "normE1": ln(de), "normE2": ln(de),
        "lin_y1": lin(dy, dim_ffy), "lin_y2": lin(dim_ffy, dy),
        "norm_y1": ln(dy), "norm_y2": ln(dy),
    }
    return P


def prepare_params(P):
    """One-time weight preparation (outside the forward pass): fuse sibling linears
    that share an input, pack the tiny geometric linears into (8, de) tables and
    pre-transpose the per-head attention weights."""
    raw = P["self_attn"]
    sa = dict(raw)
    de = raw["in_E"]["W"].shape[0]

    def catW(names):
        return jnp.concatenate([raw[m]["W"] for m in names], axis=1)

    def catb(names):
        return jnp.concatenate([raw[m]["b"] for m in names], axis=0)

    def fuse(names):
        return {"W": catW(names), "b": catb(names)}

    def geo_pack(dist, n1, n2):
        return jnp.stack([raw[dist]["W"][0], raw[dist]["W"][1], raw[dist]["b"],
                          raw[n1]["W"][0], raw[n1]["b"],
                          raw[n2]["W"][0], raw[n2]["b"],
                          jnp.zeros((de,), F32)], axis=0)

    sa["x_proj"] = fuse(["q", "k", "v", "x_e_mul1", "x_e_mul2"])
    sa["f_proj"] = fuse(["q_f", "f_e_mul1", "f_e_mul2", "f_x_add", "f_x_mul"])
    sa["y_proj"] = fuse(["y_e_add", "y_e_mul", "y_x_add", "y_x_mul", "y_y"])
    sa["w_ine"] = raw["in_E"]["W"]
    sa["b_ine"] = raw["in_E"]["b"].reshape(1, -1)
    sa["w_g"] = geo_pack("lin_dist1", "lin_norm_pos1", "lin_norm_pos2")
    sa["w_gp"] = geo_pack("lin_dist1_p", "lin_norm_p", "lin_norm_p2")
    sa["w_d"] = catW(["dist_add_e", "dist_mul_e", "pos_att_mul"])
    sa["b_d"] = catb(["dist_add_e", "dist_mul_e", "pos_att_mul"]).reshape(1, -1)
    sa["w_dp"] = catW(["dist_add_e_p", "dist_mul_e_p", "p_att_mul"])
    sa["b_dp"] = catb(["dist_add_e_p", "dist_mul_e_p", "p_att_mul"]).reshape(1, -1)
    sa["w_en"] = catW(["e_out", "e_att_mul"])
    sa["b_en"] = catb(["e_out", "e_att_mul"]).reshape(1, -1)
    sa["w_a_t"] = raw["a"]["W"].T                       # (H, dx)
    sa["w_af_t"] = raw["a_f"]["W"].T                    # (H, df)
    sa["w_m1"] = catW(["e_pos1", "e_p1"])
    sa["w_m2"] = jnp.concatenate([raw["e_pos2"]["W"].reshape(-1),
                                  raw["e_p2"]["W"].reshape(-1)]).reshape(1, -1)
    sa["w_apos_t"] = raw["a_pos"]["W"].T                # (H, de)
    sa["w_dpos"] = raw["d_pos"]["W"].reshape(-1, 1)     # (H, 1)
    sa["b_dpos"] = raw["d_pos"]["b"].reshape(-1, 1)     # (H, 1)

    out = dict(P)
    out["self_attn"] = sa
    return out


# ----------------------------------------------------------------------------
if __name__ == "__main__":
    bs, n = 2, 8
    dx = de = dy = df = 16          # df == dx is required by the Q_f * K broadcast
    n_head = 4
    dim_ffX = dim_ffE = dim_ffy = 32

    key = jax.random.PRNGKey(0)
    kp, kX, kE, ky, kpos, kpc, kpf = jax.random.split(key, 7)
    P = prepare_params(init_params(kp, dx, de, dy, df, n_head, dim_ffX, dim_ffE, dim_ffy))

    X = jax.random.normal(kX, (bs, n, dx), F32)
    E = jax.random.normal(kE, (bs, n, n, de), F32)
    E = 0.5 * (E + jnp.transpose(E, (0, 2, 1, 3)))
    y = jax.random.normal(ky, (bs, dy), F32)
    pos = jax.random.normal(kpos, (bs, n, 3), F32)
    pharma_coord = jax.random.normal(kpc, (bs, n, 3), F32)
    pharma_feat = jax.random.normal(kpf, (bs, n, df), F32)
    node_mask = jnp.array([[1, 1, 1, 1, 1, 1, 0, 0],
                           [1, 1, 1, 1, 1, 0, 0, 0]], F32)
    pharma_mask = jnp.array([[1, 1, 1, 0, 0, 0, 0, 0],
                             [1, 1, 0, 0, 0, 0, 0, 0]], F32)

    run = jax.jit(xey_transformer_layer)
    X_out, E_out, y_out, pos_out = jax.block_until_ready(
        run(P, X, E, y, pos, node_mask, pharma_coord, pharma_feat, pharma_mask))

    assert X_out.shape == (bs, n, dx)
    assert E_out.shape == (bs, n, n, de)
    assert y_out.shape == (bs, dy)
    assert pos_out.shape == (bs, n, 3)
    for o in (X_out, E_out, y_out, pos_out):
        assert bool(jnp.all(jnp.isfinite(o)))
    print("KERNEL_OK")
</pallas_src>

<mosaic_0001>
module attributes {stable_mosaic.version = 11 : i64} {
  func.func @_linear_kernel(%arg0: i32, %arg1: memref<16x16xf32, #tpu.memory_space<vmem>>, %arg2: memref<16x80xf32, #tpu.memory_space<vmem>>, %arg3: memref<1x80xf32, #tpu.memory_space<vmem>>, %arg4: memref<16x80xf32, #tpu.memory_space<vmem>>) attributes {dimension_semantics = [#tpu.dimension_semantics<parallel>], iteration_bounds = array<i64: 1>, scalar_prefetch = 0 : i64, scratch_operands = 0 : i64, tpu.core_type = #tpu.core_type<tc>, window_params = [{transform_indices = @transform_0, window_bounds = array<i64: 16, 16>}, {pipeline_mode = #tpu.pipeline_mode<synchronous>, transform_indices = @transform_1, window_bounds = array<i64: 16, 80>}, {pipeline_mode = #tpu.pipeline_mode<synchronous>, transform_indices = @transform_2, window_bounds = array<i64: 1, 80>}, {transform_indices = @transform_3, window_bounds = array<i64: 16, 80>}]} {
    %c0 = arith.constant 0 : index
    %c0_0 = arith.constant 0 : index
    %0 = vector.load %arg1[%c0, %c0_0] : memref<16x16xf32, #tpu.memory_space<vmem>>, vector<16x16xf32>
    %c0_1 = arith.constant 0 : index
    %c0_2 = arith.constant 0 : index
    %1 = vector.load %arg2[%c0_1, %c0_2] : memref<16x80xf32, #tpu.memory_space<vmem>>, vector<16x80xf32>
    %2 = arith.truncf %0 : vector<16x16xf32> to vector<16x16xbf16>
    %3 = arith.truncf %1 : vector<16x80xf32> to vector<16x80xbf16>
    %cst = arith.constant dense<0.000000e+00> : vector<16x80xf32>
    %4 = tpu.matmul %2, %3, %cst {dimension_numbers = #tpu.dot_dimension_numbers<[1], [0], [0], [1], [0, 0, 1, 1], [], []>} : vector<16x16xbf16>, vector<16x80xbf16>, vector<16x80xf32> -> vector<16x80xf32>
    %c0_3 = arith.constant 0 : index
    %c0_4 = arith.constant 0 : index
    %5 = vector.load %arg3[%c0_3, %c0_4] : memref<1x80xf32, #tpu.memory_space<vmem>>, vector<1x80xf32>
    %6 = vector.broadcast %5 : vector<1x80xf32> to vector<16x80xf32>
    %7 = arith.addf %4, %6 : vector<16x80xf32>
    %c0_5 = arith.constant 0 : index
    %c0_6 = arith.constant 0 : index
    %8 = vector.load %arg4[%c0_5, %c0_6] : memref<16x80xf32, #tpu.memory_space<vmem>>, vector<16x80xf32>
    tpu.vector_store %arg4[%c0_5, %c0_6], %7 {strides = array<i32>} : memref<16x80xf32, #tpu.memory_space<vmem>>, vector<16x80xf32>,
    return
  }
  func.func @transform_0(%arg0: i32) -> (i32, i32) {
    %c0_i32 = arith.constant 0 : i32
    %c0_i32_0 = arith.constant 0 : i32
    return %arg0, %c0_i32 : i32, i32
  }
  func.func @transform_1(%arg0: i32) -> (i32, i32) {
    %c0_i32 = arith.constant 0 : i32
    %c0_i32_0 = arith.constant 0 : i32
    %c0_i32_1 = arith.constant 0 : i32
    return %c0_i32, %c0_i32_0 : i32, i32
  }
  func.func @transform_2(%arg0: i32) -> (i32, i32) {
    %c0_i32 = arith.constant 0 : i32
    %c0_i32_0 = arith.constant 0 : i32
    %c0_i32_1 = arith.constant 0 : i32
    return %c0_i32, %c0_i32_0 : i32, i32
  }
  func.func @transform_3(%arg0: i32) -> (i32, i32) {
    %c0_i32 = arith.constant 0 : i32
    %c0_i32_0 = arith.constant 0 : i32
    return %arg0, %c0_i32 : i32, i32
  }
}

module attributes {stable_mosaic.version = 11 : i64} {
  func.func @_pos_attn_kernel(%arg0: i32, %arg1: i32, %arg2: memref<1x8x21xf32, #tpu.memory_space<vmem>>, %arg3: memref<1x8x37xf32, #tpu.memory_space<vmem>>, %arg4: memref<1x2x8xf32, #tpu.memory_space<vmem>>, %arg5: memref<4x16xf32, #tpu.memory_space<vmem>>, %arg6: memref<4x1xf32, #tpu.memory_space<vmem>>, %arg7: memref<4x1xf32, #tpu.memory_space<vmem>>, %arg8: memref<1x8x64xf32, #tpu.memory_space<vmem>>) attributes {dimension_semantics = [#tpu.dimension_semantics<parallel>, #tpu.dimension_semantics<parallel>], iteration_bounds = array<i64: 2, 1>, scalar_prefetch = 0 : i64, scratch_operands = 0 : i64, tpu.core_type = #tpu.core_type<tc>, window_params = [{transform_indices = @transform_0, window_bounds = array<i64: 1, 8, 21>}, {transform_indices = @transform_1, window_bounds = array<i64: 1, 8, 37>}, {transform_indices = @transform_2, window_bounds = array<i64: 1, 2, 8>}, {pipeline_mode = #tpu.pipeline_mode<synchronous>, transform_indices = @transform_3, window_bounds = array<i64: 4, 16>}, {pipeline_mode = #tpu.pipeline_mode<synchronous>, transform_indices = @transform_4, window_bounds = array<i64: 4, 1>}, {pipeline_mode = #tpu.pipeline_mode<synchronous>, transform_indices = @transform_5, window_bounds = array<i64: 4, 1>}, {transform_indices = @transform_6, window_bounds = array<i64: 1, 8, 64>}]} {
    %c0 = arith.constant 0 : index
    %c0_0 = arith.constant 0 : index
    %c0_1 = arith.constant 0 : index
    %0 = vector.load %arg2[%c0, %c0_0, %c0_1] : memref<1x8x21xf32, #tpu.memory_space<vmem>>, vector<1x8x21xf32>
    %1 = vector.shape_cast %0 : vector<1x8x21xf32> to vector<8x21xf32>
    %c0_2 = arith.constant 0 : index
    %c0_3 = arith.constant 0 : index
    %c0_4 = arith.constant 0 : index
    %2 = vector.load %arg3[%c0_2, %c0_3, %c0_4] : memref<1x8x37xf32, #tpu.memory_space<vmem>>, vector<1x8x37xf32>
    %3 = vector.shape_cast %2 : vector<1x8x37xf32> to vector<8x37xf32>
    %c0_5 = arith.constant 0 : index
    %c0_6 = arith.constant 0 : index
    %c0_7 = arith.constant 0 : index
    %4 = vector.load %arg4[%c0_5, %c0_6, %c0_7] : memref<1x2x8xf32, #tpu.memory_space<vmem>>, vector<1x2x8xf32>
    %5 = vector.shape_cast %4 : vector<1x2x8xf32> to vector<2x8xf32>
    %6 = vector.extract_strided_slice %1 {offsets = [0, 0], sizes = [8, 16], strides = [1, 1]} : vector<8x21xf32> to vector<8x16xf32>
    %7 = vector.extract_strided_slice %1 {offsets = [0, 16], sizes = [8, 3], strides = [1, 1]} : vector<8x21xf32> to vector<8x3xf32>
    %8 = vector.extract_strided_slice %1 {offsets = [0, 19], sizes = [8, 1], strides = [1, 1]} : vector<8x21xf32> to vector<8x1xf32>
    %9 = vector.extract_strided_slice %1 {offsets = [0, 20], sizes = [8, 1], strides = [1, 1]} : vector<8x21xf32> to vector<8x1xf32>
    %10 = vector.extract_strided_slice %3 {offsets = [0, 0], sizes = [8, 16], strides = [1, 1]} : vector<8x37xf32> to vector<8x16xf32>
    %11 = vector.extract_strided_slice %3 {offsets = [0, 16], sizes = [8, 16], strides = [1, 1]} : vector<8x37xf32> to vector<8x16xf32>
    %12 = vector.extract_strided_slice %3 {offsets = [0, 32], sizes = [8, 3], strides = [1, 1]} : vector<8x37xf32> to vector<8x3xf32>
    %13 = vector.extract_strided_slice %5 {offsets = [0, 0], sizes = [1, 8], strides = [1, 1]} : vector<2x8xf32> to vector<1x8xf32>
    %14 = vector.extract_strided_slice %5 {offsets = [1, 0], sizes = [1, 8], strides = [1, 1]} : vector<2x8xf32> to vector<1x8xf32>
    %15 = vector.broadcast %8 : vector<8x1xf32> to vector<8x8xf32>
    %16 = vector.broadcast %13 : vector<1x8xf32> to vector<8x8xf32>
    %17 = arith.mulf %15, %16 : vector<8x8xf32>
    %18 = vector.broadcast %9 : vector<8x1xf32> to vector<8x8xf32>
    %19 = vector.broadcast %14 : vector<1x8xf32> to vector<8x8xf32>
    %20 = arith.mulf %18, %19 : vector<8x8xf32>
    %21 = vector.shape_cast %7 : vector<8x3xf32> to vector<8x1x3xf32>
    %22 = vector.shape_cast %12 : vector<8x3xf32> to vector<1x8x3xf32>
    %23 = vector.broadcast %21 : vector<8x1x3xf32> to vector<8x8x3xf32>
    %24 = vector.broadcast %22 : vector<1x8x3xf32> to vector<8x8x3xf32>
    %25 = arith.subf %23, %24 : vector<8x8x3xf32>
    %26 = arith.mulf %25, %25 : vector<8x8x3xf32>
    %cst = arith.constant dense<0.000000e+00> : vector<8x8xf32>
    %27 = vector.multi_reduction <add>, %26, %cst [2] : vector<8x8x3xf32> to vector<8x8xf32>
    %28 = math.sqrt %27 : vector<8x8xf32>
    %29 = arith.mulf %28, %20 : vector<8x8xf32>
    %cst_8 = arith.constant 1.000000e+00 : f32
    %30 = vector.broadcast %cst_8 : f32 to vector<1x8xf32>
    %31 = arith.subf %30, %13 : vector<1x8xf32>
    %cst_9 = arith.constant -1.000000e+09 : f32
    %32 = vector.broadcast %cst_9 : f32 to vector<1x8xf32>
    %33 = arith.mulf %31, %32 : vector<1x8xf32>
    %c0_10 = arith.constant 0 : index
    %c0_11 = arith.constant 0 : index
    %34 = vector.load %arg5[%c0_10, %c0_11] : memref<4x16xf32, #tpu.memory_space<vmem>>, vector<4x16xf32>
    %c0_12 = arith.constant 0 : index
    %c0_13 = arith.constant 0 : index
    %35 = vector.load %arg6[%c0_12, %c0_13] : memref<4x1xf32, #tpu.memory_space<vmem>>, vector<4x1xf32>
    %c0_14 = arith.constant 0 : index
    %c0_15 = arith.constant 0 : index
    %36 = vector.load %arg7[%c0_14, %c0_15] : memref<4x1xf32, #tpu.memory_space<vmem>>, vector<4x1xf32>
    %37 = vector.extract_strided_slice %34 {offsets = [0, 0], sizes = [1, 16], strides = [1, 1]} : vector<4x16xf32> to vector<1x16xf32>
    %38 = vector.broadcast %37 : vector<1x16xf32> to vector<8x16xf32>
    %39 = arith.mulf %6, %38 : vector<8x16xf32>
    %40 = arith.truncf %39 : vector<8x16xf32> to vector<8x16xbf16>
    %41 = arith.truncf %10 : vector<8x16xf32> to vector<8x16xbf16>
    %cst_16 = arith.constant dense<0.000000e+00> : vector<8x8xf32>
    %42 = tpu.matmul %40, %41, %cst_16 {dimension_numbers = #tpu.dot_dimension_numbers<[1], [1], [0], [0], [0, 0, 1, 0], [], []>} : vector<8x16xbf16>, vector<8x16xbf16>, vector<8x8xf32> -> vector<8x8xf32>
    %cst_17 = arith.constant 2.500000e-01 : f32
    %43 = vector.broadcast %cst_17 : f32 to vector<8x8xf32>
    %44 = arith.mulf %42, %43 : vector<8x8xf32>
    %45 = arith.mulf %44, %17 : vector<8x8xf32>
    %46 = vector.extract_strided_slice %35 {offsets = [0, 0], sizes = [1, 1], strides = [1, 1]} : vector<4x1xf32> to vector<1x1xf32>
    %47 = vector.broadcast %46 : vector<1x1xf32> to vector<8x8xf32>
    %48 = arith.mulf %29, %47 : vector<8x8xf32>
    %49 = vector.extract_strided_slice %36 {offsets = [0, 0], sizes = [1, 1], strides = [1, 1]} : vector<4x1xf32> to vector<1x1xf32>
    %50 = vector.broadcast %49 : vector<1x1xf32> to vector<8x8xf32>
    %51 = arith.addf %48, %50 : vector<8x8xf32>
    %52 = arith.mulf %51, %20 : vector<8x8xf32>
    %53 = arith.subf %45, %52 : vector<8x8xf32>
    %54 = vector.broadcast %33 : vector<1x8xf32> to vector<8x8xf32>
    %55 = arith.addf %53, %54 : vector<8x8xf32>
    %cst_18 = arith.constant dense<0xFF800000> : vector<8xf32>
    %56 = vector.multi_reduction <maximumf>, %55, %cst_18 [1] : vector<8x8xf32> to vector<8xf32>
    %57 = vector.shape_cast %56 : vector<8xf32> to vector<8x1xf32>
    %58 = vector.broadcast %57 : vector<8x1xf32> to vector<8x8xf32>
    %59 = arith.subf %55, %58 : vector<8x8xf32>
    %60 = math.exp %59 : vector<8x8xf32>
    %61 = vector.broadcast %13 : vector<1x8xf32> to vector<8x8xf32>
    %62 = arith.mulf %60, %61 : vector<8x8xf32>
    %cst_19 = arith.constant dense<0.000000e+00> : vector<8xf32>
    %63 = vector.multi_reduction <add>, %62, %cst_19 [1] : vector<8x8xf32> to vector<8xf32>
    %64 = vector.shape_cast %63 : vector<8xf32> to vector<8x1xf32>
    %cst_20 = arith.constant 0.000000e+00 : f32
    %65 = vector.broadcast %cst_20 : f32 to vector<8x1xf32>
    %66 = arith.cmpf oeq, %64, %65 : vector<8x1xf32>
    %67 = arith.extui %66 : vector<8x1xi1> to vector<8x1xi32>
    %68 = arith.sitofp %67 : vector<8x1xi32> to vector<8x1xf32>
    %69 = arith.addf %64, %68 : vector<8x1xf32>
    %70 = vector.broadcast %69 : vector<8x1xf32> to vector<8x8xf32>
    %71 = arith.divf %62, %70 : vector<8x8xf32>
    %72 = arith.truncf %71 : vector<8x8xf32> to vector<8x8xbf16>
    %73 = arith.truncf %11 : vector<8x16xf32> to vector<8x16xbf16>
    %cst_21 = arith.constant dense<0.000000e+00> : vector<8x16xf32>
    %74 = tpu.matmul %72, %73, %cst_21 {dimension_numbers = #tpu.dot_dimension_numbers<[1], [0], [0], [1], [0, 0, 1, 1], [], []>} : vector<8x8xbf16>, vector<8x16xbf16>, vector<8x16xf32> -> vector<8x16xf32>
    %75 = vector.extract_strided_slice %34 {offsets = [1, 0], sizes = [1, 16], strides = [1, 1]} : vector<4x16xf32> to vector<1x16xf32>
    %76 = vector.broadcast %75 : vector<1x16xf32> to vector<8x16xf32>
    %77 = arith.mulf %6, %76 : vector<8x16xf32>
    %78 = arith.truncf %77 : vector<8x16xf32> to vector<8x16xbf16>
    %79 = arith.truncf %10 : vector<8x16xf32> to vector<8x16xbf16>
    %cst_22 = arith.constant dense<0.000000e+00> : vector<8x8xf32>
    %80 = tpu.matmul %78, %79, %cst_22 {dimension_numbers = #tpu.dot_dimension_numbers<[1], [1], [0], [0], [0, 0, 1, 0], [], []>} : vector<8x16xbf16>, vector<8x16xbf16>, vector<8x8xf32> -> vector<8x8xf32>
    %cst_23 = arith.constant 2.500000e-01 : f32
    %81 = vector.broadcast %cst_23 : f32 to vector<8x8xf32>
    %82 = arith.mulf %80, %81 : vector<8x8xf32>
    %83 = arith.mulf %82, %17 : vector<8x8xf32>
    %84 = vector.extract_strided_slice %35 {offsets = [1, 0], sizes = [1, 1], strides = [1, 1]} : vector<4x1xf32> to vector<1x1xf32>
    %85 = vector.broadcast %84 : vector<1x1xf32> to vector<8x8xf32>
    %86 = arith.mulf %29, %85 : vector<8x8xf32>
    %87 = vector.extract_strided_slice %36 {offsets = [1, 0], sizes = [1, 1], strides = [1, 1]} : vector<4x1xf32> to vector<1x1xf32>
    %88 = vector.broadcast %87 : vector<1x1xf32> to vector<8x8xf32>
    %89 = arith.addf %86, %88 : vector<8x8xf32>
    %90 = arith.mulf %89, %20 : vector<8x8xf32>
    %91 = arith.subf %83, %90 : vector<8x8xf32>
    %92 = vector.broadcast %33 : vector<1x8xf32> to vector<8x8xf32>
    %93 = arith.addf %91, %92 : vector<8x8xf32>
    %cst_24 = arith.constant dense<0xFF800000> : vector<8xf32>
    %94 = vector.multi_reduction <maximumf>, %93, %cst_24 [1] : vector<8x8xf32> to vector<8xf32>
    %95 = vector.shape_cast %94 : vector<8xf32> to vector<8x1xf32>
    %96 = vector.broadcast %95 : vector<8x1xf32> to vector<8x8xf32>
    %97 = arith.subf %93, %96 : vector<8x8xf32>
    %98 = math.exp %97 : vector<8x8xf32>
    %99 = vector.broadcast %13 : vector<1x8xf32> to vector<8x8xf32>
    %100 = arith.mulf %98, %99 : vector<8x8xf32>
    %cst_25 = arith.constant dense<0.000000e+00> : vector<8xf32>
    %101 = vector.multi_reduction <add>, %100, %cst_25 [1] : vector<8x8xf32> to vector<8xf32>
    %102 = vector.shape_cast %101 : vector<8xf32> to vector<8x1xf32>
    %cst_26 = arith.constant 0.000000e+00 : f32
    %103 = vector.broadcast %cst_26 : f32 to vector<8x1xf32>
    %104 = arith.cmpf oeq, %102, %103 : vector<8x1xf32>
    %105 = arith.extui %104 : vector<8x1xi1> to vector<8x1xi32>
    %106 = arith.sitofp %105 : vector<8x1xi32> to vector<8x1xf32>
    %107 = arith.addf %102, %106 : vector<8x1xf32>
    %108 = vector.broadcast %107 : vector<8x1xf32> to vector<8x8xf32>
    %109 = arith.divf %100, %108 : vector<8x8xf32>
    %110 = arith.truncf %109 : vector<8x8xf32> to vector<8x8xbf16>
    %111 = arith.truncf %11 : vector<8x16xf32> to vector<8x16xbf16>
    %cst_27 = arith.constant dense<0.000000e+00> : vector<8x16xf32>
    %112 = tpu.matmul %110, %111, %cst_27 {dimension_numbers = #tpu.dot_dimension_numbers<[1], [0], [0], [1], [0, 0, 1, 1], [], []>} : vector<8x8xbf16>, vector<8x16xbf16>, vector<8x16xf32> -> vector<8x16xf32>
    %113 = vector.extract_strided_slice %34 {offsets = [2, 0], sizes = [1, 16], strides = [1, 1]} : vector<4x16xf32> to vector<1x16xf32>
    %114 = vector.broadcast %113 : vector<1x16xf32> to vector<8x16xf32>
    %115 = arith.mulf %6, %114 : vector<8x16xf32>
    %116 = arith.truncf %115 : vector<8x16xf32> to vector<8x16xbf16>
    %117 = arith.truncf %10 : vector<8x16xf32> to vector<8x16xbf16>
    %cst_28 = arith.constant dense<0.000000e+00> : vector<8x8xf32>
    %118 = tpu.matmul %116, %117, %cst_28 {dimension_numbers = #tpu.dot_dimension_numbers<[1], [1], [0], [0], [0, 0, 1, 0], [], []>} : vector<8x16xbf16>, vector<8x16xbf16>, vector<8x8xf32> -> vector<8x8xf32>
    %cst_29 = arith.constant 2.500000e-01 : f32
    %119 = vector.broadcast %cst_29 : f32 to vector<8x8xf32>
    %120 = arith.mulf %118, %119 : vector<8x8xf32>
    %121 = arith.mulf %120, %17 : vector<8x8xf32>
    %122 = vector.extract_strided_slice %35 {offsets = [2, 0], sizes = [1, 1], strides = [1, 1]} : vector<4x1xf32> to vector<1x1xf32>
    %123 = vector.broadcast %122 : vector<1x1xf32> to vector<8x8xf32>
    %124 = arith.mulf %29, %123 : vector<8x8xf32>
    %125 = vector.extract_strided_slice %36 {offsets = [2, 0], sizes = [1, 1], strides = [1, 1]} : vector<4x1xf32> to vector<1x1xf32>
    %126 = vector.broadcast %125 : vector<1x1xf32> to vector<8x8xf32>
    %127 = arith.addf %124, %126 : vector<8x8xf32>
    %128 = arith.mulf %127, %20 : vector<8x8xf32>
    %129 = arith.subf %121, %128 : vector<8x8xf32>
    %130 = vector.broadcast %33 : vector<1x8xf32> to vector<8x8xf32>
    %131 = arith.addf %129, %130 : vector<8x8xf32>
    %cst_30 = arith.constant dense<0xFF800000> : vector<8xf32>
    %132 = vector.multi_reduction <maximumf>, %131, %cst_30 [1] : vector<8x8xf32> to vector<8xf32>
    %133 = vector.shape_cast %132 : vector<8xf32> to vector<8x1xf32>
    %134 = vector.broadcast %133 : vector<8x1xf32> to vector<8x8xf32>
    %135 = arith.subf %131, %134 : vector<8x8xf32>
    %136 = math.exp %135 : vector<8x8xf32>
    %137 = vector.broadcast %13 : vector<1x8xf32> to vector<8x8xf32>
    %138 = arith.mulf %136, %137 : vector<8x8xf32>
    %cst_31 = arith.constant dense<0.000000e+00> : vector<8xf32>
    %139 = vector.multi_reduction <add>, %138, %cst_31 [1] : vector<8x8xf32> to vector<8xf32>
    %140 = vector.shape_cast %139 : vector<8xf32> to vector<8x1xf32>
    %cst_32 = arith.constant 0.000000e+00 : f32
    %141 = vector.broadcast %cst_32 : f32 to vector<8x1xf32>
    %142 = arith.cmpf oeq, %140, %141 : vector<8x1xf32>
    %143 = arith.extui %142 : vector<8x1xi1> to vector<8x1xi32>
    %144 = arith.sitofp %143 : vector<8x1xi32> to vector<8x1xf32>
    %145 = arith.addf %140, %144 : vector<8x1xf32>
    %146 = vector.broadcast %145 : vector<8x1xf32> to vector<8x8xf32>
    %147 = arith.divf %138, %146 : vector<8x8xf32>
    %148 = arith.truncf %147 : vector<8x8xf32> to vector<8x8xbf16>
    %149 = arith.truncf %11 : vector<8x16xf32> to vector<8x16xbf16>
    %cst_33 = arith.constant dense<0.000000e+00> : vector<8x16xf32>
    %150 = tpu.matmul %148, %149, %cst_33 {dimension_numbers = #tpu.dot_dimension_numbers<[1], [0], [0], [1], [0, 0, 1, 1], [], []>} : vector<8x8xbf16>, vector<8x16xbf16>, vector<8x16xf32> -> vector<8x16xf32>
    %151 = vector.extract_strided_slice %34 {offsets = [3, 0], sizes = [1, 16], strides = [1, 1]} : vector<4x16xf32> to vector<1x16xf32>
    %152 = vector.broadcast %151 : vector<1x16xf32> to vector<8x16xf32>
    %153 = arith.mulf %6, %152 : vector<8x16xf32>
    %154 = arith.truncf %153 : vector<8x16xf32> to vector<8x16xbf16>
    %155 = arith.truncf %10 : vector<8x16xf32> to vector<8x16xbf16>
    %cst_34 = arith.constant dense<0.000000e+00> : vector<8x8xf32>
    %156 = tpu.matmul %154, %155, %cst_34 {dimension_numbers = #tpu.dot_dimension_numbers<[1], [1], [0], [0], [0, 0, 1, 0], [], []>} : vector<8x16xbf16>, vector<8x16xbf16>, vector<8x8xf32> -> vector<8x8xf32>
    %cst_35 = arith.constant 2.500000e-01 : f32
    %157 = vector.broadcast %cst_35 : f32 to vector<8x8xf32>
    %158 = arith.mulf %156, %157 : vector<8x8xf32>
    %159 = arith.mulf %158, %17 : vector<8x8xf32>
    %160 = vector.extract_strided_slice %35 {offsets = [3, 0], sizes = [1, 1], strides = [1, 1]} : vector<4x1xf32> to vector<1x1xf32>
    %161 = vector.broadcast %160 : vector<1x1xf32> to vector<8x8xf32>
    %162 = arith.mulf %29, %161 : vector<8x8xf32>
    %163 = vector.extract_strided_slice %36 {offsets = [3, 0], sizes = [1, 1], strides = [1, 1]} : vector<4x1xf32> to vector<1x1xf32>
    %164 = vector.broadcast %163 : vector<1x1xf32> to vector<8x8xf32>
    %165 = arith.addf %162, %164 : vector<8x8xf32>
    %166 = arith.mulf %165, %20 : vector<8x8xf32>
    %167 = arith.subf %159, %166 : vector<8x8xf32>
    %168 = vector.broadcast %33 : vector<1x8xf32> to vector<8x8xf32>
    %169 = arith.addf %167, %168 : vector<8x8xf32>
    %cst_36 = arith.constant dense<0xFF800000> : vector<8xf32>
    %170 = vector.multi_reduction <maximumf>, %169, %cst_36 [1] : vector<8x8xf32> to vector<8xf32>
    %171 = vector.shape_cast %170 : vector<8xf32> to vector<8x1xf32>
    %172 = vector.broadcast %171 : vector<8x1xf32> to vector<8x8xf32>
    %173 = arith.subf %169, %172 : vector<8x8xf32>
    %174 = math.exp %173 : vector<8x8xf32>
    %175 = vector.broadcast %13 : vector<1x8xf32> to vector<8x8xf32>
    %176 = arith.mulf %174, %175 : vector<8x8xf32>
    %cst_37 = arith.constant dense<0.000000e+00> : vector<8xf32>
    %177 = vector.multi_reduction <add>, %176, %cst_37 [1] : vector<8x8xf32> to vector<8xf32>
    %178 = vector.shape_cast %177 : vector<8xf32> to vector<8x1xf32>
    %cst_38 = arith.constant 0.000000e+00 : f32
    %179 = vector.broadcast %cst_38 : f32 to vector<8x1xf32>
    %180 = arith.cmpf oeq, %178, %179 : vector<8x1xf32>
    %181 = arith.extui %180 : vector<8x1xi1> to vector<8x1xi32>
    %182 = arith.sitofp %181 : vector<8x1xi32> to vector<8x1xf32>
    %183 = arith.addf %178, %182 : vector<8x1xf32>
    %184 = vector.broadcast %183 : vector<8x1xf32> to vector<8x8xf32>
    %185 = arith.divf %176, %184 : vector<8x8xf32>
    %186 = arith.truncf %185 : vector<8x8xf32> to vector<8x8xbf16>
    %187 = arith.truncf %11 : vector<8x16xf32> to vector<8x16xbf16>
    %cst_39 = arith.constant dense<0.000000e+00> : vector<8x16xf32>
    %188 = tpu.matmul %186, %187, %cst_39 {dimension_numbers = #tpu.dot_dimension_numbers<[1], [0], [0], [1], [0, 0, 1, 1], [], []>} : vector<8x8xbf16>, vector<8x16xbf16>, vector<8x16xf32> -> vector<8x16xf32>
    %189 = tpu.concatenate %74, %112, %150, %188 in 1 : vector<8x16xf32>, vector<8x16xf32>, vector<8x16xf32>, vector<8x16xf32> -> vector<8x64xf32>
    %c0_40 = arith.constant 0 : index
    %c0_41 = arith.constant 0 : index
    %c0_42 = arith.constant 0 : index
    %190 = vector.load %arg8[%c0_40, %c0_41, %c0_42] : memref<1x8x64xf32, #tpu.memory_space<vmem>>, vector<1x8x64xf32>
    %191 = vector.shape_cast %190 : vector<1x8x64xf32> to vector<8x64xf32>
    %192 = vector.shape_cast %189 : vector<8x64xf32> to vector<1x8x64xf32>
    tpu.vector_store %arg8[%c0_40, %c0_41, %c0_42], %192 {strides = array<i32>} : memref<1x8x64xf32, #tpu.memory_space<vmem>>, vector<1x8x64xf32>,
    return
  }
  func.func @transform_0(%arg0: i32, %arg1: i32) -> (i32, i32, i32) {
    %c0_i32 = arith.constant 0 : i32
    %c0_i32_0 = arith.constant 0 : i32
    return %arg0, %arg1, %c0_i32 : i32, i32, i32
  }
  func.func @transform_1(%arg0: i32, %arg1: i32) -> (i32, i32, i32) {
    %c0_i32 = arith.constant 0 : i32
    %c0_i32_0 = arith.constant 0 : i32
    %c0_i32_1 = arith.constant 0 : i32
    return %arg0, %c0_i32, %c0_i32_0 : i32, i32, i32
  }
  func.func @transform_2(%arg0: i32, %arg1: i32) -> (i32, i32, i32) {
    %c0_i32 = arith.constant 0 : i32
    %c0_i32_0 = arith.constant 0 : i32
    %c0_i32_1 = arith.constant 0 : i32
    return %arg0, %c0_i32, %c0_i32_0 : i32, i32, i32
  }
  func.func @transform_3(%arg0: i32, %arg1: i32) -> (i32, i32) {
    %c0_i32 = arith.constant 0 : i32
    %c0_i32_0 = arith.constant 0 : i32
    %c0_i32_1 = arith.constant 0 : i32
    return %c0_i32, %c0_i32_0 : i32, i32
  }
  func.func @transform_4(%arg0: i32, %arg1: i32) -> (i32, i32) {
    %c0_i32 = arith.constant 0 : i32
    %c0_i32_0 = arith.constant 0 : i32
    %c0_i32_1 = arith.constant 0 : i32
    return %c0_i32, %c0_i32_0 : i32, i32
  }
  func.func @transform_5(%arg0: i32, %arg1: i32) -> (i32, i32) {
    %c0_i32 = arith.constant 0 : i32
    %c0_i32_0 = arith.constant 0 : i32
    %c0_i32_1 = arith.constant 0 : i32
    return %c0_i32, %c0_i32_0 : i32, i32
  }
  func.func @transform_6(%arg0: i32, %arg1: i32) -> (i32, i32, i32) {
    %c0_i32 = arith.constant 0 : i32
    %c0_i32_0 = arith.constant 0 : i32
    return %arg0, %arg1, %c0_i32 : i32, i32, i32
  }
}

module attributes {stable_mosaic.version = 11 : i64} {
  func.func @_edge_kernel(%arg0: i32, %arg1: i32, %arg2: memref<1x8x8x16xbf16, #tpu.memory_space<vmem>>, %arg3: memref<1x8x72xf32, #tpu.memory_space<vmem>>, %arg4: memref<1x8x72xf32, #tpu.memory_space<vmem>>, %arg5: memref<1x2x8xf32, #tpu.memory_space<vmem>>, %arg6: memref<1x1x32xf32, #tpu.memory_space<vmem>>, %arg7: memref<16x16xf32, #tpu.memory_space<vmem>>, %arg8: memref<1x16xf32, #tpu.memory_space<vmem>>, %arg9: memref<8x16xf32, #tpu.memory_space<vmem>>, %arg10: memref<8x16xf32, #tpu.memory_space<vmem>>, %arg11: memref<16x36xf32, #tpu.memory_space<vmem>>, %arg12: memref<1x36xf32, #tpu.memory_space<vmem>>, %arg13: memref<16x36xf32, #tpu.memory_space<vmem>>, %arg14: memref<1x36xf32, #tpu.memory_space<vmem>>, %arg15: memref<16x20xf32, #tpu.memory_space<vmem>>, %arg16: memref<1x20xf32, #tpu.memory_space<vmem>>, %arg17: memref<4x16xf32, #tpu.memory_space<vmem>>, %arg18: memref<4x16xf32, #tpu.memory_space<vmem>>, %arg19: memref<16x32xf32, #tpu.memory_space<vmem>>, %arg20: memref<1x32xf32, #tpu.memory_space<vmem>>, %arg21: memref<1x16xf32, #tpu.memory_space<vmem>>, %arg22: memref<1x16xf32, #tpu.memory_space<vmem>>, %arg23: memref<16x32xf32, #tpu.memory_space<vmem>>, %arg24: memref<1x32xf32, #tpu.memory_space<vmem>>, %arg25: memref<32x16xf32, #tpu.memory_space<vmem>>, %arg26: memref<1x16xf32, #tpu.memory_space<vmem>>, %arg27: memref<1x16xf32, #tpu.memory_space<vmem>>, %arg28: memref<1x16xf32, #tpu.memory_space<vmem>>, %arg29: memref<1x8x8x16xf32, #tpu.memory_space<vmem>>, %arg30: memref<1x8x512xf32, #tpu.memory_space<vmem>>) attributes {dimension_semantics = [#tpu.dimension_semantics<parallel>, #tpu.dimension_semantics<parallel>], iteration_bounds = array<i64: 2, 1>, scalar_prefetch = 0 : i64, scratch_operands = 0 : i64, tpu.core_type = #tpu.core_type<tc>, window_params = [{transform_indices = @transform_0, window_bounds = array<i64: 1, 8, 8, 16>}, {transform_indices = @transform_1, window_bounds = array<i64: 1, 8, 72>}, {transform_indices = @transform_2, window_bounds = array<i64: 1, 8, 72>}, {transform_indices = @transform_3, window_bounds = array<i64: 1, 2, 8>}, {transform_indices = @transform_4, window_bounds = array<i64: 1, 1, 32>}, {pipeline_mode = #tpu.pipeline_mode<synchronous>, transform_indices = @transform_5, window_bounds = array<i64: 16, 16>}, {pipeline_mode = #tpu.pipeline_mode<synchronous>, transform_indices = @transform_6, window_bounds = array<i64: 1, 16>}, {pipeline_mode = #tpu.pipeline_mode<synchronous>, transform_indices = @transform_7, window_bounds = array<i64: 8, 16>}, {pipeline_mode = #tpu.pipeline_mode<synchronous>, transform_indices = @transform_8, window_bounds = array<i64: 8, 16>}, {pipeline_mode = #tpu.pipeline_mode<synchronous>, transform_indices = @transform_9, window_bounds = array<i64: 16, 36>}, {pipeline_mode = #tpu.pipeline_mode<synchronous>, transform_indices = @transform_10, window_bounds = array<i64: 1, 36>}, {pipeline_mode = #tpu.pipeline_mode<synchronous>, transform_indices = @transform_11, window_bounds = array<i64: 16, 36>}, {pipeline_mode = #tpu.pipeline_mode<synchronous>, transform_indices = @transform_12, window_bounds = array<i64: 1, 36>}, {pipeline_mode = #tpu.pipeline_mode<synchronous>, transform_indices = @transform_13, window_bounds = array<i64: 16, 20>}, {pipeline_mode = #tpu.pipeline_mode<synchronous>, transform_indices = @transform_14, window_bounds = array<i64: 1, 20>}, {pipeline_mode = #tpu.pipeline_mode<synchronous>, transform_indices = @transform_15, window_bounds = array<i64: 4, 16>}, {pipeline_mode = #tpu.pipeline_mode<synchronous>, transform_indices = @transform_16, window_bounds = array<i64: 4, 16>}, {pipeline_mode = #tpu.pipeline_mode<synchronous>, transform_indices = @transform_17, window_bounds = array<i64: 16, 32>}, {pipeline_mode = #tpu.pipeline_mode<synchronous>, transform_indices = @transform_18, window_bounds = array<i64: 1, 32>}, {pipeline_mode = #tpu.pipeline_mode<synchronous>, transform_indices = @transform_19, window_bounds = array<i64: 1, 16>}, {pipeline_mode = #tpu.pipeline_mode<synchronous>, transform_indices = @transform_20, window_bounds = array<i64: 1, 16>}, {pipeline_mode = #tpu.pipeline_mode<synchronous>, transform_indices = @transform_21, window_bounds = array<i64: 16, 32>}, {pipeline_mode = #tpu.pipeline_mode<synchronous>, transform_indices = @transform_22, window_bounds = array<i64: 1, 32>}, {pipeline_mode = #tpu.pipeline_mode<synchronous>, transform_indices = @transform_23, window_bounds = array<i64: 32, 16>}, {pipeline_mode = #tpu.pipeline_mode<synchronous>, transform_indices = @transform_24, window_bounds = array<i64: 1, 16>}, {pipeline_mode = #tpu.pipeline_mode<synchronous>, transform_indices = @transform_25, window_bounds = array<i64: 1, 16>}, {pipeline_mode = #tpu.pipeline_mode<synchronous>, transform_indices = @transform_26, window_bounds = array<i64: 1, 16>}, {transform_indices = @transform_27, window_bounds = array<i64: 1, 8, 8, 16>}, {transform_indices = @transform_28, window_bounds = array<i64: 1, 8, 512>}]} {
    %c0 = arith.constant 0 : index
    %c0_0 = arith.constant 0 : index
    %c0_1 = arith.constant 0 : index
    %0 = vector.load %arg3[%c0, %c0_0, %c0_1] : memref<1x8x72xf32, #tpu.memory_space<vmem>>, vector<1x8x72xf32>
    %1 = vector.shape_cast %0 : vector<1x8x72xf32> to vector<8x72xf32>
    %c0_2 = arith.constant 0 : index
    %c0_3 = arith.constant 0 : index
    %c0_4 = arith.constant 0 : index
    %2 = vector.load %arg4[%c0_2, %c0_3, %c0_4] : memref<1x8x72xf32, #tpu.memory_space<vmem>>, vector<1x8x72xf32>
    %3 = vector.shape_cast %2 : vector<1x8x72xf32> to vector<8x72xf32>
    %c0_5 = arith.constant 0 : index
    %c0_6 = arith.constant 0 : index
    %c0_7 = arith.constant 0 : index
    %4 = vector.load %arg5[%c0_5, %c0_6, %c0_7] : memref<1x2x8xf32, #tpu.memory_space<vmem>>, vector<1x2x8xf32>
    %5 = vector.shape_cast %4 : vector<1x2x8xf32> to vector<2x8xf32>
    %c0_8 = arith.constant 0 : index
    %c0_9 = arith.constant 0 : index
    %c0_10 = arith.constant 0 : index
    %6 = vector.load %arg6[%c0_8, %c0_9, %c0_10] : memref<1x1x32xf32, #tpu.memory_space<vmem>>, vector<1x1x32xf32>
    %7 = vector.shape_cast %6 : vector<1x1x32xf32> to vector<1x32xf32>
    %8 = vector.extract_strided_slice %1 {offsets = [0, 0], sizes = [8, 16], strides = [1, 1]} : vector<8x72xf32> to vector<8x16xf32>
    %9 = vector.extract_strided_slice %1 {offsets = [0, 16], sizes = [8, 16], strides = [1, 1]} : vector<8x72xf32> to vector<8x16xf32>
    %10 = vector.extract_strided_slice %1 {offsets = [0, 32], sizes = [8, 16], strides = [1, 1]} : vector<8x72xf32> to vector<8x16xf32>
    %11 = vector.extract_strided_slice %1 {offsets = [0, 48], sizes = [8, 16], strides = [1, 1]} : vector<8x72xf32> to vector<8x16xf32>
    %12 = vector.extract_strided_slice %1 {offsets = [0, 64], sizes = [8, 1], strides = [1, 1]} : vector<8x72xf32> to vector<8x1xf32>
    %13 = vector.extract_strided_slice %1 {offsets = [0, 65], sizes = [8, 1], strides = [1, 1]} : vector<8x72xf32> to vector<8x1xf32>
    %14 = vector.extract_strided_slice %1 {offsets = [0, 66], sizes = [8, 3], strides = [1, 1]} : vector<8x72xf32> to vector<8x3xf32>
    %15 = vector.extract_strided_slice %1 {offsets = [0, 69], sizes = [8, 3], strides = [1, 1]} : vector<8x72xf32> to vector<8x3xf32>
    %16 = vector.extract_strided_slice %3 {offsets = [0, 0], sizes = [8, 16], strides = [1, 1]} : vector<8x72xf32> to vector<8x16xf32>
    %17 = vector.extract_strided_slice %3 {offsets = [0, 16], sizes = [8, 16], strides = [1, 1]} : vector<8x72xf32> to vector<8x16xf32>
    %18 = vector.extract_strided_slice %3 {offsets = [0, 32], sizes = [8, 16], strides = [1, 1]} : vector<8x72xf32> to vector<8x16xf32>
    %19 = vector.extract_strided_slice %3 {offsets = [0, 48], sizes = [8, 16], strides = [1, 1]} : vector<8x72xf32> to vector<8x16xf32>
    %20 = vector.extract_strided_slice %3 {offsets = [0, 64], sizes = [8, 1], strides = [1, 1]} : vector<8x72xf32> to vector<8x1xf32>
    %21 = vector.extract_strided_slice %3 {offsets = [0, 65], sizes = [8, 1], strides = [1, 1]} : vector<8x72xf32> to vector<8x1xf32>
    %22 = vector.extract_strided_slice %3 {offsets = [0, 66], sizes = [8, 3], strides = [1, 1]} : vector<8x72xf32> to vector<8x3xf32>
    %23 = vector.extract_strided_slice %3 {offsets = [0, 69], sizes = [8, 3], strides = [1, 1]} : vector<8x72xf32> to vector<8x3xf32>
    %24 = vector.extract_strided_slice %5 {offsets = [0, 0], sizes = [1, 8], strides = [1, 1]} : vector<2x8xf32> to vector<1x8xf32>
    %25 = vector.extract_strided_slice %5 {offsets = [1, 0], sizes = [1, 8], strides = [1, 1]} : vector<2x8xf32> to vector<1x8xf32>
    %26 = vector.shape_cast %12 : vector<8x1xf32> to vector<8x1x1xf32>
    %27 = vector.shape_cast %20 : vector<8x1xf32> to vector<1x8x1xf32>
    %28 = vector.broadcast %26 : vector<8x1x1xf32> to vector<8x8x1xf32>
    %29 = vector.broadcast %27 : vector<1x8x1xf32> to vector<8x8x1xf32>
    %30 = arith.mulf %28, %29 : vector<8x8x1xf32>
    %31 = vector.shape_cast %13 : vector<8x1xf32> to vector<8x1x1xf32>
    %32 = vector.shape_cast %21 : vector<8x1xf32> to vector<1x8x1xf32>
    %33 = vector.broadcast %31 : vector<8x1x1xf32> to vector<8x8x1xf32>
    %34 = vector.broadcast %32 : vector<1x8x1xf32> to vector<8x8x1xf32>
    %35 = arith.mulf %33, %34 : vector<8x8x1xf32>
    %36 = vector.shape_cast %20 : vector<8x1xf32> to vector<1x8x1xf32>
    %37 = vector.shape_cast %21 : vector<8x1xf32> to vector<1x8x1xf32>
    %c0_11 = arith.constant 0 : index
    %c0_12 = arith.constant 0 : index
    %38 = vector.load %arg9[%c0_11, %c0_12] : memref<8x16xf32, #tpu.memory_space<vmem>>, vector<8x16xf32>
    %c0_13 = arith.constant 0 : index
    %c0_14 = arith.constant 0 : index
    %39 = vector.load %arg10[%c0_13, %c0_14] : memref<8x16xf32, #tpu.memory_space<vmem>>, vector<8x16xf32>
    %40 = arith.mulf %14, %14 : vector<8x3xf32>
    %cst = arith.constant dense<0.000000e+00> : vector<8xf32>
    %41 = vector.multi_reduction <add>, %40, %cst [1] : vector<8x3xf32> to vector<8xf32>
    %42 = vector.shape_cast %41 : vector<8xf32> to vector<8x1xf32>
    %43 = math.sqrt %42 : vector<8x1xf32>
    %44 = arith.mulf %22, %22 : vector<8x3xf32>
    %cst_15 = arith.constant dense<0.000000e+00> : vector<8xf32>
    %45 = vector.multi_reduction <add>, %44, %cst_15 [1] : vector<8x3xf32> to vector<8xf32>
    %46 = vector.shape_cast %45 : vector<8xf32> to vector<8x1xf32>
    %47 = math.sqrt %46 : vector<8x1xf32>
    %cst_16 = arith.constant 1.000000e-07 : f32
    %48 = vector.broadcast %cst_16 : f32 to vector<8x1xf32>
    %49 = arith.addf %43, %48 : vector<8x1xf32>
    %50 = vector.broadcast %49 : vector<8x1xf32> to vector<8x3xf32>
    %51 = arith.divf %14, %50 : vector<8x3xf32>
    %cst_17 = arith.constant 1.000000e-07 : f32
    %52 = vector.broadcast %cst_17 : f32 to vector<8x1xf32>
    %53 = arith.addf %47, %52 : vector<8x1xf32>
    %54 = vector.broadcast %53 : vector<8x1xf32> to vector<8x3xf32>
    %55 = arith.divf %22, %54 : vector<8x3xf32>
    %56 = vector.shape_cast %14 : vector<8x3xf32> to vector<8x1x3xf32>
    %57 = vector.shape_cast %22 : vector<8x3xf32> to vector<1x8x3xf32>
    %58 = vector.broadcast %56 : vector<8x1x3xf32> to vector<8x8x3xf32>
    %59 = vector.broadcast %57 : vector<1x8x3xf32> to vector<8x8x3xf32>
    %60 = arith.subf %58, %59 : vector<8x8x3xf32>
    %61 = arith.mulf %60, %60 : vector<8x8x3xf32>
    %cst_18 = arith.constant dense<0.000000e+00> : vector<8x8xf32>
    %62 = vector.multi_reduction <add>, %61, %cst_18 [2] : vector<8x8x3xf32> to vector<8x8xf32>
    %63 = vector.shape_cast %62 : vector<8x8xf32> to vector<8x8x1xf32>
    %64 = math.sqrt %63 : vector<8x8x1xf32>
    %65 = vector.shape_cast %51 : vector<8x3xf32> to vector<8x1x3xf32>
    %66 = vector.shape_cast %55 : vector<8x3xf32> to vector<1x8x3xf32>
    %67 = vector.broadcast %65 : vector<8x1x3xf32> to vector<8x8x3xf32>
    %68 = vector.broadcast %66 : vector<1x8x3xf32> to vector<8x8x3xf32>
    %69 = arith.mulf %67, %68 : vector<8x8x3xf32>
    %cst_19 = arith.constant dense<0.000000e+00> : vector<8x8xf32>
    %70 = vector.multi_reduction <add>, %69, %cst_19 [2] : vector<8x8x3xf32> to vector<8x8xf32>
    %71 = vector.shape_cast %70 : vector<8x8xf32> to vector<8x8x1xf32>
    %72 = vector.extract_strided_slice %38 {offsets = [3, 0], sizes = [1, 16], strides = [1, 1]} : vector<8x16xf32> to vector<1x16xf32>
    %73 = vector.broadcast %43 : vector<8x1xf32> to vector<8x16xf32>
    %74 = vector.broadcast %72 : vector<1x16xf32> to vector<8x16xf32>
    %75 = arith.mulf %73, %74 : vector<8x16xf32>
    %76 = vector.extract_strided_slice %38 {offsets = [4, 0], sizes = [1, 16], strides = [1, 1]} : vector<8x16xf32> to vector<1x16xf32>
    %77 = vector.broadcast %76 : vector<1x16xf32> to vector<8x16xf32>
    %78 = arith.addf %75, %77 : vector<8x16xf32>
    %79 = vector.extract_strided_slice %38 {offsets = [5, 0], sizes = [1, 16], strides = [1, 1]} : vector<8x16xf32> to vector<1x16xf32>
    %80 = vector.broadcast %47 : vector<8x1xf32> to vector<8x16xf32>
    %81 = vector.broadcast %79 : vector<1x16xf32> to vector<8x16xf32>
    %82 = arith.mulf %80, %81 : vector<8x16xf32>
    %83 = vector.extract_strided_slice %38 {offsets = [6, 0], sizes = [1, 16], strides = [1, 1]} : vector<8x16xf32> to vector<1x16xf32>
    %84 = vector.broadcast %83 : vector<1x16xf32> to vector<8x16xf32>
    %85 = arith.addf %82, %84 : vector<8x16xf32>
    %86 = vector.extract_strided_slice %38 {offsets = [0, 0], sizes = [1, 16], strides = [1, 1]} : vector<8x16xf32> to vector<1x16xf32>
    %87 = vector.shape_cast %86 : vector<1x16xf32> to vector<1x1x16xf32>
    %88 = vector.broadcast %64 : vector<8x8x1xf32> to vector<8x8x16xf32>
    %89 = vector.broadcast %87 : vector<1x1x16xf32> to vector<8x8x16xf32>
    %90 = arith.mulf %88, %89 : vector<8x8x16xf32>
    %91 = vector.extract_strided_slice %38 {offsets = [1, 0], sizes = [1, 16], strides = [1, 1]} : vector<8x16xf32> to vector<1x16xf32>
    %92 = vector.shape_cast %91 : vector<1x16xf32> to vector<1x1x16xf32>
    %93 = vector.broadcast %71 : vector<8x8x1xf32> to vector<8x8x16xf32>
    %94 = vector.broadcast %92 : vector<1x1x16xf32> to vector<8x8x16xf32>
    %95 = arith.mulf %93, %94 : vector<8x8x16xf32>
    %96 = arith.addf %90, %95 : vector<8x8x16xf32>
    %97 = vector.extract_strided_slice %38 {offsets = [2, 0], sizes = [1, 16], strides = [1, 1]} : vector<8x16xf32> to vector<1x16xf32>
    %98 = vector.shape_cast %97 : vector<1x16xf32> to vector<1x1x16xf32>
    %99 = vector.broadcast %98 : vector<1x1x16xf32> to vector<8x8x16xf32>
    %100 = arith.addf %96, %99 : vector<8x8x16xf32>
    %101 = vector.shape_cast %78 : vector<8x16xf32> to vector<8x1x16xf32>
    %102 = vector.broadcast %101 : vector<8x1x16xf32> to vector<8x8x16xf32>
    %103 = arith.addf %100, %102 : vector<8x8x16xf32>
    %104 = vector.shape_cast %85 : vector<8x16xf32> to vector<1x8x16xf32>
    %105 = vector.broadcast %104 : vector<1x8x16xf32> to vector<8x8x16xf32>
    %106 = arith.addf %103, %105 : vector<8x8x16xf32>
    %cst_20 = arith.constant 0.000000e+00 : f32
    %107 = vector.broadcast %cst_20 : f32 to vector<8x8x16xf32>
    %108 = arith.maximumf %106, %107 : vector<8x8x16xf32>
    %109 = vector.broadcast %30 : vector<8x8x1xf32> to vector<8x8x16xf32>
    %110 = arith.mulf %108, %109 : vector<8x8x16xf32>
    %111 = arith.mulf %15, %15 : vector<8x3xf32>
    %cst_21 = arith.constant dense<0.000000e+00> : vector<8xf32>
    %112 = vector.multi_reduction <add>, %111, %cst_21 [1] : vector<8x3xf32> to vector<8xf32>
    %113 = vector.shape_cast %112 : vector<8xf32> to vector<8x1xf32>
    %114 = math.sqrt %113 : vector<8x1xf32>
    %115 = arith.mulf %23, %23 : vector<8x3xf32>
    %cst_22 = arith.constant dense<0.000000e+00> : vector<8xf32>
    %116 = vector.multi_reduction <add>, %115, %cst_22 [1] : vector<8x3xf32> to vector<8xf32>
    %117 = vector.shape_cast %116 : vector<8xf32> to vector<8x1xf32>
    %118 = math.sqrt %117 : vector<8x1xf32>
    %cst_23 = arith.constant 1.000000e-07 : f32
    %119 = vector.broadcast %cst_23 : f32 to vector<8x1xf32>
    %120 = arith.addf %114, %119 : vector<8x1xf32>
    %121 = vector.broadcast %120 : vector<8x1xf32> to vector<8x3xf32>
    %122 = arith.divf %15, %121 : vector<8x3xf32>
    %cst_24 = arith.constant 1.000000e-07 : f32
    %123 = vector.broadcast %cst_24 : f32 to vector<8x1xf32>
    %124 = arith.addf %118, %123 : vector<8x1xf32>
    %125 = vector.broadcast %124 : vector<8x1xf32> to vector<8x3xf32>
    %126 = arith.divf %23, %125 : vector<8x3xf32>
    %127 = vector.shape_cast %15 : vector<8x3xf32> to vector<8x1x3xf32>
    %128 = vector.shape_cast %23 : vector<8x3xf32> to vector<1x8x3xf32>
    %129 = vector.broadcast %127 : vector<8x1x3xf32> to vector<8x8x3xf32>
    %130 = vector.broadcast %128 : vector<1x8x3xf32> to vector<8x8x3xf32>
    %131 = arith.subf %129, %130 : vector<8x8x3xf32>
    %132 = arith.mulf %131, %131 : vector<8x8x3xf32>
    %cst_25 = arith.constant dense<0.000000e+00> : vector<8x8xf32>
    %133 = vector.multi_reduction <add>, %132, %cst_25 [2] : vector<8x8x3xf32> to vector<8x8xf32>
    %134 = vector.shape_cast %133 : vector<8x8xf32> to vector<8x8x1xf32>
    %135 = math.sqrt %134 : vector<8x8x1xf32>
    %136 = vector.shape_cast %122 : vector<8x3xf32> to vector<8x1x3xf32>
    %137 = vector.shape_cast %126 : vector<8x3xf32> to vector<1x8x3xf32>
    %138 = vector.broadcast %136 : vector<8x1x3xf32> to vector<8x8x3xf32>
    %139 = vector.broadcast %137 : vector<1x8x3xf32> to vector<8x8x3xf32>
    %140 = arith.mulf %138, %139 : vector<8x8x3xf32>
    %cst_26 = arith.constant dense<0.000000e+00> : vector<8x8xf32>
    %141 = vector.multi_reduction <add>, %140, %cst_26 [2] : vector<8x8x3xf32> to vector<8x8xf32>
    %142 = vector.shape_cast %141 : vector<8x8xf32> to vector<8x8x1xf32>
    %143 = vector.extract_strided_slice %39 {offsets = [3, 0], sizes = [1, 16], strides = [1, 1]} : vector<8x16xf32> to vector<1x16xf32>
    %144 = vector.broadcast %114 : vector<8x1xf32> to vector<8x16xf32>
    %145 = vector.broadcast %143 : vector<1x16xf32> to vector<8x16xf32>
    %146 = arith.mulf %144, %145 : vector<8x16xf32>
    %147 = vector.extract_strided_slice %39 {offsets = [4, 0], sizes = [1, 16], strides = [1, 1]} : vector<8x16xf32> to vector<1x16xf32>
    %148 = vector.broadcast %147 : vector<1x16xf32> to vector<8x16xf32>
    %149 = arith.addf %146, %148 : vector<8x16xf32>
    %150 = vector.extract_strided_slice %39 {offsets = [5, 0], sizes = [1, 16], strides = [1, 1]} : vector<8x16xf32> to vector<1x16xf32>
    %151 = vector.broadcast %118 : vector<8x1xf32> to vector<8x16xf32>
    %152 = vector.broadcast %150 : vector<1x16xf32> to vector<8x16xf32>
    %153 = arith.mulf %151, %152 : vector<8x16xf32>
    %154 = vector.extract_strided_slice %39 {offsets = [6, 0], sizes = [1, 16], strides = [1, 1]} : vector<8x16xf32> to vector<1x16xf32>
    %155 = vector.broadcast %154 : vector<1x16xf32> to vector<8x16xf32>
    %156 = arith.addf %153, %155 : vector<8x16xf32>
    %157 = vector.extract_strided_slice %39 {offsets = [0, 0], sizes = [1, 16], strides = [1, 1]} : vector<8x16xf32> to vector<1x16xf32>
    %158 = vector.shape_cast %157 : vector<1x16xf32> to vector<1x1x16xf32>
    %159 = vector.broadcast %135 : vector<8x8x1xf32> to vector<8x8x16xf32>
    %160 = vector.broadcast %158 : vector<1x1x16xf32> to vector<8x8x16xf32>
    %161 = arith.mulf %159, %160 : vector<8x8x16xf32>
    %162 = vector.extract_strided_slice %39 {offsets = [1, 0], sizes = [1, 16], strides = [1, 1]} : vector<8x16xf32> to vector<1x16xf32>
    %163 = vector.shape_cast %162 : vector<1x16xf32> to vector<1x1x16xf32>
    %164 = vector.broadcast %142 : vector<8x8x1xf32> to vector<8x8x16xf32>
    %165 = vector.broadcast %163 : vector<1x1x16xf32> to vector<8x8x16xf32>
    %166 = arith.mulf %164, %165 : vector<8x8x16xf32>
    %167 = arith.addf %161, %166 : vector<8x8x16xf32>
    %168 = vector.extract_strided_slice %39 {offsets = [2, 0], sizes = [1, 16], strides = [1, 1]} : vector<8x16xf32> to vector<1x16xf32>
    %169 = vector.shape_cast %168 : vector<1x16xf32> to vector<1x1x16xf32>
    %170 = vector.broadcast %169 : vector<1x1x16xf32> to vector<8x8x16xf32>
    %171 = arith.addf %167, %170 : vector<8x8x16xf32>
    %172 = vector.shape_cast %149 : vector<8x16xf32> to vector<8x1x16xf32>
    %173 = vector.broadcast %172 : vector<8x1x16xf32> to vector<8x8x16xf32>
    %174 = arith.addf %171, %173 : vector<8x8x16xf32>
    %175 = vector.shape_cast %156 : vector<8x16xf32> to vector<1x8x16xf32>
    %176 = vector.broadcast %175 : vector<1x8x16xf32> to vector<8x8x16xf32>
    %177 = arith.addf %174, %176 : vector<8x8x16xf32>
    %cst_27 = arith.constant 0.000000e+00 : f32
    %178 = vector.broadcast %cst_27 : f32 to vector<8x8x16xf32>
    %179 = arith.maximumf %177, %178 : vector<8x8x16xf32>
    %180 = vector.broadcast %35 : vector<8x8x1xf32> to vector<8x8x16xf32>
    %181 = arith.mulf %179, %180 : vector<8x8x16xf32>
    %cst_28 = arith.constant dense<0.000000e+00> : vector<8x16xf32>
    %182 = vector.multi_reduction <add>, %110, %cst_28 [1] : vector<8x8x16xf32> to vector<8x16xf32>
    %cst_29 = arith.constant 1.000000e+00 : f32
    %183 = vector.broadcast %cst_29 : f32 to vector<1x8x1xf32>
    %184 = arith.subf %183, %36 : vector<1x8x1xf32>
    %cst_30 = arith.constant 1.000000e+05 : f32
    %185 = vector.broadcast %cst_30 : f32 to vector<1x8x1xf32>
    %186 = arith.mulf %185, %184 : vector<1x8x1xf32>
    %187 = vector.broadcast %186 : vector<1x8x1xf32> to vector<8x8x16xf32>
    %188 = arith.addf %110, %187 : vector<8x8x16xf32>
    %cst_31 = arith.constant dense<0x7F800000> : vector<8x16xf32>
    %189 = vector.multi_reduction <minimumf>, %188, %cst_31 [1] : vector<8x8x16xf32> to vector<8x16xf32>
    %cst_32 = arith.constant 1.000000e+00 : f32
    %190 = vector.broadcast %cst_32 : f32 to vector<1x8x1xf32>
    %191 = arith.subf %190, %36 : vector<1x8x1xf32>
    %cst_33 = arith.constant 1.000000e+05 : f32
    %192 = vector.broadcast %cst_33 : f32 to vector<1x8x1xf32>
    %193 = arith.mulf %192, %191 : vector<1x8x1xf32>
    %194 = vector.broadcast %193 : vector<1x8x1xf32> to vector<8x8x16xf32>
    %195 = arith.subf %110, %194 : vector<8x8x16xf32>
    %cst_34 = arith.constant dense<0xFF800000> : vector<8x16xf32>
    %196 = vector.multi_reduction <maximumf>, %195, %cst_34 [1] : vector<8x8x16xf32> to vector<8x16xf32>
    %197 = arith.mulf %110, %110 : vector<8x8x16xf32>
    %cst_35 = arith.constant dense<0.000000e+00> : vector<8x16xf32>
    %198 = vector.multi_reduction <add>, %197, %cst_35 [1] : vector<8x8x16xf32> to vector<8x16xf32>
    %199 = tpu.concatenate %182, %189, %196, %198 in 1 : vector<8x16xf32>, vector<8x16xf32>, vector<8x16xf32>, vector<8x16xf32> -> vector<8x64xf32>
    %cst_36 = arith.constant dense<0.000000e+00> : vector<8x16xf32>
    %200 = vector.multi_reduction <add>, %181, %cst_36 [1] : vector<8x8x16xf32> to vector<8x16xf32>
    %cst_37 = arith.constant 1.000000e+00 : f32
    %201 = vector.broadcast %cst_37 : f32 to vector<1x8x1xf32>
    %202 = arith.subf %201, %37 : vector<1x8x1xf32>
    %cst_38 = arith.constant 1.000000e+05 : f32
    %203 = vector.broadcast %cst_38 : f32 to vector<1x8x1xf32>
    %204 = arith.mulf %203, %202 : vector<1x8x1xf32>
    %205 = vector.broadcast %204 : vector<1x8x1xf32> to vector<8x8x16xf32>
    %206 = arith.addf %181, %205 : vector<8x8x16xf32>
    %cst_39 = arith.constant dense<0x7F800000> : vector<8x16xf32>
    %207 = vector.multi_reduction <minimumf>, %206, %cst_39 [1] : vector<8x8x16xf32> to vector<8x16xf32>
    %cst_40 = arith.constant 1.000000e+00 : f32
    %208 = vector.broadcast %cst_40 : f32 to vector<1x8x1xf32>
    %209 = arith.subf %208, %37 : vector<1x8x1xf32>
    %cst_41 = arith.constant 1.000000e+05 : f32
    %210 = vector.broadcast %cst_41 : f32 to vector<1x8x1xf32>
    %211 = arith.mulf %210, %209 : vector<1x8x1xf32>
    %212 = vector.broadcast %211 : vector<1x8x1xf32> to vector<8x8x16xf32>
    %213 = arith.subf %181, %212 : vector<8x8x16xf32>
    %cst_42 = arith.constant dense<0xFF800000> : vector<8x16xf32>
    %214 = vector.multi_reduction <maximumf>, %213, %cst_42 [1] : vector<8x8x16xf32> to vector<8x16xf32>
    %215 = arith.mulf %181, %181 : vector<8x8x16xf32>
    %cst_43 = arith.constant dense<0.000000e+00> : vector<8x16xf32>
    %216 = vector.multi_reduction <add>, %215, %cst_43 [1] : vector<8x8x16xf32> to vector<8x16xf32>
    %217 = tpu.concatenate %200, %207, %214, %216 in 1 : vector<8x16xf32>, vector<8x16xf32>, vector<8x16xf32>, vector<8x16xf32> -> vector<8x64xf32>
    %cst_44 = arith.constant dense<0.000000e+00> : vector<8x16xf32>
    %218 = vector.multi_reduction <add>, %110, %cst_44 [1] : vector<8x8x16xf32> to vector<8x16xf32>
    %219 = arith.mulf %110, %110 : vector<8x8x16xf32>
    %cst_45 = arith.constant dense<0.000000e+00> : vector<8x16xf32>
    %220 = vector.multi_reduction <add>, %219, %cst_45 [1] : vector<8x8x16xf32> to vector<8x16xf32>
    %cst_46 = arith.constant 1.000000e+00 : f32
    %221 = vector.broadcast %cst_46 : f32 to vector<8x8x1xf32>
    %222 = arith.subf %221, %30 : vector<8x8x1xf32>
    %cst_47 = arith.constant 1.000000e+05 : f32
    %223 = vector.broadcast %cst_47 : f32 to vector<8x8x1xf32>
    %224 = arith.mulf %223, %222 : vector<8x8x1xf32>
    %225 = vector.broadcast %224 : vector<8x8x1xf32> to vector<8x8x16xf32>
    %226 = arith.addf %110, %225 : vector<8x8x16xf32>
    %cst_48 = arith.constant dense<0x7F800000> : vector<8x16xf32>
    %227 = vector.multi_reduction <minimumf>, %226, %cst_48 [1] : vector<8x8x16xf32> to vector<8x16xf32>
    %cst_49 = arith.constant 1.000000e+00 : f32
    %228 = vector.broadcast %cst_49 : f32 to vector<8x8x1xf32>
    %229 = arith.subf %228, %30 : vector<8x8x1xf32>
    %cst_50 = arith.constant 1.000000e+05 : f32
    %230 = vector.broadcast %cst_50 : f32 to vector<8x8x1xf32>
    %231 = arith.mulf %230, %229 : vector<8x8x1xf32>
    %232 = vector.broadcast %231 : vector<8x8x1xf32> to vector<8x8x16xf32>
    %233 = arith.subf %110, %232 : vector<8x8x16xf32>
    %cst_51 = arith.constant dense<0xFF800000> : vector<8x16xf32>
    %234 = vector.multi_reduction <maximumf>, %233, %cst_51 [1] : vector<8x8x16xf32> to vector<8x16xf32>
    %235 = tpu.concatenate %218, %220, %227, %234 in 1 : vector<8x16xf32>, vector<8x16xf32>, vector<8x16xf32>, vector<8x16xf32> -> vector<8x64xf32>
    %236 = vector.shape_cast %110 : vector<8x8x16xf32> to vector<64x16xf32>
    %c0_52 = arith.constant 0 : index
    %c0_53 = arith.constant 0 : index
    %237 = vector.load %arg11[%c0_52, %c0_53] : memref<16x36xf32, #tpu.memory_space<vmem>>, vector<16x36xf32>
    %238 = arith.truncf %236 : vector<64x16xf32> to vector<64x16xbf16>
    %239 = arith.truncf %237 : vector<16x36xf32> to vector<16x36xbf16>
    %cst_54 = arith.constant dense<0.000000e+00> : vector<64x36xf32>
    %240 = tpu.matmul %238, %239, %cst_54 {dimension_numbers = #tpu.dot_dimension_numbers<[1], [0], [0], [1], [0, 0, 1, 1], [], []>} : vector<64x16xbf16>, vector<16x36xbf16>, vector<64x36xf32> -> vector<64x36xf32>
    %c0_55 = arith.constant 0 : index
    %c0_56 = arith.constant 0 : index
    %241 = vector.load %arg12[%c0_55, %c0_56] : memref<1x36xf32, #tpu.memory_space<vmem>>, vector<1x36xf32>
    %242 = vector.broadcast %241 : vector<1x36xf32> to vector<64x36xf32>
    %243 = arith.addf %240, %242 : vector<64x36xf32>
    %244 = vector.shape_cast %243 : vector<64x36xf32> to vector<8x8x36xf32>
    %245 = vector.shape_cast %181 : vector<8x8x16xf32> to vector<64x16xf32>
    %c0_57 = arith.constant 0 : index
    %c0_58 = arith.constant 0 : index
    %246 = vector.load %arg13[%c0_57, %c0_58] : memref<16x36xf32, #tpu.memory_space<vmem>>, vector<16x36xf32>
    %247 = arith.truncf %245 : vector<64x16xf32> to vector<64x16xbf16>
    %248 = arith.truncf %246 : vector<16x36xf32> to vector<16x36xbf16>
    %cst_59 = arith.constant dense<0.000000e+00> : vector<64x36xf32>
    %249 = tpu.matmul %247, %248, %cst_59 {dimension_numbers = #tpu.dot_dimension_numbers<[1], [0], [0], [1], [0, 0, 1, 1], [], []>} : vector<64x16xbf16>, vector<16x36xbf16>, vector<64x36xf32> -> vector<64x36xf32>
    %c0_60 = arith.constant 0 : index
    %c0_61 = arith.constant 0 : index
    %250 = vector.load %arg14[%c0_60, %c0_61] : memref<1x36xf32, #tpu.memory_space<vmem>>, vector<1x36xf32>
    %251 = vector.broadcast %250 : vector<1x36xf32> to vector<64x36xf32>
    %252 = arith.addf %249, %251 : vector<64x36xf32>
    %253 = vector.shape_cast %252 : vector<64x36xf32> to vector<8x8x36xf32>
    %254 = vector.extract_strided_slice %244 {offsets = [0, 0, 32], sizes = [8, 8, 4], strides = [1, 1, 1]} : vector<8x8x36xf32> to vector<8x8x4xf32>
    %255 = vector.extract_strided_slice %253 {offsets = [0, 0, 32], sizes = [8, 8, 4], strides = [1, 1, 1]} : vector<8x8x36xf32> to vector<8x8x4xf32>
    %c0_62 = arith.constant 0 : index
    %c0_63 = arith.constant 0 : index
    %c0_64 = arith.constant 0 : index
    %c0_65 = arith.constant 0 : index
    %256 = vector.load %arg2[%c0_62, %c0_63, %c0_64, %c0_65] : memref<1x8x8x16xbf16, #tpu.memory_space<vmem>>, vector<1x8x8x16xbf16>
    %257 = vector.shape_cast %256 : vector<1x8x8x16xbf16> to vector<8x8x16xbf16>
    %258 = arith.extf %257 : vector<8x8x16xbf16> to vector<8x8x16xf32>
    %259 = vector.shape_cast %258 : vector<8x8x16xf32> to vector<64x16xf32>
    %c0_66 = arith.constant 0 : index
    %c0_67 = arith.constant 0 : index
    %260 = vector.load %arg7[%c0_66, %c0_67] : memref<16x16xf32, #tpu.memory_space<vmem>>, vector<16x16xf32>
    %261 = arith.truncf %259 : vector<64x16xf32> to vector<64x16xbf16>
    %262 = arith.truncf %260 : vector<16x16xf32> to vector<16x16xbf16>
    %cst_68 = arith.constant dense<0.000000e+00> : vector<64x16xf32>
    %263 = tpu.matmul %261, %262, %cst_68 {dimension_numbers = #tpu.dot_dimension_numbers<[1], [0], [0], [1], [0, 0, 1, 1], [], []>} : vector<64x16xbf16>, vector<16x16xbf16>, vector<64x16xf32> -> vector<64x16xf32>
    %c0_69 = arith.constant 0 : index
    %c0_70 = arith.constant 0 : index
    %264 = vector.load %arg8[%c0_69, %c0_70] : memref<1x16xf32, #tpu.memory_space<vmem>>, vector<1x16xf32>
    %265 = vector.broadcast %264 : vector<1x16xf32> to vector<64x16xf32>
    %266 = arith.addf %263, %265 : vector<64x16xf32>
    %267 = vector.shape_cast %266 : vector<64x16xf32> to vector<8x8x16xf32>
    %268 = vector.shape_cast %16 : vector<8x16xf32> to vector<1x8x16xf32>
    %269 = vector.broadcast %268 : vector<1x8x16xf32> to vector<8x8x16xf32>
    %270 = arith.mulf %267, %269 : vector<8x8x16xf32>
    %271 = vector.shape_cast %8 : vector<8x16xf32> to vector<8x1x16xf32>
    %272 = vector.broadcast %271 : vector<8x1x16xf32> to vector<8x8x16xf32>
    %273 = arith.mulf %270, %272 : vector<8x8x16xf32>
    %274 = vector.broadcast %30 : vector<8x8x1xf32> to vector<8x8x16xf32>
    %275 = arith.mulf %273, %274 : vector<8x8x16xf32>
    %276 = vector.shape_cast %17 : vector<8x16xf32> to vector<1x8x16xf32>
    %277 = vector.broadcast %276 : vector<1x8x16xf32> to vector<8x8x16xf32>
    %278 = arith.mulf %267, %277 : vector<8x8x16xf32>
    %279 = vector.shape_cast %9 : vector<8x16xf32> to vector<8x1x16xf32>
    %280 = vector.broadcast %279 : vector<8x1x16xf32> to vector<8x8x16xf32>
    %281 = arith.mulf %278, %280 : vector<8x8x16xf32>
    %282 = vector.broadcast %35 : vector<8x8x1xf32> to vector<8x8x16xf32>
    %283 = arith.mulf %281, %282 : vector<8x8x16xf32>
    %284 = arith.addf %275, %283 : vector<8x8x16xf32>
    %285 = vector.extract_strided_slice %244 {offsets = [0, 0, 0], sizes = [8, 8, 16], strides = [1, 1, 1]} : vector<8x8x36xf32> to vector<8x8x16xf32>
    %286 = arith.addf %284, %285 : vector<8x8x16xf32>
    %287 = vector.extract_strided_slice %244 {offsets = [0, 0, 16], sizes = [8, 8, 16], strides = [1, 1, 1]} : vector<8x8x36xf32> to vector<8x8x16xf32>
    %288 = arith.mulf %284, %287 : vector<8x8x16xf32>
    %289 = arith.addf %286, %288 : vector<8x8x16xf32>
    %290 = vector.broadcast %30 : vector<8x8x1xf32> to vector<8x8x16xf32>
    %291 = arith.mulf %289, %290 : vector<8x8x16xf32>
    %292 = vector.extract_strided_slice %253 {offsets = [0, 0, 0], sizes = [8, 8, 16], strides = [1, 1, 1]} : vector<8x8x36xf32> to vector<8x8x16xf32>
    %293 = arith.addf %284, %292 : vector<8x8x16xf32>
    %294 = vector.extract_strided_slice %253 {offsets = [0, 0, 16], sizes = [8, 8, 16], strides = [1, 1, 1]} : vector<8x8x36xf32> to vector<8x8x16xf32>
    %295 = arith.mulf %284, %294 : vector<8x8x16xf32>
    %296 = arith.addf %293, %295 : vector<8x8x16xf32>
    %297 = vector.broadcast %35 : vector<8x8x1xf32> to vector<8x8x16xf32>
    %298 = arith.mulf %296, %297 : vector<8x8x16xf32>
    %299 = arith.addf %291, %298 : vector<8x8x16xf32>
    %cst_71 = arith.constant dense<0.000000e+00> : vector<8x16xf32>
    %300 = vector.multi_reduction <add>, %299, %cst_71 [1] : vector<8x8x16xf32> to vector<8x16xf32>
    %301 = vector.broadcast %30 : vector<8x8x1xf32> to vector<8x8x16xf32>
    %302 = arith.mulf %299, %301 : vector<8x8x16xf32>
    %cst_72 = arith.constant dense<0.000000e+00> : vector<8x16xf32>
    %303 = vector.multi_reduction <add>, %302, %cst_72 [1] : vector<8x8x16xf32> to vector<8x16xf32>
    %304 = arith.mulf %299, %299 : vector<8x8x16xf32>
    %305 = vector.broadcast %30 : vector<8x8x1xf32> to vector<8x8x16xf32>
    %306 = arith.mulf %304, %305 : vector<8x8x16xf32>
    %cst_73 = arith.constant dense<0.000000e+00> : vector<8x16xf32>
    %307 = vector.multi_reduction <add>, %306, %cst_73 [1] : vector<8x8x16xf32> to vector<8x16xf32>
    %cst_74 = arith.constant 1.000000e+00 : f32
    %308 = vector.broadcast %cst_74 : f32 to vector<8x8x1xf32>
    %309 = arith.subf %308, %30 : vector<8x8x1xf32>
    %cst_75 = arith.constant 1.000000e+05 : f32
    %310 = vector.broadcast %cst_75 : f32 to vector<8x8x1xf32>
    %311 = arith.mulf %310, %309 : vector<8x8x1xf32>
    %312 = vector.broadcast %311 : vector<8x8x1xf32> to vector<8x8x16xf32>
    %313 = arith.addf %299, %312 : vector<8x8x16xf32>
    %cst_76 = arith.constant dense<0x7F800000> : vector<8x16xf32>
    %314 = vector.multi_reduction <minimumf>, %313, %cst_76 [1] : vector<8x8x16xf32> to vector<8x16xf32>
    %cst_77 = arith.constant 1.000000e+00 : f32
    %315 = vector.broadcast %cst_77 : f32 to vector<8x8x1xf32>
    %316 = arith.subf %315, %30 : vector<8x8x1xf32>
    %cst_78 = arith.constant 1.000000e+05 : f32
    %317 = vector.broadcast %cst_78 : f32 to vector<8x8x1xf32>
    %318 = arith.mulf %317, %316 : vector<8x8x1xf32>
    %319 = vector.broadcast %318 : vector<8x8x1xf32> to vector<8x8x16xf32>
    %320 = arith.subf %299, %319 : vector<8x8x16xf32>
    %cst_79 = arith.constant dense<0xFF800000> : vector<8x16xf32>
    %321 = vector.multi_reduction <maximumf>, %320, %cst_79 [1] : vector<8x8x16xf32> to vector<8x16xf32>
    %322 = tpu.concatenate %300, %303, %307, %314, %321 in 1 : vector<8x16xf32>, vector<8x16xf32>, vector<8x16xf32>, vector<8x16xf32>, vector<8x16xf32> -> vector<8x80xf32>
    %323 = vector.shape_cast %299 : vector<8x8x16xf32> to vector<64x16xf32>
    %c0_80 = arith.constant 0 : index
    %c0_81 = arith.constant 0 : index
    %324 = vector.load %arg19[%c0_80, %c0_81] : memref<16x32xf32, #tpu.memory_space<vmem>>, vector<16x32xf32>
    %325 = arith.truncf %323 : vector<64x16xf32> to vector<64x16xbf16>
    %326 = arith.truncf %324 : vector<16x32xf32> to vector<16x32xbf16>
    %cst_82 = arith.constant dense<0.000000e+00> : vector<64x32xf32>
    %327 = tpu.matmul %325, %326, %cst_82 {dimension_numbers = #tpu.dot_dimension_numbers<[1], [0], [0], [1], [0, 0, 1, 1], [], []>} : vector<64x16xbf16>, vector<16x32xbf16>, vector<64x32xf32> -> vector<64x32xf32>
    %cst_83 = arith.constant 0.000000e+00 : f32
    %328 = vector.broadcast %cst_83 : f32 to vector<64x32xf32>
    %329 = arith.maximumf %327, %328 : vector<64x32xf32>
    %330 = vector.shape_cast %329 : vector<64x32xf32> to vector<8x8x32xf32>
    %c0_84 = arith.constant 0 : index
    %c0_85 = arith.constant 0 : index
    %331 = vector.load %arg20[%c0_84, %c0_85] : memref<1x32xf32, #tpu.memory_space<vmem>>, vector<1x32xf32>
    %332 = vector.shape_cast %331 : vector<1x32xf32> to vector<1x1x32xf32>
    %333 = vector.broadcast %332 : vector<1x1x32xf32> to vector<8x8x32xf32>
    %334 = arith.mulf %330, %333 : vector<8x8x32xf32>
    %335 = vector.extract_strided_slice %334 {offsets = [0, 0, 0], sizes = [8, 8, 16], strides = [1, 1, 1]} : vector<8x8x32xf32> to vector<8x8x16xf32>
    %cst_86 = arith.constant dense<0.000000e+00> : vector<8x8xf32>
    %336 = vector.multi_reduction <add>, %335, %cst_86 [2] : vector<8x8x16xf32> to vector<8x8xf32>
    %337 = vector.shape_cast %336 : vector<8x8xf32> to vector<8x8x1xf32>
    %338 = vector.extract_strided_slice %334 {offsets = [0, 0, 16], sizes = [8, 8, 16], strides = [1, 1, 1]} : vector<8x8x32xf32> to vector<8x8x16xf32>
    %cst_87 = arith.constant dense<0.000000e+00> : vector<8x8xf32>
    %339 = vector.multi_reduction <add>, %338, %cst_87 [2] : vector<8x8x16xf32> to vector<8x8xf32>
    %340 = vector.shape_cast %339 : vector<8x8xf32> to vector<8x8x1xf32>
    %cst_88 = arith.constant dense<0.000000e+00> : vector<8x1xf32>
    %341 = vector.multi_reduction <add>, %337, %cst_88 [1] : vector<8x8x1xf32> to vector<8x1xf32>
    %342 = vector.broadcast %341 : vector<8x1xf32> to vector<8x3xf32>
    %343 = arith.mulf %14, %342 : vector<8x3xf32>
    %344 = vector.shape_cast %22 : vector<8x3xf32> to vector<1x8x3xf32>
    %345 = vector.broadcast %337 : vector<8x8x1xf32> to vector<8x8x3xf32>
    %346 = vector.broadcast %344 : vector<1x8x3xf32> to vector<8x8x3xf32>
    %347 = arith.mulf %345, %346 : vector<8x8x3xf32>
    %cst_89 = arith.constant dense<0.000000e+00> : vector<8x3xf32>
    %348 = vector.multi_reduction <add>, %347, %cst_89 [1] : vector<8x8x3xf32> to vector<8x3xf32>
    %349 = arith.subf %343, %348 : vector<8x3xf32>
    %350 = vector.broadcast %12 : vector<8x1xf32> to vector<8x3xf32>
    %351 = arith.mulf %349, %350 : vector<8x3xf32>
    %cst_90 = arith.constant dense<0.000000e+00> : vector<8x1xf32>
    %352 = vector.multi_reduction <add>, %340, %cst_90 [1] : vector<8x8x1xf32> to vector<8x1xf32>
    %353 = vector.broadcast %352 : vector<8x1xf32> to vector<8x3xf32>
    %354 = arith.mulf %15, %353 : vector<8x3xf32>
    %355 = vector.shape_cast %23 : vector<8x3xf32> to vector<1x8x3xf32>
    %356 = vector.broadcast %340 : vector<8x8x1xf32> to vector<8x8x3xf32>
    %357 = vector.broadcast %355 : vector<1x8x3xf32> to vector<8x8x3xf32>
    %358 = arith.mulf %356, %357 : vector<8x8x3xf32>
    %cst_91 = arith.constant dense<0.000000e+00> : vector<8x3xf32>
    %359 = vector.multi_reduction <add>, %358, %cst_91 [1] : vector<8x8x3xf32> to vector<8x3xf32>
    %360 = arith.subf %354, %359 : vector<8x3xf32>
    %361 = vector.broadcast %13 : vector<8x1xf32> to vector<8x3xf32>
    %362 = arith.mulf %360, %361 : vector<8x3xf32>
    %363 = vector.extract_strided_slice %7 {offsets = [0, 0], sizes = [1, 16], strides = [1, 1]} : vector<1x32xf32> to vector<1x16xf32>
    %364 = vector.extract_strided_slice %7 {offsets = [0, 16], sizes = [1, 16], strides = [1, 1]} : vector<1x32xf32> to vector<1x16xf32>
    %365 = vector.shape_cast %363 : vector<1x16xf32> to vector<1x1x16xf32>
    %366 = vector.broadcast %365 : vector<1x1x16xf32> to vector<8x8x16xf32>
    %367 = arith.addf %299, %366 : vector<8x8x16xf32>
    %368 = vector.shape_cast %364 : vector<1x16xf32> to vector<1x1x16xf32>
    %369 = vector.broadcast %368 : vector<1x1x16xf32> to vector<8x8x16xf32>
    %370 = arith.mulf %299, %369 : vector<8x8x16xf32>
    %371 = arith.addf %367, %370 : vector<8x8x16xf32>
    %372 = vector.broadcast %30 : vector<8x8x1xf32> to vector<8x8x16xf32>
    %373 = arith.mulf %371, %372 : vector<8x8x16xf32>
    %374 = vector.shape_cast %373 : vector<8x8x16xf32> to vector<64x16xf32>
    %c0_92 = arith.constant 0 : index
    %c0_93 = arith.constant 0 : index
    %375 = vector.load %arg15[%c0_92, %c0_93] : memref<16x20xf32, #tpu.memory_space<vmem>>, vector<16x20xf32>
    %376 = arith.truncf %374 : vector<64x16xf32> to vector<64x16xbf16>
    %377 = arith.truncf %375 : vector<16x20xf32> to vector<16x20xbf16>
    %cst_94 = arith.constant dense<0.000000e+00> : vector<64x20xf32>
    %378 = tpu.matmul %376, %377, %cst_94 {dimension_numbers = #tpu.dot_dimension_numbers<[1], [0], [0], [1], [0, 0, 1, 1], [], []>} : vector<64x16xbf16>, vector<16x20xbf16>, vector<64x20xf32> -> vector<64x20xf32>
    %c0_95 = arith.constant 0 : index
    %c0_96 = arith.constant 0 : index
    %379 = vector.load %arg16[%c0_95, %c0_96] : memref<1x20xf32, #tpu.memory_space<vmem>>, vector<1x20xf32>
    %380 = vector.broadcast %379 : vector<1x20xf32> to vector<64x20xf32>
    %381 = arith.addf %378, %380 : vector<64x20xf32>
    %382 = vector.shape_cast %381 : vector<64x20xf32> to vector<8x8x20xf32>
    %383 = vector.extract_strided_slice %382 {offsets = [0, 0, 0], sizes = [8, 8, 16], strides = [1, 1, 1]} : vector<8x8x20xf32> to vector<8x8x16xf32>
    %384 = vector.broadcast %30 : vector<8x8x1xf32> to vector<8x8x16xf32>
    %385 = arith.mulf %383, %384 : vector<8x8x16xf32>
    %386 = vector.extract_strided_slice %382 {offsets = [0, 0, 16], sizes = [8, 8, 4], strides = [1, 1, 1]} : vector<8x8x20xf32> to vector<8x8x4xf32>
    %cst_97 = arith.constant dense<0.000000e+00> : vector<8x16xf32>
    %387 = vector.multi_reduction <add>, %373, %cst_97 [1] : vector<8x8x16xf32> to vector<8x16xf32>
    %cst_98 = arith.constant 1.000000e+00 : f32
    %388 = vector.broadcast %cst_98 : f32 to vector<1x8x1xf32>
    %389 = arith.subf %388, %36 : vector<1x8x1xf32>
    %cst_99 = arith.constant 1.000000e+05 : f32
    %390 = vector.broadcast %cst_99 : f32 to vector<1x8x1xf32>
    %391 = arith.mulf %390, %389 : vector<1x8x1xf32>
    %392 = vector.broadcast %391 : vector<1x8x1xf32> to vector<8x8x16xf32>
    %393 = arith.addf %373, %392 : vector<8x8x16xf32>
    %cst_100 = arith.constant dense<0x7F800000> : vector<8x16xf32>
    %394 = vector.multi_reduction <minimumf>, %393, %cst_100 [1] : vector<8x8x16xf32> to vector<8x16xf32>
    %cst_101 = arith.constant 1.000000e+00 : f32
    %395 = vector.broadcast %cst_101 : f32 to vector<1x8x1xf32>
    %396 = arith.subf %395, %36 : vector<1x8x1xf32>
    %cst_102 = arith.constant 1.000000e+05 : f32
    %397 = vector.broadcast %cst_102 : f32 to vector<1x8x1xf32>
    %398 = arith.mulf %397, %396 : vector<1x8x1xf32>
    %399 = vector.broadcast %398 : vector<1x8x1xf32> to vector<8x8x16xf32>
    %400 = arith.subf %373, %399 : vector<8x8x16xf32>
    %cst_103 = arith.constant dense<0xFF800000> : vector<8x16xf32>
    %401 = vector.multi_reduction <maximumf>, %400, %cst_103 [1] : vector<8x8x16xf32> to vector<8x16xf32>
    %402 = arith.mulf %373, %373 : vector<8x8x16xf32>
    %cst_104 = arith.constant dense<0.000000e+00> : vector<8x16xf32>
    %403 = vector.multi_reduction <add>, %402, %cst_104 [1] : vector<8x8x16xf32> to vector<8x16xf32>
    %404 = tpu.concatenate %387, %394, %401, %403 in 1 : vector<8x16xf32>, vector<8x16xf32>, vector<8x16xf32>, vector<8x16xf32> -> vector<8x64xf32>
    %405 = arith.addf %258, %385 : vector<8x8x16xf32>
    %cst_105 = arith.constant dense<0.000000e+00> : vector<8x8xf32>
    %406 = vector.multi_reduction <add>, %405, %cst_105 [2] : vector<8x8x16xf32> to vector<8x8xf32>
    %407 = vector.shape_cast %406 : vector<8x8xf32> to vector<8x8x1xf32>
    %cst_106 = arith.constant 1.600000e+01 : f32
    %408 = vector.broadcast %cst_106 : f32 to vector<8x8x1xf32>
    %409 = arith.divf %407, %408 : vector<8x8x1xf32>
    %410 = vector.broadcast %409 : vector<8x8x1xf32> to vector<8x8x16xf32>
    %411 = arith.subf %405, %410 : vector<8x8x16xf32>
    %412 = arith.mulf %411, %411 : vector<8x8x16xf32>
    %cst_107 = arith.constant dense<0.000000e+00> : vector<8x8xf32>
    %413 = vector.multi_reduction <add>, %412, %cst_107 [2] : vector<8x8x16xf32> to vector<8x8xf32>
    %414 = vector.shape_cast %413 : vector<8x8xf32> to vector<8x8x1xf32>
    %cst_108 = arith.constant 1.600000e+01 : f32
    %415 = vector.broadcast %cst_108 : f32 to vector<8x8x1xf32>
    %416 = arith.divf %414, %415 : vector<8x8x1xf32>
    %cst_109 = arith.constant 9.99999974E-6 : f32
    %417 = vector.broadcast %cst_109 : f32 to vector<8x8x1xf32>
    %418 = arith.addf %416, %417 : vector<8x8x1xf32>
    %419 = math.rsqrt %418 : vector<8x8x1xf32>
    %420 = vector.broadcast %419 : vector<8x8x1xf32> to vector<8x8x16xf32>
    %421 = arith.mulf %411, %420 : vector<8x8x16xf32>
    %c0_110 = arith.constant 0 : index
    %c0_111 = arith.constant 0 : index
    %422 = vector.load %arg21[%c0_110, %c0_111] : memref<1x16xf32, #tpu.memory_space<vmem>>, vector<1x16xf32>
    %423 = vector.shape_cast %422 : vector<1x16xf32> to vector<1x1x16xf32>
    %424 = vector.broadcast %423 : vector<1x1x16xf32> to vector<8x8x16xf32>
    %425 = arith.mulf %421, %424 : vector<8x8x16xf32>
    %c0_112 = arith.constant 0 : index
    %c0_113 = arith.constant 0 : index
    %426 = vector.load %arg22[%c0_112, %c0_113] : memref<1x16xf32, #tpu.memory_space<vmem>>, vector<1x16xf32>
    %427 = vector.shape_cast %426 : vector<1x16xf32> to vector<1x1x16xf32>
    %428 = vector.broadcast %427 : vector<1x1x16xf32> to vector<8x8x16xf32>
    %429 = arith.addf %425, %428 : vector<8x8x16xf32>
    %430 = vector.shape_cast %429 : vector<8x8x16xf32> to vector<64x16xf32>
    %c0_114 = arith.constant 0 : index
    %c0_115 = arith.constant 0 : index
    %431 = vector.load %arg23[%c0_114, %c0_115] : memref<16x32xf32, #tpu.memory_space<vmem>>, vector<16x32xf32>
    %432 = arith.truncf %430 : vector<64x16xf32> to vector<64x16xbf16>
    %433 = arith.truncf %431 : vector<16x32xf32> to vector<16x32xbf16>
    %cst_116 = arith.constant dense<0.000000e+00> : vector<64x32xf32>
    %434 = tpu.matmul %432, %433, %cst_116 {dimension_numbers = #tpu.dot_dimension_numbers<[1], [0], [0], [1], [0, 0, 1, 1], [], []>} : vector<64x16xbf16>, vector<16x32xbf16>, vector<64x32xf32> -> vector<64x32xf32>
    %c0_117 = arith.constant 0 : index
    %c0_118 = arith.constant 0 : index
    %435 = vector.load %arg24[%c0_117, %c0_118] : memref<1x32xf32, #tpu.memory_space<vmem>>, vector<1x32xf32>
    %436 = vector.broadcast %435 : vector<1x32xf32> to vector<64x32xf32>
    %437 = arith.addf %434, %436 : vector<64x32xf32>
    %cst_119 = arith.constant 0.000000e+00 : f32
    %438 = vector.broadcast %cst_119 : f32 to vector<64x32xf32>
    %439 = arith.maximumf %437, %438 : vector<64x32xf32>
    %c0_120 = arith.constant 0 : index
    %c0_121 = arith.constant 0 : index
    %440 = vector.load %arg25[%c0_120, %c0_121] : memref<32x16xf32, #tpu.memory_space<vmem>>, vector<32x16xf32>
    %441 = arith.truncf %439 : vector<64x32xf32> to vector<64x32xbf16>
    %442 = arith.truncf %440 : vector<32x16xf32> to vector<32x16xbf16>
    %cst_122 = arith.constant dense<0.000000e+00> : vector<64x16xf32>
    %443 = tpu.matmul %441, %442, %cst_122 {dimension_numbers = #tpu.dot_dimension_numbers<[1], [0], [0], [1], [0, 0, 1, 1], [], []>} : vector<64x32xbf16>, vector<32x16xbf16>, vector<64x16xf32> -> vector<64x16xf32>
    %c0_123 = arith.constant 0 : index
    %c0_124 = arith.constant 0 : index
    %444 = vector.load %arg26[%c0_123, %c0_124] : memref<1x16xf32, #tpu.memory_space<vmem>>, vector<1x16xf32>
    %445 = vector.broadcast %444 : vector<1x16xf32> to vector<64x16xf32>
    %446 = arith.addf %443, %445 : vector<64x16xf32>
    %447 = vector.shape_cast %446 : vector<64x16xf32> to vector<8x8x16xf32>
    %448 = arith.addf %429, %447 : vector<8x8x16xf32>
    %cst_125 = arith.constant dense<0.000000e+00> : vector<8x8xf32>
    %449 = vector.multi_reduction <add>, %448, %cst_125 [2] : vector<8x8x16xf32> to vector<8x8xf32>
    %450 = vector.shape_cast %449 : vector<8x8xf32> to vector<8x8x1xf32>
    %cst_126 = arith.constant 1.600000e+01 : f32
    %451 = vector.broadcast %cst_126 : f32 to vector<8x8x1xf32>
    %452 = arith.divf %450, %451 : vector<8x8x1xf32>
    %453 = vector.broadcast %452 : vector<8x8x1xf32> to vector<8x8x16xf32>
    %454 = arith.subf %448, %453 : vector<8x8x16xf32>
    %455 = arith.mulf %454, %454 : vector<8x8x16xf32>
    %cst_127 = arith.constant dense<0.000000e+00> : vector<8x8xf32>
    %456 = vector.multi_reduction <add>, %455, %cst_127 [2] : vector<8x8x16xf32> to vector<8x8xf32>
    %457 = vector.shape_cast %456 : vector<8x8xf32> to vector<8x8x1xf32>
    %cst_128 = arith.constant 1.600000e+01 : f32
    %458 = vector.broadcast %cst_128 : f32 to vector<8x8x1xf32>
    %459 = arith.divf %457, %458 : vector<8x8x1xf32>
    %cst_129 = arith.constant 9.99999974E-6 : f32
    %460 = vector.broadcast %cst_129 : f32 to vector<8x8x1xf32>
    %461 = arith.addf %459, %460 : vector<8x8x1xf32>
    %462 = math.rsqrt %461 : vector<8x8x1xf32>
    %463 = vector.broadcast %462 : vector<8x8x1xf32> to vector<8x8x16xf32>
    %464 = arith.mulf %454, %463 : vector<8x8x16xf32>
    %c0_130 = arith.constant 0 : index
    %c0_131 = arith.constant 0 : index
    %465 = vector.load %arg27[%c0_130, %c0_131] : memref<1x16xf32, #tpu.memory_space<vmem>>, vector<1x16xf32>
    %466 = vector.shape_cast %465 : vector<1x16xf32> to vector<1x1x16xf32>
    %467 = vector.broadcast %466 : vector<1x1x16xf32> to vector<8x8x16xf32>
    %468 = arith.mulf %464, %467 : vector<8x8x16xf32>
    %c0_132 = arith.constant 0 : index
    %c0_133 = arith.constant 0 : index
    %469 = vector.load %arg28[%c0_132, %c0_133] : memref<1x16xf32, #tpu.memory_space<vmem>>, vector<1x16xf32>
    %470 = vector.shape_cast %469 : vector<1x16xf32> to vector<1x1x16xf32>
    %471 = vector.broadcast %470 : vector<1x1x16xf32> to vector<8x8x16xf32>
    %472 = arith.addf %468, %471 : vector<8x8x16xf32>
    %c0_134 = arith.constant 0 : index
    %c0_135 = arith.constant 0 : index
    %c0_136 = arith.constant 0 : index
    %c0_137 = arith.constant 0 : index
    %473 = vector.load %arg29[%c0_134, %c0_135, %c0_136, %c0_137] : memref<1x8x8x16xf32, #tpu.memory_space<vmem>>, vector<1x8x8x16xf32>
    %474 = vector.shape_cast %473 : vector<1x8x8x16xf32> to vector<8x8x16xf32>
    %475 = vector.shape_cast %472 : vector<8x8x16xf32> to vector<1x8x8x16xf32>
    tpu.vector_store %arg29[%c0_134, %c0_135, %c0_136, %c0_137], %475 {strides = array<i32>} : memref<1x8x8x16xf32, #tpu.memory_space<vmem>>, vector<1x8x8x16xf32>,
    %cst_138 = arith.constant 1.000000e+00 : f32
    %476 = vector.broadcast %cst_138 : f32 to vector<8x8x4xf32>
    %477 = arith.addf %476, %386 : vector<8x8x4xf32>
    %478 = vector.broadcast %30 : vector<8x8x1xf32> to vector<8x8x4xf32>
    %479 = arith.mulf %478, %477 : vector<8x8x4xf32>
    %cst_139 = arith.constant 1.000000e+00 : f32
    %480 = vector.broadcast %cst_139 : f32 to vector<8x8x4xf32>
    %481 = arith.addf %480, %254 : vector<8x8x4xf32>
    %482 = arith.mulf %479, %481 : vector<8x8x4xf32>
    %cst_140 = arith.constant 1.000000e+00 : f32
    %483 = vector.broadcast %cst_140 : f32 to vector<8x8x4xf32>
    %484 = arith.addf %483, %255 : vector<8x8x4xf32>
    %485 = vector.broadcast %35 : vector<8x8x1xf32> to vector<8x8x4xf32>
    %486 = arith.mulf %484, %485 : vector<8x8x4xf32>
    %cst_141 = arith.constant 1.000000e+00 : f32
    %487 = vector.broadcast %cst_141 : f32 to vector<8x8x4xf32>
    %488 = arith.addf %487, %486 : vector<8x8x4xf32>
    %489 = arith.mulf %482, %488 : vector<8x8x4xf32>
    %490 = vector.broadcast %13 : vector<8x1xf32> to vector<8x8xf32>
    %491 = vector.broadcast %25 : vector<1x8xf32> to vector<8x8xf32>
    %492 = arith.mulf %490, %491 : vector<8x8xf32>
    %cst_142 = arith.constant 1.000000e+00 : f32
    %493 = vector.broadcast %cst_142 : f32 to vector<1x8xf32>
    %494 = arith.subf %493, %24 : vector<1x8xf32>
    %cst_143 = arith.constant -1.000000e+09 : f32
    %495 = vector.broadcast %cst_143 : f32 to vector<1x8xf32>
    %496 = arith.mulf %494, %495 : vector<1x8xf32>
    %c0_144 = arith.constant 0 : index
    %c0_145 = arith.constant 0 : index
    %497 = vector.load %arg17[%c0_144, %c0_145] : memref<4x16xf32, #tpu.memory_space<vmem>>, vector<4x16xf32>
    %c0_146 = arith.constant 0 : index
    %c0_147 = arith.constant 0 : index
    %498 = vector.load %arg18[%c0_146, %c0_147] : memref<4x16xf32, #tpu.memory_space<vmem>>, vector<4x16xf32>
    %499 = vector.extract_strided_slice %497 {offsets = [0, 0], sizes = [1, 16], strides = [1, 1]} : vector<4x16xf32> to vector<1x16xf32>
    %500 = vector.broadcast %499 : vector<1x16xf32> to vector<8x16xf32>
    %501 = arith.mulf %10, %500 : vector<8x16xf32>
    %502 = arith.truncf %501 : vector<8x16xf32> to vector<8x16xbf16>
    %503 = arith.truncf %18 : vector<8x16xf32> to vector<8x16xbf16>
    %cst_148 = arith.constant dense<0.000000e+00> : vector<8x8xf32>
    %504 = tpu.matmul %502, %503, %cst_148 {dimension_numbers = #tpu.dot_dimension_numbers<[1], [1], [0], [0], [0, 0, 1, 0], [], []>} : vector<8x16xbf16>, vector<8x16xbf16>, vector<8x8xf32> -> vector<8x8xf32>
    %cst_149 = arith.constant 2.500000e-01 : f32
    %505 = vector.broadcast %cst_149 : f32 to vector<8x8xf32>
    %506 = arith.mulf %504, %505 : vector<8x8xf32>
    %507 = vector.extract_strided_slice %498 {offsets = [0, 0], sizes = [1, 16], strides = [1, 1]} : vector<4x16xf32> to vector<1x16xf32>
    %508 = vector.broadcast %507 : vector<1x16xf32> to vector<8x16xf32>
    %509 = arith.mulf %11, %508 : vector<8x16xf32>
    %510 = arith.truncf %509 : vector<8x16xf32> to vector<8x16xbf16>
    %511 = arith.truncf %18 : vector<8x16xf32> to vector<8x16xbf16>
    %cst_150 = arith.constant dense<0.000000e+00> : vector<8x8xf32>
    %512 = tpu.matmul %510, %511, %cst_150 {dimension_numbers = #tpu.dot_dimension_numbers<[1], [1], [0], [0], [0, 0, 1, 0], [], []>} : vector<8x16xbf16>, vector<8x16xbf16>, vector<8x8xf32> -> vector<8x8xf32>
    %cst_151 = arith.constant 2.500000e-01 : f32
    %513 = vector.broadcast %cst_151 : f32 to vector<8x8xf32>
    %514 = arith.mulf %512, %513 : vector<8x8xf32>
    %515 = vector.extract_strided_slice %489 {offsets = [0, 0, 0], sizes = [8, 8, 1], strides = [1, 1, 1]} : vector<8x8x4xf32> to vector<8x8x1xf32>
    %516 = vector.shape_cast %515 : vector<8x8x1xf32> to vector<8x8xf32>
    %517 = arith.mulf %506, %516 : vector<8x8xf32>
    %518 = arith.mulf %514, %492 : vector<8x8xf32>
    %519 = arith.addf %517, %518 : vector<8x8xf32>
    %520 = vector.broadcast %496 : vector<1x8xf32> to vector<8x8xf32>
    %521 = arith.addf %519, %520 : vector<8x8xf32>
    %cst_152 = arith.constant dense<0xFF800000> : vector<8xf32>
    %522 = vector.multi_reduction <maximumf>, %521, %cst_152 [1] : vector<8x8xf32> to vector<8xf32>
    %523 = vector.shape_cast %522 : vector<8xf32> to vector<8x1xf32>
    %524 = vector.broadcast %523 : vector<8x1xf32> to vector<8x8xf32>
    %525 = arith.subf %521, %524 : vector<8x8xf32>
    %526 = math.exp %525 : vector<8x8xf32>
    %527 = vector.broadcast %24 : vector<1x8xf32> to vector<8x8xf32>
    %528 = arith.mulf %526, %527 : vector<8x8xf32>
    %cst_153 = arith.constant dense<0.000000e+00> : vector<8xf32>
    %529 = vector.multi_reduction <add>, %528, %cst_153 [1] : vector<8x8xf32> to vector<8xf32>
    %530 = vector.shape_cast %529 : vector<8xf32> to vector<8x1xf32>
    %cst_154 = arith.constant 0.000000e+00 : f32
    %531 = vector.broadcast %cst_154 : f32 to vector<8x1xf32>
    %532 = arith.cmpf oeq, %530, %531 : vector<8x1xf32>
    %533 = arith.extui %532 : vector<8x1xi1> to vector<8x1xi32>
    %534 = arith.sitofp %533 : vector<8x1xi32> to vector<8x1xf32>
    %535 = arith.addf %530, %534 : vector<8x1xf32>
    %536 = vector.broadcast %535 : vector<8x1xf32> to vector<8x8xf32>
    %537 = arith.divf %528, %536 : vector<8x8xf32>
    %538 = arith.truncf %537 : vector<8x8xf32> to vector<8x8xbf16>
    %539 = arith.truncf %19 : vector<8x16xf32> to vector<8x16xbf16>
    %cst_155 = arith.constant dense<0.000000e+00> : vector<8x16xf32>
    %540 = tpu.matmul %538, %539, %cst_155 {dimension_numbers = #tpu.dot_dimension_numbers<[1], [0], [0], [1], [0, 0, 1, 1], [], []>} : vector<8x8xbf16>, vector<8x16xbf16>, vector<8x16xf32> -> vector<8x16xf32>
    %541 = vector.extract_strided_slice %497 {offsets = [1, 0], sizes = [1, 16], strides = [1, 1]} : vector<4x16xf32> to vector<1x16xf32>
    %542 = vector.broadcast %541 : vector<1x16xf32> to vector<8x16xf32>
    %543 = arith.mulf %10, %542 : vector<8x16xf32>
    %544 = arith.truncf %543 : vector<8x16xf32> to vector<8x16xbf16>
    %545 = arith.truncf %18 : vector<8x16xf32> to vector<8x16xbf16>
    %cst_156 = arith.constant dense<0.000000e+00> : vector<8x8xf32>
    %546 = tpu.matmul %544, %545, %cst_156 {dimension_numbers = #tpu.dot_dimension_numbers<[1], [1], [0], [0], [0, 0, 1, 0], [], []>} : vector<8x16xbf16>, vector<8x16xbf16>, vector<8x8xf32> -> vector<8x8xf32>
    %cst_157 = arith.constant 2.500000e-01 : f32
    %547 = vector.broadcast %cst_157 : f32 to vector<8x8xf32>
    %548 = arith.mulf %546, %547 : vector<8x8xf32>
    %549 = vector.extract_strided_slice %498 {offsets = [1, 0], sizes = [1, 16], strides = [1, 1]} : vector<4x16xf32> to vector<1x16xf32>
    %550 = vector.broadcast %549 : vector<1x16xf32> to vector<8x16xf32>
    %551 = arith.mulf %11, %550 : vector<8x16xf32>
    %552 = arith.truncf %551 : vector<8x16xf32> to vector<8x16xbf16>
    %553 = arith.truncf %18 : vector<8x16xf32> to vector<8x16xbf16>
    %cst_158 = arith.constant dense<0.000000e+00> : vector<8x8xf32>
    %554 = tpu.matmul %552, %553, %cst_158 {dimension_numbers = #tpu.dot_dimension_numbers<[1], [1], [0], [0], [0, 0, 1, 0], [], []>} : vector<8x16xbf16>, vector<8x16xbf16>, vector<8x8xf32> -> vector<8x8xf32>
    %cst_159 = arith.constant 2.500000e-01 : f32
    %555 = vector.broadcast %cst_159 : f32 to vector<8x8xf32>
    %556 = arith.mulf %554, %555 : vector<8x8xf32>
    %557 = vector.extract_strided_slice %489 {offsets = [0, 0, 1], sizes = [8, 8, 1], strides = [1, 1, 1]} : vector<8x8x4xf32> to vector<8x8x1xf32>
    %558 = vector.shape_cast %557 : vector<8x8x1xf32> to vector<8x8xf32>
    %559 = arith.mulf %548, %558 : vector<8x8xf32>
    %560 = arith.mulf %556, %492 : vector<8x8xf32>
    %561 = arith.addf %559, %560 : vector<8x8xf32>
    %562 = vector.broadcast %496 : vector<1x8xf32> to vector<8x8xf32>
    %563 = arith.addf %561, %562 : vector<8x8xf32>
    %cst_160 = arith.constant dense<0xFF800000> : vector<8xf32>
    %564 = vector.multi_reduction <maximumf>, %563, %cst_160 [1] : vector<8x8xf32> to vector<8xf32>
    %565 = vector.shape_cast %564 : vector<8xf32> to vector<8x1xf32>
    %566 = vector.broadcast %565 : vector<8x1xf32> to vector<8x8xf32>
    %567 = arith.subf %563, %566 : vector<8x8xf32>
    %568 = math.exp %567 : vector<8x8xf32>
    %569 = vector.broadcast %24 : vector<1x8xf32> to vector<8x8xf32>
    %570 = arith.mulf %568, %569 : vector<8x8xf32>
    %cst_161 = arith.constant dense<0.000000e+00> : vector<8xf32>
    %571 = vector.multi_reduction <add>, %570, %cst_161 [1] : vector<8x8xf32> to vector<8xf32>
    %572 = vector.shape_cast %571 : vector<8xf32> to vector<8x1xf32>
    %cst_162 = arith.constant 0.000000e+00 : f32
    %573 = vector.broadcast %cst_162 : f32 to vector<8x1xf32>
    %574 = arith.cmpf oeq, %572, %573 : vector<8x1xf32>
    %575 = arith.extui %574 : vector<8x1xi1> to vector<8x1xi32>
    %576 = arith.sitofp %575 : vector<8x1xi32> to vector<8x1xf32>
    %577 = arith.addf %572, %576 : vector<8x1xf32>
    %578 = vector.broadcast %577 : vector<8x1xf32> to vector<8x8xf32>
    %579 = arith.divf %570, %578 : vector<8x8xf32>
    %580 = arith.truncf %579 : vector<8x8xf32> to vector<8x8xbf16>
    %581 = arith.truncf %19 : vector<8x16xf32> to vector<8x16xbf16>
    %cst_163 = arith.constant dense<0.000000e+00> : vector<8x16xf32>
    %582 = tpu.matmul %580, %581, %cst_163 {dimension_numbers = #tpu.dot_dimension_numbers<[1], [0], [0], [1], [0, 0, 1, 1], [], []>} : vector<8x8xbf16>, vector<8x16xbf16>, vector<8x16xf32> -> vector<8x16xf32>
    %583 = vector.extract_strided_slice %497 {offsets = [2, 0], sizes = [1, 16], strides = [1, 1]} : vector<4x16xf32> to vector<1x16xf32>
    %584 = vector.broadcast %583 : vector<1x16xf32> to vector<8x16xf32>
    %585 = arith.mulf %10, %584 : vector<8x16xf32>
    %586 = arith.truncf %585 : vector<8x16xf32> to vector<8x16xbf16>
    %587 = arith.truncf %18 : vector<8x16xf32> to vector<8x16xbf16>
    %cst_164 = arith.constant dense<0.000000e+00> : vector<8x8xf32>
    %588 = tpu.matmul %586, %587, %cst_164 {dimension_numbers = #tpu.dot_dimension_numbers<[1], [1], [0], [0], [0, 0, 1, 0], [], []>} : vector<8x16xbf16>, vector<8x16xbf16>, vector<8x8xf32> -> vector<8x8xf32>
    %cst_165 = arith.constant 2.500000e-01 : f32
    %589 = vector.broadcast %cst_165 : f32 to vector<8x8xf32>
    %590 = arith.mulf %588, %589 : vector<8x8xf32>
    %591 = vector.extract_strided_slice %498 {offsets = [2, 0], sizes = [1, 16], strides = [1, 1]} : vector<4x16xf32> to vector<1x16xf32>
    %592 = vector.broadcast %591 : vector<1x16xf32> to vector<8x16xf32>
    %593 = arith.mulf %11, %592 : vector<8x16xf32>
    %594 = arith.truncf %593 : vector<8x16xf32> to vector<8x16xbf16>
    %595 = arith.truncf %18 : vector<8x16xf32> to vector<8x16xbf16>
    %cst_166 = arith.constant dense<0.000000e+00> : vector<8x8xf32>
    %596 = tpu.matmul %594, %595, %cst_166 {dimension_numbers = #tpu.dot_dimension_numbers<[1], [1], [0], [0], [0, 0, 1, 0], [], []>} : vector<8x16xbf16>, vector<8x16xbf16>, vector<8x8xf32> -> vector<8x8xf32>
    %cst_167 = arith.constant 2.500000e-01 : f32
    %597 = vector.broadcast %cst_167 : f32 to vector<8x8xf32>
    %598 = arith.mulf %596, %597 : vector<8x8xf32>
    %599 = vector.extract_strided_slice %489 {offsets = [0, 0, 2], sizes = [8, 8, 1], strides = [1, 1, 1]} : vector<8x8x4xf32> to vector<8x8x1xf32>
    %600 = vector.shape_cast %599 : vector<8x8x1xf32> to vector<8x8xf32>
    %601 = arith.mulf %590, %600 : vector<8x8xf32>
    %602 = arith.mulf %598, %492 : vector<8x8xf32>
    %603 = arith.addf %601, %602 : vector<8x8xf32>
    %604 = vector.broadcast %496 : vector<1x8xf32> to vector<8x8xf32>
    %605 = arith.addf %603, %604 : vector<8x8xf32>
    %cst_168 = arith.constant dense<0xFF800000> : vector<8xf32>
    %606 = vector.multi_reduction <maximumf>, %605, %cst_168 [1] : vector<8x8xf32> to vector<8xf32>
    %607 = vector.shape_cast %606 : vector<8xf32> to vector<8x1xf32>
    %608 = vector.broadcast %607 : vector<8x1xf32> to vector<8x8xf32>
    %609 = arith.subf %605, %608 : vector<8x8xf32>
    %610 = math.exp %609 : vector<8x8xf32>
    %611 = vector.broadcast %24 : vector<1x8xf32> to vector<8x8xf32>
    %612 = arith.mulf %610, %611 : vector<8x8xf32>
    %cst_169 = arith.constant dense<0.000000e+00> : vector<8xf32>
    %613 = vector.multi_reduction <add>, %612, %cst_169 [1] : vector<8x8xf32> to vector<8xf32>
    %614 = vector.shape_cast %613 : vector<8xf32> to vector<8x1xf32>
    %cst_170 = arith.constant 0.000000e+00 : f32
    %615 = vector.broadcast %cst_170 : f32 to vector<8x1xf32>
    %616 = arith.cmpf oeq, %614, %615 : vector<8x1xf32>
    %617 = arith.extui %616 : vector<8x1xi1> to vector<8x1xi32>
    %618 = arith.sitofp %617 : vector<8x1xi32> to vector<8x1xf32>
    %619 = arith.addf %614, %618 : vector<8x1xf32>
    %620 = vector.broadcast %619 : vector<8x1xf32> to vector<8x8xf32>
    %621 = arith.divf %612, %620 : vector<8x8xf32>
    %622 = arith.truncf %621 : vector<8x8xf32> to vector<8x8xbf16>
    %623 = arith.truncf %19 : vector<8x16xf32> to vector<8x16xbf16>
    %cst_171 = arith.constant dense<0.000000e+00> : vector<8x16xf32>
    %624 = tpu.matmul %622, %623, %cst_171 {dimension_numbers = #tpu.dot_dimension_numbers<[1], [0], [0], [1], [0, 0, 1, 1], [], []>} : vector<8x8xbf16>, vector<8x16xbf16>, vector<8x16xf32> -> vector<8x16xf32>
    %625 = vector.extract_strided_slice %497 {offsets = [3, 0], sizes = [1, 16], strides = [1, 1]} : vector<4x16xf32> to vector<1x16xf32>
    %626 = vector.broadcast %625 : vector<1x16xf32> to vector<8x16xf32>
    %627 = arith.mulf %10, %626 : vector<8x16xf32>
    %628 = arith.truncf %627 : vector<8x16xf32> to vector<8x16xbf16>
    %629 = arith.truncf %18 : vector<8x16xf32> to vector<8x16xbf16>
    %cst_172 = arith.constant dense<0.000000e+00> : vector<8x8xf32>
    %630 = tpu.matmul %628, %629, %cst_172 {dimension_numbers = #tpu.dot_dimension_numbers<[1], [1], [0], [0], [0, 0, 1, 0], [], []>} : vector<8x16xbf16>, vector<8x16xbf16>, vector<8x8xf32> -> vector<8x8xf32>
    %cst_173 = arith.constant 2.500000e-01 : f32
    %631 = vector.broadcast %cst_173 : f32 to vector<8x8xf32>
    %632 = arith.mulf %630, %631 : vector<8x8xf32>
    %633 = vector.extract_strided_slice %498 {offsets = [3, 0], sizes = [1, 16], strides = [1, 1]} : vector<4x16xf32> to vector<1x16xf32>
    %634 = vector.broadcast %633 : vector<1x16xf32> to vector<8x16xf32>
    %635 = arith.mulf %11, %634 : vector<8x16xf32>
    %636 = arith.truncf %635 : vector<8x16xf32> to vector<8x16xbf16>
    %637 = arith.truncf %18 : vector<8x16xf32> to vector<8x16xbf16>
    %cst_174 = arith.constant dense<0.000000e+00> : vector<8x8xf32>
    %638 = tpu.matmul %636, %637, %cst_174 {dimension_numbers = #tpu.dot_dimension_numbers<[1], [1], [0], [0], [0, 0, 1, 0], [], []>} : vector<8x16xbf16>, vector<8x16xbf16>, vector<8x8xf32> -> vector<8x8xf32>
    %cst_175 = arith.constant 2.500000e-01 : f32
    %639 = vector.broadcast %cst_175 : f32 to vector<8x8xf32>
    %640 = arith.mulf %638, %639 : vector<8x8xf32>
    %641 = vector.extract_strided_slice %489 {offsets = [0, 0, 3], sizes = [8, 8, 1], strides = [1, 1, 1]} : vector<8x8x4xf32> to vector<8x8x1xf32>
    %642 = vector.shape_cast %641 : vector<8x8x1xf32> to vector<8x8xf32>
    %643 = arith.mulf %632, %642 : vector<8x8xf32>
    %644 = arith.mulf %640, %492 : vector<8x8xf32>
    %645 = arith.addf %643, %644 : vector<8x8xf32>
    %646 = vector.broadcast %496 : vector<1x8xf32> to vector<8x8xf32>
    %647 = arith.addf %645, %646 : vector<8x8xf32>
    %cst_176 = arith.constant dense<0xFF800000> : vector<8xf32>
    %648 = vector.multi_reduction <maximumf>, %647, %cst_176 [1] : vector<8x8xf32> to vector<8xf32>
    %649 = vector.shape_cast %648 : vector<8xf32> to vector<8x1xf32>
    %650 = vector.broadcast %649 : vector<8x1xf32> to vector<8x8xf32>
    %651 = arith.subf %647, %650 : vector<8x8xf32>
    %652 = math.exp %651 : vector<8x8xf32>
    %653 = vector.broadcast %24 : vector<1x8xf32> to vector<8x8xf32>
    %654 = arith.mulf %652, %653 : vector<8x8xf32>
    %cst_177 = arith.constant dense<0.000000e+00> : vector<8xf32>
    %655 = vector.multi_reduction <add>, %654, %cst_177 [1] : vector<8x8xf32> to vector<8xf32>
    %656 = vector.shape_cast %655 : vector<8xf32> to vector<8x1xf32>
    %cst_178 = arith.constant 0.000000e+00 : f32
    %657 = vector.broadcast %cst_178 : f32 to vector<8x1xf32>
    %658 = arith.cmpf oeq, %656, %657 : vector<8x1xf32>
    %659 = arith.extui %658 : vector<8x1xi1> to vector<8x1xi32>
    %660 = arith.sitofp %659 : vector<8x1xi32> to vector<8x1xf32>
    %661 = arith.addf %656, %660 : vector<8x1xf32>
    %662 = vector.broadcast %661 : vector<8x1xf32> to vector<8x8xf32>
    %663 = arith.divf %654, %662 : vector<8x8xf32>
    %664 = arith.truncf %663 : vector<8x8xf32> to vector<8x8xbf16>
    %665 = arith.truncf %19 : vector<8x16xf32> to vector<8x16xbf16>
    %cst_179 = arith.constant dense<0.000000e+00> : vector<8x16xf32>
    %666 = tpu.matmul %664, %665, %cst_179 {dimension_numbers = #tpu.dot_dimension_numbers<[1], [0], [0], [1], [0, 0, 1, 1], [], []>} : vector<8x8xbf16>, vector<8x16xbf16>, vector<8x16xf32> -> vector<8x16xf32>
    %667 = tpu.concatenate %540, %582, %624, %666 in 1 : vector<8x16xf32>, vector<8x16xf32>, vector<8x16xf32>, vector<8x16xf32> -> vector<8x64xf32>
    %cst_180 = arith.constant 0.000000e+00 : f32
    %668 = vector.broadcast %cst_180 : f32 to vector<8x106xf32>
    %669 = tpu.concatenate %667, %351, %362, %404, %322, %199, %217, %235, %668 in 1 : vector<8x64xf32>, vector<8x3xf32>, vector<8x3xf32>, vector<8x64xf32>, vector<8x80xf32>, vector<8x64xf32>, vector<8x64xf32>, vector<8x64xf32>, vector<8x106xf32> -> vector<8x512xf32>
    %c0_181 = arith.constant 0 : index
    %c0_182 = arith.constant 0 : index
    %c0_183 = arith.constant 0 : index
    %670 = vector.load %arg30[%c0_181, %c0_182, %c0_183] : memref<1x8x512xf32, #tpu.memory_space<vmem>>, vector<1x8x512xf32>
    %671 = vector.shape_cast %670 : vector<1x8x512xf32> to vector<8x512xf32>
    %672 = vector.shape_cast %669 : vector<8x512xf32> to vector<1x8x512xf32>
    tpu.vector_store %arg30[%c0_181, %c0_182, %c0_183], %672 {strides = array<i32>} : memref<1x8x512xf32, #tpu.memory_space<vmem>>, vector<1x8x512xf32>,
    return
  }
  func.func @transform_0(%arg0: i32, %arg1: i32) -> (i32, i32, i32, i32) {
    %c0_i32 = arith.constant 0 : i32
    %c0_i32_0 = arith.constant 0 : i32
    %c0_i32_1 = arith.constant 0 : i32
    return %arg0, %arg1, %c0_i32, %c0_i32_0 : i32, i32, i32, i32
  }
  func.func @transform_1(%arg0: i32, %arg1: i32) -> (i32, i32, i32) {
    %c0_i32 = arith.constant 0 : i32
    %c0_i32_0 = arith.constant 0 : i32
    return %arg0, %arg1, %c0_i32 : i32, i32, i32
  }
  func.func @transform_2(%arg0: i32, %arg1: i32) -> (i32, i32, i32) {
    %c0_i32 = arith.constant 0 : i32
    %c0_i32_0 = arith.constant 0 : i32
    %c0_i32_1 = arith.constant 0 : i32
    return %arg0, %c0_i32, %c0_i32_0 : i32, i32, i32
  }
  func.func @transform_3(%arg0: i32, %arg1: i32) -> (i32, i32, i32) {
    %c0_i32 = arith.constant 0 : i32
    %c0_i32_0 = arith.constant 0 : i32
    %c0_i32_1 = arith.constant 0 : i32
    return %arg0, %c0_i32, %c0_i32_0 : i32, i32, i32
  }
  func.func @transform_4(%arg0: i32, %arg1: i32) -> (i32, i32, i32) {
    %c0_i32 = arith.constant 0 : i32
    %c0_i32_0 = arith.constant 0 : i32
    %c0_i32_1 = arith.constant 0 : i32
    return %arg0, %c0_i32, %c0_i32_0 : i32, i32, i32
  }
  func.func @transform_5(%arg0: i32, %arg1: i32) -> (i32, i32) {
    %c0_i32 = arith.constant 0 : i32
    %c0_i32_0 = arith.constant 0 : i32
    %c0_i32_1 = arith.constant 0 : i32
    return %c0_i32, %c0_i32_0 : i32, i32
  }
  func.func @transform_6(%arg0: i32, %arg1: i32) -> (i32, i32) {
    %c0_i32 = arith.constant 0 : i32
    %c0_i32_0 = arith.constant 0 : i32
    %c0_i32_1 = arith.constant 0 : i32
    return %c0_i32, %c0_i32_0 : i32, i32
  }
  func.func @transform_7(%arg0: i32, %arg1: i32) -> (i32, i32) {
    %c0_i32 = arith.constant 0 : i32
    %c0_i32_0 = arith.constant 0 : i32
    %c0_i32_1 = arith.constant 0 : i32
    return %c0_i32, %c0_i32_0 : i32, i32
  }
  func.func @transform_8(%arg0: i32, %arg1: i32) -> (i32, i32) {
    %c0_i32 = arith.constant 0 : i32
    %c0_i32_0 = arith.constant 0 : i32
    %c0_i32_1 = arith.constant 0 : i32
    return %c0_i32, %c0_i32_0 : i32, i32
  }
  func.func @transform_9(%arg0: i32, %arg1: i32) -> (i32, i32) {
    %c0_i32 = arith.constant 0 : i32
    %c0_i32_0 = arith.constant 0 : i32
    %c0_i32_1 = arith.constant 0 : i32
    return %c0_i32, %c0_i32_0 : i32, i32
  }
  func.func @transform_10(%arg0: i32, %arg1: i32) -> (i32, i32) {
    %c0_i32 = arith.constant 0 : i32
    %c0_i32_0 = arith.constant 0 : i32
    %c0_i32_1 = arith.constant 0 : i32
    return %c0_i32, %c0_i32_0 : i32, i32
  }
  func.func @transform_11(%arg0: i32, %arg1: i32) -> (i32, i32) {
    %c0_i32 = arith.constant 0 : i32
    %c0_i32_0 = arith.constant 0 : i32
    %c0_i32_1 = arith.constant 0 : i32
    return %c0_i32, %c0_i32_0 : i32, i32
  }
  func.func @transform_12(%arg0: i32, %arg1: i32) -> (i32, i32) {
    %c0_i32 = arith.constant 0 : i32
    %c0_i32_0 = arith.constant 0 : i32
    %c0_i32_1 = arith.constant 0 : i32
    return %c0_i32, %c0_i32_0 : i32, i32
  }
  func.func @transform_13(%arg0: i32, %arg1: i32) -> (i32, i32) {
    %c0_i32 = arith.constant 0 : i32
    %c0_i32_0 = arith.constant 0 : i32
    %c0_i32_1 = arith.constant 0 : i32
    return %c0_i32, %c0_i32_0 : i32, i32
  }
  func.func @transform_14(%arg0: i32, %arg1: i32) -> (i32, i32) {
    %c0_i32 = arith.constant 0 : i32
    %c0_i32_0 = arith.constant 0 : i32
    %c0_i32_1 = arith.constant 0 : i32
    return %c0_i32, %c0_i32_0 : i32, i32
  }
  func.func @transform_15(%arg0: i32, %arg1: i32) -> (i32, i32) {
    %c0_i32 = arith.constant 0 : i32
    %c0_i32_0 = arith.constant 0 : i32
    %c0_i32_1 = arith.constant 0 : i32
    return %c0_i32, %c0_i32_0 : i32, i32
  }
  func.func @transform_16(%arg0: i32, %arg1: i32) -> (i32, i32) {
    %c0_i32 = arith.constant 0 : i32
    %c0_i32_0 = arith.constant 0 : i32
    %c0_i32_1 = arith.constant 0 : i32
    return %c0_i32, %c0_i32_0 : i32, i32
  }
  func.func @transform_17(%arg0: i32, %arg1: i32) -> (i32, i32) {
    %c0_i32 = arith.constant 0 : i32
    %c0_i32_0 = arith.constant 0 : i32
    %c0_i32_1 = arith.constant 0 : i32
    return %c0_i32, %c0_i32_0 : i32, i32
  }
  func.func @transform_18(%arg0: i32, %arg1: i32) -> (i32, i32) {
    %c0_i32 = arith.constant 0 : i32
    %c0_i32_0 = arith.constant 0 : i32
    %c0_i32_1 = arith.constant 0 : i32
    return %c0_i32, %c0_i32_0 : i32, i32
  }
  func.func @transform_19(%arg0: i32, %arg1: i32) -> (i32, i32) {
    %c0_i32 = arith.constant 0 : i32
    %c0_i32_0 = arith.constant 0 : i32
    %c0_i32_1 = arith.constant 0 : i32
    return %c0_i32, %c0_i32_0 : i32, i32
  }
  func.func @transform_20(%arg0: i32, %arg1: i32) -> (i32, i32) {
    %c0_i32 = arith.constant 0 : i32
    %c0_i32_0 = arith.constant 0 : i32
    %c0_i32_1 = arith.constant 0 : i32
    return %c0_i32, %c0_i32_0 : i32, i32
  }
  func.func @transform_21(%arg0: i32, %arg1: i32) -> (i32, i32) {
    %c0_i32 = arith.constant 0 : i32
    %c0_i32_0 = arith.constant 0 : i32
    %c0_i32_1 = arith.constant 0 : i32
    return %c0_i32, %c0_i32_0 : i32, i32
  }
  func.func @transform_22(%arg0: i32, %arg1: i32) -> (i32, i32) {
    %c0_i32 = arith.constant 0 : i32
    %c0_i32_0 = arith.constant 0 : i32
    %c0_i32_1 = arith.constant 0 : i32
    return %c0_i32, %c0_i32_0 : i32, i32
  }
  func.func @transform_23(%arg0: i32, %arg1: i32) -> (i32, i32) {
    %c0_i32 = arith.constant 0 : i32
    %c0_i32_0 = arith.constant 0 : i32
    %c0_i32_1 = arith.constant 0 : i32
    return %c0_i32, %c0_i32_0 : i32, i32
  }
  func.func @transform_24(%arg0: i32, %arg1: i32) -> (i32, i32) {
    %c0_i32 = arith.constant 0 : i32
    %c0_i32_0 = arith.constant 0 : i32
    %c0_i32_1 = arith.constant 0 : i32
    return %c0_i32, %c0_i32_0 : i32, i32
  }
  func.func @transform_25(%arg0: i32, %arg1: i32) -> (i32, i32) {
    %c0_i32 = arith.constant 0 : i32
    %c0_i32_0 = arith.constant 0 : i32
    %c0_i32_1 = arith.constant 0 : i32
    return %c0_i32, %c0_i32_0 : i32, i32
  }
  func.func @transform_26(%arg0: i32, %arg1: i32) -> (i32, i32) {
    %c0_i32 = arith.constant 0 : i32
    %c0_i32_0 = arith.constant 0 : i32
    %c0_i32_1 = arith.constant 0 : i32
    return %c0_i32, %c0_i32_0 : i32, i32
  }
  func.func @transform_27(%arg0: i32, %arg1: i32) -> (i32, i32, i32, i32) {
    %c0_i32 = arith.constant 0 : i32
    %c0_i32_0 = arith.constant 0 : i32
    %c0_i32_1 = arith.constant 0 : i32
    return %arg0, %arg1, %c0_i32, %c0_i32_0 : i32, i32, i32, i32
  }
  func.func @transform_28(%arg0: i32, %arg1: i32) -> (i32, i32, i32) {
    %c0_i32 = arith.constant 0 : i32
    %c0_i32_0 = arith.constant 0 : i32
    return %arg0, %arg1, %c0_i32 : i32, i32, i32
  }
}

module attributes {stable_mosaic.version = 11 : i64} {
  func.func @_linear_kernel(%arg0: i32, %arg1: memref<16x64xf32, #tpu.memory_space<vmem>>, %arg2: memref<64x16xf32, #tpu.memory_space<vmem>>, %arg3: memref<1x16xf32, #tpu.memory_space<vmem>>, %arg4: memref<16x16xf32, #tpu.memory_space<vmem>>) attributes {dimension_semantics = [#tpu.dimension_semantics<parallel>], iteration_bounds = array<i64: 1>, scalar_prefetch = 0 : i64, scratch_operands = 0 : i64, tpu.core_type = #tpu.core_type<tc>, window_params = [{transform_indices = @transform_0, window_bounds = array<i64: 16, 64>}, {pipeline_mode = #tpu.pipeline_mode<synchronous>, transform_indices = @transform_1, window_bounds = array<i64: 64, 16>}, {pipeline_mode = #tpu.pipeline_mode<synchronous>, transform_indices = @transform_2, window_bounds = array<i64: 1, 16>}, {transform_indices = @transform_3, window_bounds = array<i64: 16, 16>}]} {
    %c0 = arith.constant 0 : index
    %c0_0 = arith.constant 0 : index
    %0 = vector.load %arg1[%c0, %c0_0] : memref<16x64xf32, #tpu.memory_space<vmem>>, vector<16x64xf32>
    %c0_1 = arith.constant 0 : index
    %c0_2 = arith.constant 0 : index
    %1 = vector.load %arg2[%c0_1, %c0_2] : memref<64x16xf32, #tpu.memory_space<vmem>>, vector<64x16xf32>
    %2 = arith.truncf %0 : vector<16x64xf32> to vector<16x64xbf16>
    %3 = arith.truncf %1 : vector<64x16xf32> to vector<64x16xbf16>
    %cst = arith.constant dense<0.000000e+00> : vector<16x16xf32>
    %4 = tpu.matmul %2, %3, %cst {dimension_numbers = #tpu.dot_dimension_numbers<[1], [0], [0], [1], [0, 0, 1, 1], [], []>} : vector<16x64xbf16>, vector<64x16xbf16>, vector<16x16xf32> -> vector<16x16xf32>
    %c0_3 = arith.constant 0 : index
    %c0_4 = arith.constant 0 : index
    %5 = vector.load %arg3[%c0_3, %c0_4] : memref<1x16xf32, #tpu.memory_space<vmem>>, vector<1x16xf32>
    %6 = vector.broadcast %5 : vector<1x16xf32> to vector<16x16xf32>
    %7 = arith.addf %4, %6 : vector<16x16xf32>
    %c0_5 = arith.constant 0 : index
    %c0_6 = arith.constant 0 : index
    %8 = vector.load %arg4[%c0_5, %c0_6] : memref<16x16xf32, #tpu.memory_space<vmem>>, vector<16x16xf32>
    tpu.vector_store %arg4[%c0_5, %c0_6], %7 {strides = array<i32>} : memref<16x16xf32, #tpu.memory_space<vmem>>, vector<16x16xf32>,
    return
  }
  func.func @transform_0(%arg0: i32) -> (i32, i32) {
    %c0_i32 = arith.constant 0 : i32
    %c0_i32_0 = arith.constant 0 : i32
    return %arg0, %c0_i32 : i32, i32
  }
  func.func @transform_1(%arg0: i32) -> (i32, i32) {
    %c0_i32 = arith.constant 0 : i32
    %c0_i32_0 = arith.constant 0 : i32
    %c0_i32_1 = arith.constant 0 : i32
    return %c0_i32, %c0_i32_0 : i32, i32
  }
  func.func @transform_2(%arg0: i32) -> (i32, i32) {
    %c0_i32 = arith.constant 0 : i32
    %c0_i32_0 = arith.constant 0 : i32
    %c0_i32_1 = arith.constant 0 : i32
    return %c0_i32, %c0_i32_0 : i32, i32
  }
  func.func @transform_3(%arg0: i32) -> (i32, i32) {
    %c0_i32 = arith.constant 0 : i32
    %c0_i32_0 = arith.constant 0 : i32
    return %arg0, %c0_i32 : i32, i32
  }
}

module attributes {stable_mosaic.version = 11 : i64} {
  func.func @_ffn_ln_kernel(%arg0: i32, %arg1: memref<16x16xf32, #tpu.memory_space<vmem>>, %arg2: memref<16x32xf32, #tpu.memory_space<vmem>>, %arg3: memref<1x32xf32, #tpu.memory_space<vmem>>, %arg4: memref<32x16xf32, #tpu.memory_space<vmem>>, %arg5: memref<1x16xf32, #tpu.memory_space<vmem>>, %arg6: memref<1x16xf32, #tpu.memory_space<vmem>>, %arg7: memref<1x16xf32, #tpu.memory_space<vmem>>, %arg8: memref<16x16xf32, #tpu.memory_space<vmem>>) attributes {dimension_semantics = [#tpu.dimension_semantics<parallel>], iteration_bounds = array<i64: 1>, scalar_prefetch = 0 : i64, scratch_operands = 0 : i64, tpu.core_type = #tpu.core_type<tc>, window_params = [{transform_indices = @transform_0, window_bounds = array<i64: 16, 16>}, {pipeline_mode = #tpu.pipeline_mode<synchronous>, transform_indices = @transform_1, window_bounds = array<i64: 16, 32>}, {pipeline_mode = #tpu.pipeline_mode<synchronous>, transform_indices = @transform_2, window_bounds = array<i64: 1, 32>}, {pipeline_mode = #tpu.pipeline_mode<synchronous>, transform_indices = @transform_3, window_bounds = array<i64: 32, 16>}, {pipeline_mode = #tpu.pipeline_mode<synchronous>, transform_indices = @transform_4, window_bounds = array<i64: 1, 16>}, {pipeline_mode = #tpu.pipeline_mode<synchronous>, transform_indices = @transform_5, window_bounds = array<i64: 1, 16>}, {pipeline_mode = #tpu.pipeline_mode<synchronous>, transform_indices = @transform_6, window_bounds = array<i64: 1, 16>}, {transform_indices = @transform_7, window_bounds = array<i64: 16, 16>}]} {
    %c0 = arith.constant 0 : index
    %c0_0 = arith.constant 0 : index
    %0 = vector.load %arg1[%c0, %c0_0] : memref<16x16xf32, #tpu.memory_space<vmem>>, vector<16x16xf32>
    %c0_1 = arith.constant 0 : index
    %c0_2 = arith.constant 0 : index
    %1 = vector.load %arg2[%c0_1, %c0_2] : memref<16x32xf32, #tpu.memory_space<vmem>>, vector<16x32xf32>
    %2 = arith.truncf %0 : vector<16x16xf32> to vector<16x16xbf16>
    %3 = arith.truncf %1 : vector<16x32xf32> to vector<16x32xbf16>
    %cst = arith.constant dense<0.000000e+00> : vector<16x32xf32>
    %4 = tpu.matmul %2, %3, %cst {dimension_numbers = #tpu.dot_dimension_numbers<[1], [0], [0], [1], [0, 0, 1, 1], [], []>} : vector<16x16xbf16>, vector<16x32xbf16>, vector<16x32xf32> -> vector<16x32xf32>
    %c0_3 = arith.constant 0 : index
    %c0_4 = arith.constant 0 : index
    %5 = vector.load %arg3[%c0_3, %c0_4] : memref<1x32xf32, #tpu.memory_space<vmem>>, vector<1x32xf32>
    %6 = vector.broadcast %5 : vector<1x32xf32> to vector<16x32xf32>
    %7 = arith.addf %4, %6 : vector<16x32xf32>
    %cst_5 = arith.constant 0.000000e+00 : f32
    %8 = vector.broadcast %cst_5 : f32 to vector<16x32xf32>
    %9 = arith.maximumf %7, %8 : vector<16x32xf32>
    %c0_6 = arith.constant 0 : index
    %c0_7 = arith.constant 0 : index
    %10 = vector.load %arg4[%c0_6, %c0_7] : memref<32x16xf32, #tpu.memory_space<vmem>>, vector<32x16xf32>
    %11 = arith.truncf %9 : vector<16x32xf32> to vector<16x32xbf16>
    %12 = arith.truncf %10 : vector<32x16xf32> to vector<32x16xbf16>
    %cst_8 = arith.constant dense<0.000000e+00> : vector<16x16xf32>
    %13 = tpu.matmul %11, %12, %cst_8 {dimension_numbers = #tpu.dot_dimension_numbers<[1], [0], [0], [1], [0, 0, 1, 1], [], []>} : vector<16x32xbf16>, vector<32x16xbf16>, vector<16x16xf32> -> vector<16x16xf32>
    %c0_9 = arith.constant 0 : index
    %c0_10 = arith.constant 0 : index
    %14 = vector.load %arg5[%c0_9, %c0_10] : memref<1x16xf32, #tpu.memory_space<vmem>>, vector<1x16xf32>
    %15 = vector.broadcast %14 : vector<1x16xf32> to vector<16x16xf32>
    %16 = arith.addf %13, %15 : vector<16x16xf32>
    %17 = arith.addf %0, %16 : vector<16x16xf32>
    %cst_11 = arith.constant dense<0.000000e+00> : vector<16xf32>
    %18 = vector.multi_reduction <add>, %17, %cst_11 [1] : vector<16x16xf32> to vector<16xf32>
    %19 = vector.shape_cast %18 : vector<16xf32> to vector<16x1xf32>
    %cst_12 = arith.constant 1.600000e+01 : f32
    %20 = vector.broadcast %cst_12 : f32 to vector<16x1xf32>
    %21 = arith.divf %19, %20 : vector<16x1xf32>
    %22 = vector.broadcast %21 : vector<16x1xf32> to vector<16x16xf32>
    %23 = arith.subf %17, %22 : vector<16x16xf32>
    %24 = arith.mulf %23, %23 : vector<16x16xf32>
    %cst_13 = arith.constant dense<0.000000e+00> : vector<16xf32>
    %25 = vector.multi_reduction <add>, %24, %cst_13 [1] : vector<16x16xf32> to vector<16xf32>
    %26 = vector.shape_cast %25 : vector<16xf32> to vector<16x1xf32>
    %cst_14 = arith.constant 1.600000e+01 : f32
    %27 = vector.broadcast %cst_14 : f32 to vector<16x1xf32>
    %28 = arith.divf %26, %27 : vector<16x1xf32>
    %cst_15 = arith.constant 9.99999974E-6 : f32
    %29 = vector.broadcast %cst_15 : f32 to vector<16x1xf32>
    %30 = arith.addf %28, %29 : vector<16x1xf32>
    %31 = math.rsqrt %30 : vector<16x1xf32>
    %32 = vector.broadcast %31 : vector<16x1xf32> to vector<16x16xf32>
    %33 = arith.mulf %23, %32 : vector<16x16xf32>
    %c0_16 = arith.constant 0 : index
    %c0_17 = arith.constant 0 : index
    %34 = vector.load %arg6[%c0_16, %c0_17] : memref<1x16xf32, #tpu.memory_space<vmem>>, vector<1x16xf32>
    %35 = vector.broadcast %34 : vector<1x16xf32> to vector<16x16xf32>
    %36 = arith.mulf %33, %35 : vector<16x16xf32>
    %c0_18 = arith.constant 0 : index
    %c0_19 = arith.constant 0 : index
    %37 = vector.load %arg7[%c0_18, %c0_19] : memref<1x16xf32, #tpu.memory_space<vmem>>, vector<1x16xf32>
    %38 = vector.broadcast %37 : vector<1x16xf32> to vector<16x16xf32>
    %39 = arith.addf %36, %38 : vector<16x16xf32>
    %c0_20 = arith.constant 0 : index
    %c0_21 = arith.constant 0 : index
    %40 = vector.load %arg8[%c0_20, %c0_21] : memref<16x16xf32, #tpu.memory_space<vmem>>, vector<16x16xf32>
    tpu.vector_store %arg8[%c0_20, %c0_21], %39 {strides = array<i32>} : memref<16x16xf32, #tpu.memory_space<vmem>>, vector<16x16xf32>,
    return
  }
  func.func @transform_0(%arg0: i32) -> (i32, i32) {
    %c0_i32 = arith.constant 0 : i32
    %c0_i32_0 = arith.constant 0 : i32
    return %arg0, %c0_i32 : i32, i32
  }
  func.func @transform_1(%arg0: i32) -> (i32, i32) {
    %c0_i32 = arith.constant 0 : i32
    %c0_i32_0 = arith.constant 0 : i32
    %c0_i32_1 = arith.constant 0 : i32
    return %c0_i32, %c0_i32_0 : i32, i32
  }
  func.func @transform_2(%arg0: i32) -> (i32, i32) {
    %c0_i32 = arith.constant 0 : i32
    %c0_i32_0 = arith.constant 0 : i32
    %c0_i32_1 = arith.constant 0 : i32
    return %c0_i32, %c0_i32_0 : i32, i32
  }
  func.func @transform_3(%arg0: i32) -> (i32, i32) {
    %c0_i32 = arith.constant 0 : i32
    %c0_i32_0 = arith.constant 0 : i32
    %c0_i32_1 = arith.constant 0 : i32
    return %c0_i32, %c0_i32_0 : i32, i32
  }
  func.func @transform_4(%arg0: i32) -> (i32, i32) {
    %c0_i32 = arith.constant 0 : i32
    %c0_i32_0 = arith.constant 0 : i32
    %c0_i32_1 = arith.constant 0 : i32
    return %c0_i32, %c0_i32_0 : i32, i32
  }
  func.func @transform_5(%arg0: i32) -> (i32, i32) {
    %c0_i32 = arith.constant 0 : i32
    %c0_i32_0 = arith.constant 0 : i32
    %c0_i32_1 = arith.constant 0 : i32
    return %c0_i32, %c0_i32_0 : i32, i32
  }
  func.func @transform_6(%arg0: i32) -> (i32, i32) {
    %c0_i32 = arith.constant 0 : i32
    %c0_i32_0 = arith.constant 0 : i32
    %c0_i32_1 = arith.constant 0 : i32
    return %c0_i32, %c0_i32_0 : i32, i32
  }
  func.func @transform_7(%arg0: i32) -> (i32, i32) {
    %c0_i32 = arith.constant 0 : i32
    %c0_i32_0 = arith.constant 0 : i32
    return %arg0, %c0_i32 : i32, i32
  }
}

</mosaic_0001>

<llo_original>
// kernel: xey_transformer_layer.6
$region0: #{xey_transformer_layer.6}
  #allocation0 [shape = 'u32[]', space=smem, size = 0x4, offset = 0x4, fixed_abs, tag = 'smem constant byte address 0x4 - core index']
  #allocation1 [shape = 'u32[72,128]{1,0:T(1,128)}', space=vmem, size = 0x9000, scoped, tag = 'internal scratch']
  %s0 = inlined_call_operand.vmem [shape: f32[16,16], index: 0, kind: input, shape index: {}]
  %s1 = inlined_call_operand.vmem [shape: f32[16,80], index: 1, kind: input, shape index: {}]
  %s2 = inlined_call_operand.vmem [shape: f32[1,80], index: 2, kind: input, shape index: {}]
  %s3 = inlined_call_operand.vmem [shape: f32[16,80], index: 3, kind: output, shape index: {}]
  %s4 = sld [smem:[#allocation0]]
  $region22: #{xey_transformer_layer.6} parent=0
    _
  %s6 = ssub.s32 1, %s4
  %s7 = scalar_select 0, %s6, %s4
  // Predicated region
  $region2: #{xey_transformer_layer.6} parent=0 // pred_check
    _
  $region3: #{xey_transformer_layer.6} parent=0 // pred_check_branch
    %9 = sbr.rel (0) target = $region5
  $region4: #{xey_transformer_layer.6} parent=0 // pred_region
    _
  $region5: #{xey_transformer_layer.6} parent=0 // pred_fallthru
    _
  // Predicated region
  $region6: #{xey_transformer_layer.6} parent=0 // pred_check
    _
  $region7: #{xey_transformer_layer.6} parent=0 // pred_check_branch
    %11 = sbr.rel (0) target = $region9
  $region8: #{xey_transformer_layer.6} parent=0 // pred_region
    _
  $region9: #{xey_transformer_layer.6} parent=0 // pred_fallthru
    _
  // Predicated region
  $region10: #{xey_transformer_layer.6} parent=0 // pred_check
    _
  $region11: #{xey_transformer_layer.6} parent=0 // pred_check_branch
    %13 = sbr.rel (0) target = $region13
  $region12: #{xey_transformer_layer.6} parent=0 // pred_region
    _
  $region13: #{xey_transformer_layer.6} parent=0 // pred_fallthru
    _
  %v15 = vld [vmem:[%s0] sm:$0xff]
  %v16 = vld [vmem:[%s0 + $0x8] sm:$0xff]
  %v17 = vld [vmem:[%s1] sm:$0xff]
  %v18 = vld [vmem:[%s1 + $0x8] sm:$0xff]
  %v19 = vpack.c.bf16 %v16, %v15
  %v20 = vpack.c.bf16 %v18, %v17
  %v21 = vld [vmem:[%s2] sm:$0x1]
  %v23 = vperm.slane %v21, 0
  %vm25 = vcmask 130048
  %v27 = vsel %vm25, %v19, 0
  %29 = vmatpush.bf16.msra.mxu0 0
  %30 = vmatpush.bf16.msra.mxu0 0
  %31 = vmatpush.bf16.msra.mxu0 0
  %32 = vmatpush.bf16.msra.mxu0 0
  %33 = vmatpush.bf16.msra.mxu0 0
  %34 = vmatpush.bf16.msra.mxu0 0
  %35 = vmatpush.bf16.msra.mxu0 0
  %36 = vmatpush.bf16.msra.mxu0 %v20
  %37 = vmatmul.bf16.gmra.mxu0 %v27
  %v38 = vpop.f32.mrf.mxu0
  %v39 = vadd.f32 %v23, %v38
  %v40 = vpop.f32.mrf.mxu0
  %v41 = vadd.f32 %v23, %v40
  %42 = vdwg.mxu0
  %vm43 = vcmask 654336
  %44 = vst.msk [vmem:[%s3] sm:$0xff] %vm43, %v39
  %45 = vst.msk [vmem:[%s3 + $0x8] sm:$0xff] %vm43, %v41
  // Predicated region
  $region14: #{xey_transformer_layer.6} parent=0 // pred_check
    _
  $region15: #{xey_transformer_layer.6} parent=0 // pred_check_branch
    %47 = sbr.rel (0) target = $region17
  $region16: #{xey_transformer_layer.6} parent=0 // pred_region
    _
  $region17: #{xey_transformer_layer.6} parent=0 // pred_fallthru
    _
  // Predicated region
  $region18: #{xey_transformer_layer.6} parent=0 // pred_check
    _
  $region19: #{xey_transformer_layer.6} parent=0 // pred_check_branch
    %49 = sbr.rel (0) target = $region21
  $region20: #{xey_transformer_layer.6} parent=0 // pred_region
    _
  $region21: #{xey_transformer_layer.6} parent=0 // pred_fallthru
    _

// kernel: xey_transformer_layer.10
$region0: #{xey_transformer_layer.10}
  #allocation0 [shape = 'u32[]', space=smem, size = 0x4, offset = 0x4, fixed_abs, tag = 'smem constant byte address 0x4 - core index']
  #allocation1 [shape = 'u32[72,128]{1,0:T(1,128)}', space=vmem, size = 0x9000, scoped, tag = 'internal scratch']
  %s0 = inlined_call_operand.vmem [shape: f32[2,8,21], index: 0, kind: input, shape index: {}]
  %s1 = inlined_call_operand.vmem [shape: f32[2,8,37], index: 1, kind: input, shape index: {}]
  %s2 = inlined_call_operand.vmem [shape: f32[2,2,8], index: 2, kind: input, shape index: {}]
  %s3 = inlined_call_operand.vmem [shape: f32[4,16], index: 3, kind: input, shape index: {}]
  %s4 = inlined_call_operand.vmem [shape: f32[4,1], index: 4, kind: input, shape index: {}]
  %s5 = inlined_call_operand.vmem [shape: f32[4,1], index: 5, kind: input, shape index: {}]
  %s6 = inlined_call_operand.vmem [shape: f32[2,8,64], index: 6, kind: output, shape index: {}]
  %s7 = sld [smem:[#allocation0]]
  $region57: #{xey_transformer_layer.10} parent=0
    _
  %s9 = ssub.s32 1, %s7
  %s10 = scalar_select 0, %s9, %s7
  loop: start=0, step=1, limit=4
  $region2: #{xey_transformer_layer.10} parent=0 // loop_pre_header
    _
  $region3: #{xey_transformer_layer.10} parent=0 // loop_header
    %s12 = sphi 0, %s16
    %p13 = scmp.ge.s32.totalorder %s12, 4
    %s19 = sphi 0, %s31
    %s20 = sphi 0, %s27
    %s21 = sphi 0, %s19
    %s22 = sphi 0, %s20
    %s23 = sphi 0, %s21
    %s24 = sphi 0, %s22
    %s36 = sphi 0, %s38
    %s39 = sphi 0, %s36
    %s40 = sphi 0, %s39
    %s56 = sphi 0, %s40
    %s62 = sphi 0, %s64
    %s65 = sphi 0, %s62
    %s66 = sphi 0, %s65
    %s82 = sphi 0, %s66
    %s88 = sphi 0, %s90
    %s91 = sphi 0, %s88
    %s92 = sphi 0, %s91
    %s108 = sphi 0, %s92
    %s112 = sphi 0, %s112
    %s114 = sphi 0, %s112
    %s115 = sphi 0, %s114
    %s129 = sphi 0, %s115
    %s133 = sphi 0, %s133
    %s135 = sphi 0, %s133
    %s136 = sphi 0, %s135
    %s150 = sphi 0, %s136
    %s154 = sphi 0, %s154
    %s156 = sphi 0, %s154
    %s157 = sphi 0, %s156
    %s171 = sphi 0, %s157
    %s179 = sphi 0, %s181
    %s182 = sphi 0, %s179
    %s183 = sphi 0, %s182
    %s199 = sphi 0, %s183
  $region4: #{xey_transformer_layer.10} parent=0 // loop_header_branch
    %15 = sbr.rel (%p13) target = $region8
  $region5: #{xey_transformer_layer.10} parent=0 // loop_body
    %s17 = ssub.s32 %s12, 1
    %s18 = ssub.s32 %s12, 2
    %s25 = sadd.s32 1, %s20
    %p26 = scmp.ge.s32.totalorder %s25, 1
    %s27 = scalar_select %p26, 0, %s25
    %s28 = sadd.s32 1, %s19
    %s29 = scalar_select %p26, %s28, %s19
    %p30 = scmp.ge.s32.totalorder %s29, 2
    %s31 = scalar_select %p30, 0, %s29
    %s32 = ssub.s32 %s19, %s31
    %s33 = ssub.s32 %s20, %s27
    %s34 = sor.u32 %s32, %s33
    %p35 = scmp.eq.s32.totalorder %s34, 0
    %s37 = sadd.s32 %s36, 1
    %s38 = scalar_select %p35, %s36, %s37
    %p41 = pneg %p35
    %p42 = scmp.eq.s32.totalorder %s12, 1
    %p43 = por %p41, %p42
    %p44 = scmp.ne.s32.totalorder %s36, %s39
    %p45 = scmp.eq.s32.totalorder %s12, 0
    %p46 = por %p44, %p45
    %p47 = scmp.ne.s32.totalorder %s36, %s39
    %p48 = scmp.eq.s32.totalorder %s17, 1
    %p49 = por %p47, %p48
    %p50 = scmp.ne.s32.totalorder %s39, %s40
    %p51 = scmp.eq.s32.totalorder %s17, 0
    %p52 = por %p50, %p51
    %p53 = scmp.ne.s32.totalorder %s39, %s40
    %p54 = scmp.eq.s32.totalorder %s18, 1
    %p55 = por %p53, %p54
    %p57 = scmp.ne.s32.totalorder %s40, %s56
    %p58 = scmp.eq.s32.totalorder %s18, 0
    %p59 = por %p57, %p58
    %s60 = ssub.s32 %s19, %s31
    %p61 = scmp.eq.s32.totalorder %s60, 0
    %s63 = sadd.s32 %s62, 1
    %s64 = scalar_select %p61, %s62, %s63
    %p67 = pneg %p61
    %p68 = scmp.eq.s32.totalorder %s12, 1
    %p69 = por %p67, %p68
    %p70 = scmp.ne.s32.totalorder %s62, %s65
    %p71 = scmp.eq.s32.totalorder %s12, 0
    %p72 = por %p70, %p71
    %p73 = scmp.ne.s32.totalorder %s62, %s65
    %p74 = scmp.eq.s32.totalorder %s17, 1
    %p75 = por %p73, %p74
    %p76 = scmp.ne.s32.totalorder %s65, %s66
    %p77 = scmp.eq.s32.totalorder %s17, 0
    %p78 = por %p76, %p77
    %p79 = scmp.ne.s32.totalorder %s65, %s66
    %p80 = scmp.eq.s32.totalorder %s18, 1
    %p81 = por %p79, %p80
    %p83 = scmp.ne.s32.totalorder %s66, %s82
    %p84 = scmp.eq.s32.totalorder %s18, 0
    %p85 = por %p83, %p84
    %s86 = ssub.s32 %s19, %s31
    %p87 = scmp.eq.s32.totalorder %s86, 0
    %s89 = sadd.s32 %s88, 1
    %s90 = scalar_select %p87, %s88, %s89
    %p93 = pneg %p87
    %p94 = scmp.eq.s32.totalorder %s12, 1
    %p95 = por %p93, %p94
    %p96 = scmp.ne.s32.totalorder %s88, %s91
    %p97 = scmp.eq.s32.totalorder %s12, 0
    %p98 = por %p96, %p97
    %p99 = scmp.ne.s32.totalorder %s88, %s91
    %p100 = scmp.eq.s32.totalorder %s17, 1
    %p101 = por %p99, %p100
    %p102 = scmp.ne.s32.totalorder %s91, %s92
    %p103 = scmp.eq.s32.totalorder %s17, 0
    %p104 = por %p102, %p103
    %p105 = scmp.ne.s32.totalorder %s91, %s92
    %p106 = scmp.eq.s32.totalorder %s18, 1
    %p107 = por %p105, %p106
    %p109 = scmp.ne.s32.totalorder %s92, %s108
    %p110 = scmp.eq.s32.totalorder %s18, 0
    %p111 = por %p109, %p110
    %s113 = sadd.s32 %s112, 1
    %p116 = scmp.eq.s32.totalorder %s12, 1
    %p117 = scmp.ne.s32.totalorder %s112, %s114
    %p118 = scmp.eq.s32.totalorder %s12, 0
    %p119 = por %p117, %p118
    %p120 = scmp.ne.s32.totalorder %s112, %s114
    %p121 = scmp.eq.s32.totalorder %s17, 1
    %p122 = por %p120, %p121
    %p123 = scmp.ne.s32.totalorder %s114, %s115
    %p124 = scmp.eq.s32.totalorder %s17, 0
    %p125 = por %p123, %p124
    %p126 = scmp.ne.s32.totalorder %s114, %s115
    %p127 = scmp.eq.s32.totalorder %s18, 1
    %p128 = por %p126, %p127
    %p130 = scmp.ne.s32.totalorder %s115, %s129
    %p131 = scmp.eq.s32.totalorder %s18, 0
    %p132 = por %p130, %p131
    %s134 = sadd.s32 %s133, 1
    %p137 = scmp.eq.s32.totalorder %s12, 1
    %p138 = scmp.ne.s32.totalorder %s133, %s135
    %p139 = scmp.eq.s32.totalorder %s12, 0
    %p140 = por %p138, %p139
    %p141 = scmp.ne.s32.totalorder %s133, %s135
    %p142 = scmp.eq.s32.totalorder %s17, 1
    %p143 = por %p141, %p142
    %p144 = scmp.ne.s32.totalorder %s135, %s136
    %p145 = scmp.eq.s32.totalorder %s17, 0
    %p146 = por %p144, %p145
    %p147 = scmp.ne.s32.totalorder %s135, %s136
    %p148 = scmp.eq.s32.totalorder %s18, 1
    %p149 = por %p147, %p148
    %p151 = scmp.ne.s32.totalorder %s136, %s150
    %p152 = scmp.eq.s32.totalorder %s18, 0
    %p153 = por %p151, %p152
    %s155 = sadd.s32 %s154, 1
    %p158 = scmp.eq.s32.totalorder %s12, 1
    %p159 = scmp.ne.s32.totalorder %s154, %s156
    %p160 = scmp.eq.s32.totalorder %s12, 0
    %p161 = por %p159, %p160
    %p162 = scmp.ne.s32.totalorder %s154, %s156
    %p163 = scmp.eq.s32.totalorder %s17, 1
    %p164 = por %p162, %p163
    %p165 = scmp.ne.s32.totalorder %s156, %s157
    %p166 = scmp.eq.s32.totalorder %s17, 0
    %p167 = por %p165, %p166
    %p168 = scmp.ne.s32.totalorder %s156, %s157
    %p169 = scmp.eq.s32.totalorder %s18, 1
    %p170 = por %p168, %p169
    %p172 = scmp.ne.s32.totalorder %s157, %s171
    %p173 = scmp.eq.s32.totalorder %s18, 0
    %p174 = por %p172, %p173
    %s175 = ssub.s32 %s19, %s31
    %s176 = ssub.s32 %s20, %s27
    %s177 = sor.u32 %s175, %s176
    %p178 = scmp.eq.s32.totalorder %s177, 0
    %s180 = sadd.s32 %s179, 1
    %s181 = scalar_select %p178, %s179, %s180
    %p184 = pneg %p178
    %p185 = scmp.eq.s32.totalorder %s12, 1
    %p186 = por %p184, %p185
    %p187 = scmp.ne.s32.totalorder %s179, %s182
    %p188 = scmp.eq.s32.totalorder %s12, 0
    %p189 = por %p187, %p188
    %p190 = scmp.ne.s32.totalorder %s179, %s182
    %p191 = scmp.eq.s32.totalorder %s17, 1
    %p192 = por %p190, %p191
    %p193 = scmp.ne.s32.totalorder %s182, %s183
    %p194 = scmp.eq.s32.totalorder %s17, 0
    %p195 = por %p193, %p194
    %p196 = scmp.ne.s32.totalorder %s182, %s183
    %p197 = scmp.eq.s32.totalorder %s18, 1
    %p198 = por %p196, %p197
    %p200 = scmp.ne.s32.totalorder %s183, %s199
    %p201 = scmp.eq.s32.totalorder %s18, 0
    %p202 = por %p200, %p201
    %p203 = scmp.le.s32.totalorder 1, %s12
    %p204 = scmp.lt.s32.totalorder %s12, 3
    %p205 = pnand %p203, %p204
    %p206 = pneg %p205
    // Predicated region
    $region9: #{xey_transformer_layer.10} parent=5 // pred_check
      _
    $region10: #{xey_transformer_layer.10} parent=5 // pred_check_branch
      %208 = sbr.rel (%p205) target = $region12
    $region11: #{xey_transformer_layer.10} parent=5 // pred_region
      %s209 = ssub.s32 %s12, 1
      // Predicated region
      $region13: #{xey_transformer_layer.10} parent=11 // pred_check
        %p210 = pneg %p125
      $region14: #{xey_transformer_layer.10} parent=11 // pred_check_branch
        %212 = sbr.rel (%p210) target = $region16
      $region15: #{xey_transformer_layer.10} parent=11 // pred_region
        _
      $region16: #{xey_transformer_layer.10} parent=11 // pred_fallthru
        _
      // Predicated region
      $region17: #{xey_transformer_layer.10} parent=11 // pred_check
        %p213 = pneg %p146
      $region18: #{xey_transformer_layer.10} parent=11 // pred_check_branch
        %215 = sbr.rel (%p213) target = $region20
      $region19: #{xey_transformer_layer.10} parent=11 // pred_region
        _
      $region20: #{xey_transformer_layer.10} parent=11 // pred_fallthru
        _
      // Predicated region
      $region21: #{xey_transformer_layer.10} parent=11 // pred_check
        %p216 = pneg %p167
      $region22: #{xey_transformer_layer.10} parent=11 // pred_check_branch
        %218 = sbr.rel (%p216) target = $region24
      $region23: #{xey_transformer_layer.10} parent=11 // pred_region
        _
      $region24: #{xey_transformer_layer.10} parent=11 // pred_fallthru
        _
    $region12: #{xey_transformer_layer.10} parent=5 // pred_fallthru
      _
    %p219 = scmp.lt.s32.totalorder %s12, 2
    // Predicated region
    $region25: #{xey_transformer_layer.10} parent=5 // pred_check
      %p220 = pneg %p219
    $region26: #{xey_transformer_layer.10} parent=5 // pred_check_branch
      %222 = sbr.rel (%p220) target = $region28
    $region27: #{xey_transformer_layer.10} parent=5 // pred_region
      // Predicated region
      $region29: #{xey_transformer_layer.10} parent=27 // pred_check
        %p223 = pneg %p46
      $region30: #{xey_transformer_layer.10} parent=27 // pred_check_branch
        %225 = sbr.rel (%p223) target = $region32
      $region31: #{xey_transformer_layer.10} parent=27 // pred_region
        %p226 = scmp.lt.s32.totalorder %s19, 1
        %s227 = scalar_select %p226, %s19, 1
        %p228 = scmp.lt.s32.totalorder %s20, 0
        %s229 = scalar_select %p228, %s20, 0
        %s230 = sadd.s32 %s229, %s227
        %s231 = smul.addr %s230, 8
        %s232 = scalar_lea.vmem %s0, %s231
      $region32: #{xey_transformer_layer.10} parent=27 // pred_fallthru
        _
      // Predicated region
      $region33: #{xey_transformer_layer.10} parent=27 // pred_check
        %p233 = pneg %p72
      $region34: #{xey_transformer_layer.10} parent=27 // pred_check_branch
        %235 = sbr.rel (%p233) target = $region36
      $region35: #{xey_transformer_layer.10} parent=27 // pred_region
        %p236 = scmp.lt.s32.totalorder %s19, 1
        %s237 = scalar_select %p236, %s19, 1
        %s238 = smul.addr %s237, 8
        %s239 = scalar_lea.vmem %s1, %s238
      $region36: #{xey_transformer_layer.10} parent=27 // pred_fallthru
        _
      // Predicated region
      $region37: #{xey_transformer_layer.10} parent=27 // pred_check
        %p240 = pneg %p98
      $region38: #{xey_transformer_layer.10} parent=27 // pred_check_branch
        %242 = sbr.rel (%p240) target = $region40
      $region39: #{xey_transformer_layer.10} parent=27 // pred_region
        %p243 = scmp.lt.s32.totalorder %s19, 1
        %s244 = scalar_select %p243, %s19, 1
        %s245 = smul.addr %s244, 2
        %s246 = scalar_lea.vmem %s2, %s245
      $region40: #{xey_transformer_layer.10} parent=27 // pred_fallthru
        _
    $region28: #{xey_transformer_layer.10} parent=5 // pred_fallthru
      _
    %p247 = scmp.le.s32.totalorder 1, %s12
    %p248 = scmp.lt.s32.totalorder %s12, 3
    %p249 = pnand %p247, %p248
    %p250 = pneg %p249
    // Predicated region
    $region41: #{xey_transformer_layer.10} parent=5 // pred_check
      _
    $region42: #{xey_transformer_layer.10} parent=5 // pred_check_branch
      %252 = sbr.rel (%p249) target = $region44
    $region43: #{xey_transformer_layer.10} parent=5 // pred_region
      %s253 = ssub.s32 %s12, 1
      %p254 = scmp.lt.s32.totalorder %s21, 1
      %s255 = scalar_select %p254, %s21, 1
      %p256 = scmp.lt.s32.totalorder %s22, 0
      %s257 = scalar_select %p256, %s22, 0
      %s258 = sadd.s32 %s257, %s255
      %s259 = smul.addr %s258, 8
      %s260 = scalar_lea.vmem %s0, %s259
      %p261 = pneg %p52
      %p262 = pneg %p49
      %p263 = scmp.lt.s32.totalorder %s21, 1
      %s264 = scalar_select %p263, %s21, 1
      %s265 = smul.addr %s264, 8
      %s266 = scalar_lea.vmem %s1, %s265
      %p267 = pneg %p78
      %p268 = pneg %p75
      %p269 = scmp.lt.s32.totalorder %s21, 1
      %s270 = scalar_select %p269, %s21, 1
      %s271 = smul.addr %s270, 2
      %s272 = scalar_lea.vmem %s2, %s271
      %p273 = pneg %p104
      %p274 = pneg %p101
      %p275 = pneg %p125
      %p276 = pneg %p122
      %p277 = pneg %p146
      %p278 = pneg %p143
      %p279 = pneg %p167
      %p280 = pneg %p164
      %p281 = pneg %p195
      %p282 = pneg %p192
      %p283 = scmp.lt.s32.totalorder %s21, 1
      %s284 = scalar_select %p283, %s21, 1
      %p285 = scmp.lt.s32.totalorder %s22, 0
      %s286 = scalar_select %p285, %s22, 0
      %s287 = sadd.s32 %s286, %s284
      %s288 = smul.addr %s287, 8
      %s289 = scalar_lea.vmem %s6, %s288
      %p290 = scmp.lt.s32.totalorder %s21, 1
      %s291 = scalar_select %p290, %s21, 1
      %p292 = scmp.lt.s32.totalorder %s22, 0
      %s293 = scalar_select %p292, %s22, 0
      %s294 = sadd.s32 %s293, %s291
      %s295 = smul.addr %s294, 8
      %s296 = scalar_lea.vmem %s0, %s295
      %p297 = scmp.lt.s32.totalorder %s21, 1
      %s298 = scalar_select %p297, %s21, 1
      %s299 = smul.addr %s298, 8
      %s300 = scalar_lea.vmem %s1, %s299
      %p301 = scmp.lt.s32.totalorder %s21, 1
      %s302 = scalar_select %p301, %s21, 1
      %s303 = smul.addr %s302, 2
      %s304 = scalar_lea.vmem %s2, %s303
      %p305 = scmp.lt.s32.totalorder %s21, 1
      %s306 = scalar_select %p305, %s21, 1
      %p307 = scmp.lt.s32.totalorder %s22, 0
      %s308 = scalar_select %p307, %s22, 0
      %s309 = sadd.s32 %s308, %s306
      %s310 = smul.addr %s309, 8
      %s311 = scalar_lea.vmem %s6, %s310
      %v313 = vld [vmem:[%s296] sm:$0xff]
      %v314 = vld [vmem:[%s300] sm:$0xff]
      %v315 = vld [vmem:[%s304] sm:$0x3]
      %317 = vset.pattern.permute.xlu0 19
      %318 = vperm.xlu0 %317, %v313
      %v319 = vpop.permute.xlu0 %318
      %v321 = vperm.slane %v315, 0
      %v322 = vmul.f32 %v319, %v321
      %323 = vset.pattern.permute.xlu0 20
      %324 = vperm.xlu0 %323, %v313
      %v325 = vpop.permute.xlu0 %324
      %v327 = vperm.slane %v315, 1
      %v328 = vmul.f32 %v325, %v327
      %v329 = vrot.slane %v313, 1
      %v330 = vrot.slane %v313, 2
      %v331 = vrot.slane %v313, 3
      %v332 = vrot.slane %v313, 4
      %v333 = vrot.slane %v313, 5
      %v334 = vrot.slane %v313, 6
      %v335 = vrot.slane %v313, 7
      %v336 = vperm.slane %v313, 0
      %v337 = vperm.slane %v329, 0
      %v338 = vperm.slane %v330, 0
      %v339 = vperm.slane %v331, 0
      %v340 = vperm.slane %v332, 0
      %v341 = vperm.slane %v333, 0
      %v342 = vperm.slane %v334, 0
      %v343 = vperm.slane %v335, 0
      %353 = vrot.lane.b32.xlu0 %v314, 112
      %v354 = vpop.permute.xlu0 %353
      %v356 = vsub.f32 %v336, %v354
      %v357 = vsub.f32 %v337, %v354
      %v358 = vsub.f32 %v338, %v354
      %v359 = vsub.f32 %v339, %v354
      %v360 = vsub.f32 %v340, %v354
      %v361 = vsub.f32 %v341, %v354
      %v362 = vsub.f32 %v342, %v354
      %v363 = vsub.f32 %v343, %v354
      %v364 = vmul.f32 %v356, %v356
      %v365 = vmul.f32 %v357, %v357
      %v366 = vmul.f32 %v358, %v358
      %v367 = vmul.f32 %v359, %v359
      %v368 = vmul.f32 %v360, %v360
      %v369 = vmul.f32 %v361, %v361
      %v370 = vmul.f32 %v362, %v362
      %v371 = vmul.f32 %v363, %v363
      %380 = vrot.lane.b32.xlu0 %v364, 112
      %v381 = vpop.permute.xlu0 %380
      %382 = vrot.lane.b32.xlu0 %v365, 112
      %v383 = vpop.permute.xlu0 %382
      %384 = vrot.lane.b32.xlu0 %v366, 112
      %v385 = vpop.permute.xlu0 %384
      %386 = vrot.lane.b32.xlu0 %v367, 112
      %v387 = vpop.permute.xlu0 %386
      %388 = vrot.lane.b32.xlu0 %v368, 112
      %v389 = vpop.permute.xlu0 %388
      %390 = vrot.lane.b32.xlu0 %v369, 112
      %v391 = vpop.permute.xlu0 %390
      %392 = vrot.lane.b32.xlu0 %v370, 112
      %v393 = vpop.permute.xlu0 %392
      %394 = vrot.lane.b32.xlu0 %v371, 112
      %v395 = vpop.permute.xlu0 %394
      %vm404 = vcmask 23552
      %v405 = vsel %vm404, %v381, 0.0
      %406 = vadd.xlane.f32.xlu0 %v405
      %v407 = vpop.xlane.xlu0 %406
      %v408 = vsel %vm404, %v383, 0.0
      %409 = vadd.xlane.f32.xlu0 %v408
      %v410 = vpop.xlane.xlu0 %409
      %v411 = vsel %vm404, %v385, 0.0
      %412 = vadd.xlane.f32.xlu0 %v411
      %v413 = vpop.xlane.xlu0 %412
      %v414 = vsel %vm404, %v387, 0.0
      %415 = vadd.xlane.f32.xlu0 %v414
      %v416 = vpop.xlane.xlu0 %415
      %v417 = vsel %vm404, %v389, 0.0
      %418 = vadd.xlane.f32.xlu0 %v417
      %v419 = vpop.xlane.xlu0 %418
      %v420 = vsel %vm404, %v391, 0.0
      %421 = vadd.xlane.f32.xlu0 %v420
      %v422 = vpop.xlane.xlu0 %421
      %v423 = vsel %vm404, %v393, 0.0
      %424 = vadd.xlane.f32.xlu0 %v423
      %v425 = vpop.xlane.xlu0 %424
      %v426 = vsel %vm404, %v395, 0.0
      %427 = vadd.xlane.f32.xlu0 %v426
      %v428 = vpop.xlane.xlu0 %427
      %v429 = vrsqrt.pop %v407
      %v430 = vmul.f32 %v429, %v407
      %v431 = vmul.f32 %v430, %v429
      %v432 = vmul.f32 0.5, %v431
      %v433 = vsub.f32 1.5, %v432
      %v434 = vmul.f32 %v429, %v433
      %v435 = vmul.f32 %v407, %v434
      %vm436 = vcmp.eq.f32.partialorder %v407, inf
      %v437 = vsel %vm436, %v407, %v435
      %vm438 = vcmp.eq.f32.partialorder %v407, 0.0
      %v439 = vand.u32 %v407, 2147483648
      %v440 = vsel %vm438, %v439, %v437
      %v441 = vrsqrt.pop %v410
      %v442 = vmul.f32 %v441, %v410
      %v443 = vmul.f32 %v442, %v441
      %v444 = vmul.f32 0.5, %v443
      %v445 = vsub.f32 1.5, %v444
      %v446 = vmul.f32 %v441, %v445
      %v447 = vmul.f32 %v410, %v446
      %vm448 = vcmp.eq.f32.partialorder %v410, inf
      %v449 = vsel %vm448, %v410, %v447
      %vm450 = vcmp.eq.f32.partialorder %v410, 0.0
      %v451 = vand.u32 %v410, 2147483648
      %v452 = vsel %vm450, %v451, %v449
      %v453 = vrsqrt.pop %v413
      %v454 = vmul.f32 %v453, %v413
      %v455 = vmul.f32 %v454, %v453
      %v456 = vmul.f32 0.5, %v455
      %v457 = vsub.f32 1.5, %v456
      %v458 = vmul.f32 %v453, %v457
      %v459 = vmul.f32 %v413, %v458
      %vm460 = vcmp.eq.f32.partialorder %v413, inf
      %v461 = vsel %vm460, %v413, %v459
      %vm462 = vcmp.eq.f32.partialorder %v413, 0.0
      %v463 = vand.u32 %v413, 2147483648
      %v464 = vsel %vm462, %v463, %v461
      %v465 = vrsqrt.pop %v416
      %v466 = vmul.f32 %v465, %v416
      %v467 = vmul.f32 %v466, %v465
      %v468 = vmul.f32 0.5, %v467
      %v469 = vsub.f32 1.5, %v468
      %v470 = vmul.f32 %v465, %v469
      %v471 = vmul.f32 %v416, %v470
      %vm472 = vcmp.eq.f32.partialorder %v416, inf
      %v473 = vsel %vm472, %v416, %v471
      %vm474 = vcmp.eq.f32.partialorder %v416, 0.0
      %v475 = vand.u32 %v416, 2147483648
      %v476 = vsel %vm474, %v475, %v473
      %v477 = vrsqrt.pop %v419
      %v478 = vmul.f32 %v477, %v419
      %v479 = vmul.f32 %v478, %v477
      %v480 = vmul.f32 0.5, %v479
      %v481 = vsub.f32 1.5, %v480
      %v482 = vmul.f32 %v477, %v481
      %v483 = vmul.f32 %v419, %v482
      %vm484 = vcmp.eq.f32.partialorder %v419, inf
      %v485 = vsel %vm484, %v419, %v483
      %vm486 = vcmp.eq.f32.partialorder %v419, 0.0
      %v487 = vand.u32 %v419, 2147483648
      %v488 = vsel %vm486, %v487, %v485
      %v489 = vrsqrt.pop %v422
      %v490 = vmul.f32 %v489, %v422
      %v491 = vmul.f32 %v490, %v489
      %v492 = vmul.f32 0.5, %v491
      %v493 = vsub.f32 1.5, %v492
      %v494 = vmul.f32 %v489, %v493
      %v495 = vmul.f32 %v422, %v494
      %vm496 = vcmp.eq.f32.partialorder %v422, inf
      %v497 = vsel %vm496, %v422, %v495
      %vm498 = vcmp.eq.f32.partialorder %v422, 0.0
      %v499 = vand.u32 %v422, 2147483648
      %v500 = vsel %vm498, %v499, %v497
      %v501 = vrsqrt.pop %v425
      %v502 = vmul.f32 %v501, %v425
      %v503 = vmul.f32 %v502, %v501
      %v504 = vmul.f32 0.5, %v503
      %v505 = vsub.f32 1.5, %v504
      %v506 = vmul.f32 %v501, %v505
      %v507 = vmul.f32 %v425, %v506
      %vm508 = vcmp.eq.f32.partialorder %v425, inf
      %v509 = vsel %vm508, %v425, %v507
      %vm510 = vcmp.eq.f32.partialorder %v425, 0.0
      %v511 = vand.u32 %v425, 2147483648
      %v512 = vsel %vm510, %v511, %v509
      %v513 = vrsqrt.pop %v428
      %v514 = vmul.f32 %v513, %v428
      %v515 = vmul.f32 %v514, %v513
      %v516 = vmul.f32 0.5, %v515
      %v517 = vsub.f32 1.5, %v516
      %v518 = vmul.f32 %v513, %v517
      %v519 = vmul.f32 %v428, %v518
      %vm520 = vcmp.eq.f32.partialorder %v428, inf
      %v521 = vsel %vm520, %v428, %v519
      %vm522 = vcmp.eq.f32.partialorder %v428, 0.0
      %v523 = vand.u32 %v428, 2147483648
      %v524 = vsel %vm522, %v523, %v521
      %v526 = vperm.slane %v328, 0
      %v527 = vlaneseq
      %v528 = vshrl.u32 %v527, 7
      %530 = vset.pattern.permute.xlu0 %v528
      %531 = vperm.xlu0 %530, %v526
      %v532 = vpop.permute.xlu0 %531
      %v533 = vperm.slane %v328, 1
      %v534 = vlaneseq
      %v535 = vshrl.u32 %v534, 7
      %537 = vset.pattern.permute.xlu0 %v535
      %538 = vperm.xlu0 %537, %v533
      %v539 = vpop.permute.xlu0 %538
      %v540 = vperm.slane %v328, 2
      %v541 = vlaneseq
      %v542 = vshrl.u32 %v541, 7
      %544 = vset.pattern.permute.xlu0 %v542
      %545 = vperm.xlu0 %544, %v540
      %v546 = vpop.permute.xlu0 %545
      %v547 = vperm.slane %v328, 3
      %v548 = vlaneseq
      %v549 = vshrl.u32 %v548, 7
      %551 = vset.pattern.permute.xlu0 %v549
      %552 = vperm.xlu0 %551, %v547
      %v553 = vpop.permute.xlu0 %552
      %v554 = vperm.slane %v328, 4
      %v555 = vlaneseq
      %v556 = vshrl.u32 %v555, 7
      %558 = vset.pattern.permute.xlu0 %v556
      %559 = vperm.xlu0 %558, %v554
      %v560 = vpop.permute.xlu0 %559
      %v561 = vperm.slane %v328, 5
      %v562 = vlaneseq
      %v563 = vshrl.u32 %v562, 7
      %565 = vset.pattern.permute.xlu0 %v563
      %566 = vperm.xlu0 %565, %v561
      %v567 = vpop.permute.xlu0 %566
      %v568 = vperm.slane %v328, 6
      %v569 = vlaneseq
      %v570 = vshrl.u32 %v569, 7
      %572 = vset.pattern.permute.xlu0 %v570
      %573 = vperm.xlu0 %572, %v568
      %v574 = vpop.permute.xlu0 %573
      %v575 = vperm.slane %v328, 7
      %v576 = vlaneseq
      %v577 = vshrl.u32 %v576, 7
      %579 = vset.pattern.permute.xlu0 %v577
      %580 = vperm.xlu0 %579, %v575
      %v581 = vpop.permute.xlu0 %580
      %v590 = vmul.f32 %v440, %v532
      %v591 = vmul.f32 %v452, %v539
      %v592 = vmul.f32 %v464, %v546
      %v593 = vmul.f32 %v476, %v553
      %v594 = vmul.f32 %v488, %v560
      %v595 = vmul.f32 %v500, %v567
      %v596 = vmul.f32 %v512, %v574
      %v597 = vmul.f32 %v524, %v581
      %v598 = vsub.f32 1.0, %v315
      %v599 = vmul.f32 %v598, -1e+09
      %v600 = vld [vmem:[%s3] sm:$0xf]
      %v601 = vld [vmem:[%s4] sm:$0xf]
      %v602 = vld [vmem:[%s5] sm:$0xf]
      %v603 = vperm.slane %v600, 0
      %v604 = vmul.f32 %v313, %v603
      %v605 = vpack.c.bf16 %v604, %v604
      %v606 = vpack.c.bf16 %v314, %v314
      %vm607 = vcmask 130048
      %v609 = vsel %vm607, %v605, 0
      %v612 = vsel %vm607, %v606, 0
      %614 = vmatpush.bf16.xpose.msra.mxu0 0
      %615 = vmatpush.bf16.xpose.msra.mxu0 0
      %616 = vmatpush.bf16.xpose.msra.mxu0 0
      %617 = vmatpush.bf16.xpose.msra.mxu0 0
      %618 = vmatpush.bf16.xpose.msra.mxu0 0
      %619 = vmatpush.bf16.xpose.msra.mxu0 0
      %620 = vmatpush.bf16.xpose.msra.mxu0 0
      %621 = vmatpush.bf16.xpose.msra.mxu0 %v612
      %622 = vmatmul.bf16.gmra.mxu0 %v609
      %v623 = vpop.f32.mrf.mxu0
      %v624 = vadd.f32 0.0, %v623
      %v625 = vpop.f32.mrf.mxu0
      %626 = vdwg.mxu0
      %v627 = vmul.f32 %v624, 0.25
      %v628 = vmul.f32 %v627, %v322
      %s630 = vtos %v601
      %v631 = vstv %s630
      %v633 = vmul.f32 %v590, %v631
      %v634 = vmul.f32 %v591, %v631
      %v635 = vmul.f32 %v592, %v631
      %v636 = vmul.f32 %v593, %v631
      %v637 = vmul.f32 %v594, %v631
      %v638 = vmul.f32 %v595, %v631
      %v639 = vmul.f32 %v596, %v631
      %v640 = vmul.f32 %v597, %v631
      %s642 = vtos %v602
      %v643 = vstv %s642
      %v645 = vadd.f32 %v633, %v643
      %v646 = vadd.f32 %v634, %v643
      %v647 = vadd.f32 %v635, %v643
      %v648 = vadd.f32 %v636, %v643
      %v649 = vadd.f32 %v637, %v643
      %v650 = vadd.f32 %v638, %v643
      %v651 = vadd.f32 %v639, %v643
      %v652 = vadd.f32 %v640, %v643
      %v653 = vmul.f32 %v645, %v532
      %v654 = vmul.f32 %v646, %v539
      %v655 = vmul.f32 %v647, %v546
      %v656 = vmul.f32 %v648, %v553
      %v657 = vmul.f32 %v649, %v560
      %v658 = vmul.f32 %v650, %v567
      %v659 = vmul.f32 %v651, %v574
      %v660 = vmul.f32 %v652, %v581
      %669 = vset.pattern.permute.xlu0 0
      %670 = vperm.xlu0 %669, %v653
      %v671 = vpop.permute.xlu0 %670
      %672 = vset.pattern.permute.xlu0 0
      %673 = vperm.xlu0 %672, %v654
      %v674 = vpop.permute.xlu0 %673
      %675 = vset.pattern.permute.xlu0 0
      %676 = vperm.xlu0 %675, %v655
      %v677 = vpop.permute.xlu0 %676
      %678 = vset.pattern.permute.xlu0 0
      %679 = vperm.xlu0 %678, %v656
      %v680 = vpop.permute.xlu0 %679
      %681 = vset.pattern.permute.xlu0 0
      %682 = vperm.xlu0 %681, %v657
      %v683 = vpop.permute.xlu0 %682
      %684 = vset.pattern.permute.xlu0 0
      %685 = vperm.xlu0 %684, %v658
      %v686 = vpop.permute.xlu0 %685
      %687 = vset.pattern.permute.xlu0 0
      %688 = vperm.xlu0 %687, %v659
      %v689 = vpop.permute.xlu0 %688
      %690 = vset.pattern.permute.xlu0 0
      %691 = vperm.xlu0 %690, %v660
      %v692 = vpop.permute.xlu0 %691
      %v693 = vlaneseq
      %v694 = vand.u32 %v693, 127
      %v695 = vperm.slane %v671, %v694
      %v696 = vperm.slane %v674, %v694
      %v697 = vperm.slane %v677, %v694
      %v698 = vperm.slane %v680, %v694
      %v699 = vperm.slane %v683, %v694
      %v700 = vperm.slane %v686, %v694
      %v701 = vperm.slane %v689, %v694
      %v702 = vperm.slane %v692, %v694
      %vm703 = vcmask 1041409
      %v704 = vsel %vm703, %v696, %v695
      %vm705 = vcmask 1042434
      %v706 = vsel %vm705, %v697, %v704
      %vm707 = vcmask 1043459
      %v708 = vsel %vm707, %v698, %v706
      %vm709 = vcmask 1044484
      %v710 = vsel %vm709, %v699, %v708
      %vm711 = vcmask 1045509
      %v712 = vsel %vm711, %v700, %v710
      %vm713 = vcmask 1046534
      %v714 = vsel %vm713, %v701, %v712
      %vm715 = vcmask 1047559
      %v716 = vsel %vm715, %v702, %v714
      %v718 = vsub.f32 %v628, %v716
      %v719 = vperm.slane %v599, 0
      %v720 = vadd.f32 %v718, %v719
      %vm721 = vcmask 64512
      %v722 = vsel %vm721, %v720, -inf
      %723 = vmax.xlane.f32.xlu0 %v722
      %v724 = vpop.xlane.xlu0 %723
      %v725 = vsub.f32 %v720, %v724
      %v726 = vmul.f32 %v725, 1.442695
      %v727 = vpow.pop %v726
      %v728 = vmul.f32 %v727, %v321
      %v729 = vsel %vm721, %v728, 0.0
      %730 = vadd.xlane.f32.xlu0 %v729
      %v731 = vpop.xlane.xlu0 %730
      %vm732 = vcmp.eq.f32.partialorder %v731, 0.0
      %v733 = vsel %vm732, 1, 0
      %v734 = vcvt.s32.f32 %v733
      %v735 = vadd.f32 %v731, %v734
      %v736 = vrcp.pop %v735
      %v737 = vmul.f32 %v735, %v736
      %v738 = vsub.f32 1.0, %v737
      %v739 = vmul.f32 %v736, %v738
      %v740 = vadd.f32 %v736, %v739
      %vm741 = vweird.f32 %v735
      %vm742 = vweird.f32 %v736
      %vm743 = vmor %vm741, %vm742
      %v744 = vsel %vm743, %v736, %v740
      %v745 = vand.u32 2147483647, %v735
      %vm746 = vcmp.eq.f32.partialorder %v745, 8.507059e+37
      %v747 = vand.u32 %v735, 2147483648
      %v748 = vor.u32 1.1754944e-38, %v747
      %v749 = vsel %vm746, %v748, %v744
      %v750 = vmul.f32 %v728, %v749
      %v751 = vpack.c.bf16 %v750, %v750
      %753 = vrot.lane.b32.xlu0 %v606, 112
      %v754 = vpop.permute.xlu0 %753
      %v756 = vsel %vm721, %v751, 0
      %vm758 = vcmask 1043456
      %v760 = vsel %vm758, %v754, 0
      %762 = vmatpush.bf16.msra.mxu0 0
      %763 = vmatpush.bf16.msra.mxu0 0
      %764 = vmatpush.bf16.msra.mxu0 0
      %765 = vmatpush.bf16.msra.mxu0 0
      %766 = vmatpush.bf16.msra.mxu0 0
      %767 = vmatpush.bf16.msra.mxu0 0
      %768 = vmatpush.bf16.msra.mxu0 0
      %769 = vmatpush.bf16.msra.mxu0 %v760
      %770 = vmatmul.bf16.gmra.mxu0 %v756
      %v771 = vpop.f32.mrf.mxu0
      %v772 = vadd.f32 0.0, %v771
      %v773 = vpop.f32.mrf.mxu0
      %774 = vdwg.mxu0
      %v775 = vperm.slane %v600, 1
      %v776 = vmul.f32 %v313, %v775
      %v777 = vpack.c.bf16 %v776, %v776
      %v779 = vsel %vm607, %v777, 0
      %781 = vmatpush.bf16.xpose.msra.mxu0 0
      %782 = vmatpush.bf16.xpose.msra.mxu0 0
      %783 = vmatpush.bf16.xpose.msra.mxu0 0
      %784 = vmatpush.bf16.xpose.msra.mxu0 0
      %785 = vmatpush.bf16.xpose.msra.mxu0 0
      %786 = vmatpush.bf16.xpose.msra.mxu0 0
      %787 = vmatpush.bf16.xpose.msra.mxu0 0
      %788 = vmatpush.bf16.xpose.msra.mxu0 %v612
      %789 = vmatmul.bf16.gmra.mxu0 %v779
      %v790 = vpop.f32.mrf.mxu0
      %v791 = vadd.f32 0.0, %v790
      %v792 = vpop.f32.mrf.mxu0
      %793 = vdwg.mxu0
      %v794 = vmul.f32 %v791, 0.25
      %v795 = vmul.f32 %v794, %v322
      %v796 = vrot.slane %v601, 1
      %s797 = vtos %v796
      %v798 = vstv %s797
      %v800 = vmul.f32 %v590, %v798
      %v801 = vmul.f32 %v591, %v798
      %v802 = vmul.f32 %v592, %v798
      %v803 = vmul.f32 %v593, %v798
      %v804 = vmul.f32 %v594, %v798
      %v805 = vmul.f32 %v595, %v798
      %v806 = vmul.f32 %v596, %v798
      %v807 = vmul.f32 %v597, %v798
      %v808 = vrot.slane %v602, 1
      %s809 = vtos %v808
      %v810 = vstv %s809
      %v812 = vadd.f32 %v800, %v810
      %v813 = vadd.f32 %v801, %v810
      %v814 = vadd.f32 %v802, %v810
      %v815 = vadd.f32 %v803, %v810
      %v816 = vadd.f32 %v804, %v810
      %v817 = vadd.f32 %v805, %v810
      %v818 = vadd.f32 %v806, %v810
      %v819 = vadd.f32 %v807, %v810
      %v820 = vmul.f32 %v812, %v532
      %v821 = vmul.f32 %v813, %v539
      %v822 = vmul.f32 %v814, %v546
      %v823 = vmul.f32 %v815, %v553
      %v824 = vmul.f32 %v816, %v560
      %v825 = vmul.f32 %v817, %v567
      %v826 = vmul.f32 %v818, %v574
      %v827 = vmul.f32 %v819, %v581
      %836 = vset.pattern.permute.xlu0 0
      %837 = vperm.xlu0 %836, %v820
      %v838 = vpop.permute.xlu0 %837
      %839 = vset.pattern.permute.xlu0 0
      %840 = vperm.xlu0 %839, %v821
      %v841 = vpop.permute.xlu0 %840
      %842 = vset.pattern.permute.xlu0 0
      %843 = vperm.xlu0 %842, %v822
      %v844 = vpop.permute.xlu0 %843
      %845 = vset.pattern.permute.xlu0 0
      %846 = vperm.xlu0 %845, %v823
      %v847 = vpop.permute.xlu0 %846
      %848 = vset.pattern.permute.xlu0 0
      %849 = vperm.xlu0 %848, %v824
      %v850 = vpop.permute.xlu0 %849
      %851 = vset.pattern.permute.xlu0 0
      %852 = vperm.xlu0 %851, %v825
      %v853 = vpop.permute.xlu0 %852
      %854 = vset.pattern.permute.xlu0 0
      %855 = vperm.xlu0 %854, %v826
      %v856 = vpop.permute.xlu0 %855
      %857 = vset.pattern.permute.xlu0 0
      %858 = vperm.xlu0 %857, %v827
      %v859 = vpop.permute.xlu0 %858
      %v860 = vperm.slane %v838, %v694
      %v861 = vperm.slane %v841, %v694
      %v862 = vperm.slane %v844, %v694
      %v863 = vperm.slane %v847, %v694
      %v864 = vperm.slane %v850, %v694
      %v865 = vperm.slane %v853, %v694
      %v866 = vperm.slane %v856, %v694
      %v867 = vperm.slane %v859, %v694
      %v868 = vsel %vm703, %v861, %v860
      %v869 = vsel %vm705, %v862, %v868
      %v870 = vsel %vm707, %v863, %v869
      %v871 = vsel %vm709, %v864, %v870
      %v872 = vsel %vm711, %v865, %v871
      %v873 = vsel %vm713, %v866, %v872
      %v874 = vsel %vm715, %v867, %v873
      %v876 = vsub.f32 %v795, %v874
      %v877 = vadd.f32 %v876, %v719
      %v878 = vsel %vm721, %v877, -inf
      %879 = vmax.xlane.f32.xlu0 %v878
      %v880 = vpop.xlane.xlu0 %879
      %v881 = vsub.f32 %v877, %v880
      %v882 = vmul.f32 %v881, 1.442695
      %v883 = vpow.pop %v882
      %v884 = vmul.f32 %v883, %v321
      %v885 = vsel %vm721, %v884, 0.0
      %886 = vadd.xlane.f32.xlu0 %v885
      %v887 = vpop.xlane.xlu0 %886
      %vm888 = vcmp.eq.f32.partialorder %v887, 0.0
      %v889 = vsel %vm888, 1, 0
      %v890 = vcvt.s32.f32 %v889
      %v891 = vadd.f32 %v887, %v890
      %v892 = vrcp.pop %v891
      %v893 = vmul.f32 %v891, %v892
      %v894 = vsub.f32 1.0, %v893
      %v895 = vmul.f32 %v892, %v894
      %v896 = vadd.f32 %v892, %v895
      %vm897 = vweird.f32 %v891
      %vm898 = vweird.f32 %v892
      %vm899 = vmor %vm897, %vm898
      %v900 = vsel %vm899, %v892, %v896
      %v901 = vand.u32 2147483647, %v891
      %vm902 = vcmp.eq.f32.partialorder %v901, 8.507059e+37
      %v903 = vand.u32 %v891, 2147483648
      %v904 = vor.u32 1.1754944e-38, %v903
      %v905 = vsel %vm902, %v904, %v900
      %v906 = vmul.f32 %v884, %v905
      %v907 = vpack.c.bf16 %v906, %v906
      %v909 = vsel %vm721, %v907, 0
      %911 = vmatpush.bf16.msra.mxu0 0
      %912 = vmatpush.bf16.msra.mxu0 0
      %913 = vmatpush.bf16.msra.mxu0 0
      %914 = vmatpush.bf16.msra.mxu0 0
      %915 = vmatpush.bf16.msra.mxu0 0
      %916 = vmatpush.bf16.msra.mxu0 0
      %917 = vmatpush.bf16.msra.mxu0 0
      %918 = vmatpush.bf16.msra.mxu0 %v760
      %919 = vmatmul.bf16.gmra.mxu0 %v909
      %v920 = vpop.f32.mrf.mxu0
      %v921 = vadd.f32 0.0, %v920
      %v922 = vpop.f32.mrf.mxu0
      %923 = vdwg.mxu0
      %v924 = vperm.slane %v600, 2
      %v925 = vmul.f32 %v313, %v924
      %v926 = vpack.c.bf16 %v925, %v925
      %v928 = vsel %vm607, %v926, 0
      %930 = vmatpush.bf16.xpose.msra.mxu0 0
      %931 = vmatpush.bf16.xpose.msra.mxu0 0
      %932 = vmatpush.bf16.xpose.msra.mxu0 0
      %933 = vmatpush.bf16.xpose.msra.mxu0 0
      %934 = vmatpush.bf16.xpose.msra.mxu0 0
      %935 = vmatpush.bf16.xpose.msra.mxu0 0
      %936 = vmatpush.bf16.xpose.msra.mxu0 0
      %937 = vmatpush.bf16.xpose.msra.mxu0 %v612
      %938 = vmatmul.bf16.gmra.mxu0 %v928
      %v939 = vpop.f32.mrf.mxu0
      %v940 = vadd.f32 0.0, %v939
      %v941 = vpop.f32.mrf.mxu0
      %942 = vdwg.mxu0
      %v943 = vmul.f32 %v940, 0.25
      %v944 = vmul.f32 %v943, %v322
      %v945 = vrot.slane %v601, 2
      %s946 = vtos %v945
      %v947 = vstv %s946
      %v949 = vmul.f32 %v590, %v947
      %v950 = vmul.f32 %v591, %v947
      %v951 = vmul.f32 %v592, %v947
      %v952 = vmul.f32 %v593, %v947
      %v953 = vmul.f32 %v594, %v947
      %v954 = vmul.f32 %v595, %v947
      %v955 = vmul.f32 %v596, %v947
      %v956 = vmul.f32 %v597, %v947
      %v957 = vrot.slane %v602, 2
      %s958 = vtos %v957
      %v959 = vstv %s958
      %v961 = vadd.f32 %v949, %v959
      %v962 = vadd.f32 %v950, %v959
      %v963 = vadd.f32 %v951, %v959
      %v964 = vadd.f32 %v952, %v959
      %v965 = vadd.f32 %v953, %v959
      %v966 = vadd.f32 %v954, %v959
      %v967 = vadd.f32 %v955, %v959
      %v968 = vadd.f32 %v956, %v959
      %v969 = vmul.f32 %v961, %v532
      %v970 = vmul.f32 %v962, %v539
      %v971 = vmul.f32 %v963, %v546
      %v972 = vmul.f32 %v964, %v553
      %v973 = vmul.f32 %v965, %v560
      %v974 = vmul.f32 %v966, %v567
      %v975 = vmul.f32 %v967, %v574
      %v976 = vmul.f32 %v968, %v581
      %985 = vset.pattern.permute.xlu0 0
      %986 = vperm.xlu0 %985, %v969
      %v987 = vpop.permute.xlu0 %986
      %988 = vset.pattern.permute.xlu0 0
      %989 = vperm.xlu0 %988, %v970
      %v990 = vpop.permute.xlu0 %989
      %991 = vset.pattern.permute.xlu0 0
      %992 = vperm.xlu0 %991, %v971
      %v993 = vpop.permute.xlu0 %992
      %994 = vset.pattern.permute.xlu0 0
      %995 = vperm.xlu0 %994, %v972
      %v996 = vpop.permute.xlu0 %995
      %997 = vset.pattern.permute.xlu0 0
      %998 = vperm.xlu0 %997, %v973
      %v999 = vpop.permute.xlu0 %998
      %1000 = vset.pattern.permute.xlu0 0
      %1001 = vperm.xlu0 %1000, %v974
      %v1002 = vpop.permute.xlu0 %1001
      %1003 = vset.pattern.permute.xlu0 0
      %1004 = vperm.xlu0 %1003, %v975
      %v1005 = vpop.permute.xlu0 %1004
      %1006 = vset.pattern.permute.xlu0 0
      %1007 = vperm.xlu0 %1006, %v976
      %v1008 = vpop.permute.xlu0 %1007
      %v1009 = vperm.slane %v987, %v694
      %v1010 = vperm.slane %v990, %v694
      %v1011 = vperm.slane %v993, %v694
      %v1012 = vperm.slane %v996, %v694
      %v1013 = vperm.slane %v999, %v694
      %v1014 = vperm.slane %v1002, %v694
      %v1015 = vperm.slane %v1005, %v694
      %v1016 = vperm.slane %v1008, %v694
      %v1017 = vsel %vm703, %v1010, %v1009
      %v1018 = vsel %vm705, %v1011, %v1017
      %v1019 = vsel %vm707, %v1012, %v1018
      %v1020 = vsel %vm709, %v1013, %v1019
      %v1021 = vsel %vm711, %v1014, %v1020
      %v1022 = vsel %vm713, %v1015, %v1021
      %v1023 = vsel %vm715, %v1016, %v1022
      %v1025 = vsub.f32 %v944, %v1023
      %v1026 = vadd.f32 %v1025, %v719
      %v1027 = vsel %vm721, %v1026, -inf
      %1028 = vmax.xlane.f32.xlu0 %v1027
      %v1029 = vpop.xlane.xlu0 %1028
      %v1030 = vsub.f32 %v1026, %v1029
      %v1031 = vmul.f32 %v1030, 1.442695
      %v1032 = vpow.pop %v1031
      %v1033 = vmul.f32 %v1032, %v321
      %v1034 = vsel %vm721, %v1033, 0.0
      %1035 = vadd.xlane.f32.xlu0 %v1034
      %v1036 = vpop.xlane.xlu0 %1035
      %vm1037 = vcmp.eq.f32.partialorder %v1036, 0.0
      %v1038 = vsel %vm1037, 1, 0
      %v1039 = vcvt.s32.f32 %v1038
      %v1040 = vadd.f32 %v1036, %v1039
      %v1041 = vrcp.pop %v1040
      %v1042 = vmul.f32 %v1040, %v1041
      %v1043 = vsub.f32 1.0, %v1042
      %v1044 = vmul.f32 %v1041, %v1043
      %v1045 = vadd.f32 %v1041, %v1044
      %vm1046 = vweird.f32 %v1040
      %vm1047 = vweird.f32 %v1041
      %vm1048 = vmor %vm1046, %vm1047
      %v1049 = vsel %vm1048, %v1041, %v1045
      %v1050 = vand.u32 2147483647, %v1040
      %vm1051 = vcmp.eq.f32.partialorder %v1050, 8.507059e+37
      %v1052 = vand.u32 %v1040, 2147483648
      %v1053 = vor.u32 1.1754944e-38, %v1052
      %v1054 = vsel %vm1051, %v1053, %v1049
      %v1055 = vmul.f32 %v1033, %v1054
      %v1056 = vpack.c.bf16 %v1055, %v1055
      %v1058 = vsel %vm721, %v1056, 0
      %1060 = vmatpush.bf16.msra.mxu0 0
      %1061 = vmatpush.bf16.msra.mxu0 0
      %1062 = vmatpush.bf16.msra.mxu0 0
      %1063 = vmatpush.bf16.msra.mxu0 0
      %1064 = vmatpush.bf16.msra.mxu0 0
      %1065 = vmatpush.bf16.msra.mxu0 0
      %1066 = vmatpush.bf16.msra.mxu0 0
      %1067 = vmatpush.bf16.msra.mxu0 %v760
      %1068 = vmatmul.bf16.gmra.mxu0 %v1058
      %v1069 = vpop.f32.mrf.mxu0
      %v1070 = vadd.f32 0.0, %v1069
      %v1071 = vpop.f32.mrf.mxu0
      %1072 = vdwg.mxu0
      %v1073 = vperm.slane %v600, 3
      %v1074 = vmul.f32 %v313, %v1073
      %v1075 = vpack.c.bf16 %v1074, %v1074
      %v1077 = vsel %vm607, %v1075, 0
      %1079 = vmatpush.bf16.xpose.msra.mxu0 0
      %1080 = vmatpush.bf16.xpose.msra.mxu0 0
      %1081 = vmatpush.bf16.xpose.msra.mxu0 0
      %1082 = vmatpush.bf16.xpose.msra.mxu0 0
      %1083 = vmatpush.bf16.xpose.msra.mxu0 0
      %1084 = vmatpush.bf16.xpose.msra.mxu0 0
      %1085 = vmatpush.bf16.xpose.msra.mxu0 0
      %1086 = vmatpush.bf16.xpose.msra.mxu0 %v612
      %1087 = vmatmul.bf16.gmra.mxu0 %v1077
      %v1088 = vpop.f32.mrf.mxu0
      %v1089 = vadd.f32 0.0, %v1088
      %v1090 = vpop.f32.mrf.mxu0
      %1091 = vdwg.mxu0
      %v1092 = vmul.f32 %v1089, 0.25
      %v1093 = vmul.f32 %v1092, %v322
      %v1094 = vrot.slane %v601, 3
      %s1095 = vtos %v1094
      %v1096 = vstv %s1095
      %v1098 = vmul.f32 %v590, %v1096
      %v1099 = vmul.f32 %v591, %v1096
      %v1100 = vmul.f32 %v592, %v1096
      %v1101 = vmul.f32 %v593, %v1096
      %v1102 = vmul.f32 %v594, %v1096
      %v1103 = vmul.f32 %v595, %v1096
      %v1104 = vmul.f32 %v596, %v1096
      %v1105 = vmul.f32 %v597, %v1096
      %v1106 = vrot.slane %v602, 3
      %s1107 = vtos %v1106
      %v1108 = vstv %s1107
      %v1110 = vadd.f32 %v1098, %v1108
      %v1111 = vadd.f32 %v1099, %v1108
      %v1112 = vadd.f32 %v1100, %v1108
      %v1113 = vadd.f32 %v1101, %v1108
      %v1114 = vadd.f32 %v1102, %v1108
      %v1115 = vadd.f32 %v1103, %v1108
      %v1116 = vadd.f32 %v1104, %v1108
      %v1117 = vadd.f32 %v1105, %v1108
      %v1118 = vmul.f32 %v1110, %v532
      %v1119 = vmul.f32 %v1111, %v539
      %v1120 = vmul.f32 %v1112, %v546
      %v1121 = vmul.f32 %v1113, %v553
      %v1122 = vmul.f32 %v1114, %v560
      %v1123 = vmul.f32 %v1115, %v567
      %v1124 = vmul.f32 %v1116, %v574
      %v1125 = vmul.f32 %v1117, %v581
      %1134 = vset.pattern.permute.xlu0 0
      %1135 = vperm.xlu0 %1134, %v1118
      %v1136 = vpop.permute.xlu0 %1135
      %1137 = vset.pattern.permute.xlu0 0
      %1138 = vperm.xlu0 %1137, %v1119
      %v1139 = vpop.permute.xlu0 %1138
      %1140 = vset.pattern.permute.xlu0 0
      %1141 = vperm.xlu0 %1140, %v1120
      %v1142 = vpop.permute.xlu0 %1141
      %1143 = vset.pattern.permute.xlu0 0
      %1144 = vperm.xlu0 %1143, %v1121
      %v1145 = vpop.permute.xlu0 %1144
      %1146 = vset.pattern.permute.xlu0 0
      %1147 = vperm.xlu0 %1146, %v1122
      %v1148 = vpop.permute.xlu0 %1147
      %1149 = vset.pattern.permute.xlu0 0
      %1150 = vperm.xlu0 %1149, %v1123
      %v1151 = vpop.permute.xlu0 %1150
      %1152 = vset.pattern.permute.xlu0 0
      %1153 = vperm.xlu0 %1152, %v1124
      %v1154 = vpop.permute.xlu0 %1153
      %1155 = vset.pattern.permute.xlu0 0
      %1156 = vperm.xlu0 %1155, %v1125
      %v1157 = vpop.permute.xlu0 %1156
      %v1158 = vperm.slane %v1136, %v694
      %v1159 = vperm.slane %v1139, %v694
      %v1160 = vperm.slane %v1142, %v694
      %v1161 = vperm.slane %v1145, %v694
      %v1162 = vperm.slane %v1148, %v694
      %v1163 = vperm.slane %v1151, %v694
      %v1164 = vperm.slane %v1154, %v694
      %v1165 = vperm.slane %v1157, %v694
      %v1166 = vsel %vm703, %v1159, %v1158
      %v1167 = vsel %vm705, %v1160, %v1166
      %v1168 = vsel %vm707, %v1161, %v1167
      %v1169 = vsel %vm709, %v1162, %v1168
      %v1170 = vsel %vm711, %v1163, %v1169
      %v1171 = vsel %vm713, %v1164, %v1170
      %v1172 = vsel %vm715, %v1165, %v1171
      %v1174 = vsub.f32 %v1093, %v1172
      %v1175 = vadd.f32 %v1174, %v719
      %v1176 = vsel %vm721, %v1175, -inf
      %1177 = vmax.xlane.f32.xlu0 %v1176
      %v1178 = vpop.xlane.xlu0 %1177
      %v1179 = vsub.f32 %v1175, %v1178
      %v1180 = vmul.f32 %v1179, 1.442695
      %v1181 = vpow.pop %v1180
      %v1182 = vmul.f32 %v1181, %v321
      %v1183 = vsel %vm721, %v1182, 0.0
      %1184 = vadd.xlane.f32.xlu0 %v1183
      %v1185 = vpop.xlane.xlu0 %1184
      %vm1186 = vcmp.eq.f32.partialorder %v1185, 0.0
      %v1187 = vsel %vm1186, 1, 0
      %v1188 = vcvt.s32.f32 %v1187
      %v1189 = vadd.f32 %v1185, %v1188
      %v1190 = vrcp.pop %v1189
      %v1191 = vmul.f32 %v1189, %v1190
      %v1192 = vsub.f32 1.0, %v1191
      %v1193 = vmul.f32 %v1190, %v1192
      %v1194 = vadd.f32 %v1190, %v1193
      %vm1195 = vweird.f32 %v1189
      %vm1196 = vweird.f32 %v1190
      %vm1197 = vmor %vm1195, %vm1196
      %v1198 = vsel %vm1197, %v1190, %v1194
      %v1199 = vand.u32 2147483647, %v1189
      %vm1200 = vcmp.eq.f32.partialorder %v1199, 8.507059e+37
      %v1201 = vand.u32 %v1189, 2147483648
      %v1202 = vor.u32 1.1754944e-38, %v1201
      %v1203 = vsel %vm1200, %v1202, %v1198
      %v1204 = vmul.f32 %v1182, %v1203
      %v1205 = vpack.c.bf16 %v1204, %v1204
      %v1207 = vsel %vm721, %v1205, 0
      %1209 = vmatpush.bf16.msra.mxu0 0
      %1210 = vmatpush.bf16.msra.mxu0 0
      %1211 = vmatpush.bf16.msra.mxu0 0
      %1212 = vmatpush.bf16.msra.mxu0 0
      %1213 = vmatpush.bf16.msra.mxu0 0
      %1214 = vmatpush.bf16.msra.mxu0 0
      %1215 = vmatpush.bf16.msra.mxu0 0
      %1216 = vmatpush.bf16.msra.mxu0 %v760
      %1217 = vmatmul.bf16.gmra.mxu0 %v1207
      %v1218 = vpop.f32.mrf.mxu0
      %v1219 = vadd.f32 0.0, %v1218
      %v1220 = vpop.f32.mrf.mxu0
      %1221 = vdwg.mxu0
      %1223 = vrot.lane.b32.xlu0 %v921, 16
      %v1224 = vpop.permute.xlu0 %1223
      %1227 = vrot.lane.b32.xlu0 %v1070, 32
      %v1228 = vpop.permute.xlu0 %1227
      %1231 = vrot.lane.b32.xlu0 %v1219, 48
      %v1232 = vpop.permute.xlu0 %1231
      %v1234 = vsel %vm607, %v772, %v1224
      %vm1235 = vcmask 261120
      %v1236 = vsel %vm1235, %v1234, %v1228
      %vm1237 = vcmask 392192
      %v1238 = vsel %vm1237, %v1236, %v1232
      %vm1239 = vcmask 523264
      %1240 = vst.msk [vmem:[%s311] sm:$0xff] %vm1239, %v1238
      %p1241 = scmp.lt.s32.totalorder %s21, 1
      %s1242 = scalar_select %p1241, %s21, 1
      %p1243 = scmp.lt.s32.totalorder %s22, 0
      %s1244 = scalar_select %p1243, %s22, 0
      %s1245 = sadd.s32 %s1244, %s1242
      %s1246 = smul.addr %s1245, 8
      %s1247 = scalar_lea.vmem %s6, %s1246
      // Predicated region
      $region45: #{xey_transformer_layer.10} parent=43 // pred_check
        %p1248 = pneg %p192
      $region46: #{xey_transformer_layer.10} parent=43 // pred_check_branch
        %1250 = sbr.rel (%p1248) target = $region48
      $region47: #{xey_transformer_layer.10} parent=43 // pred_region
        _
      $region48: #{xey_transformer_layer.10} parent=43 // pred_fallthru
        _
    $region44: #{xey_transformer_layer.10} parent=5 // pred_fallthru
      _
    %p1251 = scmp.le.s32.totalorder 2, %s12
    // Predicated region
    $region49: #{xey_transformer_layer.10} parent=5 // pred_check
      %p1252 = pneg %p1251
    $region50: #{xey_transformer_layer.10} parent=5 // pred_check_branch
      %1254 = sbr.rel (%p1252) target = $region52
    $region51: #{xey_transformer_layer.10} parent=5 // pred_region
      %s1255 = ssub.s32 %s12, 2
      // Predicated region
      $region53: #{xey_transformer_layer.10} parent=51 // pred_check
        %p1256 = pneg %p198
      $region54: #{xey_transformer_layer.10} parent=51 // pred_check_branch
        %1258 = sbr.rel (%p1256) target = $region56
      $region55: #{xey_transformer_layer.10} parent=51 // pred_region
        %p1259 = scmp.lt.s32.totalorder %s23, 1
        %s1260 = scalar_select %p1259, %s23, 1
        %p1261 = scmp.lt.s32.totalorder %s24, 0
        %s1262 = scalar_select %p1261, %s24, 0
        %s1263 = sadd.s32 %s1262, %s1260
        %s1264 = smul.addr %s1263, 8
        %s1265 = scalar_lea.vmem %s6, %s1264
      $region56: #{xey_transformer_layer.10} parent=51 // pred_fallthru
        _
    $region52: #{xey_transformer_layer.10} parent=5 // pred_fallthru
      _
  $region6: #{xey_transformer_layer.10} parent=0 // loop_footer
    %s16 = sadd.s32 1, %s12
  $region7: #{xey_transformer_layer.10} parent=0 // loop_footer_branch
    %11 = sbr.rel target = $region3
  $region8: #{xey_transformer_layer.10} parent=0 // loop_exit
    _

// kernel: xey_transformer_layer.9
$region0: #{xey_transformer_layer.9}
  #allocation0 [shape = 'u32[]', space=smem, size = 0x4, offset = 0x4, fixed_abs, tag = 'smem constant byte address 0x4 - core index']
  #allocation1 [shape = 'u32[72,128]{1,0:T(1,128)}', space=vmem, size = 0x9000, scoped, tag = 'internal scratch']
  %s0 = inlined_call_operand.vmem [shape: f32[16,64], index: 0, kind: input, shape index: {}]
  %s1 = inlined_call_operand.vmem [shape: f32[64,16], index: 1, kind: input, shape index: {}]
  %s2 = inlined_call_operand.vmem [shape: f32[1,16], index: 2, kind: input, shape index: {}]
  %s3 = inlined_call_operand.vmem [shape: f32[16,16], index: 3, kind: output, shape index: {}]
  %s4 = sld [smem:[#allocation0]]
  $region22: #{xey_transformer_layer.9} parent=0
    _
  %s6 = ssub.s32 1, %s4
  %s7 = scalar_select 0, %s6, %s4
  // Predicated region
  $region2: #{xey_transformer_layer.9} parent=0 // pred_check
    _
  $region3: #{xey_transformer_layer.9} parent=0 // pred_check_branch
    %9 = sbr.rel (0) target = $region5
  $region4: #{xey_transformer_layer.9} parent=0 // pred_region
    _
  $region5: #{xey_transformer_layer.9} parent=0 // pred_fallthru
    _
  // Predicated region
  $region6: #{xey_transformer_layer.9} parent=0 // pred_check
    _
  $region7: #{xey_transformer_layer.9} parent=0 // pred_check_branch
    %11 = sbr.rel (0) target = $region9
  $region8: #{xey_transformer_layer.9} parent=0 // pred_region
    _
  $region9: #{xey_transformer_layer.9} parent=0 // pred_fallthru
    _
  // Predicated region
  $region10: #{xey_transformer_layer.9} parent=0 // pred_check
    _
  $region11: #{xey_transformer_layer.9} parent=0 // pred_check_branch
    %13 = sbr.rel (0) target = $region13
  $region12: #{xey_transformer_layer.9} parent=0 // pred_region
    _
  $region13: #{xey_transformer_layer.9} parent=0 // pred_fallthru
    _
  %v15 = vld [vmem:[%s0] sm:$0xff]
  %v16 = vld [vmem:[%s0 + $0x8] sm:$0xff]
  %v17 = vld [vmem:[%s1] sm:$0xff]
  %v18 = vld [vmem:[%s1 + $0x8] sm:$0xff]
  %v19 = vld [vmem:[%s1 + $0x10] sm:$0xff]
  %v20 = vld [vmem:[%s1 + $0x18] sm:$0xff]
  %v21 = vld [vmem:[%s1 + $0x20] sm:$0xff]
  %v22 = vld [vmem:[%s1 + $0x28] sm:$0xff]
  %v23 = vld [vmem:[%s1 + $0x30] sm:$0xff]
  %v24 = vld [vmem:[%s1 + $0x38] sm:$0xff]
  %v25 = vpack.c.bf16 %v16, %v15
  %v26 = vpack.c.bf16 %v18, %v17
  %v27 = vpack.c.bf16 %v20, %v19
  %v28 = vpack.c.bf16 %v22, %v21
  %v29 = vpack.c.bf16 %v24, %v23
  %v30 = vld [vmem:[%s2] sm:$0x1]
  %v32 = vperm.slane %v30, 0
  %vm34 = vcmask 523264
  %v36 = vsel %vm34, %v25, 0
  %38 = vmatpush.bf16.msra.mxu0 0
  %39 = vmatpush.bf16.msra.mxu0 0
  %40 = vmatpush.bf16.msra.mxu0 0
  %41 = vmatpush.bf16.msra.mxu0 0
  %42 = vmatpush.bf16.msra.mxu0 %v29
  %43 = vmatpush.bf16.msra.mxu0 %v28
  %44 = vmatpush.bf16.msra.mxu0 %v27
  %45 = vmatpush.bf16.msra.mxu0 %v26
  %46 = vmatmul.bf16.gmra.mxu0 %v36
  %v47 = vpop.f32.mrf.mxu0
  %v48 = vadd.f32 %v32, %v47
  %v49 = vpop.f32.mrf.mxu0
  %v50 = vadd.f32 %v32, %v49
  %51 = vdwg.mxu0
  %vm52 = vcmask 130048
  %53 = vst.msk [vmem:[%s3] sm:$0xff] %vm52, %v48
  %54 = vst.msk [vmem:[%s3 + $0x8] sm:$0xff] %vm52, %v50
  // Predicated region
  $region14: #{xey_transformer_layer.9} parent=0 // pred_check
    _
  $region15: #{xey_transformer_layer.9} parent=0 // pred_check_branch
    %56 = sbr.rel (0) target = $region17
  $region16: #{xey_transformer_layer.9} parent=0 // pred_region
    _
  $region17: #{xey_transformer_layer.9} parent=0 // pred_fallthru
    _
  // Predicated region
  $region18: #{xey_transformer_layer.9} parent=0 // pred_check
    _
  $region19: #{xey_transformer_layer.9} parent=0 // pred_check_branch
    %58 = sbr.rel (0) target = $region21
  $region20: #{xey_transformer_layer.9} parent=0 // pred_region
    _
  $region21: #{xey_transformer_layer.9} parent=0 // pred_fallthru
    _

// kernel: xey_transformer_layer.11
$region0: #{xey_transformer_layer.11}
  #allocation0 [shape = 'u32[]', space=smem, size = 0x4, offset = 0x4, fixed_abs, tag = 'smem constant byte address 0x4 - core index']
  #allocation1 [shape = 'u32[72,128]{1,0:T(1,128)}', space=vmem, size = 0x9000, scoped, tag = 'internal scratch']
  %s0 = inlined_call_operand.vmem [shape: f32[16,16], index: 0, kind: input, shape index: {}]
  %s1 = inlined_call_operand.vmem [shape: f32[16,32], index: 1, kind: input, shape index: {}]
  %s2 = inlined_call_operand.vmem [shape: f32[1,32], index: 2, kind: input, shape index: {}]
  %s3 = inlined_call_operand.vmem [shape: f32[32,16], index: 3, kind: input, shape index: {}]
  %s4 = inlined_call_operand.vmem [shape: f32[1,16], index: 4, kind: input, shape index: {}]
  %s5 = inlined_call_operand.vmem [shape: f32[1,16], index: 5, kind: input, shape index: {}]
  %s6 = inlined_call_operand.vmem [shape: f32[1,16], index: 6, kind: input, shape index: {}]
  %s7 = inlined_call_operand.vmem [shape: f32[16,16], index: 7, kind: output, shape index: {}]
  %s8 = sld [smem:[#allocation0]]
  $region38: #{xey_transformer_layer.11} parent=0
    _
  %s10 = ssub.s32 1, %s8
  %s11 = scalar_select 0, %s10, %s8
  // Predicated region
  $region2: #{xey_transformer_layer.11} parent=0 // pred_check
    _
  $region3: #{xey_transformer_layer.11} parent=0 // pred_check_branch
    %13 = sbr.rel (0) target = $region5
  $region4: #{xey_transformer_layer.11} parent=0 // pred_region
    _
  $region5: #{xey_transformer_layer.11} parent=0 // pred_fallthru
    _
  // Predicated region
  $region6: #{xey_transformer_layer.11} parent=0 // pred_check
    _
  $region7: #{xey_transformer_layer.11} parent=0 // pred_check_branch
    %15 = sbr.rel (0) target = $region9
  $region8: #{xey_transformer_layer.11} parent=0 // pred_region
    _
  $region9: #{xey_transformer_layer.11} parent=0 // pred_fallthru
    _
  // Predicated region
  $region10: #{xey_transformer_layer.11} parent=0 // pred_check
    _
  $region11: #{xey_transformer_layer.11} parent=0 // pred_check_branch
    %17 = sbr.rel (0) target = $region13
  $region12: #{xey_transformer_layer.11} parent=0 // pred_region
    _
  $region13: #{xey_transformer_layer.11} parent=0 // pred_fallthru
    _
  // Predicated region
  $region14: #{xey_transformer_layer.11} parent=0 // pred_check
    _
  $region15: #{xey_transformer_layer.11} parent=0 // pred_check_branch
    %19 = sbr.rel (0) target = $region17
  $region16: #{xey_transformer_layer.11} parent=0 // pred_region
    _
  $region17: #{xey_transformer_layer.11} parent=0 // pred_fallthru
    _
  // Predicated region
  $region18: #{xey_transformer_layer.11} parent=0 // pred_check
    _
  $region19: #{xey_transformer_layer.11} parent=0 // pred_check_branch
    %21 = sbr.rel (0) target = $region21
  $region20: #{xey_transformer_layer.11} parent=0 // pred_region
    _
  $region21: #{xey_transformer_layer.11} parent=0 // pred_fallthru
    _
  // Predicated region
  $region22: #{xey_transformer_layer.11} parent=0 // pred_check
    _
  $region23: #{xey_transformer_layer.11} parent=0 // pred_check_branch
    %23 = sbr.rel (0) target = $region25
  $region24: #{xey_transformer_layer.11} parent=0 // pred_region
    _
  $region25: #{xey_transformer_layer.11} parent=0 // pred_fallthru
    _
  // Predicated region
  $region26: #{xey_transformer_layer.11} parent=0 // pred_check
    _
  $region27: #{xey_transformer_layer.11} parent=0 // pred_check_branch
    %25 = sbr.rel (0) target = $region29
  $region28: #{xey_transformer_layer.11} parent=0 // pred_region
    _
  $region29: #{xey_transformer_layer.11} parent=0 // pred_fallthru
    _
  %v27 = vld [vmem:[%s0] sm:$0xff]
  %v28 = vld [vmem:[%s0 + $0x8] sm:$0xff]
  %v29 = vld [vmem:[%s1] sm:$0xff]
  %v30 = vld [vmem:[%s1 + $0x8] sm:$0xff]
  %v31 = vpack.c.bf16 %v28, %v27
  %v32 = vpack.c.bf16 %v30, %v29
  %v33 = vld [vmem:[%s2] sm:$0x1]
  %v35 = vperm.slane %v33, 0
  %vm37 = vcmask 130048
  %v39 = vsel %vm37, %v31, 0
  %41 = vmatpush.bf16.msra.mxu0 0
  %42 = vmatpush.bf16.msra.mxu0 0
  %43 = vmatpush.bf16.msra.mxu0 0
  %44 = vmatpush.bf16.msra.mxu0 0
  %45 = vmatpush.bf16.msra.mxu0 0
  %46 = vmatpush.bf16.msra.mxu0 0
  %47 = vmatpush.bf16.msra.mxu0 0
  %48 = vmatpush.bf16.msra.mxu0 %v32
  %49 = vmatmul.bf16.gmra.mxu0 %v39
  %v50 = vpop.f32.mrf.mxu0
  %v51 = vadd.f32 %v35, %v50
  %v52 = vpop.f32.mrf.mxu0
  %v53 = vadd.f32 %v35, %v52
  %54 = vdwg.mxu0
  %v55 = vmax.f32 %v51, 0.0
  %v56 = vmax.f32 %v53, 0.0
  %v57 = vld [vmem:[%s3] sm:$0xff]
  %v58 = vld [vmem:[%s3 + $0x8] sm:$0xff]
  %v59 = vld [vmem:[%s3 + $0x10] sm:$0xff]
  %v60 = vld [vmem:[%s3 + $0x18] sm:$0xff]
  %v61 = vpack.c.bf16 %v56, %v55
  %v62 = vpack.c.bf16 %v58, %v57
  %v63 = vpack.c.bf16 %v60, %v59
  %v64 = vld [vmem:[%s4] sm:$0x1]
  %v66 = vperm.slane %v64, 0
  %vm68 = vcmask 261120
  %v70 = vsel %vm68, %v61, 0
  %72 = vmatpush.bf16.msra.mxu0 0
  %73 = vmatpush.bf16.msra.mxu0 0
  %74 = vmatpush.bf16.msra.mxu0 0
  %75 = vmatpush.bf16.msra.mxu0 0
  %76 = vmatpush.bf16.msra.mxu0 0
  %77 = vmatpush.bf16.msra.mxu0 0
  %78 = vmatpush.bf16.msra.mxu0 %v63
  %79 = vmatpush.bf16.msra.mxu0 %v62
  %80 = vmatmul.bf16.gmra.mxu0 %v70
  %v81 = vpop.f32.mrf.mxu0
  %v82 = vadd.f32 %v66, %v81
  %v83 = vpop.f32.mrf.mxu0
  %v84 = vadd.f32 %v66, %v83
  %85 = vdwg.mxu0
  %v86 = vadd.f32 %v27, %v82
  %v87 = vadd.f32 %v28, %v84
  %v88 = vsel %vm37, %v86, 0.0
  %89 = vadd.xlane.f32.xlu0 %v88
  %v90 = vpop.xlane.xlu0 %89
  %v91 = vsel %vm37, %v87, 0.0
  %92 = vadd.xlane.f32.xlu0 %v91
  %v93 = vpop.xlane.xlu0 %92
  %v94 = vrcp.pop 16.0
  %v95 = vmul.f32 16.0, %v94
  %v96 = vsub.f32 1.0, %v95
  %v97 = vmul.f32 %v94, %v96
  %v98 = vadd.f32 %v94, %v97
  %vm99 = vweird.f32 %v94
  %v100 = vsel %vm99, %v94, %v98
  %v101 = vmul.f32 %v90, %v100
  %v102 = vmul.f32 %v93, %v100
  %v103 = vsub.f32 %v86, %v101
  %v104 = vsub.f32 %v87, %v102
  %v105 = vmul.f32 %v103, %v103
  %v106 = vmul.f32 %v104, %v104
  %v107 = vsel %vm37, %v105, 0.0
  %108 = vadd.xlane.f32.xlu0 %v107
  %v109 = vpop.xlane.xlu0 %108
  %v110 = vsel %vm37, %v106, 0.0
  %111 = vadd.xlane.f32.xlu0 %v110
  %v112 = vpop.xlane.xlu0 %111
  %v113 = vmul.f32 %v109, %v100
  %v114 = vmul.f32 %v112, %v100
  %v115 = vadd.f32 %v113, 1e-05
  %v116 = vadd.f32 %v114, 1e-05
  %v117 = vrsqrt.pop %v115
  %v118 = vmul.f32 %v117, %v115
  %v119 = vmul.f32 %v118, %v117
  %v120 = vmul.f32 0.5, %v119
  %v121 = vsub.f32 1.5, %v120
  %v122 = vmul.f32 %v117, %v121
  %vm123 = vweird.f32 %v115
  %vm124 = vweird.f32 %v117
  %vm125 = vmor %vm123, %vm124
  %v126 = vsel %vm125, %v117, %v122
  %v127 = vrsqrt.pop %v116
  %v128 = vmul.f32 %v127, %v116
  %v129 = vmul.f32 %v128, %v127
  %v130 = vmul.f32 0.5, %v129
  %v131 = vsub.f32 1.5, %v130
  %v132 = vmul.f32 %v127, %v131
  %vm133 = vweird.f32 %v116
  %vm134 = vweird.f32 %v127
  %vm135 = vmor %vm133, %vm134
  %v136 = vsel %vm135, %v127, %v132
  %v137 = vmul.f32 %v103, %v126
  %v138 = vmul.f32 %v104, %v136
  %v139 = vld [vmem:[%s5] sm:$0x1]
  %v141 = vperm.slane %v139, 0
  %v143 = vmul.f32 %v137, %v141
  %v144 = vmul.f32 %v138, %v141
  %v145 = vld [vmem:[%s6] sm:$0x1]
  %v147 = vperm.slane %v145, 0
  %v149 = vadd.f32 %v143, %v147
  %v150 = vadd.f32 %v144, %v147
  %151 = vst.msk [vmem:[%s7] sm:$0xff] %vm37, %v149
  %152 = vst.msk [vmem:[%s7 + $0x8] sm:$0xff] %vm37, %v150
  // Predicated region
  $region30: #{xey_transformer_layer.11} parent=0 // pred_check
    _
  $region31: #{xey_transformer_layer.11} parent=0 // pred_check_branch
    %154 = sbr.rel (0) target = $region33
  $region32: #{xey_transformer_layer.11} parent=0 // pred_region
    _
  $region33: #{xey_transformer_layer.11} parent=0 // pred_fallthru
    _
  // Predicated region
  $region34: #{xey_transformer_layer.11} parent=0 // pred_check
    _
  $region35: #{xey_transformer_layer.11} parent=0 // pred_check_branch
    %156 = sbr.rel (0) target = $region37
  $region36: #{xey_transformer_layer.11} parent=0 // pred_region
    _
  $region37: #{xey_transformer_layer.11} parent=0 // pred_fallthru
    _

// kernel: xey_transformer_layer.8
$region0: #{xey_transformer_layer.8}
  #allocation0 [shape = 'u32[]', space=smem, size = 0x4, offset = 0x4, fixed_abs, tag = 'smem constant byte address 0x4 - core index']
  #allocation1 [shape = 'u32[72,128]{1,0:T(1,128)}', space=vmem, size = 0x9000, scoped, tag = 'internal scratch']
  %s0 = inlined_call_operand.vmem [shape: bf16[2,8,8,16], index: 0, kind: input, shape index: {}]
  %s1 = inlined_call_operand.vmem [shape: f32[2,8,72], index: 1, kind: input, shape index: {}]
  %s2 = inlined_call_operand.vmem [shape: f32[2,8,72], index: 2, kind: input, shape index: {}]
  %s3 = inlined_call_operand.vmem [shape: f32[2,2,8], index: 3, kind: input, shape index: {}]
  %s4 = inlined_call_operand.vmem [shape: f32[2,1,32], index: 4, kind: input, shape index: {}]
  %s5 = inlined_call_operand.vmem [shape: f32[16,16], index: 5, kind: input, shape index: {}]
  %s6 = inlined_call_operand.vmem [shape: f32[1,16], index: 6, kind: input, shape index: {}]
  %s7 = inlined_call_operand.vmem [shape: f32[8,16], index: 7, kind: input, shape index: {}]
  %s8 = inlined_call_operand.vmem [shape: f32[8,16], index: 8, kind: input, shape index: {}]
  %s9 = inlined_call_operand.vmem [shape: f32[16,36], index: 9, kind: input, shape index: {}]
  %s10 = inlined_call_operand.vmem [shape: f32[1,36], index: 10, kind: input, shape index: {}]
  %s11 = inlined_call_operand.vmem [shape: f32[16,36], index: 11, kind: input, shape index: {}]
  %s12 = inlined_call_operand.vmem [shape: f32[1,36], index: 12, kind: input, shape index: {}]
  %s13 = inlined_call_operand.vmem [shape: f32[16,20], index: 13, kind: input, shape index: {}]
  %s14 = inlined_call_operand.vmem [shape: f32[1,20], index: 14, kind: input, shape index: {}]
  %s15 = inlined_call_operand.vmem [shape: f32[4,16], index: 15, kind: input, shape index: {}]
  %s16 = inlined_call_operand.vmem [shape: f32[4,16], index: 16, kind: input, shape index: {}]
  %s17 = inlined_call_operand.vmem [shape: f32[16,32], index: 17, kind: input, shape index: {}]
  %s18 = inlined_call_operand.vmem [shape: f32[1,32], index: 18, kind: input, shape index: {}]
  %s19 = inlined_call_operand.vmem [shape: f32[1,16], index: 19, kind: input, shape index: {}]
  %s20 = inlined_call_operand.vmem [shape: f32[1,16], index: 20, kind: input, shape index: {}]
  %s21 = inlined_call_operand.vmem [shape: f32[16,32], index: 21, kind: input, shape index: {}]
  %s22 = inlined_call_operand.vmem [shape: f32[1,32], index: 22, kind: input, shape index: {}]
  %s23 = inlined_call_operand.vmem [shape: f32[32,16], index: 23, kind: input, shape index: {}]
  %s24 = inlined_call_operand.vmem [shape: f32[1,16], index: 24, kind: input, shape index: {}]
  %s25 = inlined_call_operand.vmem [shape: f32[1,16], index: 25, kind: input, shape index: {}]
  %s26 = inlined_call_operand.vmem [shape: f32[1,16], index: 26, kind: input, shape index: {}]
  %s27 = inlined_call_operand.vmem [shape: f32[2,8,8,16], index: 27, kind: output, shape index: {0}]
  %s28 = inlined_call_operand.vmem [shape: f32[2,8,512], index: 28, kind: output, shape index: {1}]
  %29 = xla_tuple %s27, %s28
  %s30 = sld [smem:[#allocation0]]
  $region149: #{xey_transformer_layer.8} parent=0
    _
  %s32 = ssub.s32 1, %s30
  %s33 = scalar_select 0, %s32, %s30
  loop: start=0, step=1, limit=4
  $region2: #{xey_transformer_layer.8} parent=0 // loop_pre_header
    _
  $region3: #{xey_transformer_layer.8} parent=0 // loop_header
    %s35 = sphi 0, %s39
    %p36 = scmp.ge.s32.totalorder %s35, 4
    %s42 = sphi 0, %s54
    %s43 = sphi 0, %s50
    %s44 = sphi 0, %s42
    %s45 = sphi 0, %s43
    %s46 = sphi 0, %s44
    %s47 = sphi 0, %s45
    %s59 = sphi 0, %s61
    %s62 = sphi 0, %s59
    %s63 = sphi 0, %s62
    %s79 = sphi 0, %s63
    %s87 = sphi 0, %s89
    %s90 = sphi 0, %s87
    %s91 = sphi 0, %s90
    %s107 = sphi 0, %s91
    %s113 = sphi 0, %s115
    %s116 = sphi 0, %s113
    %s117 = sphi 0, %s116
    %s133 = sphi 0, %s117
    %s139 = sphi 0, %s141
    %s142 = sphi 0, %s139
    %s143 = sphi 0, %s142
    %s159 = sphi 0, %s143
    %s165 = sphi 0, %s167
    %s168 = sphi 0, %s165
    %s169 = sphi 0, %s168
    %s185 = sphi 0, %s169
    %s189 = sphi 0, %s189
    %s191 = sphi 0, %s189
    %s192 = sphi 0, %s191
    %s206 = sphi 0, %s192
    %s210 = sphi 0, %s210
    %s212 = sphi 0, %s210
    %s213 = sphi 0, %s212
    %s227 = sphi 0, %s213
    %s231 = sphi 0, %s231
    %s233 = sphi 0, %s231
    %s234 = sphi 0, %s233
    %s248 = sphi 0, %s234
    %s252 = sphi 0, %s252
    %s254 = sphi 0, %s252
    %s255 = sphi 0, %s254
    %s269 = sphi 0, %s255
    %s273 = sphi 0, %s273
    %s275 = sphi 0, %s273
    %s276 = sphi 0, %s275
    %s290 = sphi 0, %s276
    %s294 = sphi 0, %s294
    %s296 = sphi 0, %s294
    %s297 = sphi 0, %s296
    %s311 = sphi 0, %s297
    %s315 = sphi 0, %s315
    %s317 = sphi 0, %s315
    %s318 = sphi 0, %s317
    %s332 = sphi 0, %s318
    %s336 = sphi 0, %s336
    %s338 = sphi 0, %s336
    %s339 = sphi 0, %s338
    %s353 = sphi 0, %s339
    %s357 = sphi 0, %s357
    %s359 = sphi 0, %s357
    %s360 = sphi 0, %s359
    %s374 = sphi 0, %s360
    %s378 = sphi 0, %s378
    %s380 = sphi 0, %s378
    %s381 = sphi 0, %s380
    %s395 = sphi 0, %s381
    %s399 = sphi 0, %s399
    %s401 = sphi 0, %s399
    %s402 = sphi 0, %s401
    %s416 = sphi 0, %s402
    %s420 = sphi 0, %s420
    %s422 = sphi 0, %s420
    %s423 = sphi 0, %s422
    %s437 = sphi 0, %s423
    %s441 = sphi 0, %s441
    %s443 = sphi 0, %s441
    %s444 = sphi 0, %s443
    %s458 = sphi 0, %s444
    %s462 = sphi 0, %s462
    %s464 = sphi 0, %s462
    %s465 = sphi 0, %s464
    %s479 = sphi 0, %s465
    %s483 = sphi 0, %s483
    %s485 = sphi 0, %s483
    %s486 = sphi 0, %s485
    %s500 = sphi 0, %s486
    %s504 = sphi 0, %s504
    %s506 = sphi 0, %s504
    %s507 = sphi 0, %s506
    %s521 = sphi 0, %s507
    %s525 = sphi 0, %s525
    %s527 = sphi 0, %s525
    %s528 = sphi 0, %s527
    %s542 = sphi 0, %s528
    %s546 = sphi 0, %s546
    %s548 = sphi 0, %s546
    %s549 = sphi 0, %s548
    %s563 = sphi 0, %s549
    %s567 = sphi 0, %s567
    %s569 = sphi 0, %s567
    %s570 = sphi 0, %s569
    %s584 = sphi 0, %s570
    %s588 = sphi 0, %s588
    %s590 = sphi 0, %s588
    %s591 = sphi 0, %s590
    %s605 = sphi 0, %s591
    %s609 = sphi 0, %s609
    %s611 = sphi 0, %s609
    %s612 = sphi 0, %s611
    %s626 = sphi 0, %s612
    %s630 = sphi 0, %s630
    %s632 = sphi 0, %s630
    %s633 = sphi 0, %s632
    %s647 = sphi 0, %s633
    %s655 = sphi 0, %s657
    %s658 = sphi 0, %s655
    %s659 = sphi 0, %s658
    %s675 = sphi 0, %s659
    %s683 = sphi 0, %s685
    %s686 = sphi 0, %s683
    %s687 = sphi 0, %s686
    %s703 = sphi 0, %s687
  $region4: #{xey_transformer_layer.8} parent=0 // loop_header_branch
    %38 = sbr.rel (%p36) target = $region8
  $region5: #{xey_transformer_layer.8} parent=0 // loop_body
    %s40 = ssub.s32 %s35, 1
    %s41 = ssub.s32 %s35, 2
    %s48 = sadd.s32 1, %s43
    %p49 = scmp.ge.s32.totalorder %s48, 1
    %s50 = scalar_select %p49, 0, %s48
    %s51 = sadd.s32 1, %s42
    %s52 = scalar_select %p49, %s51, %s42
    %p53 = scmp.ge.s32.totalorder %s52, 2
    %s54 = scalar_select %p53, 0, %s52
    %s55 = ssub.s32 %s42, %s54
    %s56 = ssub.s32 %s43, %s50
    %s57 = sor.u32 %s55, %s56
    %p58 = scmp.eq.s32.totalorder %s57, 0
    %s60 = sadd.s32 %s59, 1
    %s61 = scalar_select %p58, %s59, %s60
    %p64 = pneg %p58
    %p65 = scmp.eq.s32.totalorder %s35, 1
    %p66 = por %p64, %p65
    %p67 = scmp.ne.s32.totalorder %s59, %s62
    %p68 = scmp.eq.s32.totalorder %s35, 0
    %p69 = por %p67, %p68
    %p70 = scmp.ne.s32.totalorder %s59, %s62
    %p71 = scmp.eq.s32.totalorder %s40, 1
    %p72 = por %p70, %p71
    %p73 = scmp.ne.s32.totalorder %s62, %s63
    %p74 = scmp.eq.s32.totalorder %s40, 0
    %p75 = por %p73, %p74
    %p76 = scmp.ne.s32.totalorder %s62, %s63
    %p77 = scmp.eq.s32.totalorder %s41, 1
    %p78 = por %p76, %p77
    %p80 = scmp.ne.s32.totalorder %s63, %s79
    %p81 = scmp.eq.s32.totalorder %s41, 0
    %p82 = por %p80, %p81
    %s83 = ssub.s32 %s42, %s54
    %s84 = ssub.s32 %s43, %s50
    %s85 = sor.u32 %s83, %s84
    %p86 = scmp.eq.s32.totalorder %s85, 0
    %s88 = sadd.s32 %s87, 1
    %s89 = scalar_select %p86, %s87, %s88
    %p92 = pneg %p86
    %p93 = scmp.eq.s32.totalorder %s35, 1
    %p94 = por %p92, %p93
    %p95 = scmp.ne.s32.totalorder %s87, %s90
    %p96 = scmp.eq.s32.totalorder %s35, 0
    %p97 = por %p95, %p96
    %p98 = scmp.ne.s32.totalorder %s87, %s90
    %p99 = scmp.eq.s32.totalorder %s40, 1
    %p100 = por %p98, %p99
    %p101 = scmp.ne.s32.totalorder %s90, %s91
    %p102 = scmp.eq.s32.totalorder %s40, 0
    %p103 = por %p101, %p102
    %p104 = scmp.ne.s32.totalorder %s90, %s91
    %p105 = scmp.eq.s32.totalorder %s41, 1
    %p106 = por %p104, %p105
    %p108 = scmp.ne.s32.totalorder %s91, %s107
    %p109 = scmp.eq.s32.totalorder %s41, 0
    %p110 = por %p108, %p109
    %s111 = ssub.s32 %s42, %s54
    %p112 = scmp.eq.s32.totalorder %s111, 0
    %s114 = sadd.s32 %s113, 1
    %s115 = scalar_select %p112, %s113, %s114
    %p118 = pneg %p112
    %p119 = scmp.eq.s32.totalorder %s35, 1
    %p120 = por %p118, %p119
    %p121 = scmp.ne.s32.totalorder %s113, %s116
    %p122 = scmp.eq.s32.totalorder %s35, 0
    %p123 = por %p121, %p122
    %p124 = scmp.ne.s32.totalorder %s113, %s116
    %p125 = scmp.eq.s32.totalorder %s40, 1
    %p126 = por %p124, %p125
    %p127 = scmp.ne.s32.totalorder %s116, %s117
    %p128 = scmp.eq.s32.totalorder %s40, 0
    %p129 = por %p127, %p128
    %p130 = scmp.ne.s32.totalorder %s116, %s117
    %p131 = scmp.eq.s32.totalorder %s41, 1
    %p132 = por %p130, %p131
    %p134 = scmp.ne.s32.totalorder %s117, %s133
    %p135 = scmp.eq.s32.totalorder %s41, 0
    %p136 = por %p134, %p135
    %s137 = ssub.s32 %s42, %s54
    %p138 = scmp.eq.s32.totalorder %s137, 0
    %s140 = sadd.s32 %s139, 1
    %s141 = scalar_select %p138, %s139, %s140
    %p144 = pneg %p138
    %p145 = scmp.eq.s32.totalorder %s35, 1
    %p146 = por %p144, %p145
    %p147 = scmp.ne.s32.totalorder %s139, %s142
    %p148 = scmp.eq.s32.totalorder %s35, 0
    %p149 = por %p147, %p148
    %p150 = scmp.ne.s32.totalorder %s139, %s142
    %p151 = scmp.eq.s32.totalorder %s40, 1
    %p152 = por %p150, %p151
    %p153 = scmp.ne.s32.totalorder %s142, %s143
    %p154 = scmp.eq.s32.totalorder %s40, 0
    %p155 = por %p153, %p154
    %p156 = scmp.ne.s32.totalorder %s142, %s143
    %p157 = scmp.eq.s32.totalorder %s41, 1
    %p158 = por %p156, %p157
    %p160 = scmp.ne.s32.totalorder %s143, %s159
    %p161 = scmp.eq.s32.totalorder %s41, 0
    %p162 = por %p160, %p161
    %s163 = ssub.s32 %s42, %s54
    %p164 = scmp.eq.s32.totalorder %s163, 0
    %s166 = sadd.s32 %s165, 1
    %s167 = scalar_select %p164, %s165, %s166
    %p170 = pneg %p164
    %p171 = scmp.eq.s32.totalorder %s35, 1
    %p172 = por %p170, %p171
    %p173 = scmp.ne.s32.totalorder %s165, %s168
    %p174 = scmp.eq.s32.totalorder %s35, 0
    %p175 = por %p173, %p174
    %p176 = scmp.ne.s32.totalorder %s165, %s168
    %p177 = scmp.eq.s32.totalorder %s40, 1
    %p178 = por %p176, %p177
    %p179 = scmp.ne.s32.totalorder %s168, %s169
    %p180 = scmp.eq.s32.totalorder %s40, 0
    %p181 = por %p179, %p180
    %p182 = scmp.ne.s32.totalorder %s168, %s169
    %p183 = scmp.eq.s32.totalorder %s41, 1
    %p184 = por %p182, %p183
    %p186 = scmp.ne.s32.totalorder %s169, %s185
    %p187 = scmp.eq.s32.totalorder %s41, 0
    %p188 = por %p186, %p187
    %s190 = sadd.s32 %s189, 1
    %p193 = scmp.eq.s32.totalorder %s35, 1
    %p194 = scmp.ne.s32.totalorder %s189, %s191
    %p195 = scmp.eq.s32.totalorder %s35, 0
    %p196 = por %p194, %p195
    %p197 = scmp.ne.s32.totalorder %s189, %s191
    %p198 = scmp.eq.s32.totalorder %s40, 1
    %p199 = por %p197, %p198
    %p200 = scmp.ne.s32.totalorder %s191, %s192
    %p201 = scmp.eq.s32.totalorder %s40, 0
    %p202 = por %p200, %p201
    %p203 = scmp.ne.s32.totalorder %s191, %s192
    %p204 = scmp.eq.s32.totalorder %s41, 1
    %p205 = por %p203, %p204
    %p207 = scmp.ne.s32.totalorder %s192, %s206
    %p208 = scmp.eq.s32.totalorder %s41, 0
    %p209 = por %p207, %p208
    %s211 = sadd.s32 %s210, 1
    %p214 = scmp.eq.s32.totalorder %s35, 1
    %p215 = scmp.ne.s32.totalorder %s210, %s212
    %p216 = scmp.eq.s32.totalorder %s35, 0
    %p217 = por %p215, %p216
    %p218 = scmp.ne.s32.totalorder %s210, %s212
    %p219 = scmp.eq.s32.totalorder %s40, 1
    %p220 = por %p218, %p219
    %p221 = scmp.ne.s32.totalorder %s212, %s213
    %p222 = scmp.eq.s32.totalorder %s40, 0
    %p223 = por %p221, %p222
    %p224 = scmp.ne.s32.totalorder %s212, %s213
    %p225 = scmp.eq.s32.totalorder %s41, 1
    %p226 = por %p224, %p225
    %p228 = scmp.ne.s32.totalorder %s213, %s227
    %p229 = scmp.eq.s32.totalorder %s41, 0
    %p230 = por %p228, %p229
    %s232 = sadd.s32 %s231, 1
    %p235 = scmp.eq.s32.totalorder %s35, 1
    %p236 = scmp.ne.s32.totalorder %s231, %s233
    %p237 = scmp.eq.s32.totalorder %s35, 0
    %p238 = por %p236, %p237
    %p239 = scmp.ne.s32.totalorder %s231, %s233
    %p240 = scmp.eq.s32.totalorder %s40, 1
    %p241 = por %p239, %p240
    %p242 = scmp.ne.s32.totalorder %s233, %s234
    %p243 = scmp.eq.s32.totalorder %s40, 0
    %p244 = por %p242, %p243
    %p245 = scmp.ne.s32.totalorder %s233, %s234
    %p246 = scmp.eq.s32.totalorder %s41, 1
    %p247 = por %p245, %p246
    %p249 = scmp.ne.s32.totalorder %s234, %s248
    %p250 = scmp.eq.s32.totalorder %s41, 0
    %p251 = por %p249, %p250
    %s253 = sadd.s32 %s252, 1
    %p256 = scmp.eq.s32.totalorder %s35, 1
    %p257 = scmp.ne.s32.totalorder %s252, %s254
    %p258 = scmp.eq.s32.totalorder %s35, 0
    %p259 = por %p257, %p258
    %p260 = scmp.ne.s32.totalorder %s252, %s254
    %p261 = scmp.eq.s32.totalorder %s40, 1
    %p262 = por %p260, %p261
    %p263 = scmp.ne.s32.totalorder %s254, %s255
    %p264 = scmp.eq.s32.totalorder %s40, 0
    %p265 = por %p263, %p264
    %p266 = scmp.ne.s32.totalorder %s254, %s255
    %p267 = scmp.eq.s32.totalorder %s41, 1
    %p268 = por %p266, %p267
    %p270 = scmp.ne.s32.totalorder %s255, %s269
    %p271 = scmp.eq.s32.totalorder %s41, 0
    %p272 = por %p270, %p271
    %s274 = sadd.s32 %s273, 1
    %p277 = scmp.eq.s32.totalorder %s35, 1
    %p278 = scmp.ne.s32.totalorder %s273, %s275
    %p279 = scmp.eq.s32.totalorder %s35, 0
    %p280 = por %p278, %p279
    %p281 = scmp.ne.s32.totalorder %s273, %s275
    %p282 = scmp.eq.s32.totalorder %s40, 1
    %p283 = por %p281, %p282
    %p284 = scmp.ne.s32.totalorder %s275, %s276
    %p285 = scmp.eq.s32.totalorder %s40, 0
    %p286 = por %p284, %p285
    %p287 = scmp.ne.s32.totalorder %s275, %s276
    %p288 = scmp.eq.s32.totalorder %s41, 1
    %p289 = por %p287, %p288
    %p291 = scmp.ne.s32.totalorder %s276, %s290
    %p292 = scmp.eq.s32.totalorder %s41, 0
    %p293 = por %p291, %p292
    %s295 = sadd.s32 %s294, 1
    %p298 = scmp.eq.s32.totalorder %s35, 1
    %p299 = scmp.ne.s32.totalorder %s294, %s296
    %p300 = scmp.eq.s32.totalorder %s35, 0
    %p301 = por %p299, %p300
    %p302 = scmp.ne.s32.totalorder %s294, %s296
    %p303 = scmp.eq.s32.totalorder %s40, 1
    %p304 = por %p302, %p303
    %p305 = scmp.ne.s32.totalorder %s296, %s297
    %p306 = scmp.eq.s32.totalorder %s40, 0
    %p307 = por %p305, %p306
    %p308 = scmp.ne.s32.totalorder %s296, %s297
    %p309 = scmp.eq.s32.totalorder %s41, 1
    %p310 = por %p308, %p309
    %p312 = scmp.ne.s32.totalorder %s297, %s311
    %p313 = scmp.eq.s32.totalorder %s41, 0
    %p314 = por %p312, %p313
    %s316 = sadd.s32 %s315, 1
    %p319 = scmp.eq.s32.totalorder %s35, 1
    %p320 = scmp.ne.s32.totalorder %s315, %s317
    %p321 = scmp.eq.s32.totalorder %s35, 0
    %p322 = por %p320, %p321
    %p323 = scmp.ne.s32.totalorder %s315, %s317
    %p324 = scmp.eq.s32.totalorder %s40, 1
    %p325 = por %p323, %p324
    %p326 = scmp.ne.s32.totalorder %s317, %s318
    %p327 = scmp.eq.s32.totalorder %s40, 0
    %p328 = por %p326, %p327
    %p329 = scmp.ne.s32.totalorder %s317, %s318
    %p330 = scmp.eq.s32.totalorder %s41, 1
    %p331 = por %p329, %p330
    %p333 = scmp.ne.s32.totalorder %s318, %s332
    %p334 = scmp.eq.s32.totalorder %s41, 0
    %p335 = por %p333, %p334
    %s337 = sadd.s32 %s336, 1
    %p340 = scmp.eq.s32.totalorder %s35, 1
    %p341 = scmp.ne.s32.totalorder %s336, %s338
    %p342 = scmp.eq.s32.totalorder %s35, 0
    %p343 = por %p341, %p342
    %p344 = scmp.ne.s32.totalorder %s336, %s338
    %p345 = scmp.eq.s32.totalorder %s40, 1
    %p346 = por %p344, %p345
    %p347 = scmp.ne.s32.totalorder %s338, %s339
    %p348 = scmp.eq.s32.totalorder %s40, 0
    %p349 = por %p347, %p348
    %p350 = scmp.ne.s32.totalorder %s338, %s339
    %p351 = scmp.eq.s32.totalorder %s41, 1
    %p352 = por %p350, %p351
    %p354 = scmp.ne.s32.totalorder %s339, %s353
    %p355 = scmp.eq.s32.totalorder %s41, 0
    %p356 = por %p354, %p355
    %s358 = sadd.s32 %s357, 1
    %p361 = scmp.eq.s32.totalorder %s35, 1
    %p362 = scmp.ne.s32.totalorder %s357, %s359
    %p363 = scmp.eq.s32.totalorder %s35, 0
    %p364 = por %p362, %p363
    %p365 = scmp.ne.s32.totalorder %s357, %s359
    %p366 = scmp.eq.s32.totalorder %s40, 1
    %p367 = por %p365, %p366
    %p368 = scmp.ne.s32.totalorder %s359, %s360
    %p369 = scmp.eq.s32.totalorder %s40, 0
    %p370 = por %p368, %p369
    %p371 = scmp.ne.s32.totalorder %s359, %s360
    %p372 = scmp.eq.s32.totalorder %s41, 1
    %p373 = por %p371, %p372
    %p375 = scmp.ne.s32.totalorder %s360, %s374
    %p376 = scmp.eq.s32.totalorder %s41, 0
    %p377 = por %p375, %p376
    %s379 = sadd.s32 %s378, 1
    %p382 = scmp.eq.s32.totalorder %s35, 1
    %p383 = scmp.ne.s32.totalorder %s378, %s380
    %p384 = scmp.eq.s32.totalorder %s35, 0
    %p385 = por %p383, %p384
    %p386 = scmp.ne.s32.totalorder %s378, %s380
    %p387 = scmp.eq.s32.totalorder %s40, 1
    %p388 = por %p386, %p387
    %p389 = scmp.ne.s32.totalorder %s380, %s381
    %p390 = scmp.eq.s32.totalorder %s40, 0
    %p391 = por %p389, %p390
    %p392 = scmp.ne.s32.totalorder %s380, %s381
    %p393 = scmp.eq.s32.totalorder %s41, 1
    %p394 = por %p392, %p393
    %p396 = scmp.ne.s32.totalorder %s381, %s395
    %p397 = scmp.eq.s32.totalorder %s41, 0
    %p398 = por %p396, %p397
    %s400 = sadd.s32 %s399, 1
    %p403 = scmp.eq.s32.totalorder %s35, 1
    %p404 = scmp.ne.s32.totalorder %s399, %s401
    %p405 = scmp.eq.s32.totalorder %s35, 0
    %p406 = por %p404, %p405
    %p407 = scmp.ne.s32.totalorder %s399, %s401
    %p408 = scmp.eq.s32.totalorder %s40, 1
    %p409 = por %p407, %p408
    %p410 = scmp.ne.s32.totalorder %s401, %s402
    %p411 = scmp.eq.s32.totalorder %s40, 0
    %p412 = por %p410, %p411
    %p413 = scmp.ne.s32.totalorder %s401, %s402
    %p414 = scmp.eq.s32.totalorder %s41, 1
    %p415 = por %p413, %p414
    %p417 = scmp.ne.s32.totalorder %s402, %s416
    %p418 = scmp.eq.s32.totalorder %s41, 0
    %p419 = por %p417, %p418
    %s421 = sadd.s32 %s420, 1
    %p424 = scmp.eq.s32.totalorder %s35, 1
    %p425 = scmp.ne.s32.totalorder %s420, %s422
    %p426 = scmp.eq.s32.totalorder %s35, 0
    %p427 = por %p425, %p426
    %p428 = scmp.ne.s32.totalorder %s420, %s422
    %p429 = scmp.eq.s32.totalorder %s40, 1
    %p430 = por %p428, %p429
    %p431 = scmp.ne.s32.totalorder %s422, %s423
    %p432 = scmp.eq.s32.totalorder %s40, 0
    %p433 = por %p431, %p432
    %p434 = scmp.ne.s32.totalorder %s422, %s423
    %p435 = scmp.eq.s32.totalorder %s41, 1
    %p436 = por %p434, %p435
    %p438 = scmp.ne.s32.totalorder %s423, %s437
    %p439 = scmp.eq.s32.totalorder %s41, 0
    %p440 = por %p438, %p439
    %s442 = sadd.s32 %s441, 1
    %p445 = scmp.eq.s32.totalorder %s35, 1
    %p446 = scmp.ne.s32.totalorder %s441, %s443
    %p447 = scmp.eq.s32.totalorder %s35, 0
    %p448 = por %p446, %p447
    %p449 = scmp.ne.s32.totalorder %s441, %s443
    %p450 = scmp.eq.s32.totalorder %s40, 1
    %p451 = por %p449, %p450
    %p452 = scmp.ne.s32.totalorder %s443, %s444
    %p453 = scmp.eq.s32.totalorder %s40, 0
    %p454 = por %p452, %p453
    %p455 = scmp.ne.s32.totalorder %s443, %s444
    %p456 = scmp.eq.s32.totalorder %s41, 1
    %p457 = por %p455, %p456
    %p459 = scmp.ne.s32.totalorder %s444, %s458
    %p460 = scmp.eq.s32.totalorder %s41, 0
    %p461 = por %p459, %p460
    %s463 = sadd.s32 %s462, 1
    %p466 = scmp.eq.s32.totalorder %s35, 1
    %p467 = scmp.ne.s32.totalorder %s462, %s464
    %p468 = scmp.eq.s32.totalorder %s35, 0
    %p469 = por %p467, %p468
    %p470 = scmp.ne.s32.totalorder %s462, %s464
    %p471 = scmp.eq.s32.totalorder %s40, 1
    %p472 = por %p470, %p471
    %p473 = scmp.ne.s32.totalorder %s464, %s465
    %p474 = scmp.eq.s32.totalorder %s40, 0
    %p475 = por %p473, %p474
    %p476 = scmp.ne.s32.totalorder %s464, %s465
    %p477 = scmp.eq.s32.totalorder %s41, 1
    %p478 = por %p476, %p477
    %p480 = scmp.ne.s32.totalorder %s465, %s479
    %p481 = scmp.eq.s32.totalorder %s41, 0
    %p482 = por %p480, %p481
    %s484 = sadd.s32 %s483, 1
    %p487 = scmp.eq.s32.totalorder %s35, 1
    %p488 = scmp.ne.s32.totalorder %s483, %s485
    %p489 = scmp.eq.s32.totalorder %s35, 0
    %p490 = por %p488, %p489
    %p491 = scmp.ne.s32.totalorder %s483, %s485
    %p492 = scmp.eq.s32.totalorder %s40, 1
    %p493 = por %p491, %p492
    %p494 = scmp.ne.s32.totalorder %s485, %s486
    %p495 = scmp.eq.s32.totalorder %s40, 0
    %p496 = por %p494, %p495
    %p497 = scmp.ne.s32.totalorder %s485, %s486
    %p498 = scmp.eq.s32.totalorder %s41, 1
    %p499 = por %p497, %p498
    %p501 = scmp.ne.s32.totalorder %s486, %s500
    %p502 = scmp.eq.s32.totalorder %s41, 0
    %p503 = por %p501, %p502
    %s505 = sadd.s32 %s504, 1
    %p508 = scmp.eq.s32.totalorder %s35, 1
    %p509 = scmp.ne.s32.totalorder %s504, %s506
    %p510 = scmp.eq.s32.totalorder %s35, 0
    %p511 = por %p509, %p510
    %p512 = scmp.ne.s32.totalorder %s504, %s506
    %p513 = scmp.eq.s32.totalorder %s40, 1
    %p514 = por %p512, %p513
    %p515 = scmp.ne.s32.totalorder %s506, %s507
    %p516 = scmp.eq.s32.totalorder %s40, 0
    %p517 = por %p515, %p516
    %p518 = scmp.ne.s32.totalorder %s506, %s507
    %p519 = scmp.eq.s32.totalorder %s41, 1
    %p520 = por %p518, %p519
    %p522 = scmp.ne.s32.totalorder %s507, %s521
    %p523 = scmp.eq.s32.totalorder %s41, 0
    %p524 = por %p522, %p523
    %s526 = sadd.s32 %s525, 1
    %p529 = scmp.eq.s32.totalorder %s35, 1
    %p530 = scmp.ne.s32.totalorder %s525, %s527
    %p531 = scmp.eq.s32.totalorder %s35, 0
    %p532 = por %p530, %p531
    %p533 = scmp.ne.s32.totalorder %s525, %s527
    %p534 = scmp.eq.s32.totalorder %s40, 1
    %p535 = por %p533, %p534
    %p536 = scmp.ne.s32.totalorder %s527, %s528
    %p537 = scmp.eq.s32.totalorder %s40, 0
    %p538 = por %p536, %p537
    %p539 = scmp.ne.s32.totalorder %s527, %s528
    %p540 = scmp.eq.s32.totalorder %s41, 1
    %p541 = por %p539, %p540
    %p543 = scmp.ne.s32.totalorder %s528, %s542
    %p544 = scmp.eq.s32.totalorder %s41, 0
    %p545 = por %p543, %p544
    %s547 = sadd.s32 %s546, 1
    %p550 = scmp.eq.s32.totalorder %s35, 1
    %p551 = scmp.ne.s32.totalorder %s546, %s548
    %p552 = scmp.eq.s32.totalorder %s35, 0
    %p553 = por %p551, %p552
    %p554 = scmp.ne.s32.totalorder %s546, %s548
    %p555 = scmp.eq.s32.totalorder %s40, 1
    %p556 = por %p554, %p555
    %p557 = scmp.ne.s32.totalorder %s548, %s549
    %p558 = scmp.eq.s32.totalorder %s40, 0
    %p559 = por %p557, %p558
    %p560 = scmp.ne.s32.totalorder %s548, %s549
    %p561 = scmp.eq.s32.totalorder %s41, 1
    %p562 = por %p560, %p561
    %p564 = scmp.ne.s32.totalorder %s549, %s563
    %p565 = scmp.eq.s32.totalorder %s41, 0
    %p566 = por %p564, %p565
    %s568 = sadd.s32 %s567, 1
    %p571 = scmp.eq.s32.totalorder %s35, 1
    %p572 = scmp.ne.s32.totalorder %s567, %s569
    %p573 = scmp.eq.s32.totalorder %s35, 0
    %p574 = por %p572, %p573
    %p575 = scmp.ne.s32.totalorder %s567, %s569
    %p576 = scmp.eq.s32.totalorder %s40, 1
    %p577 = por %p575, %p576
    %p578 = scmp.ne.s32.totalorder %s569, %s570
    %p579 = scmp.eq.s32.totalorder %s40, 0
    %p580 = por %p578, %p579
    %p581 = scmp.ne.s32.totalorder %s569, %s570
    %p582 = scmp.eq.s32.totalorder %s41, 1
    %p583 = por %p581, %p582
    %p585 = scmp.ne.s32.totalorder %s570, %s584
    %p586 = scmp.eq.s32.totalorder %s41, 0
    %p587 = por %p585, %p586
    %s589 = sadd.s32 %s588, 1
    %p592 = scmp.eq.s32.totalorder %s35, 1
    %p593 = scmp.ne.s32.totalorder %s588, %s590
    %p594 = scmp.eq.s32.totalorder %s35, 0
    %p595 = por %p593, %p594
    %p596 = scmp.ne.s32.totalorder %s588, %s590
    %p597 = scmp.eq.s32.totalorder %s40, 1
    %p598 = por %p596, %p597
    %p599 = scmp.ne.s32.totalorder %s590, %s591
    %p600 = scmp.eq.s32.totalorder %s40, 0
    %p601 = por %p599, %p600
    %p602 = scmp.ne.s32.totalorder %s590, %s591
    %p603 = scmp.eq.s32.totalorder %s41, 1
    %p604 = por %p602, %p603
    %p606 = scmp.ne.s32.totalorder %s591, %s605
    %p607 = scmp.eq.s32.totalorder %s41, 0
    %p608 = por %p606, %p607
    %s610 = sadd.s32 %s609, 1
    %p613 = scmp.eq.s32.totalorder %s35, 1
    %p614 = scmp.ne.s32.totalorder %s609, %s611
    %p615 = scmp.eq.s32.totalorder %s35, 0
    %p616 = por %p614, %p615
    %p617 = scmp.ne.s32.totalorder %s609, %s611
    %p618 = scmp.eq.s32.totalorder %s40, 1
    %p619 = por %p617, %p618
    %p620 = scmp.ne.s32.totalorder %s611, %s612
    %p621 = scmp.eq.s32.totalorder %s40, 0
    %p622 = por %p620, %p621
    %p623 = scmp.ne.s32.totalorder %s611, %s612
    %p624 = scmp.eq.s32.totalorder %s41, 1
    %p625 = por %p623, %p624
    %p627 = scmp.ne.s32.totalorder %s612, %s626
    %p628 = scmp.eq.s32.totalorder %s41, 0
    %p629 = por %p627, %p628
    %s631 = sadd.s32 %s630, 1
    %p634 = scmp.eq.s32.totalorder %s35, 1
    %p635 = scmp.ne.s32.totalorder %s630, %s632
    %p636 = scmp.eq.s32.totalorder %s35, 0
    %p637 = por %p635, %p636
    %p638 = scmp.ne.s32.totalorder %s630, %s632
    %p639 = scmp.eq.s32.totalorder %s40, 1
    %p640 = por %p638, %p639
    %p641 = scmp.ne.s32.totalorder %s632, %s633
    %p642 = scmp.eq.s32.totalorder %s40, 0
    %p643 = por %p641, %p642
    %p644 = scmp.ne.s32.totalorder %s632, %s633
    %p645 = scmp.eq.s32.totalorder %s41, 1
    %p646 = por %p644, %p645
    %p648 = scmp.ne.s32.totalorder %s633, %s647
    %p649 = scmp.eq.s32.totalorder %s41, 0
    %p650 = por %p648, %p649
    %s651 = ssub.s32 %s42, %s54
    %s652 = ssub.s32 %s43, %s50
    %s653 = sor.u32 %s651, %s652
    %p654 = scmp.eq.s32.totalorder %s653, 0
    %s656 = sadd.s32 %s655, 1
    %s657 = scalar_select %p654, %s655, %s656
    %p660 = pneg %p654
    %p661 = scmp.eq.s32.totalorder %s35, 1
    %p662 = por %p660, %p661
    %p663 = scmp.ne.s32.totalorder %s655, %s658
    %p664 = scmp.eq.s32.totalorder %s35, 0
    %p665 = por %p663, %p664
    %p666 = scmp.ne.s32.totalorder %s655, %s658
    %p667 = scmp.eq.s32.totalorder %s40, 1
    %p668 = por %p666, %p667
    %p669 = scmp.ne.s32.totalorder %s658, %s659
    %p670 = scmp.eq.s32.totalorder %s40, 0
    %p671 = por %p669, %p670
    %p672 = scmp.ne.s32.totalorder %s658, %s659
    %p673 = scmp.eq.s32.totalorder %s41, 1
    %p674 = por %p672, %p673
    %p676 = scmp.ne.s32.totalorder %s659, %s675
    %p677 = scmp.eq.s32.totalorder %s41, 0
    %p678 = por %p676, %p677
    %s679 = ssub.s32 %s42, %s54
    %s680 = ssub.s32 %s43, %s50
    %s681 = sor.u32 %s679, %s680
    %p682 = scmp.eq.s32.totalorder %s681, 0
    %s684 = sadd.s32 %s683, 1
    %s685 = scalar_select %p682, %s683, %s684
    %p688 = pneg %p682
    %p689 = scmp.eq.s32.totalorder %s35, 1
    %p690 = por %p688, %p689
    %p691 = scmp.ne.s32.totalorder %s683, %s686
    %p692 = scmp.eq.s32.totalorder %s35, 0
    %p693 = por %p691, %p692
    %p694 = scmp.ne.s32.totalorder %s683, %s686
    %p695 = scmp.eq.s32.totalorder %s40, 1
    %p696 = por %p694, %p695
    %p697 = scmp.ne.s32.totalorder %s686, %s687
    %p698 = scmp.eq.s32.totalorder %s40, 0
    %p699 = por %p697, %p698
    %p700 = scmp.ne.s32.totalorder %s686, %s687
    %p701 = scmp.eq.s32.totalorder %s41, 1
    %p702 = por %p700, %p701
    %p704 = scmp.ne.s32.totalorder %s687, %s703
    %p705 = scmp.eq.s32.totalorder %s41, 0
    %p706 = por %p704, %p705
    %p707 = scmp.le.s32.totalorder 1, %s35
    %p708 = scmp.lt.s32.totalorder %s35, 3
    %p709 = pnand %p707, %p708
    %p710 = pneg %p709
    // Predicated region
    $region9: #{xey_transformer_layer.8} parent=5 // pred_check
      _
    $region10: #{xey_transformer_layer.8} parent=5 // pred_check_branch
      %712 = sbr.rel (%p709) target = $region12
    $region11: #{xey_transformer_layer.8} parent=5 // pred_region
      %s713 = ssub.s32 %s35, 1
      // Predicated region
      $region13: #{xey_transformer_layer.8} parent=11 // pred_check
        %p714 = pneg %p202
      $region14: #{xey_transformer_layer.8} parent=11 // pred_check_branch
        %716 = sbr.rel (%p714) target = $region16
      $region15: #{xey_transformer_layer.8} parent=11 // pred_region
        _
      $region16: #{xey_transformer_layer.8} parent=11 // pred_fallthru
        _
      // Predicated region
      $region17: #{xey_transformer_layer.8} parent=11 // pred_check
        %p717 = pneg %p223
      $region18: #{xey_transformer_layer.8} parent=11 // pred_check_branch
        %719 = sbr.rel (%p717) target = $region20
      $region19: #{xey_transformer_layer.8} parent=11 // pred_region
        _
      $region20: #{xey_transformer_layer.8} parent=11 // pred_fallthru
        _
      // Predicated region
      $region21: #{xey_transformer_layer.8} parent=11 // pred_check
        %p720 = pneg %p244
      $region22: #{xey_transformer_layer.8} parent=11 // pred_check_branch
        %722 = sbr.rel (%p720) target = $region24
      $region23: #{xey_transformer_layer.8} parent=11 // pred_region
        _
      $region24: #{xey_transformer_layer.8} parent=11 // pred_fallthru
        _
      // Predicated region
      $region25: #{xey_transformer_layer.8} parent=11 // pred_check
        %p723 = pneg %p265
      $region26: #{xey_transformer_layer.8} parent=11 // pred_check_branch
        %725 = sbr.rel (%p723) target = $region28
      $region27: #{xey_transformer_layer.8} parent=11 // pred_region
        _
      $region28: #{xey_transformer_layer.8} parent=11 // pred_fallthru
        _
      // Predicated region
      $region29: #{xey_transformer_layer.8} parent=11 // pred_check
        %p726 = pneg %p286
      $region30: #{xey_transformer_layer.8} parent=11 // pred_check_branch
        %728 = sbr.rel (%p726) target = $region32
      $region31: #{xey_transformer_layer.8} parent=11 // pred_region
        _
      $region32: #{xey_transformer_layer.8} parent=11 // pred_fallthru
        _
      // Predicated region
      $region33: #{xey_transformer_layer.8} parent=11 // pred_check
        %p729 = pneg %p307
      $region34: #{xey_transformer_layer.8} parent=11 // pred_check_branch
        %731 = sbr.rel (%p729) target = $region36
      $region35: #{xey_transformer_layer.8} parent=11 // pred_region
        _
      $region36: #{xey_transformer_layer.8} parent=11 // pred_fallthru
        _
      // Predicated region
      $region37: #{xey_transformer_layer.8} parent=11 // pred_check
        %p732 = pneg %p328
      $region38: #{xey_transformer_layer.8} parent=11 // pred_check_branch
        %734 = sbr.rel (%p732) target = $region40
      $region39: #{xey_transformer_layer.8} parent=11 // pred_region
        _
      $region40: #{xey_transformer_layer.8} parent=11 // pred_fallthru
        _
      // Predicated region
      $region41: #{xey_transformer_layer.8} parent=11 // pred_check
        %p735 = pneg %p349
      $region42: #{xey_transformer_layer.8} parent=11 // pred_check_branch
        %737 = sbr.rel (%p735) target = $region44
      $region43: #{xey_transformer_layer.8} parent=11 // pred_region
        _
      $region44: #{xey_transformer_layer.8} parent=11 // pred_fallthru
        _
      // Predicated region
      $region45: #{xey_transformer_layer.8} parent=11 // pred_check
        %p738 = pneg %p370
      $region46: #{xey_transformer_layer.8} parent=11 // pred_check_branch
        %740 = sbr.rel (%p738) target = $region48
      $region47: #{xey_transformer_layer.8} parent=11 // pred_region
        _
      $region48: #{xey_transformer_layer.8} parent=11 // pred_fallthru
        _
      // Predicated region
      $region49: #{xey_transformer_layer.8} parent=11 // pred_check
        %p741 = pneg %p391
      $region50: #{xey_transformer_layer.8} parent=11 // pred_check_branch
        %743 = sbr.rel (%p741) target = $region52
      $region51: #{xey_transformer_layer.8} parent=11 // pred_region
        _
      $region52: #{xey_transformer_layer.8} parent=11 // pred_fallthru
        _
      // Predicated region
      $region53: #{xey_transformer_layer.8} parent=11 // pred_check
        %p744 = pneg %p412
      $region54: #{xey_transformer_layer.8} parent=11 // pred_check_branch
        %746 = sbr.rel (%p744) target = $region56
      $region55: #{xey_transformer_layer.8} parent=11 // pred_region
        _
      $region56: #{xey_transformer_layer.8} parent=11 // pred_fallthru
        _
      // Predicated region
      $region57: #{xey_transformer_layer.8} parent=11 // pred_check
        %p747 = pneg %p433
      $region58: #{xey_transformer_layer.8} parent=11 // pred_check_branch
        %749 = sbr.rel (%p747) target = $region60
      $region59: #{xey_transformer_layer.8} parent=11 // pred_region
        _
      $region60: #{xey_transformer_layer.8} parent=11 // pred_fallthru
        _
      // Predicated region
      $region61: #{xey_transformer_layer.8} parent=11 // pred_check
        %p750 = pneg %p454
      $region62: #{xey_transformer_layer.8} parent=11 // pred_check_branch
        %752 = sbr.rel (%p750) target = $region64
      $region63: #{xey_transformer_layer.8} parent=11 // pred_region
        _
      $region64: #{xey_transformer_layer.8} parent=11 // pred_fallthru
        _
      // Predicated region
      $region65: #{xey_transformer_layer.8} parent=11 // pred_check
        %p753 = pneg %p475
      $region66: #{xey_transformer_layer.8} parent=11 // pred_check_branch
        %755 = sbr.rel (%p753) target = $region68
      $region67: #{xey_transformer_layer.8} parent=11 // pred_region
        _
      $region68: #{xey_transformer_layer.8} parent=11 // pred_fallthru
        _
      // Predicated region
      $region69: #{xey_transformer_layer.8} parent=11 // pred_check
        %p756 = pneg %p496
      $region70: #{xey_transformer_layer.8} parent=11 // pred_check_branch
        %758 = sbr.rel (%p756) target = $region72
      $region71: #{xey_transformer_layer.8} parent=11 // pred_region
        _
      $region72: #{xey_transformer_layer.8} parent=11 // pred_fallthru
        _
      // Predicated region
      $region73: #{xey_transformer_layer.8} parent=11 // pred_check
        %p759 = pneg %p517
      $region74: #{xey_transformer_layer.8} parent=11 // pred_check_branch
        %761 = sbr.rel (%p759) target = $region76
      $region75: #{xey_transformer_layer.8} parent=11 // pred_region
        _
      $region76: #{xey_transformer_layer.8} parent=11 // pred_fallthru
        _
      // Predicated region
      $region77: #{xey_transformer_layer.8} parent=11 // pred_check
        %p762 = pneg %p538
      $region78: #{xey_transformer_layer.8} parent=11 // pred_check_branch
        %764 = sbr.rel (%p762) target = $region80
      $region79: #{xey_transformer_layer.8} parent=11 // pred_region
        _
      $region80: #{xey_transformer_layer.8} parent=11 // pred_fallthru
        _
      // Predicated region
      $region81: #{xey_transformer_layer.8} parent=11 // pred_check
        %p765 = pneg %p559
      $region82: #{xey_transformer_layer.8} parent=11 // pred_check_branch
        %767 = sbr.rel (%p765) target = $region84
      $region83: #{xey_transformer_layer.8} parent=11 // pred_region
        _
      $region84: #{xey_transformer_layer.8} parent=11 // pred_fallthru
        _
      // Predicated region
      $region85: #{xey_transformer_layer.8} parent=11 // pred_check
        %p768 = pneg %p580
      $region86: #{xey_transformer_layer.8} parent=11 // pred_check_branch
        %770 = sbr.rel (%p768) target = $region88
      $region87: #{xey_transformer_layer.8} parent=11 // pred_region
        _
      $region88: #{xey_transformer_layer.8} parent=11 // pred_fallthru
        _
      // Predicated region
      $region89: #{xey_transformer_layer.8} parent=11 // pred_check
        %p771 = pneg %p601
      $region90: #{xey_transformer_layer.8} parent=11 // pred_check_branch
        %773 = sbr.rel (%p771) target = $region92
      $region91: #{xey_transformer_layer.8} parent=11 // pred_region
        _
      $region92: #{xey_transformer_layer.8} parent=11 // pred_fallthru
        _
      // Predicated region
      $region93: #{xey_transformer_layer.8} parent=11 // pred_check
        %p774 = pneg %p622
      $region94: #{xey_transformer_layer.8} parent=11 // pred_check_branch
        %776 = sbr.rel (%p774) target = $region96
      $region95: #{xey_transformer_layer.8} parent=11 // pred_region
        _
      $region96: #{xey_transformer_layer.8} parent=11 // pred_fallthru
        _
      // Predicated region
      $region97: #{xey_transformer_layer.8} parent=11 // pred_check
        %p777 = pneg %p643
      $region98: #{xey_transformer_layer.8} parent=11 // pred_check_branch
        %779 = sbr.rel (%p777) target = $region100
      $region99: #{xey_transformer_layer.8} parent=11 // pred_region
        _
      $region100: #{xey_transformer_layer.8} parent=11 // pred_fallthru
        _
    $region12: #{xey_transformer_layer.8} parent=5 // pred_fallthru
      _
    %p780 = scmp.lt.s32.totalorder %s35, 2
    // Predicated region
    $region101: #{xey_transformer_layer.8} parent=5 // pred_check
      %p781 = pneg %p780
    $region102: #{xey_transformer_layer.8} parent=5 // pred_check_branch
      %783 = sbr.rel (%p781) target = $region104
    $region103: #{xey_transformer_layer.8} parent=5 // pred_region
      // Predicated region
      $region105: #{xey_transformer_layer.8} parent=103 // pred_check
        %p784 = pneg %p69
      $region106: #{xey_transformer_layer.8} parent=103 // pred_check_branch
        %786 = sbr.rel (%p784) target = $region108
      $region107: #{xey_transformer_layer.8} parent=103 // pred_region
        %s787 = smul.u32 8, %s43
        %p788 = scmp.lt.s32.totalorder %s42, 1
        %s789 = scalar_select %p788, %s42, 1
        %p790 = scmp.lt.s32.totalorder %s787, 7
        %s791 = scalar_select %p790, %s787, 7
        %s792 = smul.addr %s789, 8
        %s793 = sadd.s32 %s791, %s792
        %s794 = smul.addr %s793, 4
        %s795 = scalar_lea.vmem %s0, %s794
        %s796 = smul.u32 8, %s43
      $region108: #{xey_transformer_layer.8} parent=103 // pred_fallthru
        _
      // Predicated region
      $region109: #{xey_transformer_layer.8} parent=103 // pred_check
        %p797 = pneg %p97
      $region110: #{xey_transformer_layer.8} parent=103 // pred_check_branch
        %799 = sbr.rel (%p797) target = $region112
      $region111: #{xey_transformer_layer.8} parent=103 // pred_region
        %p800 = scmp.lt.s32.totalorder %s42, 1
        %s801 = scalar_select %p800, %s42, 1
        %p802 = scmp.lt.s32.totalorder %s43, 0
        %s803 = scalar_select %p802, %s43, 0
        %s804 = sadd.s32 %s803, %s801
        %s805 = smul.addr %s804, 8
        %s806 = scalar_lea.vmem %s1, %s805
      $region112: #{xey_transformer_layer.8} parent=103 // pred_fallthru
        _
      // Predicated region
      $region113: #{xey_transformer_layer.8} parent=103 // pred_check
        %p807 = pneg %p123
      $region114: #{xey_transformer_layer.8} parent=103 // pred_check_branch
        %809 = sbr.rel (%p807) target = $region116
      $region115: #{xey_transformer_layer.8} parent=103 // pred_region
        %p810 = scmp.lt.s32.totalorder %s42, 1
        %s811 = scalar_select %p810, %s42, 1
        %s812 = smul.addr %s811, 8
        %s813 = scalar_lea.vmem %s2, %s812
      $region116: #{xey_transformer_layer.8} parent=103 // pred_fallthru
        _
      // Predicated region
      $region117: #{xey_transformer_layer.8} parent=103 // pred_check
        %p814 = pneg %p149
      $region118: #{xey_transformer_layer.8} parent=103 // pred_check_branch
        %816 = sbr.rel (%p814) target = $region120
      $region119: #{xey_transformer_layer.8} parent=103 // pred_region
        %p817 = scmp.lt.s32.totalorder %s42, 1
        %s818 = scalar_select %p817, %s42, 1
        %s819 = smul.addr %s818, 2
        %s820 = scalar_lea.vmem %s3, %s819
      $region120: #{xey_transformer_layer.8} parent=103 // pred_fallthru
        _
      // Predicated region
      $region121: #{xey_transformer_layer.8} parent=103 // pred_check
        %p821 = pneg %p175
      $region122: #{xey_transformer_layer.8} parent=103 // pred_check_branch
        %823 = sbr.rel (%p821) target = $region124
      $region123: #{xey_transformer_layer.8} parent=103 // pred_region
        %p824 = scmp.lt.s32.totalorder %s42, 1
        %s825 = scalar_select %p824, %s42, 1
        %s826 = scalar_lea.vmem %s4, %s825
      $region124: #{xey_transformer_layer.8} parent=103 // pred_fallthru
        _
    $region104: #{xey_transformer_layer.8} parent=5 // pred_fallthru
      _
    %p827 = scmp.le.s32.totalorder 1, %s35
    %p828 = scmp.lt.s32.totalorder %s35, 3
    %p829 = pnand %p827, %p828
    %p830 = pneg %p829
    // Predicated region
    $region125: #{xey_transformer_layer.8} parent=5 // pred_check
      _
    $region126: #{xey_transformer_layer.8} parent=5 // pred_check_branch
      %832 = sbr.rel (%p829) target = $region128
    $region127: #{xey_transformer_layer.8} parent=5 // pred_region
      %s833 = ssub.s32 %s35, 1
      %s834 = smul.u32 8, %s45
      %p835 = scmp.lt.s32.totalorder %s44, 1
      %s836 = scalar_select %p835, %s44, 1
      %p837 = scmp.lt.s32.totalorder %s834, 7
      %s838 = scalar_select %p837, %s834, 7
      %s839 = smul.addr %s836, 8
      %s840 = sadd.s32 %s838, %s839
      %s841 = smul.addr %s840, 4
      %s842 = scalar_lea.vmem %s0, %s841
      %p843 = pneg %p75
      %p844 = pneg %p72
      %p845 = scmp.lt.s32.totalorder %s44, 1
      %s846 = scalar_select %p845, %s44, 1
      %p847 = scmp.lt.s32.totalorder %s45, 0
      %s848 = scalar_select %p847, %s45, 0
      %s849 = sadd.s32 %s848, %s846
      %s850 = smul.addr %s849, 8
      %s851 = scalar_lea.vmem %s1, %s850
      %p852 = pneg %p103
      %p853 = pneg %p100
      %p854 = scmp.lt.s32.totalorder %s44, 1
      %s855 = scalar_select %p854, %s44, 1
      %s856 = smul.addr %s855, 8
      %s857 = scalar_lea.vmem %s2, %s856
      %p858 = pneg %p129
      %p859 = pneg %p126
      %p860 = scmp.lt.s32.totalorder %s44, 1
      %s861 = scalar_select %p860, %s44, 1
      %s862 = smul.addr %s861, 2
      %s863 = scalar_lea.vmem %s3, %s862
      %p864 = pneg %p155
      %p865 = pneg %p152
      %p866 = scmp.lt.s32.totalorder %s44, 1
      %s867 = scalar_select %p866, %s44, 1
      %s868 = scalar_lea.vmem %s4, %s867
      %p869 = pneg %p181
      %p870 = pneg %p178
      %p871 = pneg %p202
      %p872 = pneg %p199
      %p873 = pneg %p223
      %p874 = pneg %p220
      %p875 = pneg %p244
      %p876 = pneg %p241
      %p877 = pneg %p265
      %p878 = pneg %p262
      %p879 = pneg %p286
      %p880 = pneg %p283
      %p881 = pneg %p307
      %p882 = pneg %p304
      %p883 = pneg %p328
      %p884 = pneg %p325
      %p885 = pneg %p349
      %p886 = pneg %p346
      %p887 = pneg %p370
      %p888 = pneg %p367
      %p889 = pneg %p391
      %p890 = pneg %p388
      %p891 = pneg %p412
      %p892 = pneg %p409
      %p893 = pneg %p433
      %p894 = pneg %p430
      %p895 = pneg %p454
      %p896 = pneg %p451
      %p897 = pneg %p475
      %p898 = pneg %p472
      %p899 = pneg %p496
      %p900 = pneg %p493
      %p901 = pneg %p517
      %p902 = pneg %p514
      %p903 = pneg %p538
      %p904 = pneg %p535
      %p905 = pneg %p559
      %p906 = pneg %p556
      %p907 = pneg %p580
      %p908 = pneg %p577
      %p909 = pneg %p601
      %p910 = pneg %p598
      %p911 = pneg %p622
      %p912 = pneg %p619
      %p913 = pneg %p643
      %p914 = pneg %p640
      %p915 = pneg %p671
      %p916 = pneg %p668
      %s917 = smul.u32 8, %s45
      %p918 = scmp.lt.s32.totalorder %s44, 1
      %s919 = scalar_select %p918, %s44, 1
      %p920 = scmp.lt.s32.totalorder %s917, 7
      %s921 = scalar_select %p920, %s917, 7
      %s922 = smul.addr %s919, 8
      %s923 = sadd.s32 %s921, %s922
      %s924 = smul.addr %s923, 8
      %s925 = scalar_lea.vmem %s27, %s924
      %p926 = pneg %p699
      %p927 = pneg %p696
      %p928 = scmp.lt.s32.totalorder %s44, 1
      %s929 = scalar_select %p928, %s44, 1
      %p930 = scmp.lt.s32.totalorder %s45, 0
      %s931 = scalar_select %p930, %s45, 0
      %s932 = smul.addr %s931, 4
      %s933 = smul.addr %s929, 4
      %s934 = sadd.s32 %s932, %s933
      %s935 = smul.addr %s934, 8
      %s936 = scalar_lea.vmem %s28, %s935
      %s937 = smul.u32 8, %s45
      %p938 = scmp.lt.s32.totalorder %s44, 1
      %s939 = scalar_select %p938, %s44, 1
      %p940 = scmp.lt.s32.totalorder %s937, 7
      %s941 = scalar_select %p940, %s937, 7
      %s942 = smul.addr %s939, 8
      %s943 = sadd.s32 %s941, %s942
      %s944 = smul.addr %s943, 4
      %s945 = scalar_lea.vmem %s0, %s944
      %s946 = smul.u32 8, %s45
      %p947 = scmp.lt.s32.totalorder %s44, 1
      %s948 = scalar_select %p947, %s44, 1
      %p949 = scmp.lt.s32.totalorder %s45, 0
      %s950 = scalar_select %p949, %s45, 0
      %s951 = sadd.s32 %s950, %s948
      %s952 = smul.addr %s951, 8
      %s953 = scalar_lea.vmem %s1, %s952
      %p954 = scmp.lt.s32.totalorder %s44, 1
      %s955 = scalar_select %p954, %s44, 1
      %s956 = smul.addr %s955, 8
      %s957 = scalar_lea.vmem %s2, %s956
      %p958 = scmp.lt.s32.totalorder %s44, 1
      %s959 = scalar_select %p958, %s44, 1
      %s960 = smul.addr %s959, 2
      %s961 = scalar_lea.vmem %s3, %s960
      %p962 = scmp.lt.s32.totalorder %s44, 1
      %s963 = scalar_select %p962, %s44, 1
      %s964 = scalar_lea.vmem %s4, %s963
      %s965 = smul.u32 8, %s45
      %p966 = scmp.lt.s32.totalorder %s44, 1
      %s967 = scalar_select %p966, %s44, 1
      %p968 = scmp.lt.s32.totalorder %s965, 7
      %s969 = scalar_select %p968, %s965, 7
      %s970 = smul.addr %s967, 8
      %s971 = sadd.s32 %s969, %s970
      %s972 = smul.addr %s971, 8
      %s973 = scalar_lea.vmem %s27, %s972
      %s974 = smul.u32 8, %s45
      %p975 = scmp.lt.s32.totalorder %s44, 1
      %s976 = scalar_select %p975, %s44, 1
      %p977 = scmp.lt.s32.totalorder %s45, 0
      %s978 = scalar_select %p977, %s45, 0
      %s979 = smul.addr %s978, 4
      %s980 = smul.addr %s976, 4
      %s981 = sadd.s32 %s979, %s980
      %s982 = smul.addr %s981, 8
      %s983 = scalar_lea.vmem %s28, %s982
      %v985 = vld [vmem:[%s953] sm:$0xff]
      %v986 = vld [vmem:[%s957] sm:$0xff]
      %v987 = vld [vmem:[%s961] sm:$0x3]
      %v988 = vld [vmem:[%s964] sm:$0x1]
      %v990 = vrot.slane %v985, 1
      %v991 = vrot.slane %v985, 2
      %v992 = vrot.slane %v985, 3
      %v993 = vrot.slane %v985, 4
      %v994 = vrot.slane %v985, 5
      %v995 = vrot.slane %v985, 6
      %v996 = vrot.slane %v985, 7
      %v997 = vperm.slane %v985, 0
      %v998 = vperm.slane %v990, 0
      %v999 = vperm.slane %v991, 0
      %v1000 = vperm.slane %v992, 0
      %v1001 = vperm.slane %v993, 0
      %v1002 = vperm.slane %v994, 0
      %v1003 = vperm.slane %v995, 0
      %v1004 = vperm.slane %v996, 0
      %v1013 = vmul.f32 %v997, %v986
      %v1014 = vmul.f32 %v998, %v986
      %v1015 = vmul.f32 %v999, %v986
      %v1016 = vmul.f32 %v1000, %v986
      %v1017 = vmul.f32 %v1001, %v986
      %v1018 = vmul.f32 %v1002, %v986
      %v1019 = vmul.f32 %v1003, %v986
      %v1020 = vmul.f32 %v1004, %v986
      %v1021 = vld [vmem:[%s7] sm:$0xff]
      %v1022 = vld [vmem:[%s8] sm:$0xff]
      %v1023 = vmul.f32 %v985, %v985
      %1025 = vrot.lane.b32.xlu0 %v1023, 62
      %v1026 = vpop.permute.xlu0 %1025
      %vm1028 = vcmask 23552
      %v1029 = vsel %vm1028, %v1026, 0.0
      %1030 = vadd.xlane.f32.xlu0 %v1029
      %v1031 = vpop.xlane.xlu0 %1030
      %v1032 = vrsqrt.pop %v1031
      %v1033 = vmul.f32 %v1032, %v1031
      %v1034 = vmul.f32 %v1033, %v1032
      %v1035 = vmul.f32 0.5, %v1034
      %v1036 = vsub.f32 1.5, %v1035
      %v1037 = vmul.f32 %v1032, %v1036
      %v1038 = vmul.f32 %v1031, %v1037
      %vm1039 = vcmp.eq.f32.partialorder %v1031, inf
      %v1040 = vsel %vm1039, %v1031, %v1038
      %vm1041 = vcmp.eq.f32.partialorder %v1031, 0.0
      %v1042 = vand.u32 %v1031, 2147483648
      %v1043 = vsel %vm1041, %v1042, %v1040
      %v1044 = vmul.f32 %v986, %v986
      %1046 = vrot.lane.b32.xlu0 %v1044, 62
      %v1047 = vpop.permute.xlu0 %1046
      %v1049 = vsel %vm1028, %v1047, 0.0
      %1050 = vadd.xlane.f32.xlu0 %v1049
      %v1051 = vpop.xlane.xlu0 %1050
      %v1052 = vrsqrt.pop %v1051
      %v1053 = vmul.f32 %v1052, %v1051
      %v1054 = vmul.f32 %v1053, %v1052
      %v1055 = vmul.f32 0.5, %v1054
      %v1056 = vsub.f32 1.5, %v1055
      %v1057 = vmul.f32 %v1052, %v1056
      %v1058 = vmul.f32 %v1051, %v1057
      %vm1059 = vcmp.eq.f32.partialorder %v1051, inf
      %v1060 = vsel %vm1059, %v1051, %v1058
      %vm1061 = vcmp.eq.f32.partialorder %v1051, 0.0
      %v1062 = vand.u32 %v1051, 2147483648
      %v1063 = vsel %vm1061, %v1062, %v1060
      %v1064 = vadd.f32 %v1043, 1e-07
      %v1065 = vrcp.pop %v1064
      %v1066 = vmul.f32 %v1064, %v1065
      %v1067 = vsub.f32 1.0, %v1066
      %v1068 = vmul.f32 %v1065, %v1067
      %v1069 = vadd.f32 %v1065, %v1068
      %vm1070 = vweird.f32 %v1064
      %vm1071 = vweird.f32 %v1065
      %vm1072 = vmor %vm1070, %vm1071
      %v1073 = vsel %vm1072, %v1065, %v1069
      %v1074 = vand.u32 2147483647, %v1064
      %vm1075 = vcmp.eq.f32.partialorder %v1074, 8.507059e+37
      %v1076 = vand.u32 %v1064, 2147483648
      %v1077 = vor.u32 1.1754944e-38, %v1076
      %v1078 = vsel %vm1075, %v1077, %v1073
      %v1079 = vmul.f32 %v985, %v1078
      %v1080 = vadd.f32 %v1063, 1e-07
      %v1081 = vrcp.pop %v1080
      %v1082 = vmul.f32 %v1080, %v1081
      %v1083 = vsub.f32 1.0, %v1082
      %v1084 = vmul.f32 %v1081, %v1083
      %v1085 = vadd.f32 %v1081, %v1084
      %vm1086 = vweird.f32 %v1080
      %vm1087 = vweird.f32 %v1081
      %vm1088 = vmor %vm1086, %vm1087
      %v1089 = vsel %vm1088, %v1081, %v1085
      %v1090 = vand.u32 2147483647, %v1080
      %vm1091 = vcmp.eq.f32.partialorder %v1090, 8.507059e+37
      %v1092 = vand.u32 %v1080, 2147483648
      %v1093 = vor.u32 1.1754944e-38, %v1092
      %v1094 = vsel %vm1091, %v1093, %v1089
      %v1095 = vmul.f32 %v986, %v1094
      %v1096 = vsub.f32 %v997, %v986
      %v1097 = vsub.f32 %v998, %v986
      %v1098 = vsub.f32 %v999, %v986
      %v1099 = vsub.f32 %v1000, %v986
      %v1100 = vsub.f32 %v1001, %v986
      %v1101 = vsub.f32 %v1002, %v986
      %v1102 = vsub.f32 %v1003, %v986
      %v1103 = vsub.f32 %v1004, %v986
      %v1104 = vmul.f32 %v1096, %v1096
      %v1105 = vmul.f32 %v1097, %v1097
      %v1106 = vmul.f32 %v1098, %v1098
      %v1107 = vmul.f32 %v1099, %v1099
      %v1108 = vmul.f32 %v1100, %v1100
      %v1109 = vmul.f32 %v1101, %v1101
      %v1110 = vmul.f32 %v1102, %v1102
      %v1111 = vmul.f32 %v1103, %v1103
      %1120 = vrot.lane.b32.xlu0 %v1104, 62
      %v1121 = vpop.permute.xlu0 %1120
      %1122 = vrot.lane.b32.xlu0 %v1105, 62
      %v1123 = vpop.permute.xlu0 %1122
      %1124 = vrot.lane.b32.xlu0 %v1106, 62
      %v1125 = vpop.permute.xlu0 %1124
      %1126 = vrot.lane.b32.xlu0 %v1107, 62
      %v1127 = vpop.permute.xlu0 %1126
      %1128 = vrot.lane.b32.xlu0 %v1108, 62
      %v1129 = vpop.permute.xlu0 %1128
      %1130 = vrot.lane.b32.xlu0 %v1109, 62
      %v1131 = vpop.permute.xlu0 %1130
      %1132 = vrot.lane.b32.xlu0 %v1110, 62
      %v1133 = vpop.permute.xlu0 %1132
      %1134 = vrot.lane.b32.xlu0 %v1111, 62
      %v1135 = vpop.permute.xlu0 %1134
      %v1144 = vsel %vm1028, %v1121, 0.0
      %1145 = vadd.xlane.f32.xlu0 %v1144
      %v1146 = vpop.xlane.xlu0 %1145
      %v1147 = vsel %vm1028, %v1123, 0.0
      %1148 = vadd.xlane.f32.xlu0 %v1147
      %v1149 = vpop.xlane.xlu0 %1148
      %v1150 = vsel %vm1028, %v1125, 0.0
      %1151 = vadd.xlane.f32.xlu0 %v1150
      %v1152 = vpop.xlane.xlu0 %1151
      %v1153 = vsel %vm1028, %v1127, 0.0
      %1154 = vadd.xlane.f32.xlu0 %v1153
      %v1155 = vpop.xlane.xlu0 %1154
      %v1156 = vsel %vm1028, %v1129, 0.0
      %1157 = vadd.xlane.f32.xlu0 %v1156
      %v1158 = vpop.xlane.xlu0 %1157
      %v1159 = vsel %vm1028, %v1131, 0.0
      %1160 = vadd.xlane.f32.xlu0 %v1159
      %v1161 = vpop.xlane.xlu0 %1160
      %v1162 = vsel %vm1028, %v1133, 0.0
      %1163 = vadd.xlane.f32.xlu0 %v1162
      %v1164 = vpop.xlane.xlu0 %1163
      %v1165 = vsel %vm1028, %v1135, 0.0
      %1166 = vadd.xlane.f32.xlu0 %v1165
      %v1167 = vpop.xlane.xlu0 %1166
      %v1168 = vrsqrt.pop %v1146
      %v1169 = vmul.f32 %v1168, %v1146
      %v1170 = vmul.f32 %v1169, %v1168
      %v1171 = vmul.f32 0.5, %v1170
      %v1172 = vsub.f32 1.5, %v1171
      %v1173 = vmul.f32 %v1168, %v1172
      %v1174 = vmul.f32 %v1146, %v1173
      %vm1175 = vcmp.eq.f32.partialorder %v1146, inf
      %v1176 = vsel %vm1175, %v1146, %v1174
      %vm1177 = vcmp.eq.f32.partialorder %v1146, 0.0
      %v1178 = vand.u32 %v1146, 2147483648
      %v1179 = vsel %vm1177, %v1178, %v1176
      %v1180 = vrsqrt.pop %v1149
      %v1181 = vmul.f32 %v1180, %v1149
      %v1182 = vmul.f32 %v1181, %v1180
      %v1183 = vmul.f32 0.5, %v1182
      %v1184 = vsub.f32 1.5, %v1183
      %v1185 = vmul.f32 %v1180, %v1184
      %v1186 = vmul.f32 %v1149, %v1185
      %vm1187 = vcmp.eq.f32.partialorder %v1149, inf
      %v1188 = vsel %vm1187, %v1149, %v1186
      %vm1189 = vcmp.eq.f32.partialorder %v1149, 0.0
      %v1190 = vand.u32 %v1149, 2147483648
      %v1191 = vsel %vm1189, %v1190, %v1188
      %v1192 = vrsqrt.pop %v1152
      %v1193 = vmul.f32 %v1192, %v1152
      %v1194 = vmul.f32 %v1193, %v1192
      %v1195 = vmul.f32 0.5, %v1194
      %v1196 = vsub.f32 1.5, %v1195
      %v1197 = vmul.f32 %v1192, %v1196
      %v1198 = vmul.f32 %v1152, %v1197
      %vm1199 = vcmp.eq.f32.partialorder %v1152, inf
      %v1200 = vsel %vm1199, %v1152, %v1198
      %vm1201 = vcmp.eq.f32.partialorder %v1152, 0.0
      %v1202 = vand.u32 %v1152, 2147483648
      %v1203 = vsel %vm1201, %v1202, %v1200
      %v1204 = vrsqrt.pop %v1155
      %v1205 = vmul.f32 %v1204, %v1155
      %v1206 = vmul.f32 %v1205, %v1204
      %v1207 = vmul.f32 0.5, %v1206
      %v1208 = vsub.f32 1.5, %v1207
      %v1209 = vmul.f32 %v1204, %v1208
      %v1210 = vmul.f32 %v1155, %v1209
      %vm1211 = vcmp.eq.f32.partialorder %v1155, inf
      %v1212 = vsel %vm1211, %v1155, %v1210
      %vm1213 = vcmp.eq.f32.partialorder %v1155, 0.0
      %v1214 = vand.u32 %v1155, 2147483648
      %v1215 = vsel %vm1213, %v1214, %v1212
      %v1216 = vrsqrt.pop %v1158
      %v1217 = vmul.f32 %v1216, %v1158
      %v1218 = vmul.f32 %v1217, %v1216
      %v1219 = vmul.f32 0.5, %v1218
      %v1220 = vsub.f32 1.5, %v1219
      %v1221 = vmul.f32 %v1216, %v1220
      %v1222 = vmul.f32 %v1158, %v1221
      %vm1223 = vcmp.eq.f32.partialorder %v1158, inf
      %v1224 = vsel %vm1223, %v1158, %v1222
      %vm1225 = vcmp.eq.f32.partialorder %v1158, 0.0
      %v1226 = vand.u32 %v1158, 2147483648
      %v1227 = vsel %vm1225, %v1226, %v1224
      %v1228 = vrsqrt.pop %v1161
      %v1229 = vmul.f32 %v1228, %v1161
      %v1230 = vmul.f32 %v1229, %v1228
      %v1231 = vmul.f32 0.5, %v1230
      %v1232 = vsub.f32 1.5, %v1231
      %v1233 = vmul.f32 %v1228, %v1232
      %v1234 = vmul.f32 %v1161, %v1233
      %vm1235 = vcmp.eq.f32.partialorder %v1161, inf
      %v1236 = vsel %vm1235, %v1161, %v1234
      %vm1237 = vcmp.eq.f32.partialorder %v1161, 0.0
      %v1238 = vand.u32 %v1161, 2147483648
      %v1239 = vsel %vm1237, %v1238, %v1236
      %v1240 = vrsqrt.pop %v1164
      %v1241 = vmul.f32 %v1240, %v1164
      %v1242 = vmul.f32 %v1241, %v1240
      %v1243 = vmul.f32 0.5, %v1242
      %v1244 = vsub.f32 1.5, %v1243
      %v1245 = vmul.f32 %v1240, %v1244
      %v1246 = vmul.f32 %v1164, %v1245
      %vm1247 = vcmp.eq.f32.partialorder %v1164, inf
      %v1248 = vsel %vm1247, %v1164, %v1246
      %vm1249 = vcmp.eq.f32.partialorder %v1164, 0.0
      %v1250 = vand.u32 %v1164, 2147483648
      %v1251 = vsel %vm1249, %v1250, %v1248
      %v1252 = vrsqrt.pop %v1167
      %v1253 = vmul.f32 %v1252, %v1167
      %v1254 = vmul.f32 %v1253, %v1252
      %v1255 = vmul.f32 0.5, %v1254
      %v1256 = vsub.f32 1.5, %v1255
      %v1257 = vmul.f32 %v1252, %v1256
      %v1258 = vmul.f32 %v1167, %v1257
      %vm1259 = vcmp.eq.f32.partialorder %v1167, inf
      %v1260 = vsel %vm1259, %v1167, %v1258
      %vm1261 = vcmp.eq.f32.partialorder %v1167, 0.0
      %v1262 = vand.u32 %v1167, 2147483648
      %v1263 = vsel %vm1261, %v1262, %v1260
      %v1265 = vrot.slane %v1079, 1
      %v1266 = vrot.slane %v1079, 2
      %v1267 = vrot.slane %v1079, 3
      %v1268 = vrot.slane %v1079, 4
      %v1269 = vrot.slane %v1079, 5
      %v1270 = vrot.slane %v1079, 6
      %v1271 = vrot.slane %v1079, 7
      %v1272 = vperm.slane %v1079, 0
      %v1273 = vperm.slane %v1265, 0
      %v1274 = vperm.slane %v1266, 0
      %v1275 = vperm.slane %v1267, 0
      %v1276 = vperm.slane %v1268, 0
      %v1277 = vperm.slane %v1269, 0
      %v1278 = vperm.slane %v1270, 0
      %v1279 = vperm.slane %v1271, 0
      %v1288 = vmul.f32 %v1272, %v1095
      %v1289 = vmul.f32 %v1273, %v1095
      %v1290 = vmul.f32 %v1274, %v1095
      %v1291 = vmul.f32 %v1275, %v1095
      %v1292 = vmul.f32 %v1276, %v1095
      %v1293 = vmul.f32 %v1277, %v1095
      %v1294 = vmul.f32 %v1278, %v1095
      %v1295 = vmul.f32 %v1279, %v1095
      %1304 = vrot.lane.b32.xlu0 %v1288, 62
      %v1305 = vpop.permute.xlu0 %1304
      %1306 = vrot.lane.b32.xlu0 %v1289, 62
      %v1307 = vpop.permute.xlu0 %1306
      %1308 = vrot.lane.b32.xlu0 %v1290, 62
      %v1309 = vpop.permute.xlu0 %1308
      %1310 = vrot.lane.b32.xlu0 %v1291, 62
      %v1311 = vpop.permute.xlu0 %1310
      %1312 = vrot.lane.b32.xlu0 %v1292, 62
      %v1313 = vpop.permute.xlu0 %1312
      %1314 = vrot.lane.b32.xlu0 %v1293, 62
      %v1315 = vpop.permute.xlu0 %1314
      %1316 = vrot.lane.b32.xlu0 %v1294, 62
      %v1317 = vpop.permute.xlu0 %1316
      %1318 = vrot.lane.b32.xlu0 %v1295, 62
      %v1319 = vpop.permute.xlu0 %1318
      %v1328 = vsel %vm1028, %v1305, 0.0
      %1329 = vadd.xlane.f32.xlu0 %v1328
      %v1330 = vpop.xlane.xlu0 %1329
      %v1331 = vsel %vm1028, %v1307, 0.0
      %1332 = vadd.xlane.f32.xlu0 %v1331
      %v1333 = vpop.xlane.xlu0 %1332
      %v1334 = vsel %vm1028, %v1309, 0.0
      %1335 = vadd.xlane.f32.xlu0 %v1334
      %v1336 = vpop.xlane.xlu0 %1335
      %v1337 = vsel %vm1028, %v1311, 0.0
      %1338 = vadd.xlane.f32.xlu0 %v1337
      %v1339 = vpop.xlane.xlu0 %1338
      %v1340 = vsel %vm1028, %v1313, 0.0
      %1341 = vadd.xlane.f32.xlu0 %v1340
      %v1342 = vpop.xlane.xlu0 %1341
      %v1343 = vsel %vm1028, %v1315, 0.0
      %1344 = vadd.xlane.f32.xlu0 %v1343
      %v1345 = vpop.xlane.xlu0 %1344
      %v1346 = vsel %vm1028, %v1317, 0.0
      %1347 = vadd.xlane.f32.xlu0 %v1346
      %v1348 = vpop.xlane.xlu0 %1347
      %v1349 = vsel %vm1028, %v1319, 0.0
      %1350 = vadd.xlane.f32.xlu0 %v1349
      %v1351 = vpop.xlane.xlu0 %1350
      %v1352 = vperm.slane %v1021, 3
      %v1353 = vmul.f32 %v1043, %v1352
      %v1354 = vperm.slane %v1021, 4
      %v1355 = vadd.f32 %v1353, %v1354
      %v1356 = vperm.slane %v1021, 5
      %v1357 = vmul.f32 %v1063, %v1356
      %v1358 = vperm.slane %v1021, 6
      %v1359 = vadd.f32 %v1357, %v1358
      %v1360 = vperm.slane %v1021, 0
      %v1361 = vmul.f32 %v1179, %v1360
      %v1362 = vmul.f32 %v1191, %v1360
      %v1363 = vmul.f32 %v1203, %v1360
      %v1364 = vmul.f32 %v1215, %v1360
      %v1365 = vmul.f32 %v1227, %v1360
      %v1366 = vmul.f32 %v1239, %v1360
      %v1367 = vmul.f32 %v1251, %v1360
      %v1368 = vmul.f32 %v1263, %v1360
      %v1369 = vperm.slane %v1021, 1
      %v1370 = vmul.f32 %v1330, %v1369
      %v1371 = vmul.f32 %v1333, %v1369
      %v1372 = vmul.f32 %v1336, %v1369
      %v1373 = vmul.f32 %v1339, %v1369
      %v1374 = vmul.f32 %v1342, %v1369
      %v1375 = vmul.f32 %v1345, %v1369
      %v1376 = vmul.f32 %v1348, %v1369
      %v1377 = vmul.f32 %v1351, %v1369
      %v1378 = vadd.f32 %v1361, %v1370
      %v1379 = vadd.f32 %v1362, %v1371
      %v1380 = vadd.f32 %v1363, %v1372
      %v1381 = vadd.f32 %v1364, %v1373
      %v1382 = vadd.f32 %v1365, %v1374
      %v1383 = vadd.f32 %v1366, %v1375
      %v1384 = vadd.f32 %v1367, %v1376
      %v1385 = vadd.f32 %v1368, %v1377
      %v1386 = vperm.slane %v1021, 2
      %v1387 = vadd.f32 %v1378, %v1386
      %v1388 = vadd.f32 %v1379, %v1386
      %v1389 = vadd.f32 %v1380, %v1386
      %v1390 = vadd.f32 %v1381, %v1386
      %v1391 = vadd.f32 %v1382, %v1386
      %v1392 = vadd.f32 %v1383, %v1386
      %v1393 = vadd.f32 %v1384, %v1386
      %v1394 = vadd.f32 %v1385, %v1386
      %v1396 = vrot.slane %v1355, 1
      %v1397 = vrot.slane %v1355, 2
      %v1398 = vrot.slane %v1355, 3
      %v1399 = vrot.slane %v1355, 4
      %v1400 = vrot.slane %v1355, 5
      %v1401 = vrot.slane %v1355, 6
      %v1402 = vrot.slane %v1355, 7
      %v1403 = vperm.slane %v1355, 0
      %v1404 = vperm.slane %v1396, 0
      %v1405 = vperm.slane %v1397, 0
      %v1406 = vperm.slane %v1398, 0
      %v1407 = vperm.slane %v1399, 0
      %v1408 = vperm.slane %v1400, 0
      %v1409 = vperm.slane %v1401, 0
      %v1410 = vperm.slane %v1402, 0
      %v1419 = vadd.f32 %v1387, %v1403
      %v1420 = vadd.f32 %v1388, %v1404
      %v1421 = vadd.f32 %v1389, %v1405
      %v1422 = vadd.f32 %v1390, %v1406
      %v1423 = vadd.f32 %v1391, %v1407
      %v1424 = vadd.f32 %v1392, %v1408
      %v1425 = vadd.f32 %v1393, %v1409
      %v1426 = vadd.f32 %v1394, %v1410
      %v1427 = vadd.f32 %v1419, %v1359
      %v1428 = vadd.f32 %v1420, %v1359
      %v1429 = vadd.f32 %v1421, %v1359
      %v1430 = vadd.f32 %v1422, %v1359
      %v1431 = vadd.f32 %v1423, %v1359
      %v1432 = vadd.f32 %v1424, %v1359
      %v1433 = vadd.f32 %v1425, %v1359
      %v1434 = vadd.f32 %v1426, %v1359
      %v1435 = vmax.f32 %v1427, 0.0
      %v1436 = vmax.f32 %v1428, 0.0
      %v1437 = vmax.f32 %v1429, 0.0
      %v1438 = vmax.f32 %v1430, 0.0
      %v1439 = vmax.f32 %v1431, 0.0
      %v1440 = vmax.f32 %v1432, 0.0
      %v1441 = vmax.f32 %v1433, 0.0
      %v1442 = vmax.f32 %v1434, 0.0
      %1444 = vset.pattern.permute.xlu0 64
      %1445 = vperm.xlu0 %1444, %v1013
      %v1446 = vpop.permute.xlu0 %1445
      %1449 = vset.pattern.permute.xlu0 64
      %1450 = vperm.xlu0 %1449, %v1014
      %v1451 = vpop.permute.xlu0 %1450
      %1454 = vset.pattern.permute.xlu0 64
      %1455 = vperm.xlu0 %1454, %v1015
      %v1456 = vpop.permute.xlu0 %1455
      %1459 = vset.pattern.permute.xlu0 64
      %1460 = vperm.xlu0 %1459, %v1016
      %v1461 = vpop.permute.xlu0 %1460
      %1464 = vset.pattern.permute.xlu0 64
      %1465 = vperm.xlu0 %1464, %v1017
      %v1466 = vpop.permute.xlu0 %1465
      %1469 = vset.pattern.permute.xlu0 64
      %1470 = vperm.xlu0 %1469, %v1018
      %v1471 = vpop.permute.xlu0 %1470
      %1474 = vset.pattern.permute.xlu0 64
      %1475 = vperm.xlu0 %1474, %v1019
      %v1476 = vpop.permute.xlu0 %1475
      %1479 = vset.pattern.permute.xlu0 64
      %1480 = vperm.xlu0 %1479, %v1020
      %v1481 = vpop.permute.xlu0 %1480
      %v1483 = vmul.f32 %v1435, %v1446
      %v1484 = vmul.f32 %v1436, %v1451
      %v1485 = vmul.f32 %v1437, %v1456
      %v1486 = vmul.f32 %v1438, %v1461
      %v1487 = vmul.f32 %v1439, %v1466
      %v1488 = vmul.f32 %v1440, %v1471
      %v1489 = vmul.f32 %v1441, %v1476
      %v1490 = vmul.f32 %v1442, %v1481
      %1491 = vrot.lane.b32.xlu0 %v1023, 59
      %v1492 = vpop.permute.xlu0 %1491
      %v1494 = vsel %vm1028, %v1492, 0.0
      %1495 = vadd.xlane.f32.xlu0 %v1494
      %v1496 = vpop.xlane.xlu0 %1495
      %v1497 = vrsqrt.pop %v1496
      %v1498 = vmul.f32 %v1497, %v1496
      %v1499 = vmul.f32 %v1498, %v1497
      %v1500 = vmul.f32 0.5, %v1499
      %v1501 = vsub.f32 1.5, %v1500
      %v1502 = vmul.f32 %v1497, %v1501
      %v1503 = vmul.f32 %v1496, %v1502
      %vm1504 = vcmp.eq.f32.partialorder %v1496, inf
      %v1505 = vsel %vm1504, %v1496, %v1503
      %vm1506 = vcmp.eq.f32.partialorder %v1496, 0.0
      %v1507 = vand.u32 %v1496, 2147483648
      %v1508 = vsel %vm1506, %v1507, %v1505
      %1509 = vrot.lane.b32.xlu0 %v1044, 59
      %v1510 = vpop.permute.xlu0 %1509
      %v1512 = vsel %vm1028, %v1510, 0.0
      %1513 = vadd.xlane.f32.xlu0 %v1512
      %v1514 = vpop.xlane.xlu0 %1513
      %v1515 = vrsqrt.pop %v1514
      %v1516 = vmul.f32 %v1515, %v1514
      %v1517 = vmul.f32 %v1516, %v1515
      %v1518 = vmul.f32 0.5, %v1517
      %v1519 = vsub.f32 1.5, %v1518
      %v1520 = vmul.f32 %v1515, %v1519
      %v1521 = vmul.f32 %v1514, %v1520
      %vm1522 = vcmp.eq.f32.partialorder %v1514, inf
      %v1523 = vsel %vm1522, %v1514, %v1521
      %vm1524 = vcmp.eq.f32.partialorder %v1514, 0.0
      %v1525 = vand.u32 %v1514, 2147483648
      %v1526 = vsel %vm1524, %v1525, %v1523
      %v1527 = vadd.f32 %v1508, 1e-07
      %v1528 = vrcp.pop %v1527
      %v1529 = vmul.f32 %v1527, %v1528
      %v1530 = vsub.f32 1.0, %v1529
      %v1531 = vmul.f32 %v1528, %v1530
      %v1532 = vadd.f32 %v1528, %v1531
      %vm1533 = vweird.f32 %v1527
      %vm1534 = vweird.f32 %v1528
      %vm1535 = vmor %vm1533, %vm1534
      %v1536 = vsel %vm1535, %v1528, %v1532
      %v1537 = vand.u32 2147483647, %v1527
      %vm1538 = vcmp.eq.f32.partialorder %v1537, 8.507059e+37
      %v1539 = vand.u32 %v1527, 2147483648
      %v1540 = vor.u32 1.1754944e-38, %v1539
      %v1541 = vsel %vm1538, %v1540, %v1536
      %v1542 = vmul.f32 %v985, %v1541
      %v1543 = vadd.f32 %v1526, 1e-07
      %v1544 = vrcp.pop %v1543
      %v1545 = vmul.f32 %v1543, %v1544
      %v1546 = vsub.f32 1.0, %v1545
      %v1547 = vmul.f32 %v1544, %v1546
      %v1548 = vadd.f32 %v1544, %v1547
      %vm1549 = vweird.f32 %v1543
      %vm1550 = vweird.f32 %v1544
      %vm1551 = vmor %vm1549, %vm1550
      %v1552 = vsel %vm1551, %v1544, %v1548
      %v1553 = vand.u32 2147483647, %v1543
      %vm1554 = vcmp.eq.f32.partialorder %v1553, 8.507059e+37
      %v1555 = vand.u32 %v1543, 2147483648
      %v1556 = vor.u32 1.1754944e-38, %v1555
      %v1557 = vsel %vm1554, %v1556, %v1552
      %v1558 = vmul.f32 %v986, %v1557
      %1559 = vrot.lane.b32.xlu0 %v1104, 59
      %v1560 = vpop.permute.xlu0 %1559
      %1561 = vrot.lane.b32.xlu0 %v1105, 59
      %v1562 = vpop.permute.xlu0 %1561
      %1563 = vrot.lane.b32.xlu0 %v1106, 59
      %v1564 = vpop.permute.xlu0 %1563
      %1565 = vrot.lane.b32.xlu0 %v1107, 59
      %v1566 = vpop.permute.xlu0 %1565
      %1567 = vrot.lane.b32.xlu0 %v1108, 59
      %v1568 = vpop.permute.xlu0 %1567
      %1569 = vrot.lane.b32.xlu0 %v1109, 59
      %v1570 = vpop.permute.xlu0 %1569
      %1571 = vrot.lane.b32.xlu0 %v1110, 59
      %v1572 = vpop.permute.xlu0 %1571
      %1573 = vrot.lane.b32.xlu0 %v1111, 59
      %v1574 = vpop.permute.xlu0 %1573
      %v1583 = vsel %vm1028, %v1560, 0.0
      %1584 = vadd.xlane.f32.xlu0 %v1583
      %v1585 = vpop.xlane.xlu0 %1584
      %v1586 = vsel %vm1028, %v1562, 0.0
      %1587 = vadd.xlane.f32.xlu0 %v1586
      %v1588 = vpop.xlane.xlu0 %1587
      %v1589 = vsel %vm1028, %v1564, 0.0
      %1590 = vadd.xlane.f32.xlu0 %v1589
      %v1591 = vpop.xlane.xlu0 %1590
      %v1592 = vsel %vm1028, %v1566, 0.0
      %1593 = vadd.xlane.f32.xlu0 %v1592
      %v1594 = vpop.xlane.xlu0 %1593
      %v1595 = vsel %vm1028, %v1568, 0.0
      %1596 = vadd.xlane.f32.xlu0 %v1595
      %v1597 = vpop.xlane.xlu0 %1596
      %v1598 = vsel %vm1028, %v1570, 0.0
      %1599 = vadd.xlane.f32.xlu0 %v1598
      %v1600 = vpop.xlane.xlu0 %1599
      %v1601 = vsel %vm1028, %v1572, 0.0
      %1602 = vadd.xlane.f32.xlu0 %v1601
      %v1603 = vpop.xlane.xlu0 %1602
      %v1604 = vsel %vm1028, %v1574, 0.0
      %1605 = vadd.xlane.f32.xlu0 %v1604
      %v1606 = vpop.xlane.xlu0 %1605
      %v1607 = vrsqrt.pop %v1585
      %v1608 = vmul.f32 %v1607, %v1585
      %v1609 = vmul.f32 %v1608, %v1607
      %v1610 = vmul.f32 0.5, %v1609
      %v1611 = vsub.f32 1.5, %v1610
      %v1612 = vmul.f32 %v1607, %v1611
      %v1613 = vmul.f32 %v1585, %v1612
      %vm1614 = vcmp.eq.f32.partialorder %v1585, inf
      %v1615 = vsel %vm1614, %v1585, %v1613
      %vm1616 = vcmp.eq.f32.partialorder %v1585, 0.0
      %v1617 = vand.u32 %v1585, 2147483648
      %v1618 = vsel %vm1616, %v1617, %v1615
      %v1619 = vrsqrt.pop %v1588
      %v1620 = vmul.f32 %v1619, %v1588
      %v1621 = vmul.f32 %v1620, %v1619
      %v1622 = vmul.f32 0.5, %v1621
      %v1623 = vsub.f32 1.5, %v1622
      %v1624 = vmul.f32 %v1619, %v1623
      %v1625 = vmul.f32 %v1588, %v1624
      %vm1626 = vcmp.eq.f32.partialorder %v1588, inf
      %v1627 = vsel %vm1626, %v1588, %v1625
      %vm1628 = vcmp.eq.f32.partialorder %v1588, 0.0
      %v1629 = vand.u32 %v1588, 2147483648
      %v1630 = vsel %vm1628, %v1629, %v1627
      %v1631 = vrsqrt.pop %v1591
      %v1632 = vmul.f32 %v1631, %v1591
      %v1633 = vmul.f32 %v1632, %v1631
      %v1634 = vmul.f32 0.5, %v1633
      %v1635 = vsub.f32 1.5, %v1634
      %v1636 = vmul.f32 %v1631, %v1635
      %v1637 = vmul.f32 %v1591, %v1636
      %vm1638 = vcmp.eq.f32.partialorder %v1591, inf
      %v1639 = vsel %vm1638, %v1591, %v1637
      %vm1640 = vcmp.eq.f32.partialorder %v1591, 0.0
      %v1641 = vand.u32 %v1591, 2147483648
      %v1642 = vsel %vm1640, %v1641, %v1639
      %v1643 = vrsqrt.pop %v1594
      %v1644 = vmul.f32 %v1643, %v1594
      %v1645 = vmul.f32 %v1644, %v1643
      %v1646 = vmul.f32 0.5, %v1645
      %v1647 = vsub.f32 1.5, %v1646
      %v1648 = vmul.f32 %v1643, %v1647
      %v1649 = vmul.f32 %v1594, %v1648
      %vm1650 = vcmp.eq.f32.partialorder %v1594, inf
      %v1651 = vsel %vm1650, %v1594, %v1649
      %vm1652 = vcmp.eq.f32.partialorder %v1594, 0.0
      %v1653 = vand.u32 %v1594, 2147483648
      %v1654 = vsel %vm1652, %v1653, %v1651
      %v1655 = vrsqrt.pop %v1597
      %v1656 = vmul.f32 %v1655, %v1597
      %v1657 = vmul.f32 %v1656, %v1655
      %v1658 = vmul.f32 0.5, %v1657
      %v1659 = vsub.f32 1.5, %v1658
      %v1660 = vmul.f32 %v1655, %v1659
      %v1661 = vmul.f32 %v1597, %v1660
      %vm1662 = vcmp.eq.f32.partialorder %v1597, inf
      %v1663 = vsel %vm1662, %v1597, %v1661
      %vm1664 = vcmp.eq.f32.partialorder %v1597, 0.0
      %v1665 = vand.u32 %v1597, 2147483648
      %v1666 = vsel %vm1664, %v1665, %v1663
      %v1667 = vrsqrt.pop %v1600
      %v1668 = vmul.f32 %v1667, %v1600
      %v1669 = vmul.f32 %v1668, %v1667
      %v1670 = vmul.f32 0.5, %v1669
      %v1671 = vsub.f32 1.5, %v1670
      %v1672 = vmul.f32 %v1667, %v1671
      %v1673 = vmul.f32 %v1600, %v1672
      %vm1674 = vcmp.eq.f32.partialorder %v1600, inf
      %v1675 = vsel %vm1674, %v1600, %v1673
      %vm1676 = vcmp.eq.f32.partialorder %v1600, 0.0
      %v1677 = vand.u32 %v1600, 2147483648
      %v1678 = vsel %vm1676, %v1677, %v1675
      %v1679 = vrsqrt.pop %v1603
      %v1680 = vmul.f32 %v1679, %v1603
      %v1681 = vmul.f32 %v1680, %v1679
      %v1682 = vmul.f32 0.5, %v1681
      %v1683 = vsub.f32 1.5, %v1682
      %v1684 = vmul.f32 %v1679, %v1683
      %v1685 = vmul.f32 %v1603, %v1684
      %vm1686 = vcmp.eq.f32.partialorder %v1603, inf
      %v1687 = vsel %vm1686, %v1603, %v1685
      %vm1688 = vcmp.eq.f32.partialorder %v1603, 0.0
      %v1689 = vand.u32 %v1603, 2147483648
      %v1690 = vsel %vm1688, %v1689, %v1687
      %v1691 = vrsqrt.pop %v1606
      %v1692 = vmul.f32 %v1691, %v1606
      %v1693 = vmul.f32 %v1692, %v1691
      %v1694 = vmul.f32 0.5, %v1693
      %v1695 = vsub.f32 1.5, %v1694
      %v1696 = vmul.f32 %v1691, %v1695
      %v1697 = vmul.f32 %v1606, %v1696
      %vm1698 = vcmp.eq.f32.partialorder %v1606, inf
      %v1699 = vsel %vm1698, %v1606, %v1697
      %vm1700 = vcmp.eq.f32.partialorder %v1606, 0.0
      %v1701 = vand.u32 %v1606, 2147483648
      %v1702 = vsel %vm1700, %v1701, %v1699
      %v1704 = vrot.slane %v1542, 1
      %v1705 = vrot.slane %v1542, 2
      %v1706 = vrot.slane %v1542, 3
      %v1707 = vrot.slane %v1542, 4
      %v1708 = vrot.slane %v1542, 5
      %v1709 = vrot.slane %v1542, 6
      %v1710 = vrot.slane %v1542, 7
      %v1711 = vperm.slane %v1542, 0
      %v1712 = vperm.slane %v1704, 0
      %v1713 = vperm.slane %v1705, 0
      %v1714 = vperm.slane %v1706, 0
      %v1715 = vperm.slane %v1707, 0
      %v1716 = vperm.slane %v1708, 0
      %v1717 = vperm.slane %v1709, 0
      %v1718 = vperm.slane %v1710, 0
      %v1727 = vmul.f32 %v1711, %v1558
      %v1728 = vmul.f32 %v1712, %v1558
      %v1729 = vmul.f32 %v1713, %v1558
      %v1730 = vmul.f32 %v1714, %v1558
      %v1731 = vmul.f32 %v1715, %v1558
      %v1732 = vmul.f32 %v1716, %v1558
      %v1733 = vmul.f32 %v1717, %v1558
      %v1734 = vmul.f32 %v1718, %v1558
      %1743 = vrot.lane.b32.xlu0 %v1727, 59
      %v1744 = vpop.permute.xlu0 %1743
      %1745 = vrot.lane.b32.xlu0 %v1728, 59
      %v1746 = vpop.permute.xlu0 %1745
      %1747 = vrot.lane.b32.xlu0 %v1729, 59
      %v1748 = vpop.permute.xlu0 %1747
      %1749 = vrot.lane.b32.xlu0 %v1730, 59
      %v1750 = vpop.permute.xlu0 %1749
      %1751 = vrot.lane.b32.xlu0 %v1731, 59
      %v1752 = vpop.permute.xlu0 %1751
      %1753 = vrot.lane.b32.xlu0 %v1732, 59
      %v1754 = vpop.permute.xlu0 %1753
      %1755 = vrot.lane.b32.xlu0 %v1733, 59
      %v1756 = vpop.permute.xlu0 %1755
      %1757 = vrot.lane.b32.xlu0 %v1734, 59
      %v1758 = vpop.permute.xlu0 %1757
      %v1767 = vsel %vm1028, %v1744, 0.0
      %1768 = vadd.xlane.f32.xlu0 %v1767
      %v1769 = vpop.xlane.xlu0 %1768
      %v1770 = vsel %vm1028, %v1746, 0.0
      %1771 = vadd.xlane.f32.xlu0 %v1770
      %v1772 = vpop.xlane.xlu0 %1771
      %v1773 = vsel %vm1028, %v1748, 0.0
      %1774 = vadd.xlane.f32.xlu0 %v1773
      %v1775 = vpop.xlane.xlu0 %1774
      %v1776 = vsel %vm1028, %v1750, 0.0
      %1777 = vadd.xlane.f32.xlu0 %v1776
      %v1778 = vpop.xlane.xlu0 %1777
      %v1779 = vsel %vm1028, %v1752, 0.0
      %1780 = vadd.xlane.f32.xlu0 %v1779
      %v1781 = vpop.xlane.xlu0 %1780
      %v1782 = vsel %vm1028, %v1754, 0.0
      %1783 = vadd.xlane.f32.xlu0 %v1782
      %v1784 = vpop.xlane.xlu0 %1783
      %v1785 = vsel %vm1028, %v1756, 0.0
      %1786 = vadd.xlane.f32.xlu0 %v1785
      %v1787 = vpop.xlane.xlu0 %1786
      %v1788 = vsel %vm1028, %v1758, 0.0
      %1789 = vadd.xlane.f32.xlu0 %v1788
      %v1790 = vpop.xlane.xlu0 %1789
      %v1791 = vperm.slane %v1022, 3
      %v1792 = vmul.f32 %v1508, %v1791
      %v1793 = vperm.slane %v1022, 4
      %v1794 = vadd.f32 %v1792, %v1793
      %v1795 = vperm.slane %v1022, 5
      %v1796 = vmul.f32 %v1526, %v1795
      %v1797 = vperm.slane %v1022, 6
      %v1798 = vadd.f32 %v1796, %v1797
      %v1799 = vperm.slane %v1022, 0
      %v1800 = vmul.f32 %v1618, %v1799
      %v1801 = vmul.f32 %v1630, %v1799
      %v1802 = vmul.f32 %v1642, %v1799
      %v1803 = vmul.f32 %v1654, %v1799
      %v1804 = vmul.f32 %v1666, %v1799
      %v1805 = vmul.f32 %v1678, %v1799
      %v1806 = vmul.f32 %v1690, %v1799
      %v1807 = vmul.f32 %v1702, %v1799
      %v1808 = vperm.slane %v1022, 1
      %v1809 = vmul.f32 %v1769, %v1808
      %v1810 = vmul.f32 %v1772, %v1808
      %v1811 = vmul.f32 %v1775, %v1808
      %v1812 = vmul.f32 %v1778, %v1808
      %v1813 = vmul.f32 %v1781, %v1808
      %v1814 = vmul.f32 %v1784, %v1808
      %v1815 = vmul.f32 %v1787, %v1808
      %v1816 = vmul.f32 %v1790, %v1808
      %v1817 = vadd.f32 %v1800, %v1809
      %v1818 = vadd.f32 %v1801, %v1810
      %v1819 = vadd.f32 %v1802, %v1811
      %v1820 = vadd.f32 %v1803, %v1812
      %v1821 = vadd.f32 %v1804, %v1813
      %v1822 = vadd.f32 %v1805, %v1814
      %v1823 = vadd.f32 %v1806, %v1815
      %v1824 = vadd.f32 %v1807, %v1816
      %v1825 = vperm.slane %v1022, 2
      %v1826 = vadd.f32 %v1817, %v1825
      %v1827 = vadd.f32 %v1818, %v1825
      %v1828 = vadd.f32 %v1819, %v1825
      %v1829 = vadd.f32 %v1820, %v1825
      %v1830 = vadd.f32 %v1821, %v1825
      %v1831 = vadd.f32 %v1822, %v1825
      %v1832 = vadd.f32 %v1823, %v1825
      %v1833 = vadd.f32 %v1824, %v1825
      %v1835 = vrot.slane %v1794, 1
      %v1836 = vrot.slane %v1794, 2
      %v1837 = vrot.slane %v1794, 3
      %v1838 = vrot.slane %v1794, 4
      %v1839 = vrot.slane %v1794, 5
      %v1840 = vrot.slane %v1794, 6
      %v1841 = vrot.slane %v1794, 7
      %v1842 = vperm.slane %v1794, 0
      %v1843 = vperm.slane %v1835, 0
      %v1844 = vperm.slane %v1836, 0
      %v1845 = vperm.slane %v1837, 0
      %v1846 = vperm.slane %v1838, 0
      %v1847 = vperm.slane %v1839, 0
      %v1848 = vperm.slane %v1840, 0
      %v1849 = vperm.slane %v1841, 0
      %v1858 = vadd.f32 %v1826, %v1842
      %v1859 = vadd.f32 %v1827, %v1843
      %v1860 = vadd.f32 %v1828, %v1844
      %v1861 = vadd.f32 %v1829, %v1845
      %v1862 = vadd.f32 %v1830, %v1846
      %v1863 = vadd.f32 %v1831, %v1847
      %v1864 = vadd.f32 %v1832, %v1848
      %v1865 = vadd.f32 %v1833, %v1849
      %v1866 = vadd.f32 %v1858, %v1798
      %v1867 = vadd.f32 %v1859, %v1798
      %v1868 = vadd.f32 %v1860, %v1798
      %v1869 = vadd.f32 %v1861, %v1798
      %v1870 = vadd.f32 %v1862, %v1798
      %v1871 = vadd.f32 %v1863, %v1798
      %v1872 = vadd.f32 %v1864, %v1798
      %v1873 = vadd.f32 %v1865, %v1798
      %v1874 = vmax.f32 %v1866, 0.0
      %v1875 = vmax.f32 %v1867, 0.0
      %v1876 = vmax.f32 %v1868, 0.0
      %v1877 = vmax.f32 %v1869, 0.0
      %v1878 = vmax.f32 %v1870, 0.0
      %v1879 = vmax.f32 %v1871, 0.0
      %v1880 = vmax.f32 %v1872, 0.0
      %v1881 = vmax.f32 %v1873, 0.0
      %1882 = vset.pattern.permute.xlu0 65
      %1883 = vperm.xlu0 %1882, %v1013
      %v1884 = vpop.permute.xlu0 %1883
      %1886 = vset.pattern.permute.xlu0 65
      %1887 = vperm.xlu0 %1886, %v1014
      %v1888 = vpop.permute.xlu0 %1887
      %1890 = vset.pattern.permute.xlu0 65
      %1891 = vperm.xlu0 %1890, %v1015
      %v1892 = vpop.permute.xlu0 %1891
      %1894 = vset.pattern.permute.xlu0 65
      %1895 = vperm.xlu0 %1894, %v1016
      %v1896 = vpop.permute.xlu0 %1895
      %1898 = vset.pattern.permute.xlu0 65
      %1899 = vperm.xlu0 %1898, %v1017
      %v1900 = vpop.permute.xlu0 %1899
      %1902 = vset.pattern.permute.xlu0 65
      %1903 = vperm.xlu0 %1902, %v1018
      %v1904 = vpop.permute.xlu0 %1903
      %1906 = vset.pattern.permute.xlu0 65
      %1907 = vperm.xlu0 %1906, %v1019
      %v1908 = vpop.permute.xlu0 %1907
      %1910 = vset.pattern.permute.xlu0 65
      %1911 = vperm.xlu0 %1910, %v1020
      %v1912 = vpop.permute.xlu0 %1911
      %v1914 = vmul.f32 %v1874, %v1884
      %v1915 = vmul.f32 %v1875, %v1888
      %v1916 = vmul.f32 %v1876, %v1892
      %v1917 = vmul.f32 %v1877, %v1896
      %v1918 = vmul.f32 %v1878, %v1900
      %v1919 = vmul.f32 %v1879, %v1904
      %v1920 = vmul.f32 %v1880, %v1908
      %v1921 = vmul.f32 %v1881, %v1912
      %vm1922 = vcmask 130048
      %v1923 = vsel %vm1922, %v1483, 0.0
      %v1924 = vrot.slane %v1923, 4
      %v1925 = vadd.f32 %v1923, %v1924
      %v1926 = vrot.slane %v1925, 2
      %v1927 = vadd.f32 %v1925, %v1926
      %v1928 = vrot.slane %v1927, 1
      %v1929 = vadd.f32 %v1927, %v1928
      %v1930 = vsel %vm1922, %v1484, 0.0
      %v1931 = vrot.slane %v1930, 4
      %v1932 = vadd.f32 %v1930, %v1931
      %v1933 = vrot.slane %v1932, 2
      %v1934 = vadd.f32 %v1932, %v1933
      %v1935 = vrot.slane %v1934, 1
      %v1936 = vadd.f32 %v1934, %v1935
      %v1937 = vsel %vm1922, %v1485, 0.0
      %v1938 = vrot.slane %v1937, 4
      %v1939 = vadd.f32 %v1937, %v1938
      %v1940 = vrot.slane %v1939, 2
      %v1941 = vadd.f32 %v1939, %v1940
      %v1942 = vrot.slane %v1941, 1
      %v1943 = vadd.f32 %v1941, %v1942
      %v1944 = vsel %vm1922, %v1486, 0.0
      %v1945 = vrot.slane %v1944, 4
      %v1946 = vadd.f32 %v1944, %v1945
      %v1947 = vrot.slane %v1946, 2
      %v1948 = vadd.f32 %v1946, %v1947
      %v1949 = vrot.slane %v1948, 1
      %v1950 = vadd.f32 %v1948, %v1949
      %v1951 = vsel %vm1922, %v1487, 0.0
      %v1952 = vrot.slane %v1951, 4
      %v1953 = vadd.f32 %v1951, %v1952
      %v1954 = vrot.slane %v1953, 2
      %v1955 = vadd.f32 %v1953, %v1954
      %v1956 = vrot.slane %v1955, 1
      %v1957 = vadd.f32 %v1955, %v1956
      %v1958 = vsel %vm1922, %v1488, 0.0
      %v1959 = vrot.slane %v1958, 4
      %v1960 = vadd.f32 %v1958, %v1959
      %v1961 = vrot.slane %v1960, 2
      %v1962 = vadd.f32 %v1960, %v1961
      %v1963 = vrot.slane %v1962, 1
      %v1964 = vadd.f32 %v1962, %v1963
      %v1965 = vsel %vm1922, %v1489, 0.0
      %v1966 = vrot.slane %v1965, 4
      %v1967 = vadd.f32 %v1965, %v1966
      %v1968 = vrot.slane %v1967, 2
      %v1969 = vadd.f32 %v1967, %v1968
      %v1970 = vrot.slane %v1969, 1
      %v1971 = vadd.f32 %v1969, %v1970
      %v1972 = vsel %vm1922, %v1490, 0.0
      %v1973 = vrot.slane %v1972, 4
      %v1974 = vadd.f32 %v1972, %v1973
      %v1975 = vrot.slane %v1974, 2
      %v1976 = vadd.f32 %v1974, %v1975
      %v1977 = vrot.slane %v1976, 1
      %v1978 = vadd.f32 %v1976, %v1977
      %v1979 = vsub.f32 1.0, %v986
      %v1980 = vmul.f32 %v1979, 100000.0
      %1982 = vset.pattern.permute.xlu0 64
      %1983 = vperm.xlu0 %1982, %v1980
      %v1984 = vpop.permute.xlu0 %1983
      %v1986 = vadd.f32 %v1483, %v1984
      %v1987 = vadd.f32 %v1484, %v1984
      %v1988 = vadd.f32 %v1485, %v1984
      %v1989 = vadd.f32 %v1486, %v1984
      %v1990 = vadd.f32 %v1487, %v1984
      %v1991 = vadd.f32 %v1488, %v1984
      %v1992 = vadd.f32 %v1489, %v1984
      %v1993 = vadd.f32 %v1490, %v1984
      %v1994 = vsel %vm1922, %v1986, inf
      %v1995 = vrot.slane %v1994, 4
      %v1996 = vmin.f32 %v1994, %v1995
      %v1997 = vrot.slane %v1996, 2
      %v1998 = vmin.f32 %v1996, %v1997
      %v1999 = vrot.slane %v1998, 1
      %v2000 = vmin.f32 %v1998, %v1999
      %v2001 = vsel %vm1922, %v1987, inf
      %v2002 = vrot.slane %v2001, 4
      %v2003 = vmin.f32 %v2001, %v2002
      %v2004 = vrot.slane %v2003, 2
      %v2005 = vmin.f32 %v2003, %v2004
      %v2006 = vrot.slane %v2005, 1
      %v2007 = vmin.f32 %v2005, %v2006
      %v2008 = vsel %vm1922, %v1988, inf
      %v2009 = vrot.slane %v2008, 4
      %v2010 = vmin.f32 %v2008, %v2009
      %v2011 = vrot.slane %v2010, 2
      %v2012 = vmin.f32 %v2010, %v2011
      %v2013 = vrot.slane %v2012, 1
      %v2014 = vmin.f32 %v2012, %v2013
      %v2015 = vsel %vm1922, %v1989, inf
      %v2016 = vrot.slane %v2015, 4
      %v2017 = vmin.f32 %v2015, %v2016
      %v2018 = vrot.slane %v2017, 2
      %v2019 = vmin.f32 %v2017, %v2018
      %v2020 = vrot.slane %v2019, 1
      %v2021 = vmin.f32 %v2019, %v2020
      %v2022 = vsel %vm1922, %v1990, inf
      %v2023 = vrot.slane %v2022, 4
      %v2024 = vmin.f32 %v2022, %v2023
      %v2025 = vrot.slane %v2024, 2
      %v2026 = vmin.f32 %v2024, %v2025
      %v2027 = vrot.slane %v2026, 1
      %v2028 = vmin.f32 %v2026, %v2027
      %v2029 = vsel %vm1922, %v1991, inf
      %v2030 = vrot.slane %v2029, 4
      %v2031 = vmin.f32 %v2029, %v2030
      %v2032 = vrot.slane %v2031, 2
      %v2033 = vmin.f32 %v2031, %v2032
      %v2034 = vrot.slane %v2033, 1
      %v2035 = vmin.f32 %v2033, %v2034
      %v2036 = vsel %vm1922, %v1992, inf
      %v2037 = vrot.slane %v2036, 4
      %v2038 = vmin.f32 %v2036, %v2037
      %v2039 = vrot.slane %v2038, 2
      %v2040 = vmin.f32 %v2038, %v2039
      %v2041 = vrot.slane %v2040, 1
      %v2042 = vmin.f32 %v2040, %v2041
      %v2043 = vsel %vm1922, %v1993, inf
      %v2044 = vrot.slane %v2043, 4
      %v2045 = vmin.f32 %v2043, %v2044
      %v2046 = vrot.slane %v2045, 2
      %v2047 = vmin.f32 %v2045, %v2046
      %v2048 = vrot.slane %v2047, 1
      %v2049 = vmin.f32 %v2047, %v2048
      %v2050 = vsub.f32 %v1483, %v1984
      %v2051 = vsub.f32 %v1484, %v1984
      %v2052 = vsub.f32 %v1485, %v1984
      %v2053 = vsub.f32 %v1486, %v1984
      %v2054 = vsub.f32 %v1487, %v1984
      %v2055 = vsub.f32 %v1488, %v1984
      %v2056 = vsub.f32 %v1489, %v1984
      %v2057 = vsub.f32 %v1490, %v1984
      %v2058 = vsel %vm1922, %v2050, -inf
      %v2059 = vrot.slane %v2058, 4
      %v2060 = vmax.f32 %v2058, %v2059
      %v2061 = vrot.slane %v2060, 2
      %v2062 = vmax.f32 %v2060, %v2061
      %v2063 = vrot.slane %v2062, 1
      %v2064 = vmax.f32 %v2062, %v2063
      %v2065 = vsel %vm1922, %v2051, -inf
      %v2066 = vrot.slane %v2065, 4
      %v2067 = vmax.f32 %v2065, %v2066
      %v2068 = vrot.slane %v2067, 2
      %v2069 = vmax.f32 %v2067, %v2068
      %v2070 = vrot.slane %v2069, 1
      %v2071 = vmax.f32 %v2069, %v2070
      %v2072 = vsel %vm1922, %v2052, -inf
      %v2073 = vrot.slane %v2072, 4
      %v2074 = vmax.f32 %v2072, %v2073
      %v2075 = vrot.slane %v2074, 2
      %v2076 = vmax.f32 %v2074, %v2075
      %v2077 = vrot.slane %v2076, 1
      %v2078 = vmax.f32 %v2076, %v2077
      %v2079 = vsel %vm1922, %v2053, -inf
      %v2080 = vrot.slane %v2079, 4
      %v2081 = vmax.f32 %v2079, %v2080
      %v2082 = vrot.slane %v2081, 2
      %v2083 = vmax.f32 %v2081, %v2082
      %v2084 = vrot.slane %v2083, 1
      %v2085 = vmax.f32 %v2083, %v2084
      %v2086 = vsel %vm1922, %v2054, -inf
      %v2087 = vrot.slane %v2086, 4
      %v2088 = vmax.f32 %v2086, %v2087
      %v2089 = vrot.slane %v2088, 2
      %v2090 = vmax.f32 %v2088, %v2089
      %v2091 = vrot.slane %v2090, 1
      %v2092 = vmax.f32 %v2090, %v2091
      %v2093 = vsel %vm1922, %v2055, -inf
      %v2094 = vrot.slane %v2093, 4
      %v2095 = vmax.f32 %v2093, %v2094
      %v2096 = vrot.slane %v2095, 2
      %v2097 = vmax.f32 %v2095, %v2096
      %v2098 = vrot.slane %v2097, 1
      %v2099 = vmax.f32 %v2097, %v2098
      %v2100 = vsel %vm1922, %v2056, -inf
      %v2101 = vrot.slane %v2100, 4
      %v2102 = vmax.f32 %v2100, %v2101
      %v2103 = vrot.slane %v2102, 2
      %v2104 = vmax.f32 %v2102, %v2103
      %v2105 = vrot.slane %v2104, 1
      %v2106 = vmax.f32 %v2104, %v2105
      %v2107 = vsel %vm1922, %v2057, -inf
      %v2108 = vrot.slane %v2107, 4
      %v2109 = vmax.f32 %v2107, %v2108
      %v2110 = vrot.slane %v2109, 2
      %v2111 = vmax.f32 %v2109, %v2110
      %v2112 = vrot.slane %v2111, 1
      %v2113 = vmax.f32 %v2111, %v2112
      %v2114 = vmul.f32 %v1483, %v1483
      %v2115 = vmul.f32 %v1484, %v1484
      %v2116 = vmul.f32 %v1485, %v1485
      %v2117 = vmul.f32 %v1486, %v1486
      %v2118 = vmul.f32 %v1487, %v1487
      %v2119 = vmul.f32 %v1488, %v1488
      %v2120 = vmul.f32 %v1489, %v1489
      %v2121 = vmul.f32 %v1490, %v1490
      %v2122 = vsel %vm1922, %v2114, 0.0
      %v2123 = vrot.slane %v2122, 4
      %v2124 = vadd.f32 %v2122, %v2123
      %v2125 = vrot.slane %v2124, 2
      %v2126 = vadd.f32 %v2124, %v2125
      %v2127 = vrot.slane %v2126, 1
      %v2128 = vadd.f32 %v2126, %v2127
      %v2129 = vsel %vm1922, %v2115, 0.0
      %v2130 = vrot.slane %v2129, 4
      %v2131 = vadd.f32 %v2129, %v2130
      %v2132 = vrot.slane %v2131, 2
      %v2133 = vadd.f32 %v2131, %v2132
      %v2134 = vrot.slane %v2133, 1
      %v2135 = vadd.f32 %v2133, %v2134
      %v2136 = vsel %vm1922, %v2116, 0.0
      %v2137 = vrot.slane %v2136, 4
      %v2138 = vadd.f32 %v2136, %v2137
      %v2139 = vrot.slane %v2138, 2
      %v2140 = vadd.f32 %v2138, %v2139
      %v2141 = vrot.slane %v2140, 1
      %v2142 = vadd.f32 %v2140, %v2141
      %v2143 = vsel %vm1922, %v2117, 0.0
      %v2144 = vrot.slane %v2143, 4
      %v2145 = vadd.f32 %v2143, %v2144
      %v2146 = vrot.slane %v2145, 2
      %v2147 = vadd.f32 %v2145, %v2146
      %v2148 = vrot.slane %v2147, 1
      %v2149 = vadd.f32 %v2147, %v2148
      %v2150 = vsel %vm1922, %v2118, 0.0
      %v2151 = vrot.slane %v2150, 4
      %v2152 = vadd.f32 %v2150, %v2151
      %v2153 = vrot.slane %v2152, 2
      %v2154 = vadd.f32 %v2152, %v2153
      %v2155 = vrot.slane %v2154, 1
      %v2156 = vadd.f32 %v2154, %v2155
      %v2157 = vsel %vm1922, %v2119, 0.0
      %v2158 = vrot.slane %v2157, 4
      %v2159 = vadd.f32 %v2157, %v2158
      %v2160 = vrot.slane %v2159, 2
      %v2161 = vadd.f32 %v2159, %v2160
      %v2162 = vrot.slane %v2161, 1
      %v2163 = vadd.f32 %v2161, %v2162
      %v2164 = vsel %vm1922, %v2120, 0.0
      %v2165 = vrot.slane %v2164, 4
      %v2166 = vadd.f32 %v2164, %v2165
      %v2167 = vrot.slane %v2166, 2
      %v2168 = vadd.f32 %v2166, %v2167
      %v2169 = vrot.slane %v2168, 1
      %v2170 = vadd.f32 %v2168, %v2169
      %v2171 = vsel %vm1922, %v2121, 0.0
      %v2172 = vrot.slane %v2171, 4
      %v2173 = vadd.f32 %v2171, %v2172
      %v2174 = vrot.slane %v2173, 2
      %v2175 = vadd.f32 %v2173, %v2174
      %v2176 = vrot.slane %v2175, 1
      %v2177 = vadd.f32 %v2175, %v2176
      %vm2186 = vcmask 1041409
      %v2187 = vsel %vm2186, %v1936, %v1929
      %vm2188 = vcmask 1042434
      %v2189 = vsel %vm2188, %v1943, %v2187
      %vm2190 = vcmask 1043459
      %v2191 = vsel %vm2190, %v1950, %v2189
      %vm2192 = vcmask 1044484
      %v2193 = vsel %vm2192, %v1957, %v2191
      %vm2194 = vcmask 1045509
      %v2195 = vsel %vm2194, %v1964, %v2193
      %vm2196 = vcmask 1046534
      %v2197 = vsel %vm2196, %v1971, %v2195
      %vm2198 = vcmask 1047559
      %v2199 = vsel %vm2198, %v1978, %v2197
      %v2209 = vsel %vm2186, %v2007, %v2000
      %v2210 = vsel %vm2188, %v2014, %v2209
      %v2211 = vsel %vm2190, %v2021, %v2210
      %v2212 = vsel %vm2192, %v2028, %v2211
      %v2213 = vsel %vm2194, %v2035, %v2212
      %v2214 = vsel %vm2196, %v2042, %v2213
      %v2215 = vsel %vm2198, %v2049, %v2214
      %2216 = vrot.lane.b32.xlu0 %v2215, 16
      %v2217 = vpop.permute.xlu0 %2216
      %v2227 = vsel %vm2186, %v2071, %v2064
      %v2228 = vsel %vm2188, %v2078, %v2227
      %v2229 = vsel %vm2190, %v2085, %v2228
      %v2230 = vsel %vm2192, %v2092, %v2229
      %v2231 = vsel %vm2194, %v2099, %v2230
      %v2232 = vsel %vm2196, %v2106, %v2231
      %v2233 = vsel %vm2198, %v2113, %v2232
      %2234 = vrot.lane.b32.xlu0 %v2233, 32
      %v2235 = vpop.permute.xlu0 %2234
      %v2245 = vsel %vm2186, %v2135, %v2128
      %v2246 = vsel %vm2188, %v2142, %v2245
      %v2247 = vsel %vm2190, %v2149, %v2246
      %v2248 = vsel %vm2192, %v2156, %v2247
      %v2249 = vsel %vm2194, %v2163, %v2248
      %v2250 = vsel %vm2196, %v2170, %v2249
      %v2251 = vsel %vm2198, %v2177, %v2250
      %2252 = vrot.lane.b32.xlu0 %v2251, 48
      %v2253 = vpop.permute.xlu0 %2252
      %v2255 = vsel %vm1922, %v2199, %v2217
      %vm2256 = vcmask 261120
      %v2257 = vsel %vm2256, %v2255, %v2235
      %vm2258 = vcmask 392192
      %v2259 = vsel %vm2258, %v2257, %v2253
      %v2260 = vsel %vm1922, %v1914, 0.0
      %v2261 = vrot.slane %v2260, 4
      %v2262 = vadd.f32 %v2260, %v2261
      %v2263 = vrot.slane %v2262, 2
      %v2264 = vadd.f32 %v2262, %v2263
      %v2265 = vrot.slane %v2264, 1
      %v2266 = vadd.f32 %v2264, %v2265
      %v2267 = vsel %vm1922, %v1915, 0.0
      %v2268 = vrot.slane %v2267, 4
      %v2269 = vadd.f32 %v2267, %v2268
      %v2270 = vrot.slane %v2269, 2
      %v2271 = vadd.f32 %v2269, %v2270
      %v2272 = vrot.slane %v2271, 1
      %v2273 = vadd.f32 %v2271, %v2272
      %v2274 = vsel %vm1922, %v1916, 0.0
      %v2275 = vrot.slane %v2274, 4
      %v2276 = vadd.f32 %v2274, %v2275
      %v2277 = vrot.slane %v2276, 2
      %v2278 = vadd.f32 %v2276, %v2277
      %v2279 = vrot.slane %v2278, 1
      %v2280 = vadd.f32 %v2278, %v2279
      %v2281 = vsel %vm1922, %v1917, 0.0
      %v2282 = vrot.slane %v2281, 4
      %v2283 = vadd.f32 %v2281, %v2282
      %v2284 = vrot.slane %v2283, 2
      %v2285 = vadd.f32 %v2283, %v2284
      %v2286 = vrot.slane %v2285, 1
      %v2287 = vadd.f32 %v2285, %v2286
      %v2288 = vsel %vm1922, %v1918, 0.0
      %v2289 = vrot.slane %v2288, 4
      %v2290 = vadd.f32 %v2288, %v2289
      %v2291 = vrot.slane %v2290, 2
      %v2292 = vadd.f32 %v2290, %v2291
      %v2293 = vrot.slane %v2292, 1
      %v2294 = vadd.f32 %v2292, %v2293
      %v2295 = vsel %vm1922, %v1919, 0.0
      %v2296 = vrot.slane %v2295, 4
      %v2297 = vadd.f32 %v2295, %v2296
      %v2298 = vrot.slane %v2297, 2
      %v2299 = vadd.f32 %v2297, %v2298
      %v2300 = vrot.slane %v2299, 1
      %v2301 = vadd.f32 %v2299, %v2300
      %v2302 = vsel %vm1922, %v1920, 0.0
      %v2303 = vrot.slane %v2302, 4
      %v2304 = vadd.f32 %v2302, %v2303
      %v2305 = vrot.slane %v2304, 2
      %v2306 = vadd.f32 %v2304, %v2305
      %v2307 = vrot.slane %v2306, 1
      %v2308 = vadd.f32 %v2306, %v2307
      %v2309 = vsel %vm1922, %v1921, 0.0
      %v2310 = vrot.slane %v2309, 4
      %v2311 = vadd.f32 %v2309, %v2310
      %v2312 = vrot.slane %v2311, 2
      %v2313 = vadd.f32 %v2311, %v2312
      %v2314 = vrot.slane %v2313, 1
      %v2315 = vadd.f32 %v2313, %v2314
      %2316 = vset.pattern.permute.xlu0 65
      %2317 = vperm.xlu0 %2316, %v1980
      %v2318 = vpop.permute.xlu0 %2317
      %v2320 = vadd.f32 %v1914, %v2318
      %v2321 = vadd.f32 %v1915, %v2318
      %v2322 = vadd.f32 %v1916, %v2318
      %v2323 = vadd.f32 %v1917, %v2318
      %v2324 = vadd.f32 %v1918, %v2318
      %v2325 = vadd.f32 %v1919, %v2318
      %v2326 = vadd.f32 %v1920, %v2318
      %v2327 = vadd.f32 %v1921, %v2318
      %v2328 = vsel %vm1922, %v2320, inf
      %v2329 = vrot.slane %v2328, 4
      %v2330 = vmin.f32 %v2328, %v2329
      %v2331 = vrot.slane %v2330, 2
      %v2332 = vmin.f32 %v2330, %v2331
      %v2333 = vrot.slane %v2332, 1
      %v2334 = vmin.f32 %v2332, %v2333
      %v2335 = vsel %vm1922, %v2321, inf
      %v2336 = vrot.slane %v2335, 4
      %v2337 = vmin.f32 %v2335, %v2336
      %v2338 = vrot.slane %v2337, 2
      %v2339 = vmin.f32 %v2337, %v2338
      %v2340 = vrot.slane %v2339, 1
      %v2341 = vmin.f32 %v2339, %v2340
      %v2342 = vsel %vm1922, %v2322, inf
      %v2343 = vrot.slane %v2342, 4
      %v2344 = vmin.f32 %v2342, %v2343
      %v2345 = vrot.slane %v2344, 2
      %v2346 = vmin.f32 %v2344, %v2345
      %v2347 = vrot.slane %v2346, 1
      %v2348 = vmin.f32 %v2346, %v2347
      %v2349 = vsel %vm1922, %v2323, inf
      %v2350 = vrot.slane %v2349, 4
      %v2351 = vmin.f32 %v2349, %v2350
      %v2352 = vrot.slane %v2351, 2
      %v2353 = vmin.f32 %v2351, %v2352
      %v2354 = vrot.slane %v2353, 1
      %v2355 = vmin.f32 %v2353, %v2354
      %v2356 = vsel %vm1922, %v2324, inf
      %v2357 = vrot.slane %v2356, 4
      %v2358 = vmin.f32 %v2356, %v2357
      %v2359 = vrot.slane %v2358, 2
      %v2360 = vmin.f32 %v2358, %v2359
      %v2361 = vrot.slane %v2360, 1
      %v2362 = vmin.f32 %v2360, %v2361
      %v2363 = vsel %vm1922, %v2325, inf
      %v2364 = vrot.slane %v2363, 4
      %v2365 = vmin.f32 %v2363, %v2364
      %v2366 = vrot.slane %v2365, 2
      %v2367 = vmin.f32 %v2365, %v2366
      %v2368 = vrot.slane %v2367, 1
      %v2369 = vmin.f32 %v2367, %v2368
      %v2370 = vsel %vm1922, %v2326, inf
      %v2371 = vrot.slane %v2370, 4
      %v2372 = vmin.f32 %v2370, %v2371
      %v2373 = vrot.slane %v2372, 2
      %v2374 = vmin.f32 %v2372, %v2373
      %v2375 = vrot.slane %v2374, 1
      %v2376 = vmin.f32 %v2374, %v2375
      %v2377 = vsel %vm1922, %v2327, inf
      %v2378 = vrot.slane %v2377, 4
      %v2379 = vmin.f32 %v2377, %v2378
      %v2380 = vrot.slane %v2379, 2
      %v2381 = vmin.f32 %v2379, %v2380
      %v2382 = vrot.slane %v2381, 1
      %v2383 = vmin.f32 %v2381, %v2382
      %v2384 = vsub.f32 %v1914, %v2318
      %v2385 = vsub.f32 %v1915, %v2318
      %v2386 = vsub.f32 %v1916, %v2318
      %v2387 = vsub.f32 %v1917, %v2318
      %v2388 = vsub.f32 %v1918, %v2318
      %v2389 = vsub.f32 %v1919, %v2318
      %v2390 = vsub.f32 %v1920, %v2318
      %v2391 = vsub.f32 %v1921, %v2318
      %v2392 = vsel %vm1922, %v2384, -inf
      %v2393 = vrot.slane %v2392, 4
      %v2394 = vmax.f32 %v2392, %v2393
      %v2395 = vrot.slane %v2394, 2
      %v2396 = vmax.f32 %v2394, %v2395
      %v2397 = vrot.slane %v2396, 1
      %v2398 = vmax.f32 %v2396, %v2397
      %v2399 = vsel %vm1922, %v2385, -inf
      %v2400 = vrot.slane %v2399, 4
      %v2401 = vmax.f32 %v2399, %v2400
      %v2402 = vrot.slane %v2401, 2
      %v2403 = vmax.f32 %v2401, %v2402
      %v2404 = vrot.slane %v2403, 1
      %v2405 = vmax.f32 %v2403, %v2404
      %v2406 = vsel %vm1922, %v2386, -inf
      %v2407 = vrot.slane %v2406, 4
      %v2408 = vmax.f32 %v2406, %v2407
      %v2409 = vrot.slane %v2408, 2
      %v2410 = vmax.f32 %v2408, %v2409
      %v2411 = vrot.slane %v2410, 1
      %v2412 = vmax.f32 %v2410, %v2411
      %v2413 = vsel %vm1922, %v2387, -inf
      %v2414 = vrot.slane %v2413, 4
      %v2415 = vmax.f32 %v2413, %v2414
      %v2416 = vrot.slane %v2415, 2
      %v2417 = vmax.f32 %v2415, %v2416
      %v2418 = vrot.slane %v2417, 1
      %v2419 = vmax.f32 %v2417, %v2418
      %v2420 = vsel %vm1922, %v2388, -inf
      %v2421 = vrot.slane %v2420, 4
      %v2422 = vmax.f32 %v2420, %v2421
      %v2423 = vrot.slane %v2422, 2
      %v2424 = vmax.f32 %v2422, %v2423
      %v2425 = vrot.slane %v2424, 1
      %v2426 = vmax.f32 %v2424, %v2425
      %v2427 = vsel %vm1922, %v2389, -inf
      %v2428 = vrot.slane %v2427, 4
      %v2429 = vmax.f32 %v2427, %v2428
      %v2430 = vrot.slane %v2429, 2
      %v2431 = vmax.f32 %v2429, %v2430
      %v2432 = vrot.slane %v2431, 1
      %v2433 = vmax.f32 %v2431, %v2432
      %v2434 = vsel %vm1922, %v2390, -inf
      %v2435 = vrot.slane %v2434, 4
      %v2436 = vmax.f32 %v2434, %v2435
      %v2437 = vrot.slane %v2436, 2
      %v2438 = vmax.f32 %v2436, %v2437
      %v2439 = vrot.slane %v2438, 1
      %v2440 = vmax.f32 %v2438, %v2439
      %v2441 = vsel %vm1922, %v2391, -inf
      %v2442 = vrot.slane %v2441, 4
      %v2443 = vmax.f32 %v2441, %v2442
      %v2444 = vrot.slane %v2443, 2
      %v2445 = vmax.f32 %v2443, %v2444
      %v2446 = vrot.slane %v2445, 1
      %v2447 = vmax.f32 %v2445, %v2446
      %v2448 = vmul.f32 %v1914, %v1914
      %v2449 = vmul.f32 %v1915, %v1915
      %v2450 = vmul.f32 %v1916, %v1916
      %v2451 = vmul.f32 %v1917, %v1917
      %v2452 = vmul.f32 %v1918, %v1918
      %v2453 = vmul.f32 %v1919, %v1919
      %v2454 = vmul.f32 %v1920, %v1920
      %v2455 = vmul.f32 %v1921, %v1921
      %v2456 = vsel %vm1922, %v2448, 0.0
      %v2457 = vrot.slane %v2456, 4
      %v2458 = vadd.f32 %v2456, %v2457
      %v2459 = vrot.slane %v2458, 2
      %v2460 = vadd.f32 %v2458, %v2459
      %v2461 = vrot.slane %v2460, 1
      %v2462 = vadd.f32 %v2460, %v2461
      %v2463 = vsel %vm1922, %v2449, 0.0
      %v2464 = vrot.slane %v2463, 4
      %v2465 = vadd.f32 %v2463, %v2464
      %v2466 = vrot.slane %v2465, 2
      %v2467 = vadd.f32 %v2465, %v2466
      %v2468 = vrot.slane %v2467, 1
      %v2469 = vadd.f32 %v2467, %v2468
      %v2470 = vsel %vm1922, %v2450, 0.0
      %v2471 = vrot.slane %v2470, 4
      %v2472 = vadd.f32 %v2470, %v2471
      %v2473 = vrot.slane %v2472, 2
      %v2474 = vadd.f32 %v2472, %v2473
      %v2475 = vrot.slane %v2474, 1
      %v2476 = vadd.f32 %v2474, %v2475
      %v2477 = vsel %vm1922, %v2451, 0.0
      %v2478 = vrot.slane %v2477, 4
      %v2479 = vadd.f32 %v2477, %v2478
      %v2480 = vrot.slane %v2479, 2
      %v2481 = vadd.f32 %v2479, %v2480
      %v2482 = vrot.slane %v2481, 1
      %v2483 = vadd.f32 %v2481, %v2482
      %v2484 = vsel %vm1922, %v2452, 0.0
      %v2485 = vrot.slane %v2484, 4
      %v2486 = vadd.f32 %v2484, %v2485
      %v2487 = vrot.slane %v2486, 2
      %v2488 = vadd.f32 %v2486, %v2487
      %v2489 = vrot.slane %v2488, 1
      %v2490 = vadd.f32 %v2488, %v2489
      %v2491 = vsel %vm1922, %v2453, 0.0
      %v2492 = vrot.slane %v2491, 4
      %v2493 = vadd.f32 %v2491, %v2492
      %v2494 = vrot.slane %v2493, 2
      %v2495 = vadd.f32 %v2493, %v2494
      %v2496 = vrot.slane %v2495, 1
      %v2497 = vadd.f32 %v2495, %v2496
      %v2498 = vsel %vm1922, %v2454, 0.0
      %v2499 = vrot.slane %v2498, 4
      %v2500 = vadd.f32 %v2498, %v2499
      %v2501 = vrot.slane %v2500, 2
      %v2502 = vadd.f32 %v2500, %v2501
      %v2503 = vrot.slane %v2502, 1
      %v2504 = vadd.f32 %v2502, %v2503
      %v2505 = vsel %vm1922, %v2455, 0.0
      %v2506 = vrot.slane %v2505, 4
      %v2507 = vadd.f32 %v2505, %v2506
      %v2508 = vrot.slane %v2507, 2
      %v2509 = vadd.f32 %v2507, %v2508
      %v2510 = vrot.slane %v2509, 1
      %v2511 = vadd.f32 %v2509, %v2510
      %v2520 = vsel %vm2186, %v2273, %v2266
      %v2521 = vsel %vm2188, %v2280, %v2520
      %v2522 = vsel %vm2190, %v2287, %v2521
      %v2523 = vsel %vm2192, %v2294, %v2522
      %v2524 = vsel %vm2194, %v2301, %v2523
      %v2525 = vsel %vm2196, %v2308, %v2524
      %v2526 = vsel %vm2198, %v2315, %v2525
      %v2536 = vsel %vm2186, %v2341, %v2334
      %v2537 = vsel %vm2188, %v2348, %v2536
      %v2538 = vsel %vm2190, %v2355, %v2537
      %v2539 = vsel %vm2192, %v2362, %v2538
      %v2540 = vsel %vm2194, %v2369, %v2539
      %v2541 = vsel %vm2196, %v2376, %v2540
      %v2542 = vsel %vm2198, %v2383, %v2541
      %2543 = vrot.lane.b32.xlu0 %v2542, 16
      %v2544 = vpop.permute.xlu0 %2543
      %v2554 = vsel %vm2186, %v2405, %v2398
      %v2555 = vsel %vm2188, %v2412, %v2554
      %v2556 = vsel %vm2190, %v2419, %v2555
      %v2557 = vsel %vm2192, %v2426, %v2556
      %v2558 = vsel %vm2194, %v2433, %v2557
      %v2559 = vsel %vm2196, %v2440, %v2558
      %v2560 = vsel %vm2198, %v2447, %v2559
      %2561 = vrot.lane.b32.xlu0 %v2560, 32
      %v2562 = vpop.permute.xlu0 %2561
      %v2572 = vsel %vm2186, %v2469, %v2462
      %v2573 = vsel %vm2188, %v2476, %v2572
      %v2574 = vsel %vm2190, %v2483, %v2573
      %v2575 = vsel %vm2192, %v2490, %v2574
      %v2576 = vsel %vm2194, %v2497, %v2575
      %v2577 = vsel %vm2196, %v2504, %v2576
      %v2578 = vsel %vm2198, %v2511, %v2577
      %2579 = vrot.lane.b32.xlu0 %v2578, 48
      %v2580 = vpop.permute.xlu0 %2579
      %v2582 = vsel %vm1922, %v2526, %v2544
      %v2583 = vsel %vm2256, %v2582, %v2562
      %v2584 = vsel %vm2258, %v2583, %v2580
      %v2585 = vsub.f32 1.0, %v1013
      %v2586 = vsub.f32 1.0, %v1014
      %v2587 = vsub.f32 1.0, %v1015
      %v2588 = vsub.f32 1.0, %v1016
      %v2589 = vsub.f32 1.0, %v1017
      %v2590 = vsub.f32 1.0, %v1018
      %v2591 = vsub.f32 1.0, %v1019
      %v2592 = vsub.f32 1.0, %v1020
      %v2593 = vmul.f32 %v2585, 100000.0
      %v2594 = vmul.f32 %v2586, 100000.0
      %v2595 = vmul.f32 %v2587, 100000.0
      %v2596 = vmul.f32 %v2588, 100000.0
      %v2597 = vmul.f32 %v2589, 100000.0
      %v2598 = vmul.f32 %v2590, 100000.0
      %v2599 = vmul.f32 %v2591, 100000.0
      %v2600 = vmul.f32 %v2592, 100000.0
      %2602 = vset.pattern.permute.xlu0 64
      %2603 = vperm.xlu0 %2602, %v2593
      %v2604 = vpop.permute.xlu0 %2603
      %2607 = vset.pattern.permute.xlu0 64
      %2608 = vperm.xlu0 %2607, %v2594
      %v2609 = vpop.permute.xlu0 %2608
      %2612 = vset.pattern.permute.xlu0 64
      %2613 = vperm.xlu0 %2612, %v2595
      %v2614 = vpop.permute.xlu0 %2613
      %2617 = vset.pattern.permute.xlu0 64
      %2618 = vperm.xlu0 %2617, %v2596
      %v2619 = vpop.permute.xlu0 %2618
      %2622 = vset.pattern.permute.xlu0 64
      %2623 = vperm.xlu0 %2622, %v2597
      %v2624 = vpop.permute.xlu0 %2623
      %2627 = vset.pattern.permute.xlu0 64
      %2628 = vperm.xlu0 %2627, %v2598
      %v2629 = vpop.permute.xlu0 %2628
      %2632 = vset.pattern.permute.xlu0 64
      %2633 = vperm.xlu0 %2632, %v2599
      %v2634 = vpop.permute.xlu0 %2633
      %2637 = vset.pattern.permute.xlu0 64
      %2638 = vperm.xlu0 %2637, %v2600
      %v2639 = vpop.permute.xlu0 %2638
      %v2641 = vadd.f32 %v1483, %v2604
      %v2642 = vadd.f32 %v1484, %v2609
      %v2643 = vadd.f32 %v1485, %v2614
      %v2644 = vadd.f32 %v1486, %v2619
      %v2645 = vadd.f32 %v1487, %v2624
      %v2646 = vadd.f32 %v1488, %v2629
      %v2647 = vadd.f32 %v1489, %v2634
      %v2648 = vadd.f32 %v1490, %v2639
      %v2649 = vsel %vm1922, %v2641, inf
      %v2650 = vrot.slane %v2649, 4
      %v2651 = vmin.f32 %v2649, %v2650
      %v2652 = vrot.slane %v2651, 2
      %v2653 = vmin.f32 %v2651, %v2652
      %v2654 = vrot.slane %v2653, 1
      %v2655 = vmin.f32 %v2653, %v2654
      %v2656 = vsel %vm1922, %v2642, inf
      %v2657 = vrot.slane %v2656, 4
      %v2658 = vmin.f32 %v2656, %v2657
      %v2659 = vrot.slane %v2658, 2
      %v2660 = vmin.f32 %v2658, %v2659
      %v2661 = vrot.slane %v2660, 1
      %v2662 = vmin.f32 %v2660, %v2661
      %v2663 = vsel %vm1922, %v2643, inf
      %v2664 = vrot.slane %v2663, 4
      %v2665 = vmin.f32 %v2663, %v2664
      %v2666 = vrot.slane %v2665, 2
      %v2667 = vmin.f32 %v2665, %v2666
      %v2668 = vrot.slane %v2667, 1
      %v2669 = vmin.f32 %v2667, %v2668
      %v2670 = vsel %vm1922, %v2644, inf
      %v2671 = vrot.slane %v2670, 4
      %v2672 = vmin.f32 %v2670, %v2671
      %v2673 = vrot.slane %v2672, 2
      %v2674 = vmin.f32 %v2672, %v2673
      %v2675 = vrot.slane %v2674, 1
      %v2676 = vmin.f32 %v2674, %v2675
      %v2677 = vsel %vm1922, %v2645, inf
      %v2678 = vrot.slane %v2677, 4
      %v2679 = vmin.f32 %v2677, %v2678
      %v2680 = vrot.slane %v2679, 2
      %v2681 = vmin.f32 %v2679, %v2680
      %v2682 = vrot.slane %v2681, 1
      %v2683 = vmin.f32 %v2681, %v2682
      %v2684 = vsel %vm1922, %v2646, inf
      %v2685 = vrot.slane %v2684, 4
      %v2686 = vmin.f32 %v2684, %v2685
      %v2687 = vrot.slane %v2686, 2
      %v2688 = vmin.f32 %v2686, %v2687
      %v2689 = vrot.slane %v2688, 1
      %v2690 = vmin.f32 %v2688, %v2689
      %v2691 = vsel %vm1922, %v2647, inf
      %v2692 = vrot.slane %v2691, 4
      %v2693 = vmin.f32 %v2691, %v2692
      %v2694 = vrot.slane %v2693, 2
      %v2695 = vmin.f32 %v2693, %v2694
      %v2696 = vrot.slane %v2695, 1
      %v2697 = vmin.f32 %v2695, %v2696
      %v2698 = vsel %vm1922, %v2648, inf
      %v2699 = vrot.slane %v2698, 4
      %v2700 = vmin.f32 %v2698, %v2699
      %v2701 = vrot.slane %v2700, 2
      %v2702 = vmin.f32 %v2700, %v2701
      %v2703 = vrot.slane %v2702, 1
      %v2704 = vmin.f32 %v2702, %v2703
      %v2705 = vsub.f32 %v1483, %v2604
      %v2706 = vsub.f32 %v1484, %v2609
      %v2707 = vsub.f32 %v1485, %v2614
      %v2708 = vsub.f32 %v1486, %v2619
      %v2709 = vsub.f32 %v1487, %v2624
      %v2710 = vsub.f32 %v1488, %v2629
      %v2711 = vsub.f32 %v1489, %v2634
      %v2712 = vsub.f32 %v1490, %v2639
      %v2713 = vsel %vm1922, %v2705, -inf
      %v2714 = vrot.slane %v2713, 4
      %v2715 = vmax.f32 %v2713, %v2714
      %v2716 = vrot.slane %v2715, 2
      %v2717 = vmax.f32 %v2715, %v2716
      %v2718 = vrot.slane %v2717, 1
      %v2719 = vmax.f32 %v2717, %v2718
      %v2720 = vsel %vm1922, %v2706, -inf
      %v2721 = vrot.slane %v2720, 4
      %v2722 = vmax.f32 %v2720, %v2721
      %v2723 = vrot.slane %v2722, 2
      %v2724 = vmax.f32 %v2722, %v2723
      %v2725 = vrot.slane %v2724, 1
      %v2726 = vmax.f32 %v2724, %v2725
      %v2727 = vsel %vm1922, %v2707, -inf
      %v2728 = vrot.slane %v2727, 4
      %v2729 = vmax.f32 %v2727, %v2728
      %v2730 = vrot.slane %v2729, 2
      %v2731 = vmax.f32 %v2729, %v2730
      %v2732 = vrot.slane %v2731, 1
      %v2733 = vmax.f32 %v2731, %v2732
      %v2734 = vsel %vm1922, %v2708, -inf
      %v2735 = vrot.slane %v2734, 4
      %v2736 = vmax.f32 %v2734, %v2735
      %v2737 = vrot.slane %v2736, 2
      %v2738 = vmax.f32 %v2736, %v2737
      %v2739 = vrot.slane %v2738, 1
      %v2740 = vmax.f32 %v2738, %v2739
      %v2741 = vsel %vm1922, %v2709, -inf
      %v2742 = vrot.slane %v2741, 4
      %v2743 = vmax.f32 %v2741, %v2742
      %v2744 = vrot.slane %v2743, 2
      %v2745 = vmax.f32 %v2743, %v2744
      %v2746 = vrot.slane %v2745, 1
      %v2747 = vmax.f32 %v2745, %v2746
      %v2748 = vsel %vm1922, %v2710, -inf
      %v2749 = vrot.slane %v2748, 4
      %v2750 = vmax.f32 %v2748, %v2749
      %v2751 = vrot.slane %v2750, 2
      %v2752 = vmax.f32 %v2750, %v2751
      %v2753 = vrot.slane %v2752, 1
      %v2754 = vmax.f32 %v2752, %v2753
      %v2755 = vsel %vm1922, %v2711, -inf
      %v2756 = vrot.slane %v2755, 4
      %v2757 = vmax.f32 %v2755, %v2756
      %v2758 = vrot.slane %v2757, 2
      %v2759 = vmax.f32 %v2757, %v2758
      %v2760 = vrot.slane %v2759, 1
      %v2761 = vmax.f32 %v2759, %v2760
      %v2762 = vsel %vm1922, %v2712, -inf
      %v2763 = vrot.slane %v2762, 4
      %v2764 = vmax.f32 %v2762, %v2763
      %v2765 = vrot.slane %v2764, 2
      %v2766 = vmax.f32 %v2764, %v2765
      %v2767 = vrot.slane %v2766, 1
      %v2768 = vmax.f32 %v2766, %v2767
      %2769 = vrot.lane.b32.xlu0 %v2251, 16
      %v2770 = vpop.permute.xlu0 %2769
      %v2780 = vsel %vm2186, %v2662, %v2655
      %v2781 = vsel %vm2188, %v2669, %v2780
      %v2782 = vsel %vm2190, %v2676, %v2781
      %v2783 = vsel %vm2192, %v2683, %v2782
      %v2784 = vsel %vm2194, %v2690, %v2783
      %v2785 = vsel %vm2196, %v2697, %v2784
      %v2786 = vsel %vm2198, %v2704, %v2785
      %2787 = vrot.lane.b32.xlu0 %v2786, 32
      %v2788 = vpop.permute.xlu0 %2787
      %v2798 = vsel %vm2186, %v2726, %v2719
      %v2799 = vsel %vm2188, %v2733, %v2798
      %v2800 = vsel %vm2190, %v2740, %v2799
      %v2801 = vsel %vm2192, %v2747, %v2800
      %v2802 = vsel %vm2194, %v2754, %v2801
      %v2803 = vsel %vm2196, %v2761, %v2802
      %v2804 = vsel %vm2198, %v2768, %v2803
      %2805 = vrot.lane.b32.xlu0 %v2804, 48
      %v2806 = vpop.permute.xlu0 %2805
      %v2808 = vsel %vm1922, %v2199, %v2770
      %v2809 = vsel %vm2256, %v2808, %v2788
      %v2810 = vsel %vm2258, %v2809, %v2806
      %v2811 = vld [vmem:[%s9] sm:$0xff]
      %v2812 = vld [vmem:[%s9 + $0x8] sm:$0xff]
      %v2813 = vpack.c.bf16 %v1484, %v1483
      %v2814 = vpack.c.bf16 %v1486, %v1485
      %v2815 = vpack.c.bf16 %v1488, %v1487
      %v2816 = vpack.c.bf16 %v1490, %v1489
      %v2817 = vpack.c.bf16 %v2812, %v2811
      %v2818 = vld [vmem:[%s10] sm:$0x1]
      %v2820 = vperm.slane %v2818, 0
      %v2823 = vsel %vm1922, %v2813, 0
      %v2826 = vsel %vm1922, %v2814, 0
      %v2829 = vsel %vm1922, %v2815, 0
      %v2832 = vsel %vm1922, %v2816, 0
      %2834 = vmatpush.bf16.msra.mxu0 0
      %2835 = vmatpush.bf16.msra.mxu0 0
      %2836 = vmatpush.bf16.msra.mxu0 0
      %2837 = vmatpush.bf16.msra.mxu0 0
      %2838 = vmatpush.bf16.msra.mxu0 0
      %2839 = vmatpush.bf16.msra.mxu0 0
      %2840 = vmatpush.bf16.msra.mxu0 0
      %2841 = vmatpush.bf16.msra.mxu0 %v2817
      %2842 = vmatmul.bf16.gmra.mxu0 %v2823
      %v2843 = vpop.f32.mrf.mxu0
      %v2844 = vadd.f32 %v2820, %v2843
      %v2845 = vpop.f32.mrf.mxu0
      %v2846 = vadd.f32 %v2820, %v2845
      %2847 = vmatmul.bf16.gmra.mxu0 %v2826
      %v2848 = vpop.f32.mrf.mxu0
      %v2849 = vadd.f32 %v2820, %v2848
      %v2850 = vpop.f32.mrf.mxu0
      %v2851 = vadd.f32 %v2820, %v2850
      %2852 = vmatmul.bf16.gmra.mxu0 %v2829
      %v2853 = vpop.f32.mrf.mxu0
      %v2854 = vadd.f32 %v2820, %v2853
      %v2855 = vpop.f32.mrf.mxu0
      %v2856 = vadd.f32 %v2820, %v2855
      %2857 = vmatmul.bf16.gmra.mxu0 %v2832
      %v2858 = vpop.f32.mrf.mxu0
      %v2859 = vadd.f32 %v2820, %v2858
      %v2860 = vpop.f32.mrf.mxu0
      %v2861 = vadd.f32 %v2820, %v2860
      %2862 = vdwg.mxu0
      %v2863 = vld [vmem:[%s11] sm:$0xff]
      %v2864 = vld [vmem:[%s11 + $0x8] sm:$0xff]
      %v2865 = vpack.c.bf16 %v1915, %v1914
      %v2866 = vpack.c.bf16 %v1917, %v1916
      %v2867 = vpack.c.bf16 %v1919, %v1918
      %v2868 = vpack.c.bf16 %v1921, %v1920
      %v2869 = vpack.c.bf16 %v2864, %v2863
      %v2870 = vld [vmem:[%s12] sm:$0x1]
      %v2872 = vperm.slane %v2870, 0
      %v2875 = vsel %vm1922, %v2865, 0
      %v2878 = vsel %vm1922, %v2866, 0
      %v2881 = vsel %vm1922, %v2867, 0
      %v2884 = vsel %vm1922, %v2868, 0
      %2886 = vmatpush.bf16.msra.mxu0 0
      %2887 = vmatpush.bf16.msra.mxu0 0
      %2888 = vmatpush.bf16.msra.mxu0 0
      %2889 = vmatpush.bf16.msra.mxu0 0
      %2890 = vmatpush.bf16.msra.mxu0 0
      %2891 = vmatpush.bf16.msra.mxu0 0
      %2892 = vmatpush.bf16.msra.mxu0 0
      %2893 = vmatpush.bf16.msra.mxu0 %v2869
      %2894 = vmatmul.bf16.gmra.mxu0 %v2875
      %v2895 = vpop.f32.mrf.mxu0
      %v2896 = vadd.f32 %v2872, %v2895
      %v2897 = vpop.f32.mrf.mxu0
      %v2898 = vadd.f32 %v2872, %v2897
      %2899 = vmatmul.bf16.gmra.mxu0 %v2878
      %v2900 = vpop.f32.mrf.mxu0
      %v2901 = vadd.f32 %v2872, %v2900
      %v2902 = vpop.f32.mrf.mxu0
      %v2903 = vadd.f32 %v2872, %v2902
      %2904 = vmatmul.bf16.gmra.mxu0 %v2881
      %v2905 = vpop.f32.mrf.mxu0
      %v2906 = vadd.f32 %v2872, %v2905
      %v2907 = vpop.f32.mrf.mxu0
      %v2908 = vadd.f32 %v2872, %v2907
      %2909 = vmatmul.bf16.gmra.mxu0 %v2884
      %v2910 = vpop.f32.mrf.mxu0
      %v2911 = vadd.f32 %v2872, %v2910
      %v2912 = vpop.f32.mrf.mxu0
      %v2913 = vadd.f32 %v2872, %v2912
      %2914 = vdwg.mxu0
      %v2915 = vld [vmem:[%s945] sm:$0xf]
      %v2916 = vld [vmem:[%s945 + $0x4] sm:$0xf]
      %v2917 = vld [vmem:[%s945 + $0x8] sm:$0xf]
      %v2918 = vld [vmem:[%s945 + $0xc] sm:$0xf]
      %v2919 = vld [vmem:[%s945 + $0x10] sm:$0xf]
      %v2920 = vld [vmem:[%s945 + $0x14] sm:$0xf]
      %v2921 = vld [vmem:[%s945 + $0x18] sm:$0xf]
      %v2922 = vld [vmem:[%s945 + $0x1c] sm:$0xf]
      %v2923 = vunpack.c.l.bf16 %v2915
      %v2924 = vunpack.c.l.bf16 %v2916
      %v2925 = vunpack.c.l.bf16 %v2917
      %v2926 = vunpack.c.l.bf16 %v2918
      %v2927 = vunpack.c.l.bf16 %v2919
      %v2928 = vunpack.c.l.bf16 %v2920
      %v2929 = vunpack.c.l.bf16 %v2921
      %v2930 = vunpack.c.l.bf16 %v2922
      %v2931 = vld [vmem:[%s5] sm:$0xff]
      %v2932 = vld [vmem:[%s5 + $0x8] sm:$0xff]
      %v2933 = vpack.c.bf16 %v2924, %v2923
      %v2934 = vpack.c.bf16 %v2926, %v2925
      %v2935 = vpack.c.bf16 %v2928, %v2927
      %v2936 = vpack.c.bf16 %v2930, %v2929
      %v2937 = vpack.c.bf16 %v2932, %v2931
      %v2938 = vld [vmem:[%s6] sm:$0x1]
      %v2940 = vperm.slane %v2938, 0
      %v2943 = vsel %vm1922, %v2933, 0
      %v2946 = vsel %vm1922, %v2934, 0
      %v2949 = vsel %vm1922, %v2935, 0
      %v2952 = vsel %vm1922, %v2936, 0
      %2954 = vmatpush.bf16.msra.mxu0 0
      %2955 = vmatpush.bf16.msra.mxu0 0
      %2956 = vmatpush.bf16.msra.mxu0 0
      %2957 = vmatpush.bf16.msra.mxu0 0
      %2958 = vmatpush.bf16.msra.mxu0 0
      %2959 = vmatpush.bf16.msra.mxu0 0
      %2960 = vmatpush.bf16.msra.mxu0 0
      %2961 = vmatpush.bf16.msra.mxu0 %v2937
      %2962 = vmatmul.bf16.gmra.mxu0 %v2943
      %v2963 = vpop.f32.mrf.mxu0
      %v2964 = vadd.f32 %v2940, %v2963
      %v2965 = vpop.f32.mrf.mxu0
      %v2966 = vadd.f32 %v2940, %v2965
      %2967 = vmatmul.bf16.gmra.mxu0 %v2946
      %v2968 = vpop.f32.mrf.mxu0
      %v2969 = vadd.f32 %v2940, %v2968
      %v2970 = vpop.f32.mrf.mxu0
      %v2971 = vadd.f32 %v2940, %v2970
      %2972 = vmatmul.bf16.gmra.mxu0 %v2949
      %v2973 = vpop.f32.mrf.mxu0
      %v2974 = vadd.f32 %v2940, %v2973
      %v2975 = vpop.f32.mrf.mxu0
      %v2976 = vadd.f32 %v2940, %v2975
      %2977 = vmatmul.bf16.gmra.mxu0 %v2952
      %v2978 = vpop.f32.mrf.mxu0
      %v2979 = vadd.f32 %v2940, %v2978
      %v2980 = vpop.f32.mrf.mxu0
      %v2981 = vadd.f32 %v2940, %v2980
      %2982 = vdwg.mxu0
      %v2983 = vmul.f32 %v2964, %v986
      %v2984 = vmul.f32 %v2966, %v986
      %v2985 = vmul.f32 %v2969, %v986
      %v2986 = vmul.f32 %v2971, %v986
      %v2987 = vmul.f32 %v2974, %v986
      %v2988 = vmul.f32 %v2976, %v986
      %v2989 = vmul.f32 %v2979, %v986
      %v2990 = vmul.f32 %v2981, %v986
      %v2991 = vmul.f32 %v2983, %v997
      %v2992 = vmul.f32 %v2984, %v998
      %v2993 = vmul.f32 %v2985, %v999
      %v2994 = vmul.f32 %v2986, %v1000
      %v2995 = vmul.f32 %v2987, %v1001
      %v2996 = vmul.f32 %v2988, %v1002
      %v2997 = vmul.f32 %v2989, %v1003
      %v2998 = vmul.f32 %v2990, %v1004
      %v2999 = vmul.f32 %v2991, %v1446
      %v3000 = vmul.f32 %v2992, %v1451
      %v3001 = vmul.f32 %v2993, %v1456
      %v3002 = vmul.f32 %v2994, %v1461
      %v3003 = vmul.f32 %v2995, %v1466
      %v3004 = vmul.f32 %v2996, %v1471
      %v3005 = vmul.f32 %v2997, %v1476
      %v3006 = vmul.f32 %v2998, %v1481
      %3008 = vrot.lane.b32.xlu0 %v986, 112
      %v3009 = vpop.permute.xlu0 %3008
      %v3011 = vmul.f32 %v2964, %v3009
      %v3012 = vmul.f32 %v2966, %v3009
      %v3013 = vmul.f32 %v2969, %v3009
      %v3014 = vmul.f32 %v2971, %v3009
      %v3015 = vmul.f32 %v2974, %v3009
      %v3016 = vmul.f32 %v2976, %v3009
      %v3017 = vmul.f32 %v2979, %v3009
      %v3018 = vmul.f32 %v2981, %v3009
      %3019 = vrot.lane.b32.xlu0 %v997, 112
      %v3020 = vpop.permute.xlu0 %3019
      %3021 = vrot.lane.b32.xlu0 %v998, 112
      %v3022 = vpop.permute.xlu0 %3021
      %3023 = vrot.lane.b32.xlu0 %v999, 112
      %v3024 = vpop.permute.xlu0 %3023
      %3025 = vrot.lane.b32.xlu0 %v1000, 112
      %v3026 = vpop.permute.xlu0 %3025
      %3027 = vrot.lane.b32.xlu0 %v1001, 112
      %v3028 = vpop.permute.xlu0 %3027
      %3029 = vrot.lane.b32.xlu0 %v1002, 112
      %v3030 = vpop.permute.xlu0 %3029
      %3031 = vrot.lane.b32.xlu0 %v1003, 112
      %v3032 = vpop.permute.xlu0 %3031
      %3033 = vrot.lane.b32.xlu0 %v1004, 112
      %v3034 = vpop.permute.xlu0 %3033
      %v3043 = vmul.f32 %v3011, %v3020
      %v3044 = vmul.f32 %v3012, %v3022
      %v3045 = vmul.f32 %v3013, %v3024
      %v3046 = vmul.f32 %v3014, %v3026
      %v3047 = vmul.f32 %v3015, %v3028
      %v3048 = vmul.f32 %v3016, %v3030
      %v3049 = vmul.f32 %v3017, %v3032
      %v3050 = vmul.f32 %v3018, %v3034
      %v3051 = vmul.f32 %v3043, %v1884
      %v3052 = vmul.f32 %v3044, %v1888
      %v3053 = vmul.f32 %v3045, %v1892
      %v3054 = vmul.f32 %v3046, %v1896
      %v3055 = vmul.f32 %v3047, %v1900
      %v3056 = vmul.f32 %v3048, %v1904
      %v3057 = vmul.f32 %v3049, %v1908
      %v3058 = vmul.f32 %v3050, %v1912
      %v3059 = vadd.f32 %v2999, %v3051
      %v3060 = vadd.f32 %v3000, %v3052
      %v3061 = vadd.f32 %v3001, %v3053
      %v3062 = vadd.f32 %v3002, %v3054
      %v3063 = vadd.f32 %v3003, %v3055
      %v3064 = vadd.f32 %v3004, %v3056
      %v3065 = vadd.f32 %v3005, %v3057
      %v3066 = vadd.f32 %v3006, %v3058
      %v3067 = vadd.f32 %v3059, %v2844
      %v3068 = vadd.f32 %v3060, %v2846
      %v3069 = vadd.f32 %v3061, %v2849
      %v3070 = vadd.f32 %v3062, %v2851
      %v3071 = vadd.f32 %v3063, %v2854
      %v3072 = vadd.f32 %v3064, %v2856
      %v3073 = vadd.f32 %v3065, %v2859
      %v3074 = vadd.f32 %v3066, %v2861
      %3083 = vrot.lane.b32.xlu0 %v2844, 112
      %v3084 = vpop.permute.xlu0 %3083
      %3085 = vrot.lane.b32.xlu0 %v2846, 112
      %v3086 = vpop.permute.xlu0 %3085
      %3087 = vrot.lane.b32.xlu0 %v2849, 112
      %v3088 = vpop.permute.xlu0 %3087
      %3089 = vrot.lane.b32.xlu0 %v2851, 112
      %v3090 = vpop.permute.xlu0 %3089
      %3091 = vrot.lane.b32.xlu0 %v2854, 112
      %v3092 = vpop.permute.xlu0 %3091
      %3093 = vrot.lane.b32.xlu0 %v2856, 112
      %v3094 = vpop.permute.xlu0 %3093
      %3095 = vrot.lane.b32.xlu0 %v2859, 112
      %v3096 = vpop.permute.xlu0 %3095
      %3097 = vrot.lane.b32.xlu0 %v2861, 112
      %v3098 = vpop.permute.xlu0 %3097
      %v3107 = vmul.f32 %v3059, %v3084
      %v3108 = vmul.f32 %v3060, %v3086
      %v3109 = vmul.f32 %v3061, %v3088
      %v3110 = vmul.f32 %v3062, %v3090
      %v3111 = vmul.f32 %v3063, %v3092
      %v3112 = vmul.f32 %v3064, %v3094
      %v3113 = vmul.f32 %v3065, %v3096
      %v3114 = vmul.f32 %v3066, %v3098
      %v3115 = vadd.f32 %v3067, %v3107
      %v3116 = vadd.f32 %v3068, %v3108
      %v3117 = vadd.f32 %v3069, %v3109
      %v3118 = vadd.f32 %v3070, %v3110
      %v3119 = vadd.f32 %v3071, %v3111
      %v3120 = vadd.f32 %v3072, %v3112
      %v3121 = vadd.f32 %v3073, %v3113
      %v3122 = vadd.f32 %v3074, %v3114
      %v3123 = vmul.f32 %v3115, %v1446
      %v3124 = vmul.f32 %v3116, %v1451
      %v3125 = vmul.f32 %v3117, %v1456
      %v3126 = vmul.f32 %v3118, %v1461
      %v3127 = vmul.f32 %v3119, %v1466
      %v3128 = vmul.f32 %v3120, %v1471
      %v3129 = vmul.f32 %v3121, %v1476
      %v3130 = vmul.f32 %v3122, %v1481
      %v3131 = vadd.f32 %v3059, %v2896
      %v3132 = vadd.f32 %v3060, %v2898
      %v3133 = vadd.f32 %v3061, %v2901
      %v3134 = vadd.f32 %v3062, %v2903
      %v3135 = vadd.f32 %v3063, %v2906
      %v3136 = vadd.f32 %v3064, %v2908
      %v3137 = vadd.f32 %v3065, %v2911
      %v3138 = vadd.f32 %v3066, %v2913
      %3147 = vrot.lane.b32.xlu0 %v2896, 112
      %v3148 = vpop.permute.xlu0 %3147
      %3149 = vrot.lane.b32.xlu0 %v2898, 112
      %v3150 = vpop.permute.xlu0 %3149
      %3151 = vrot.lane.b32.xlu0 %v2901, 112
      %v3152 = vpop.permute.xlu0 %3151
      %3153 = vrot.lane.b32.xlu0 %v2903, 112
      %v3154 = vpop.permute.xlu0 %3153
      %3155 = vrot.lane.b32.xlu0 %v2906, 112
      %v3156 = vpop.permute.xlu0 %3155
      %3157 = vrot.lane.b32.xlu0 %v2908, 112
      %v3158 = vpop.permute.xlu0 %3157
      %3159 = vrot.lane.b32.xlu0 %v2911, 112
      %v3160 = vpop.permute.xlu0 %3159
      %3161 = vrot.lane.b32.xlu0 %v2913, 112
      %v3162 = vpop.permute.xlu0 %3161
      %v3171 = vmul.f32 %v3059, %v3148
      %v3172 = vmul.f32 %v3060, %v3150
      %v3173 = vmul.f32 %v3061, %v3152
      %v3174 = vmul.f32 %v3062, %v3154
      %v3175 = vmul.f32 %v3063, %v3156
      %v3176 = vmul.f32 %v3064, %v3158
      %v3177 = vmul.f32 %v3065, %v3160
      %v3178 = vmul.f32 %v3066, %v3162
      %v3179 = vadd.f32 %v3131, %v3171
      %v3180 = vadd.f32 %v3132, %v3172
      %v3181 = vadd.f32 %v3133, %v3173
      %v3182 = vadd.f32 %v3134, %v3174
      %v3183 = vadd.f32 %v3135, %v3175
      %v3184 = vadd.f32 %v3136, %v3176
      %v3185 = vadd.f32 %v3137, %v3177
      %v3186 = vadd.f32 %v3138, %v3178
      %v3187 = vmul.f32 %v3179, %v1884
      %v3188 = vmul.f32 %v3180, %v1888
      %v3189 = vmul.f32 %v3181, %v1892
      %v3190 = vmul.f32 %v3182, %v1896
      %v3191 = vmul.f32 %v3183, %v1900
      %v3192 = vmul.f32 %v3184, %v1904
      %v3193 = vmul.f32 %v3185, %v1908
      %v3194 = vmul.f32 %v3186, %v1912
      %v3195 = vadd.f32 %v3123, %v3187
      %v3196 = vadd.f32 %v3124, %v3188
      %v3197 = vadd.f32 %v3125, %v3189
      %v3198 = vadd.f32 %v3126, %v3190
      %v3199 = vadd.f32 %v3127, %v3191
      %v3200 = vadd.f32 %v3128, %v3192
      %v3201 = vadd.f32 %v3129, %v3193
      %v3202 = vadd.f32 %v3130, %v3194
      %v3203 = vsel %vm1922, %v3195, 0.0
      %v3204 = vrot.slane %v3203, 4
      %v3205 = vadd.f32 %v3203, %v3204
      %v3206 = vrot.slane %v3205, 2
      %v3207 = vadd.f32 %v3205, %v3206
      %v3208 = vrot.slane %v3207, 1
      %v3209 = vadd.f32 %v3207, %v3208
      %v3210 = vsel %vm1922, %v3196, 0.0
      %v3211 = vrot.slane %v3210, 4
      %v3212 = vadd.f32 %v3210, %v3211
      %v3213 = vrot.slane %v3212, 2
      %v3214 = vadd.f32 %v3212, %v3213
      %v3215 = vrot.slane %v3214, 1
      %v3216 = vadd.f32 %v3214, %v3215
      %v3217 = vsel %vm1922, %v3197, 0.0
      %v3218 = vrot.slane %v3217, 4
      %v3219 = vadd.f32 %v3217, %v3218
      %v3220 = vrot.slane %v3219, 2
      %v3221 = vadd.f32 %v3219, %v3220
      %v3222 = vrot.slane %v3221, 1
      %v3223 = vadd.f32 %v3221, %v3222
      %v3224 = vsel %vm1922, %v3198, 0.0
      %v3225 = vrot.slane %v3224, 4
      %v3226 = vadd.f32 %v3224, %v3225
      %v3227 = vrot.slane %v3226, 2
      %v3228 = vadd.f32 %v3226, %v3227
      %v3229 = vrot.slane %v3228, 1
      %v3230 = vadd.f32 %v3228, %v3229
      %v3231 = vsel %vm1922, %v3199, 0.0
      %v3232 = vrot.slane %v3231, 4
      %v3233 = vadd.f32 %v3231, %v3232
      %v3234 = vrot.slane %v3233, 2
      %v3235 = vadd.f32 %v3233, %v3234
      %v3236 = vrot.slane %v3235, 1
      %v3237 = vadd.f32 %v3235, %v3236
      %v3238 = vsel %vm1922, %v3200, 0.0
      %v3239 = vrot.slane %v3238, 4
      %v3240 = vadd.f32 %v3238, %v3239
      %v3241 = vrot.slane %v3240, 2
      %v3242 = vadd.f32 %v3240, %v3241
      %v3243 = vrot.slane %v3242, 1
      %v3244 = vadd.f32 %v3242, %v3243
      %v3245 = vsel %vm1922, %v3201, 0.0
      %v3246 = vrot.slane %v3245, 4
      %v3247 = vadd.f32 %v3245, %v3246
      %v3248 = vrot.slane %v3247, 2
      %v3249 = vadd.f32 %v3247, %v3248
      %v3250 = vrot.slane %v3249, 1
      %v3251 = vadd.f32 %v3249, %v3250
      %v3252 = vsel %vm1922, %v3202, 0.0
      %v3253 = vrot.slane %v3252, 4
      %v3254 = vadd.f32 %v3252, %v3253
      %v3255 = vrot.slane %v3254, 2
      %v3256 = vadd.f32 %v3254, %v3255
      %v3257 = vrot.slane %v3256, 1
      %v3258 = vadd.f32 %v3256, %v3257
      %v3259 = vmul.f32 %v3195, %v1446
      %v3260 = vmul.f32 %v3196, %v1451
      %v3261 = vmul.f32 %v3197, %v1456
      %v3262 = vmul.f32 %v3198, %v1461
      %v3263 = vmul.f32 %v3199, %v1466
      %v3264 = vmul.f32 %v3200, %v1471
      %v3265 = vmul.f32 %v3201, %v1476
      %v3266 = vmul.f32 %v3202, %v1481
      %v3267 = vsel %vm1922, %v3259, 0.0
      %v3268 = vrot.slane %v3267, 4
      %v3269 = vadd.f32 %v3267, %v3268
      %v3270 = vrot.slane %v3269, 2
      %v3271 = vadd.f32 %v3269, %v3270
      %v3272 = vrot.slane %v3271, 1
      %v3273 = vadd.f32 %v3271, %v3272
      %v3274 = vsel %vm1922, %v3260, 0.0
      %v3275 = vrot.slane %v3274, 4
      %v3276 = vadd.f32 %v3274, %v3275
      %v3277 = vrot.slane %v3276, 2
      %v3278 = vadd.f32 %v3276, %v3277
      %v3279 = vrot.slane %v3278, 1
      %v3280 = vadd.f32 %v3278, %v3279
      %v3281 = vsel %vm1922, %v3261, 0.0
      %v3282 = vrot.slane %v3281, 4
      %v3283 = vadd.f32 %v3281, %v3282
      %v3284 = vrot.slane %v3283, 2
      %v3285 = vadd.f32 %v3283, %v3284
      %v3286 = vrot.slane %v3285, 1
      %v3287 = vadd.f32 %v3285, %v3286
      %v3288 = vsel %vm1922, %v3262, 0.0
      %v3289 = vrot.slane %v3288, 4
      %v3290 = vadd.f32 %v3288, %v3289
      %v3291 = vrot.slane %v3290, 2
      %v3292 = vadd.f32 %v3290, %v3291
      %v3293 = vrot.slane %v3292, 1
      %v3294 = vadd.f32 %v3292, %v3293
      %v3295 = vsel %vm1922, %v3263, 0.0
      %v3296 = vrot.slane %v3295, 4
      %v3297 = vadd.f32 %v3295, %v3296
      %v3298 = vrot.slane %v3297, 2
      %v3299 = vadd.f32 %v3297, %v3298
      %v3300 = vrot.slane %v3299, 1
      %v3301 = vadd.f32 %v3299, %v3300
      %v3302 = vsel %vm1922, %v3264, 0.0
      %v3303 = vrot.slane %v3302, 4
      %v3304 = vadd.f32 %v3302, %v3303
      %v3305 = vrot.slane %v3304, 2
      %v3306 = vadd.f32 %v3304, %v3305
      %v3307 = vrot.slane %v3306, 1
      %v3308 = vadd.f32 %v3306, %v3307
      %v3309 = vsel %vm1922, %v3265, 0.0
      %v3310 = vrot.slane %v3309, 4
      %v3311 = vadd.f32 %v3309, %v3310
      %v3312 = vrot.slane %v3311, 2
      %v3313 = vadd.f32 %v3311, %v3312
      %v3314 = vrot.slane %v3313, 1
      %v3315 = vadd.f32 %v3313, %v3314
      %v3316 = vsel %vm1922, %v3266, 0.0
      %v3317 = vrot.slane %v3316, 4
      %v3318 = vadd.f32 %v3316, %v3317
      %v3319 = vrot.slane %v3318, 2
      %v3320 = vadd.f32 %v3318, %v3319
      %v3321 = vrot.slane %v3320, 1
      %v3322 = vadd.f32 %v3320, %v3321
      %v3323 = vmul.f32 %v3195, %v3195
      %v3324 = vmul.f32 %v3196, %v3196
      %v3325 = vmul.f32 %v3197, %v3197
      %v3326 = vmul.f32 %v3198, %v3198
      %v3327 = vmul.f32 %v3199, %v3199
      %v3328 = vmul.f32 %v3200, %v3200
      %v3329 = vmul.f32 %v3201, %v3201
      %v3330 = vmul.f32 %v3202, %v3202
      %v3331 = vmul.f32 %v3323, %v1446
      %v3332 = vmul.f32 %v3324, %v1451
      %v3333 = vmul.f32 %v3325, %v1456
      %v3334 = vmul.f32 %v3326, %v1461
      %v3335 = vmul.f32 %v3327, %v1466
      %v3336 = vmul.f32 %v3328, %v1471
      %v3337 = vmul.f32 %v3329, %v1476
      %v3338 = vmul.f32 %v3330, %v1481
      %v3339 = vsel %vm1922, %v3331, 0.0
      %v3340 = vrot.slane %v3339, 4
      %v3341 = vadd.f32 %v3339, %v3340
      %v3342 = vrot.slane %v3341, 2
      %v3343 = vadd.f32 %v3341, %v3342
      %v3344 = vrot.slane %v3343, 1
      %v3345 = vadd.f32 %v3343, %v3344
      %v3346 = vsel %vm1922, %v3332, 0.0
      %v3347 = vrot.slane %v3346, 4
      %v3348 = vadd.f32 %v3346, %v3347
      %v3349 = vrot.slane %v3348, 2
      %v3350 = vadd.f32 %v3348, %v3349
      %v3351 = vrot.slane %v3350, 1
      %v3352 = vadd.f32 %v3350, %v3351
      %v3353 = vsel %vm1922, %v3333, 0.0
      %v3354 = vrot.slane %v3353, 4
      %v3355 = vadd.f32 %v3353, %v3354
      %v3356 = vrot.slane %v3355, 2
      %v3357 = vadd.f32 %v3355, %v3356
      %v3358 = vrot.slane %v3357, 1
      %v3359 = vadd.f32 %v3357, %v3358
      %v3360 = vsel %vm1922, %v3334, 0.0
      %v3361 = vrot.slane %v3360, 4
      %v3362 = vadd.f32 %v3360, %v3361
      %v3363 = vrot.slane %v3362, 2
      %v3364 = vadd.f32 %v3362, %v3363
      %v3365 = vrot.slane %v3364, 1
      %v3366 = vadd.f32 %v3364, %v3365
      %v3367 = vsel %vm1922, %v3335, 0.0
      %v3368 = vrot.slane %v3367, 4
      %v3369 = vadd.f32 %v3367, %v3368
      %v3370 = vrot.slane %v3369, 2
      %v3371 = vadd.f32 %v3369, %v3370
      %v3372 = vrot.slane %v3371, 1
      %v3373 = vadd.f32 %v3371, %v3372
      %v3374 = vsel %vm1922, %v3336, 0.0
      %v3375 = vrot.slane %v3374, 4
      %v3376 = vadd.f32 %v3374, %v3375
      %v3377 = vrot.slane %v3376, 2
      %v3378 = vadd.f32 %v3376, %v3377
      %v3379 = vrot.slane %v3378, 1
      %v3380 = vadd.f32 %v3378, %v3379
      %v3381 = vsel %vm1922, %v3337, 0.0
      %v3382 = vrot.slane %v3381, 4
      %v3383 = vadd.f32 %v3381, %v3382
      %v3384 = vrot.slane %v3383, 2
      %v3385 = vadd.f32 %v3383, %v3384
      %v3386 = vrot.slane %v3385, 1
      %v3387 = vadd.f32 %v3385, %v3386
      %v3388 = vsel %vm1922, %v3338, 0.0
      %v3389 = vrot.slane %v3388, 4
      %v3390 = vadd.f32 %v3388, %v3389
      %v3391 = vrot.slane %v3390, 2
      %v3392 = vadd.f32 %v3390, %v3391
      %v3393 = vrot.slane %v3392, 1
      %v3394 = vadd.f32 %v3392, %v3393
      %v3395 = vadd.f32 %v3195, %v2604
      %v3396 = vadd.f32 %v3196, %v2609
      %v3397 = vadd.f32 %v3197, %v2614
      %v3398 = vadd.f32 %v3198, %v2619
      %v3399 = vadd.f32 %v3199, %v2624
      %v3400 = vadd.f32 %v3200, %v2629
      %v3401 = vadd.f32 %v3201, %v2634
      %v3402 = vadd.f32 %v3202, %v2639
      %v3403 = vsel %vm1922, %v3395, inf
      %v3404 = vrot.slane %v3403, 4
      %v3405 = vmin.f32 %v3403, %v3404
      %v3406 = vrot.slane %v3405, 2
      %v3407 = vmin.f32 %v3405, %v3406
      %v3408 = vrot.slane %v3407, 1
      %v3409 = vmin.f32 %v3407, %v3408
      %v3410 = vsel %vm1922, %v3396, inf
      %v3411 = vrot.slane %v3410, 4
      %v3412 = vmin.f32 %v3410, %v3411
      %v3413 = vrot.slane %v3412, 2
      %v3414 = vmin.f32 %v3412, %v3413
      %v3415 = vrot.slane %v3414, 1
      %v3416 = vmin.f32 %v3414, %v3415
      %v3417 = vsel %vm1922, %v3397, inf
      %v3418 = vrot.slane %v3417, 4
      %v3419 = vmin.f32 %v3417, %v3418
      %v3420 = vrot.slane %v3419, 2
      %v3421 = vmin.f32 %v3419, %v3420
      %v3422 = vrot.slane %v3421, 1
      %v3423 = vmin.f32 %v3421, %v3422
      %v3424 = vsel %vm1922, %v3398, inf
      %v3425 = vrot.slane %v3424, 4
      %v3426 = vmin.f32 %v3424, %v3425
      %v3427 = vrot.slane %v3426, 2
      %v3428 = vmin.f32 %v3426, %v3427
      %v3429 = vrot.slane %v3428, 1
      %v3430 = vmin.f32 %v3428, %v3429
      %v3431 = vsel %vm1922, %v3399, inf
      %v3432 = vrot.slane %v3431, 4
      %v3433 = vmin.f32 %v3431, %v3432
      %v3434 = vrot.slane %v3433, 2
      %v3435 = vmin.f32 %v3433, %v3434
      %v3436 = vrot.slane %v3435, 1
      %v3437 = vmin.f32 %v3435, %v3436
      %v3438 = vsel %vm1922, %v3400, inf
      %v3439 = vrot.slane %v3438, 4
      %v3440 = vmin.f32 %v3438, %v3439
      %v3441 = vrot.slane %v3440, 2
      %v3442 = vmin.f32 %v3440, %v3441
      %v3443 = vrot.slane %v3442, 1
      %v3444 = vmin.f32 %v3442, %v3443
      %v3445 = vsel %vm1922, %v3401, inf
      %v3446 = vrot.slane %v3445, 4
      %v3447 = vmin.f32 %v3445, %v3446
      %v3448 = vrot.slane %v3447, 2
      %v3449 = vmin.f32 %v3447, %v3448
      %v3450 = vrot.slane %v3449, 1
      %v3451 = vmin.f32 %v3449, %v3450
      %v3452 = vsel %vm1922, %v3402, inf
      %v3453 = vrot.slane %v3452, 4
      %v3454 = vmin.f32 %v3452, %v3453
      %v3455 = vrot.slane %v3454, 2
      %v3456 = vmin.f32 %v3454, %v3455
      %v3457 = vrot.slane %v3456, 1
      %v3458 = vmin.f32 %v3456, %v3457
      %v3459 = vsub.f32 %v3195, %v2604
      %v3460 = vsub.f32 %v3196, %v2609
      %v3461 = vsub.f32 %v3197, %v2614
      %v3462 = vsub.f32 %v3198, %v2619
      %v3463 = vsub.f32 %v3199, %v2624
      %v3464 = vsub.f32 %v3200, %v2629
      %v3465 = vsub.f32 %v3201, %v2634
      %v3466 = vsub.f32 %v3202, %v2639
      %v3467 = vsel %vm1922, %v3459, -inf
      %v3468 = vrot.slane %v3467, 4
      %v3469 = vmax.f32 %v3467, %v3468
      %v3470 = vrot.slane %v3469, 2
      %v3471 = vmax.f32 %v3469, %v3470
      %v3472 = vrot.slane %v3471, 1
      %v3473 = vmax.f32 %v3471, %v3472
      %v3474 = vsel %vm1922, %v3460, -inf
      %v3475 = vrot.slane %v3474, 4
      %v3476 = vmax.f32 %v3474, %v3475
      %v3477 = vrot.slane %v3476, 2
      %v3478 = vmax.f32 %v3476, %v3477
      %v3479 = vrot.slane %v3478, 1
      %v3480 = vmax.f32 %v3478, %v3479
      %v3481 = vsel %vm1922, %v3461, -inf
      %v3482 = vrot.slane %v3481, 4
      %v3483 = vmax.f32 %v3481, %v3482
      %v3484 = vrot.slane %v3483, 2
      %v3485 = vmax.f32 %v3483, %v3484
      %v3486 = vrot.slane %v3485, 1
      %v3487 = vmax.f32 %v3485, %v3486
      %v3488 = vsel %vm1922, %v3462, -inf
      %v3489 = vrot.slane %v3488, 4
      %v3490 = vmax.f32 %v3488, %v3489
      %v3491 = vrot.slane %v3490, 2
      %v3492 = vmax.f32 %v3490, %v3491
      %v3493 = vrot.slane %v3492, 1
      %v3494 = vmax.f32 %v3492, %v3493
      %v3495 = vsel %vm1922, %v3463, -inf
      %v3496 = vrot.slane %v3495, 4
      %v3497 = vmax.f32 %v3495, %v3496
      %v3498 = vrot.slane %v3497, 2
      %v3499 = vmax.f32 %v3497, %v3498
      %v3500 = vrot.slane %v3499, 1
      %v3501 = vmax.f32 %v3499, %v3500
      %v3502 = vsel %vm1922, %v3464, -inf
      %v3503 = vrot.slane %v3502, 4
      %v3504 = vmax.f32 %v3502, %v3503
      %v3505 = vrot.slane %v3504, 2
      %v3506 = vmax.f32 %v3504, %v3505
      %v3507 = vrot.slane %v3506, 1
      %v3508 = vmax.f32 %v3506, %v3507
      %v3509 = vsel %vm1922, %v3465, -inf
      %v3510 = vrot.slane %v3509, 4
      %v3511 = vmax.f32 %v3509, %v3510
      %v3512 = vrot.slane %v3511, 2
      %v3513 = vmax.f32 %v3511, %v3512
      %v3514 = vrot.slane %v3513, 1
      %v3515 = vmax.f32 %v3513, %v3514
      %v3516 = vsel %vm1922, %v3466, -inf
      %v3517 = vrot.slane %v3516, 4
      %v3518 = vmax.f32 %v3516, %v3517
      %v3519 = vrot.slane %v3518, 2
      %v3520 = vmax.f32 %v3518, %v3519
      %v3521 = vrot.slane %v3520, 1
      %v3522 = vmax.f32 %v3520, %v3521
      %v3531 = vsel %vm2186, %v3216, %v3209
      %v3532 = vsel %vm2188, %v3223, %v3531
      %v3533 = vsel %vm2190, %v3230, %v3532
      %v3534 = vsel %vm2192, %v3237, %v3533
      %v3535 = vsel %vm2194, %v3244, %v3534
      %v3536 = vsel %vm2196, %v3251, %v3535
      %v3537 = vsel %vm2198, %v3258, %v3536
      %v3547 = vsel %vm2186, %v3280, %v3273
      %v3548 = vsel %vm2188, %v3287, %v3547
      %v3549 = vsel %vm2190, %v3294, %v3548
      %v3550 = vsel %vm2192, %v3301, %v3549
      %v3551 = vsel %vm2194, %v3308, %v3550
      %v3552 = vsel %vm2196, %v3315, %v3551
      %v3553 = vsel %vm2198, %v3322, %v3552
      %3554 = vrot.lane.b32.xlu0 %v3553, 16
      %v3555 = vpop.permute.xlu0 %3554
      %v3565 = vsel %vm2186, %v3352, %v3345
      %v3566 = vsel %vm2188, %v3359, %v3565
      %v3567 = vsel %vm2190, %v3366, %v3566
      %v3568 = vsel %vm2192, %v3373, %v3567
      %v3569 = vsel %vm2194, %v3380, %v3568
      %v3570 = vsel %vm2196, %v3387, %v3569
      %v3571 = vsel %vm2198, %v3394, %v3570
      %3572 = vrot.lane.b32.xlu0 %v3571, 32
      %v3573 = vpop.permute.xlu0 %3572
      %v3583 = vsel %vm2186, %v3416, %v3409
      %v3584 = vsel %vm2188, %v3423, %v3583
      %v3585 = vsel %vm2190, %v3430, %v3584
      %v3586 = vsel %vm2192, %v3437, %v3585
      %v3587 = vsel %vm2194, %v3444, %v3586
      %v3588 = vsel %vm2196, %v3451, %v3587
      %v3589 = vsel %vm2198, %v3458, %v3588
      %3590 = vrot.lane.b32.xlu0 %v3589, 48
      %v3591 = vpop.permute.xlu0 %3590
      %v3601 = vsel %vm2186, %v3480, %v3473
      %v3602 = vsel %vm2188, %v3487, %v3601
      %v3603 = vsel %vm2190, %v3494, %v3602
      %v3604 = vsel %vm2192, %v3501, %v3603
      %v3605 = vsel %vm2194, %v3508, %v3604
      %v3606 = vsel %vm2196, %v3515, %v3605
      %v3607 = vsel %vm2198, %v3522, %v3606
      %3608 = vrot.lane.b32.xlu0 %v3607, 64
      %v3609 = vpop.permute.xlu0 %3608
      %v3611 = vsel %vm1922, %v3537, %v3555
      %v3612 = vsel %vm2256, %v3611, %v3573
      %v3613 = vsel %vm2258, %v3612, %v3591
      %vm3614 = vcmask 523264
      %v3615 = vsel %vm3614, %v3613, %v3609
      %v3616 = vld [vmem:[%s17] sm:$0xff]
      %v3617 = vld [vmem:[%s17 + $0x8] sm:$0xff]
      %v3618 = vpack.c.bf16 %v3196, %v3195
      %v3619 = vpack.c.bf16 %v3198, %v3197
      %v3620 = vpack.c.bf16 %v3200, %v3199
      %v3621 = vpack.c.bf16 %v3202, %v3201
      %v3622 = vpack.c.bf16 %v3617, %v3616
      %v3624 = vsel %vm1922, %v3618, 0
      %v3627 = vsel %vm1922, %v3619, 0
      %v3630 = vsel %vm1922, %v3620, 0
      %v3633 = vsel %vm1922, %v3621, 0
      %3635 = vmatpush.bf16.msra.mxu0 0
      %3636 = vmatpush.bf16.msra.mxu0 0
      %3637 = vmatpush.bf16.msra.mxu0 0
      %3638 = vmatpush.bf16.msra.mxu0 0
      %3639 = vmatpush.bf16.msra.mxu0 0
      %3640 = vmatpush.bf16.msra.mxu0 0
      %3641 = vmatpush.bf16.msra.mxu0 0
      %3642 = vmatpush.bf16.msra.mxu0 %v3622
      %3643 = vmatmul.bf16.gmra.mxu0 %v3624
      %v3644 = vpop.f32.mrf.mxu0
      %v3645 = vadd.f32 0.0, %v3644
      %v3646 = vpop.f32.mrf.mxu0
      %v3647 = vadd.f32 0.0, %v3646
      %3648 = vmatmul.bf16.gmra.mxu0 %v3627
      %v3649 = vpop.f32.mrf.mxu0
      %v3650 = vadd.f32 0.0, %v3649
      %v3651 = vpop.f32.mrf.mxu0
      %v3652 = vadd.f32 0.0, %v3651
      %3653 = vmatmul.bf16.gmra.mxu0 %v3630
      %v3654 = vpop.f32.mrf.mxu0
      %v3655 = vadd.f32 0.0, %v3654
      %v3656 = vpop.f32.mrf.mxu0
      %v3657 = vadd.f32 0.0, %v3656
      %3658 = vmatmul.bf16.gmra.mxu0 %v3633
      %v3659 = vpop.f32.mrf.mxu0
      %v3660 = vadd.f32 0.0, %v3659
      %v3661 = vpop.f32.mrf.mxu0
      %v3662 = vadd.f32 0.0, %v3661
      %3663 = vdwg.mxu0
      %v3664 = vmax.f32 %v3645, 0.0
      %v3665 = vmax.f32 %v3647, 0.0
      %v3666 = vmax.f32 %v3650, 0.0
      %v3667 = vmax.f32 %v3652, 0.0
      %v3668 = vmax.f32 %v3655, 0.0
      %v3669 = vmax.f32 %v3657, 0.0
      %v3670 = vmax.f32 %v3660, 0.0
      %v3671 = vmax.f32 %v3662, 0.0
      %v3672 = vld [vmem:[%s18] sm:$0x1]
      %v3674 = vperm.slane %v3672, 0
      %v3676 = vmul.f32 %v3664, %v3674
      %v3677 = vmul.f32 %v3665, %v3674
      %v3678 = vmul.f32 %v3666, %v3674
      %v3679 = vmul.f32 %v3667, %v3674
      %v3680 = vmul.f32 %v3668, %v3674
      %v3681 = vmul.f32 %v3669, %v3674
      %v3682 = vmul.f32 %v3670, %v3674
      %v3683 = vmul.f32 %v3671, %v3674
      %v3684 = vsel %vm1922, %v3676, 0.0
      %3685 = vadd.xlane.f32.xlu0 %v3684
      %v3686 = vpop.xlane.xlu0 %3685
      %v3687 = vsel %vm1922, %v3677, 0.0
      %3688 = vadd.xlane.f32.xlu0 %v3687
      %v3689 = vpop.xlane.xlu0 %3688
      %v3690 = vsel %vm1922, %v3678, 0.0
      %3691 = vadd.xlane.f32.xlu0 %v3690
      %v3692 = vpop.xlane.xlu0 %3691
      %v3693 = vsel %vm1922, %v3679, 0.0
      %3694 = vadd.xlane.f32.xlu0 %v3693
      %v3695 = vpop.xlane.xlu0 %3694
      %v3696 = vsel %vm1922, %v3680, 0.0
      %3697 = vadd.xlane.f32.xlu0 %v3696
      %v3698 = vpop.xlane.xlu0 %3697
      %v3699 = vsel %vm1922, %v3681, 0.0
      %3700 = vadd.xlane.f32.xlu0 %v3699
      %v3701 = vpop.xlane.xlu0 %3700
      %v3702 = vsel %vm1922, %v3682, 0.0
      %3703 = vadd.xlane.f32.xlu0 %v3702
      %v3704 = vpop.xlane.xlu0 %3703
      %v3705 = vsel %vm1922, %v3683, 0.0
      %3706 = vadd.xlane.f32.xlu0 %v3705
      %v3707 = vpop.xlane.xlu0 %3706
      %3716 = vrot.lane.b32.xlu0 %v3676, 112
      %v3717 = vpop.permute.xlu0 %3716
      %3718 = vrot.lane.b32.xlu0 %v3677, 112
      %v3719 = vpop.permute.xlu0 %3718
      %3720 = vrot.lane.b32.xlu0 %v3678, 112
      %v3721 = vpop.permute.xlu0 %3720
      %3722 = vrot.lane.b32.xlu0 %v3679, 112
      %v3723 = vpop.permute.xlu0 %3722
      %3724 = vrot.lane.b32.xlu0 %v3680, 112
      %v3725 = vpop.permute.xlu0 %3724
      %3726 = vrot.lane.b32.xlu0 %v3681, 112
      %v3727 = vpop.permute.xlu0 %3726
      %3728 = vrot.lane.b32.xlu0 %v3682, 112
      %v3729 = vpop.permute.xlu0 %3728
      %3730 = vrot.lane.b32.xlu0 %v3683, 112
      %v3731 = vpop.permute.xlu0 %3730
      %v3740 = vsel %vm1922, %v3717, 0.0
      %3741 = vadd.xlane.f32.xlu0 %v3740
      %v3742 = vpop.xlane.xlu0 %3741
      %v3743 = vsel %vm1922, %v3719, 0.0
      %3744 = vadd.xlane.f32.xlu0 %v3743
      %v3745 = vpop.xlane.xlu0 %3744
      %v3746 = vsel %vm1922, %v3721, 0.0
      %3747 = vadd.xlane.f32.xlu0 %v3746
      %v3748 = vpop.xlane.xlu0 %3747
      %v3749 = vsel %vm1922, %v3723, 0.0
      %3750 = vadd.xlane.f32.xlu0 %v3749
      %v3751 = vpop.xlane.xlu0 %3750
      %v3752 = vsel %vm1922, %v3725, 0.0
      %3753 = vadd.xlane.f32.xlu0 %v3752
      %v3754 = vpop.xlane.xlu0 %3753
      %v3755 = vsel %vm1922, %v3727, 0.0
      %3756 = vadd.xlane.f32.xlu0 %v3755
      %v3757 = vpop.xlane.xlu0 %3756
      %v3758 = vsel %vm1922, %v3729, 0.0
      %3759 = vadd.xlane.f32.xlu0 %v3758
      %v3760 = vpop.xlane.xlu0 %3759
      %v3761 = vsel %vm1922, %v3731, 0.0
      %3762 = vadd.xlane.f32.xlu0 %v3761
      %v3763 = vpop.xlane.xlu0 %3762
      %v3764 = vrot.slane %v3686, 4
      %v3765 = vadd.f32 %v3686, %v3764
      %v3766 = vrot.slane %v3765, 2
      %v3767 = vadd.f32 %v3765, %v3766
      %v3768 = vrot.slane %v3767, 1
      %v3769 = vadd.f32 %v3767, %v3768
      %v3770 = vrot.slane %v3689, 4
      %v3771 = vadd.f32 %v3689, %v3770
      %v3772 = vrot.slane %v3771, 2
      %v3773 = vadd.f32 %v3771, %v3772
      %v3774 = vrot.slane %v3773, 1
      %v3775 = vadd.f32 %v3773, %v3774
      %v3776 = vrot.slane %v3692, 4
      %v3777 = vadd.f32 %v3692, %v3776
      %v3778 = vrot.slane %v3777, 2
      %v3779 = vadd.f32 %v3777, %v3778
      %v3780 = vrot.slane %v3779, 1
      %v3781 = vadd.f32 %v3779, %v3780
      %v3782 = vrot.slane %v3695, 4
      %v3783 = vadd.f32 %v3695, %v3782
      %v3784 = vrot.slane %v3783, 2
      %v3785 = vadd.f32 %v3783, %v3784
      %v3786 = vrot.slane %v3785, 1
      %v3787 = vadd.f32 %v3785, %v3786
      %v3788 = vrot.slane %v3698, 4
      %v3789 = vadd.f32 %v3698, %v3788
      %v3790 = vrot.slane %v3789, 2
      %v3791 = vadd.f32 %v3789, %v3790
      %v3792 = vrot.slane %v3791, 1
      %v3793 = vadd.f32 %v3791, %v3792
      %v3794 = vrot.slane %v3701, 4
      %v3795 = vadd.f32 %v3701, %v3794
      %v3796 = vrot.slane %v3795, 2
      %v3797 = vadd.f32 %v3795, %v3796
      %v3798 = vrot.slane %v3797, 1
      %v3799 = vadd.f32 %v3797, %v3798
      %v3800 = vrot.slane %v3704, 4
      %v3801 = vadd.f32 %v3704, %v3800
      %v3802 = vrot.slane %v3801, 2
      %v3803 = vadd.f32 %v3801, %v3802
      %v3804 = vrot.slane %v3803, 1
      %v3805 = vadd.f32 %v3803, %v3804
      %v3806 = vrot.slane %v3707, 4
      %v3807 = vadd.f32 %v3707, %v3806
      %v3808 = vrot.slane %v3807, 2
      %v3809 = vadd.f32 %v3807, %v3808
      %v3810 = vrot.slane %v3809, 1
      %v3811 = vadd.f32 %v3809, %v3810
      %v3820 = vsel %vm2186, %v3775, %v3769
      %v3821 = vsel %vm2188, %v3781, %v3820
      %v3822 = vsel %vm2190, %v3787, %v3821
      %v3823 = vsel %vm2192, %v3793, %v3822
      %v3824 = vsel %vm2194, %v3799, %v3823
      %v3825 = vsel %vm2196, %v3805, %v3824
      %v3826 = vsel %vm2198, %v3811, %v3825
      %v3828 = vmul.f32 %v985, %v3826
      %v3829 = vmul.f32 %v3686, %v986
      %v3830 = vmul.f32 %v3689, %v986
      %v3831 = vmul.f32 %v3692, %v986
      %v3832 = vmul.f32 %v3695, %v986
      %v3833 = vmul.f32 %v3698, %v986
      %v3834 = vmul.f32 %v3701, %v986
      %v3835 = vmul.f32 %v3704, %v986
      %v3836 = vmul.f32 %v3707, %v986
      %vm3837 = vcmask 564752
      %v3838 = vsel %vm3837, %v3829, 0.0
      %v3839 = vrot.slane %v3838, 4
      %v3840 = vadd.f32 %v3838, %v3839
      %v3841 = vrot.slane %v3840, 2
      %v3842 = vadd.f32 %v3840, %v3841
      %v3843 = vrot.slane %v3842, 1
      %v3844 = vadd.f32 %v3842, %v3843
      %v3845 = vsel %vm3837, %v3830, 0.0
      %v3846 = vrot.slane %v3845, 4
      %v3847 = vadd.f32 %v3845, %v3846
      %v3848 = vrot.slane %v3847, 2
      %v3849 = vadd.f32 %v3847, %v3848
      %v3850 = vrot.slane %v3849, 1
      %v3851 = vadd.f32 %v3849, %v3850
      %v3852 = vsel %vm3837, %v3831, 0.0
      %v3853 = vrot.slane %v3852, 4
      %v3854 = vadd.f32 %v3852, %v3853
      %v3855 = vrot.slane %v3854, 2
      %v3856 = vadd.f32 %v3854, %v3855
      %v3857 = vrot.slane %v3856, 1
      %v3858 = vadd.f32 %v3856, %v3857
      %v3859 = vsel %vm3837, %v3832, 0.0
      %v3860 = vrot.slane %v3859, 4
      %v3861 = vadd.f32 %v3859, %v3860
      %v3862 = vrot.slane %v3861, 2
      %v3863 = vadd.f32 %v3861, %v3862
      %v3864 = vrot.slane %v3863, 1
      %v3865 = vadd.f32 %v3863, %v3864
      %v3866 = vsel %vm3837, %v3833, 0.0
      %v3867 = vrot.slane %v3866, 4
      %v3868 = vadd.f32 %v3866, %v3867
      %v3869 = vrot.slane %v3868, 2
      %v3870 = vadd.f32 %v3868, %v3869
      %v3871 = vrot.slane %v3870, 1
      %v3872 = vadd.f32 %v3870, %v3871
      %v3873 = vsel %vm3837, %v3834, 0.0
      %v3874 = vrot.slane %v3873, 4
      %v3875 = vadd.f32 %v3873, %v3874
      %v3876 = vrot.slane %v3875, 2
      %v3877 = vadd.f32 %v3875, %v3876
      %v3878 = vrot.slane %v3877, 1
      %v3879 = vadd.f32 %v3877, %v3878
      %v3880 = vsel %vm3837, %v3835, 0.0
      %v3881 = vrot.slane %v3880, 4
      %v3882 = vadd.f32 %v3880, %v3881
      %v3883 = vrot.slane %v3882, 2
      %v3884 = vadd.f32 %v3882, %v3883
      %v3885 = vrot.slane %v3884, 1
      %v3886 = vadd.f32 %v3884, %v3885
      %v3887 = vsel %vm3837, %v3836, 0.0
      %v3888 = vrot.slane %v3887, 4
      %v3889 = vadd.f32 %v3887, %v3888
      %v3890 = vrot.slane %v3889, 2
      %v3891 = vadd.f32 %v3889, %v3890
      %v3892 = vrot.slane %v3891, 1
      %v3893 = vadd.f32 %v3891, %v3892
      %v3902 = vsel %vm2186, %v3851, %v3844
      %v3903 = vsel %vm2188, %v3858, %v3902
      %v3904 = vsel %vm2190, %v3865, %v3903
      %v3905 = vsel %vm2192, %v3872, %v3904
      %v3906 = vsel %vm2194, %v3879, %v3905
      %v3907 = vsel %vm2196, %v3886, %v3906
      %v3908 = vsel %vm2198, %v3893, %v3907
      %v3910 = vsub.f32 %v3828, %v3908
      %3911 = vset.pattern.permute.xlu0 64
      %3912 = vperm.xlu0 %3911, %v985
      %v3913 = vpop.permute.xlu0 %3912
      %v3915 = vmul.f32 %v3910, %v3913
      %v3916 = vrot.slane %v3742, 4
      %v3917 = vadd.f32 %v3742, %v3916
      %v3918 = vrot.slane %v3917, 2
      %v3919 = vadd.f32 %v3917, %v3918
      %v3920 = vrot.slane %v3919, 1
      %v3921 = vadd.f32 %v3919, %v3920
      %v3922 = vrot.slane %v3745, 4
      %v3923 = vadd.f32 %v3745, %v3922
      %v3924 = vrot.slane %v3923, 2
      %v3925 = vadd.f32 %v3923, %v3924
      %v3926 = vrot.slane %v3925, 1
      %v3927 = vadd.f32 %v3925, %v3926
      %v3928 = vrot.slane %v3748, 4
      %v3929 = vadd.f32 %v3748, %v3928
      %v3930 = vrot.slane %v3929, 2
      %v3931 = vadd.f32 %v3929, %v3930
      %v3932 = vrot.slane %v3931, 1
      %v3933 = vadd.f32 %v3931, %v3932
      %v3934 = vrot.slane %v3751, 4
      %v3935 = vadd.f32 %v3751, %v3934
      %v3936 = vrot.slane %v3935, 2
      %v3937 = vadd.f32 %v3935, %v3936
      %v3938 = vrot.slane %v3937, 1
      %v3939 = vadd.f32 %v3937, %v3938
      %v3940 = vrot.slane %v3754, 4
      %v3941 = vadd.f32 %v3754, %v3940
      %v3942 = vrot.slane %v3941, 2
      %v3943 = vadd.f32 %v3941, %v3942
      %v3944 = vrot.slane %v3943, 1
      %v3945 = vadd.f32 %v3943, %v3944
      %v3946 = vrot.slane %v3757, 4
      %v3947 = vadd.f32 %v3757, %v3946
      %v3948 = vrot.slane %v3947, 2
      %v3949 = vadd.f32 %v3947, %v3948
      %v3950 = vrot.slane %v3949, 1
      %v3951 = vadd.f32 %v3949, %v3950
      %v3952 = vrot.slane %v3760, 4
      %v3953 = vadd.f32 %v3760, %v3952
      %v3954 = vrot.slane %v3953, 2
      %v3955 = vadd.f32 %v3953, %v3954
      %v3956 = vrot.slane %v3955, 1
      %v3957 = vadd.f32 %v3955, %v3956
      %v3958 = vrot.slane %v3763, 4
      %v3959 = vadd.f32 %v3763, %v3958
      %v3960 = vrot.slane %v3959, 2
      %v3961 = vadd.f32 %v3959, %v3960
      %v3962 = vrot.slane %v3961, 1
      %v3963 = vadd.f32 %v3961, %v3962
      %v3972 = vsel %vm2186, %v3927, %v3921
      %v3973 = vsel %vm2188, %v3933, %v3972
      %v3974 = vsel %vm2190, %v3939, %v3973
      %v3975 = vsel %vm2192, %v3945, %v3974
      %v3976 = vsel %vm2194, %v3951, %v3975
      %v3977 = vsel %vm2196, %v3957, %v3976
      %v3978 = vsel %vm2198, %v3963, %v3977
      %v3980 = vmul.f32 %v985, %v3978
      %v3981 = vmul.f32 %v3742, %v986
      %v3982 = vmul.f32 %v3745, %v986
      %v3983 = vmul.f32 %v3748, %v986
      %v3984 = vmul.f32 %v3751, %v986
      %v3985 = vmul.f32 %v3754, %v986
      %v3986 = vmul.f32 %v3757, %v986
      %v3987 = vmul.f32 %v3760, %v986
      %v3988 = vmul.f32 %v3763, %v986
      %vm3989 = vcmask 589352
      %v3990 = vsel %vm3989, %v3981, 0.0
      %v3991 = vrot.slane %v3990, 4
      %v3992 = vadd.f32 %v3990, %v3991
      %v3993 = vrot.slane %v3992, 2
      %v3994 = vadd.f32 %v3992, %v3993
      %v3995 = vrot.slane %v3994, 1
      %v3996 = vadd.f32 %v3994, %v3995
      %v3997 = vsel %vm3989, %v3982, 0.0
      %v3998 = vrot.slane %v3997, 4
      %v3999 = vadd.f32 %v3997, %v3998
      %v4000 = vrot.slane %v3999, 2
      %v4001 = vadd.f32 %v3999, %v4000
      %v4002 = vrot.slane %v4001, 1
      %v4003 = vadd.f32 %v4001, %v4002
      %v4004 = vsel %vm3989, %v3983, 0.0
      %v4005 = vrot.slane %v4004, 4
      %v4006 = vadd.f32 %v4004, %v4005
      %v4007 = vrot.slane %v4006, 2
      %v4008 = vadd.f32 %v4006, %v4007
      %v4009 = vrot.slane %v4008, 1
      %v4010 = vadd.f32 %v4008, %v4009
      %v4011 = vsel %vm3989, %v3984, 0.0
      %v4012 = vrot.slane %v4011, 4
      %v4013 = vadd.f32 %v4011, %v4012
      %v4014 = vrot.slane %v4013, 2
      %v4015 = vadd.f32 %v4013, %v4014
      %v4016 = vrot.slane %v4015, 1
      %v4017 = vadd.f32 %v4015, %v4016
      %v4018 = vsel %vm3989, %v3985, 0.0
      %v4019 = vrot.slane %v4018, 4
      %v4020 = vadd.f32 %v4018, %v4019
      %v4021 = vrot.slane %v4020, 2
      %v4022 = vadd.f32 %v4020, %v4021
      %v4023 = vrot.slane %v4022, 1
      %v4024 = vadd.f32 %v4022, %v4023
      %v4025 = vsel %vm3989, %v3986, 0.0
      %v4026 = vrot.slane %v4025, 4
      %v4027 = vadd.f32 %v4025, %v4026
      %v4028 = vrot.slane %v4027, 2
      %v4029 = vadd.f32 %v4027, %v4028
      %v4030 = vrot.slane %v4029, 1
      %v4031 = vadd.f32 %v4029, %v4030
      %v4032 = vsel %vm3989, %v3987, 0.0
      %v4033 = vrot.slane %v4032, 4
      %v4034 = vadd.f32 %v4032, %v4033
      %v4035 = vrot.slane %v4034, 2
      %v4036 = vadd.f32 %v4034, %v4035
      %v4037 = vrot.slane %v4036, 1
      %v4038 = vadd.f32 %v4036, %v4037
      %v4039 = vsel %vm3989, %v3988, 0.0
      %v4040 = vrot.slane %v4039, 4
      %v4041 = vadd.f32 %v4039, %v4040
      %v4042 = vrot.slane %v4041, 2
      %v4043 = vadd.f32 %v4041, %v4042
      %v4044 = vrot.slane %v4043, 1
      %v4045 = vadd.f32 %v4043, %v4044
      %v4054 = vsel %vm2186, %v4003, %v3996
      %v4055 = vsel %vm2188, %v4010, %v4054
      %v4056 = vsel %vm2190, %v4017, %v4055
      %v4057 = vsel %vm2192, %v4024, %v4056
      %v4058 = vsel %vm2194, %v4031, %v4057
      %v4059 = vsel %vm2196, %v4038, %v4058
      %v4060 = vsel %vm2198, %v4045, %v4059
      %v4062 = vsub.f32 %v3980, %v4060
      %4063 = vset.pattern.permute.xlu0 65
      %4064 = vperm.xlu0 %4063, %v985
      %v4065 = vpop.permute.xlu0 %4064
      %v4067 = vmul.f32 %v4062, %v4065
      %v4069 = vperm.slane %v988, 0
      %v4071 = vadd.f32 %v3195, %v4069
      %v4072 = vadd.f32 %v3196, %v4069
      %v4073 = vadd.f32 %v3197, %v4069
      %v4074 = vadd.f32 %v3198, %v4069
      %v4075 = vadd.f32 %v3199, %v4069
      %v4076 = vadd.f32 %v3200, %v4069
      %v4077 = vadd.f32 %v3201, %v4069
      %v4078 = vadd.f32 %v3202, %v4069
      %4079 = vrot.lane.b32.xlu0 %v4069, 112
      %v4080 = vpop.permute.xlu0 %4079
      %v4082 = vmul.f32 %v3195, %v4080
      %v4083 = vmul.f32 %v3196, %v4080
      %v4084 = vmul.f32 %v3197, %v4080
      %v4085 = vmul.f32 %v3198, %v4080
      %v4086 = vmul.f32 %v3199, %v4080
      %v4087 = vmul.f32 %v3200, %v4080
      %v4088 = vmul.f32 %v3201, %v4080
      %v4089 = vmul.f32 %v3202, %v4080
      %v4090 = vadd.f32 %v4071, %v4082
      %v4091 = vadd.f32 %v4072, %v4083
      %v4092 = vadd.f32 %v4073, %v4084
      %v4093 = vadd.f32 %v4074, %v4085
      %v4094 = vadd.f32 %v4075, %v4086
      %v4095 = vadd.f32 %v4076, %v4087
      %v4096 = vadd.f32 %v4077, %v4088
      %v4097 = vadd.f32 %v4078, %v4089
      %v4098 = vmul.f32 %v4090, %v1446
      %v4099 = vmul.f32 %v4091, %v1451
      %v4100 = vmul.f32 %v4092, %v1456
      %v4101 = vmul.f32 %v4093, %v1461
      %v4102 = vmul.f32 %v4094, %v1466
      %v4103 = vmul.f32 %v4095, %v1471
      %v4104 = vmul.f32 %v4096, %v1476
      %v4105 = vmul.f32 %v4097, %v1481
      %v4106 = vld [vmem:[%s13] sm:$0xff]
      %v4107 = vld [vmem:[%s13 + $0x8] sm:$0xff]
      %v4108 = vpack.c.bf16 %v4099, %v4098
      %v4109 = vpack.c.bf16 %v4101, %v4100
      %v4110 = vpack.c.bf16 %v4103, %v4102
      %v4111 = vpack.c.bf16 %v4105, %v4104
      %v4112 = vpack.c.bf16 %v4107, %v4106
      %v4113 = vld [vmem:[%s14] sm:$0x1]
      %v4115 = vperm.slane %v4113, 0
      %v4118 = vsel %vm1922, %v4108, 0
      %v4121 = vsel %vm1922, %v4109, 0
      %v4124 = vsel %vm1922, %v4110, 0
      %v4127 = vsel %vm1922, %v4111, 0
      %4129 = vmatpush.bf16.msra.mxu0 0
      %4130 = vmatpush.bf16.msra.mxu0 0
      %4131 = vmatpush.bf16.msra.mxu0 0
      %4132 = vmatpush.bf16.msra.mxu0 0
      %4133 = vmatpush.bf16.msra.mxu0 0
      %4134 = vmatpush.bf16.msra.mxu0 0
      %4135 = vmatpush.bf16.msra.mxu0 0
      %4136 = vmatpush.bf16.msra.mxu0 %v4112
      %4137 = vmatmul.bf16.gmra.mxu0 %v4118
      %v4138 = vpop.f32.mrf.mxu0
      %v4139 = vadd.f32 %v4115, %v4138
      %v4140 = vpop.f32.mrf.mxu0
      %v4141 = vadd.f32 %v4115, %v4140
      %4142 = vmatmul.bf16.gmra.mxu0 %v4121
      %v4143 = vpop.f32.mrf.mxu0
      %v4144 = vadd.f32 %v4115, %v4143
      %v4145 = vpop.f32.mrf.mxu0
      %v4146 = vadd.f32 %v4115, %v4145
      %4147 = vmatmul.bf16.gmra.mxu0 %v4124
      %v4148 = vpop.f32.mrf.mxu0
      %v4149 = vadd.f32 %v4115, %v4148
      %v4150 = vpop.f32.mrf.mxu0
      %v4151 = vadd.f32 %v4115, %v4150
      %4152 = vmatmul.bf16.gmra.mxu0 %v4127
      %v4153 = vpop.f32.mrf.mxu0
      %v4154 = vadd.f32 %v4115, %v4153
      %v4155 = vpop.f32.mrf.mxu0
      %v4156 = vadd.f32 %v4115, %v4155
      %4157 = vdwg.mxu0
      %v4158 = vmul.f32 %v4139, %v1446
      %v4159 = vmul.f32 %v4141, %v1451
      %v4160 = vmul.f32 %v4144, %v1456
      %v4161 = vmul.f32 %v4146, %v1461
      %v4162 = vmul.f32 %v4149, %v1466
      %v4163 = vmul.f32 %v4151, %v1471
      %v4164 = vmul.f32 %v4154, %v1476
      %v4165 = vmul.f32 %v4156, %v1481
      %v4166 = vsel %vm1922, %v4098, 0.0
      %v4167 = vrot.slane %v4166, 4
      %v4168 = vadd.f32 %v4166, %v4167
      %v4169 = vrot.slane %v4168, 2
      %v4170 = vadd.f32 %v4168, %v4169
      %v4171 = vrot.slane %v4170, 1
      %v4172 = vadd.f32 %v4170, %v4171
      %v4173 = vsel %vm1922, %v4099, 0.0
      %v4174 = vrot.slane %v4173, 4
      %v4175 = vadd.f32 %v4173, %v4174
      %v4176 = vrot.slane %v4175, 2
      %v4177 = vadd.f32 %v4175, %v4176
      %v4178 = vrot.slane %v4177, 1
      %v4179 = vadd.f32 %v4177, %v4178
      %v4180 = vsel %vm1922, %v4100, 0.0
      %v4181 = vrot.slane %v4180, 4
      %v4182 = vadd.f32 %v4180, %v4181
      %v4183 = vrot.slane %v4182, 2
      %v4184 = vadd.f32 %v4182, %v4183
      %v4185 = vrot.slane %v4184, 1
      %v4186 = vadd.f32 %v4184, %v4185
      %v4187 = vsel %vm1922, %v4101, 0.0
      %v4188 = vrot.slane %v4187, 4
      %v4189 = vadd.f32 %v4187, %v4188
      %v4190 = vrot.slane %v4189, 2
      %v4191 = vadd.f32 %v4189, %v4190
      %v4192 = vrot.slane %v4191, 1
      %v4193 = vadd.f32 %v4191, %v4192
      %v4194 = vsel %vm1922, %v4102, 0.0
      %v4195 = vrot.slane %v4194, 4
      %v4196 = vadd.f32 %v4194, %v4195
      %v4197 = vrot.slane %v4196, 2
      %v4198 = vadd.f32 %v4196, %v4197
      %v4199 = vrot.slane %v4198, 1
      %v4200 = vadd.f32 %v4198, %v4199
      %v4201 = vsel %vm1922, %v4103, 0.0
      %v4202 = vrot.slane %v4201, 4
      %v4203 = vadd.f32 %v4201, %v4202
      %v4204 = vrot.slane %v4203, 2
      %v4205 = vadd.f32 %v4203, %v4204
      %v4206 = vrot.slane %v4205, 1
      %v4207 = vadd.f32 %v4205, %v4206
      %v4208 = vsel %vm1922, %v4104, 0.0
      %v4209 = vrot.slane %v4208, 4
      %v4210 = vadd.f32 %v4208, %v4209
      %v4211 = vrot.slane %v4210, 2
      %v4212 = vadd.f32 %v4210, %v4211
      %v4213 = vrot.slane %v4212, 1
      %v4214 = vadd.f32 %v4212, %v4213
      %v4215 = vsel %vm1922, %v4105, 0.0
      %v4216 = vrot.slane %v4215, 4
      %v4217 = vadd.f32 %v4215, %v4216
      %v4218 = vrot.slane %v4217, 2
      %v4219 = vadd.f32 %v4217, %v4218
      %v4220 = vrot.slane %v4219, 1
      %v4221 = vadd.f32 %v4219, %v4220
      %v4222 = vadd.f32 %v4098, %v1984
      %v4223 = vadd.f32 %v4099, %v1984
      %v4224 = vadd.f32 %v4100, %v1984
      %v4225 = vadd.f32 %v4101, %v1984
      %v4226 = vadd.f32 %v4102, %v1984
      %v4227 = vadd.f32 %v4103, %v1984
      %v4228 = vadd.f32 %v4104, %v1984
      %v4229 = vadd.f32 %v4105, %v1984
      %v4230 = vsel %vm1922, %v4222, inf
      %v4231 = vrot.slane %v4230, 4
      %v4232 = vmin.f32 %v4230, %v4231
      %v4233 = vrot.slane %v4232, 2
      %v4234 = vmin.f32 %v4232, %v4233
      %v4235 = vrot.slane %v4234, 1
      %v4236 = vmin.f32 %v4234, %v4235
      %v4237 = vsel %vm1922, %v4223, inf
      %v4238 = vrot.slane %v4237, 4
      %v4239 = vmin.f32 %v4237, %v4238
      %v4240 = vrot.slane %v4239, 2
      %v4241 = vmin.f32 %v4239, %v4240
      %v4242 = vrot.slane %v4241, 1
      %v4243 = vmin.f32 %v4241, %v4242
      %v4244 = vsel %vm1922, %v4224, inf
      %v4245 = vrot.slane %v4244, 4
      %v4246 = vmin.f32 %v4244, %v4245
      %v4247 = vrot.slane %v4246, 2
      %v4248 = vmin.f32 %v4246, %v4247
      %v4249 = vrot.slane %v4248, 1
      %v4250 = vmin.f32 %v4248, %v4249
      %v4251 = vsel %vm1922, %v4225, inf
      %v4252 = vrot.slane %v4251, 4
      %v4253 = vmin.f32 %v4251, %v4252
      %v4254 = vrot.slane %v4253, 2
      %v4255 = vmin.f32 %v4253, %v4254
      %v4256 = vrot.slane %v4255, 1
      %v4257 = vmin.f32 %v4255, %v4256
      %v4258 = vsel %vm1922, %v4226, inf
      %v4259 = vrot.slane %v4258, 4
      %v4260 = vmin.f32 %v4258, %v4259
      %v4261 = vrot.slane %v4260, 2
      %v4262 = vmin.f32 %v4260, %v4261
      %v4263 = vrot.slane %v4262, 1
      %v4264 = vmin.f32 %v4262, %v4263
      %v4265 = vsel %vm1922, %v4227, inf
      %v4266 = vrot.slane %v4265, 4
      %v4267 = vmin.f32 %v4265, %v4266
      %v4268 = vrot.slane %v4267, 2
      %v4269 = vmin.f32 %v4267, %v4268
      %v4270 = vrot.slane %v4269, 1
      %v4271 = vmin.f32 %v4269, %v4270
      %v4272 = vsel %vm1922, %v4228, inf
      %v4273 = vrot.slane %v4272, 4
      %v4274 = vmin.f32 %v4272, %v4273
      %v4275 = vrot.slane %v4274, 2
      %v4276 = vmin.f32 %v4274, %v4275
      %v4277 = vrot.slane %v4276, 1
      %v4278 = vmin.f32 %v4276, %v4277
      %v4279 = vsel %vm1922, %v4229, inf
      %v4280 = vrot.slane %v4279, 4
      %v4281 = vmin.f32 %v4279, %v4280
      %v4282 = vrot.slane %v4281, 2
      %v4283 = vmin.f32 %v4281, %v4282
      %v4284 = vrot.slane %v4283, 1
      %v4285 = vmin.f32 %v4283, %v4284
      %v4286 = vsub.f32 %v4098, %v1984
      %v4287 = vsub.f32 %v4099, %v1984
      %v4288 = vsub.f32 %v4100, %v1984
      %v4289 = vsub.f32 %v4101, %v1984
      %v4290 = vsub.f32 %v4102, %v1984
      %v4291 = vsub.f32 %v4103, %v1984
      %v4292 = vsub.f32 %v4104, %v1984
      %v4293 = vsub.f32 %v4105, %v1984
      %v4294 = vsel %vm1922, %v4286, -inf
      %v4295 = vrot.slane %v4294, 4
      %v4296 = vmax.f32 %v4294, %v4295
      %v4297 = vrot.slane %v4296, 2
      %v4298 = vmax.f32 %v4296, %v4297
      %v4299 = vrot.slane %v4298, 1
      %v4300 = vmax.f32 %v4298, %v4299
      %v4301 = vsel %vm1922, %v4287, -inf
      %v4302 = vrot.slane %v4301, 4
      %v4303 = vmax.f32 %v4301, %v4302
      %v4304 = vrot.slane %v4303, 2
      %v4305 = vmax.f32 %v4303, %v4304
      %v4306 = vrot.slane %v4305, 1
      %v4307 = vmax.f32 %v4305, %v4306
      %v4308 = vsel %vm1922, %v4288, -inf
      %v4309 = vrot.slane %v4308, 4
      %v4310 = vmax.f32 %v4308, %v4309
      %v4311 = vrot.slane %v4310, 2
      %v4312 = vmax.f32 %v4310, %v4311
      %v4313 = vrot.slane %v4312, 1
      %v4314 = vmax.f32 %v4312, %v4313
      %v4315 = vsel %vm1922, %v4289, -inf
      %v4316 = vrot.slane %v4315, 4
      %v4317 = vmax.f32 %v4315, %v4316
      %v4318 = vrot.slane %v4317, 2
      %v4319 = vmax.f32 %v4317, %v4318
      %v4320 = vrot.slane %v4319, 1
      %v4321 = vmax.f32 %v4319, %v4320
      %v4322 = vsel %vm1922, %v4290, -inf
      %v4323 = vrot.slane %v4322, 4
      %v4324 = vmax.f32 %v4322, %v4323
      %v4325 = vrot.slane %v4324, 2
      %v4326 = vmax.f32 %v4324, %v4325
      %v4327 = vrot.slane %v4326, 1
      %v4328 = vmax.f32 %v4326, %v4327
      %v4329 = vsel %vm1922, %v4291, -inf
      %v4330 = vrot.slane %v4329, 4
      %v4331 = vmax.f32 %v4329, %v4330
      %v4332 = vrot.slane %v4331, 2
      %v4333 = vmax.f32 %v4331, %v4332
      %v4334 = vrot.slane %v4333, 1
      %v4335 = vmax.f32 %v4333, %v4334
      %v4336 = vsel %vm1922, %v4292, -inf
      %v4337 = vrot.slane %v4336, 4
      %v4338 = vmax.f32 %v4336, %v4337
      %v4339 = vrot.slane %v4338, 2
      %v4340 = vmax.f32 %v4338, %v4339
      %v4341 = vrot.slane %v4340, 1
      %v4342 = vmax.f32 %v4340, %v4341
      %v4343 = vsel %vm1922, %v4293, -inf
      %v4344 = vrot.slane %v4343, 4
      %v4345 = vmax.f32 %v4343, %v4344
      %v4346 = vrot.slane %v4345, 2
      %v4347 = vmax.f32 %v4345, %v4346
      %v4348 = vrot.slane %v4347, 1
      %v4349 = vmax.f32 %v4347, %v4348
      %v4350 = vmul.f32 %v4098, %v4098
      %v4351 = vmul.f32 %v4099, %v4099
      %v4352 = vmul.f32 %v4100, %v4100
      %v4353 = vmul.f32 %v4101, %v4101
      %v4354 = vmul.f32 %v4102, %v4102
      %v4355 = vmul.f32 %v4103, %v4103
      %v4356 = vmul.f32 %v4104, %v4104
      %v4357 = vmul.f32 %v4105, %v4105
      %v4358 = vsel %vm1922, %v4350, 0.0
      %v4359 = vrot.slane %v4358, 4
      %v4360 = vadd.f32 %v4358, %v4359
      %v4361 = vrot.slane %v4360, 2
      %v4362 = vadd.f32 %v4360, %v4361
      %v4363 = vrot.slane %v4362, 1
      %v4364 = vadd.f32 %v4362, %v4363
      %v4365 = vsel %vm1922, %v4351, 0.0
      %v4366 = vrot.slane %v4365, 4
      %v4367 = vadd.f32 %v4365, %v4366
      %v4368 = vrot.slane %v4367, 2
      %v4369 = vadd.f32 %v4367, %v4368
      %v4370 = vrot.slane %v4369, 1
      %v4371 = vadd.f32 %v4369, %v4370
      %v4372 = vsel %vm1922, %v4352, 0.0
      %v4373 = vrot.slane %v4372, 4
      %v4374 = vadd.f32 %v4372, %v4373
      %v4375 = vrot.slane %v4374, 2
      %v4376 = vadd.f32 %v4374, %v4375
      %v4377 = vrot.slane %v4376, 1
      %v4378 = vadd.f32 %v4376, %v4377
      %v4379 = vsel %vm1922, %v4353, 0.0
      %v4380 = vrot.slane %v4379, 4
      %v4381 = vadd.f32 %v4379, %v4380
      %v4382 = vrot.slane %v4381, 2
      %v4383 = vadd.f32 %v4381, %v4382
      %v4384 = vrot.slane %v4383, 1
      %v4385 = vadd.f32 %v4383, %v4384
      %v4386 = vsel %vm1922, %v4354, 0.0
      %v4387 = vrot.slane %v4386, 4
      %v4388 = vadd.f32 %v4386, %v4387
      %v4389 = vrot.slane %v4388, 2
      %v4390 = vadd.f32 %v4388, %v4389
      %v4391 = vrot.slane %v4390, 1
      %v4392 = vadd.f32 %v4390, %v4391
      %v4393 = vsel %vm1922, %v4355, 0.0
      %v4394 = vrot.slane %v4393, 4
      %v4395 = vadd.f32 %v4393, %v4394
      %v4396 = vrot.slane %v4395, 2
      %v4397 = vadd.f32 %v4395, %v4396
      %v4398 = vrot.slane %v4397, 1
      %v4399 = vadd.f32 %v4397, %v4398
      %v4400 = vsel %vm1922, %v4356, 0.0
      %v4401 = vrot.slane %v4400, 4
      %v4402 = vadd.f32 %v4400, %v4401
      %v4403 = vrot.slane %v4402, 2
      %v4404 = vadd.f32 %v4402, %v4403
      %v4405 = vrot.slane %v4404, 1
      %v4406 = vadd.f32 %v4404, %v4405
      %v4407 = vsel %vm1922, %v4357, 0.0
      %v4408 = vrot.slane %v4407, 4
      %v4409 = vadd.f32 %v4407, %v4408
      %v4410 = vrot.slane %v4409, 2
      %v4411 = vadd.f32 %v4409, %v4410
      %v4412 = vrot.slane %v4411, 1
      %v4413 = vadd.f32 %v4411, %v4412
      %v4422 = vsel %vm2186, %v4179, %v4172
      %v4423 = vsel %vm2188, %v4186, %v4422
      %v4424 = vsel %vm2190, %v4193, %v4423
      %v4425 = vsel %vm2192, %v4200, %v4424
      %v4426 = vsel %vm2194, %v4207, %v4425
      %v4427 = vsel %vm2196, %v4214, %v4426
      %v4428 = vsel %vm2198, %v4221, %v4427
      %v4438 = vsel %vm2186, %v4243, %v4236
      %v4439 = vsel %vm2188, %v4250, %v4438
      %v4440 = vsel %vm2190, %v4257, %v4439
      %v4441 = vsel %vm2192, %v4264, %v4440
      %v4442 = vsel %vm2194, %v4271, %v4441
      %v4443 = vsel %vm2196, %v4278, %v4442
      %v4444 = vsel %vm2198, %v4285, %v4443
      %4445 = vrot.lane.b32.xlu0 %v4444, 16
      %v4446 = vpop.permute.xlu0 %4445
      %v4456 = vsel %vm2186, %v4307, %v4300
      %v4457 = vsel %vm2188, %v4314, %v4456
      %v4458 = vsel %vm2190, %v4321, %v4457
      %v4459 = vsel %vm2192, %v4328, %v4458
      %v4460 = vsel %vm2194, %v4335, %v4459
      %v4461 = vsel %vm2196, %v4342, %v4460
      %v4462 = vsel %vm2198, %v4349, %v4461
      %4463 = vrot.lane.b32.xlu0 %v4462, 32
      %v4464 = vpop.permute.xlu0 %4463
      %v4474 = vsel %vm2186, %v4371, %v4364
      %v4475 = vsel %vm2188, %v4378, %v4474
      %v4476 = vsel %vm2190, %v4385, %v4475
      %v4477 = vsel %vm2192, %v4392, %v4476
      %v4478 = vsel %vm2194, %v4399, %v4477
      %v4479 = vsel %vm2196, %v4406, %v4478
      %v4480 = vsel %vm2198, %v4413, %v4479
      %4481 = vrot.lane.b32.xlu0 %v4480, 48
      %v4482 = vpop.permute.xlu0 %4481
      %v4484 = vsel %vm1922, %v4428, %v4446
      %v4485 = vsel %vm2256, %v4484, %v4464
      %v4486 = vsel %vm2258, %v4485, %v4482
      %v4487 = vadd.f32 %v2923, %v4158
      %v4488 = vadd.f32 %v2924, %v4159
      %v4489 = vadd.f32 %v2925, %v4160
      %v4490 = vadd.f32 %v2926, %v4161
      %v4491 = vadd.f32 %v2927, %v4162
      %v4492 = vadd.f32 %v2928, %v4163
      %v4493 = vadd.f32 %v2929, %v4164
      %v4494 = vadd.f32 %v2930, %v4165
      %v4495 = vsel %vm1922, %v4487, 0.0
      %4496 = vadd.xlane.f32.xlu0 %v4495
      %v4497 = vpop.xlane.xlu0 %4496
      %v4498 = vsel %vm1922, %v4488, 0.0
      %4499 = vadd.xlane.f32.xlu0 %v4498
      %v4500 = vpop.xlane.xlu0 %4499
      %v4501 = vsel %vm1922, %v4489, 0.0
      %4502 = vadd.xlane.f32.xlu0 %v4501
      %v4503 = vpop.xlane.xlu0 %4502
      %v4504 = vsel %vm1922, %v4490, 0.0
      %4505 = vadd.xlane.f32.xlu0 %v4504
      %v4506 = vpop.xlane.xlu0 %4505
      %v4507 = vsel %vm1922, %v4491, 0.0
      %4508 = vadd.xlane.f32.xlu0 %v4507
      %v4509 = vpop.xlane.xlu0 %4508
      %v4510 = vsel %vm1922, %v4492, 0.0
      %4511 = vadd.xlane.f32.xlu0 %v4510
      %v4512 = vpop.xlane.xlu0 %4511
      %v4513 = vsel %vm1922, %v4493, 0.0
      %4514 = vadd.xlane.f32.xlu0 %v4513
      %v4515 = vpop.xlane.xlu0 %4514
      %v4516 = vsel %vm1922, %v4494, 0.0
      %4517 = vadd.xlane.f32.xlu0 %v4516
      %v4518 = vpop.xlane.xlu0 %4517
      %v4519 = vrcp.pop 16.0
      %v4520 = vmul.f32 16.0, %v4519
      %v4521 = vsub.f32 1.0, %v4520
      %v4522 = vmul.f32 %v4519, %v4521
      %v4523 = vadd.f32 %v4519, %v4522
      %vm4524 = vweird.f32 %v4519
      %v4525 = vsel %vm4524, %v4519, %v4523
      %v4526 = vmul.f32 %v4497, %v4525
      %v4527 = vmul.f32 %v4500, %v4525
      %v4528 = vmul.f32 %v4503, %v4525
      %v4529 = vmul.f32 %v4506, %v4525
      %v4530 = vmul.f32 %v4509, %v4525
      %v4531 = vmul.f32 %v4512, %v4525
      %v4532 = vmul.f32 %v4515, %v4525
      %v4533 = vmul.f32 %v4518, %v4525
      %v4534 = vsub.f32 %v4487, %v4526
      %v4535 = vsub.f32 %v4488, %v4527
      %v4536 = vsub.f32 %v4489, %v4528
      %v4537 = vsub.f32 %v4490, %v4529
      %v4538 = vsub.f32 %v4491, %v4530
      %v4539 = vsub.f32 %v4492, %v4531
      %v4540 = vsub.f32 %v4493, %v4532
      %v4541 = vsub.f32 %v4494, %v4533
      %v4542 = vmul.f32 %v4534, %v4534
      %v4543 = vmul.f32 %v4535, %v4535
      %v4544 = vmul.f32 %v4536, %v4536
      %v4545 = vmul.f32 %v4537, %v4537
      %v4546 = vmul.f32 %v4538, %v4538
      %v4547 = vmul.f32 %v4539, %v4539
      %v4548 = vmul.f32 %v4540, %v4540
      %v4549 = vmul.f32 %v4541, %v4541
      %v4550 = vsel %vm1922, %v4542, 0.0
      %4551 = vadd.xlane.f32.xlu0 %v4550
      %v4552 = vpop.xlane.xlu0 %4551
      %v4553 = vsel %vm1922, %v4543, 0.0
      %4554 = vadd.xlane.f32.xlu0 %v4553
      %v4555 = vpop.xlane.xlu0 %4554
      %v4556 = vsel %vm1922, %v4544, 0.0
      %4557 = vadd.xlane.f32.xlu0 %v4556
      %v4558 = vpop.xlane.xlu0 %4557
      %v4559 = vsel %vm1922, %v4545, 0.0
      %4560 = vadd.xlane.f32.xlu0 %v4559
      %v4561 = vpop.xlane.xlu0 %4560
      %v4562 = vsel %vm1922, %v4546, 0.0
      %4563 = vadd.xlane.f32.xlu0 %v4562
      %v4564 = vpop.xlane.xlu0 %4563
      %v4565 = vsel %vm1922, %v4547, 0.0
      %4566 = vadd.xlane.f32.xlu0 %v4565
      %v4567 = vpop.xlane.xlu0 %4566
      %v4568 = vsel %vm1922, %v4548, 0.0
      %4569 = vadd.xlane.f32.xlu0 %v4568
      %v4570 = vpop.xlane.xlu0 %4569
      %v4571 = vsel %vm1922, %v4549, 0.0
      %4572 = vadd.xlane.f32.xlu0 %v4571
      %v4573 = vpop.xlane.xlu0 %4572
      %v4574 = vmul.f32 %v4552, %v4525
      %v4575 = vmul.f32 %v4555, %v4525
      %v4576 = vmul.f32 %v4558, %v4525
      %v4577 = vmul.f32 %v4561, %v4525
      %v4578 = vmul.f32 %v4564, %v4525
      %v4579 = vmul.f32 %v4567, %v4525
      %v4580 = vmul.f32 %v4570, %v4525
      %v4581 = vmul.f32 %v4573, %v4525
      %v4582 = vadd.f32 %v4574, 1e-05
      %v4583 = vadd.f32 %v4575, 1e-05
      %v4584 = vadd.f32 %v4576, 1e-05
      %v4585 = vadd.f32 %v4577, 1e-05
      %v4586 = vadd.f32 %v4578, 1e-05
      %v4587 = vadd.f32 %v4579, 1e-05
      %v4588 = vadd.f32 %v4580, 1e-05
      %v4589 = vadd.f32 %v4581, 1e-05
      %v4590 = vrsqrt.pop %v4582
      %v4591 = vmul.f32 %v4590, %v4582
      %v4592 = vmul.f32 %v4591, %v4590
      %v4593 = vmul.f32 0.5, %v4592
      %v4594 = vsub.f32 1.5, %v4593
      %v4595 = vmul.f32 %v4590, %v4594
      %vm4596 = vweird.f32 %v4582
      %vm4597 = vweird.f32 %v4590
      %vm4598 = vmor %vm4596, %vm4597
      %v4599 = vsel %vm4598, %v4590, %v4595
      %v4600 = vrsqrt.pop %v4583
      %v4601 = vmul.f32 %v4600, %v4583
      %v4602 = vmul.f32 %v4601, %v4600
      %v4603 = vmul.f32 0.5, %v4602
      %v4604 = vsub.f32 1.5, %v4603
      %v4605 = vmul.f32 %v4600, %v4604
      %vm4606 = vweird.f32 %v4583
      %vm4607 = vweird.f32 %v4600
      %vm4608 = vmor %vm4606, %vm4607
      %v4609 = vsel %vm4608, %v4600, %v4605
      %v4610 = vrsqrt.pop %v4584
      %v4611 = vmul.f32 %v4610, %v4584
      %v4612 = vmul.f32 %v4611, %v4610
      %v4613 = vmul.f32 0.5, %v4612
      %v4614 = vsub.f32 1.5, %v4613
      %v4615 = vmul.f32 %v4610, %v4614
      %vm4616 = vweird.f32 %v4584
      %vm4617 = vweird.f32 %v4610
      %vm4618 = vmor %vm4616, %vm4617
      %v4619 = vsel %vm4618, %v4610, %v4615
      %v4620 = vrsqrt.pop %v4585
      %v4621 = vmul.f32 %v4620, %v4585
      %v4622 = vmul.f32 %v4621, %v4620
      %v4623 = vmul.f32 0.5, %v4622
      %v4624 = vsub.f32 1.5, %v4623
      %v4625 = vmul.f32 %v4620, %v4624
      %vm4626 = vweird.f32 %v4585
      %vm4627 = vweird.f32 %v4620
      %vm4628 = vmor %vm4626, %vm4627
      %v4629 = vsel %vm4628, %v4620, %v4625
      %v4630 = vrsqrt.pop %v4586
      %v4631 = vmul.f32 %v4630, %v4586
      %v4632 = vmul.f32 %v4631, %v4630
      %v4633 = vmul.f32 0.5, %v4632
      %v4634 = vsub.f32 1.5, %v4633
      %v4635 = vmul.f32 %v4630, %v4634
      %vm4636 = vweird.f32 %v4586
      %vm4637 = vweird.f32 %v4630
      %vm4638 = vmor %vm4636, %vm4637
      %v4639 = vsel %vm4638, %v4630, %v4635
      %v4640 = vrsqrt.pop %v4587
      %v4641 = vmul.f32 %v4640, %v4587
      %v4642 = vmul.f32 %v4641, %v4640
      %v4643 = vmul.f32 0.5, %v4642
      %v4644 = vsub.f32 1.5, %v4643
      %v4645 = vmul.f32 %v4640, %v4644
      %vm4646 = vweird.f32 %v4587
      %vm4647 = vweird.f32 %v4640
      %vm4648 = vmor %vm4646, %vm4647
      %v4649 = vsel %vm4648, %v4640, %v4645
      %v4650 = vrsqrt.pop %v4588
      %v4651 = vmul.f32 %v4650, %v4588
      %v4652 = vmul.f32 %v4651, %v4650
      %v4653 = vmul.f32 0.5, %v4652
      %v4654 = vsub.f32 1.5, %v4653
      %v4655 = vmul.f32 %v4650, %v4654
      %vm4656 = vweird.f32 %v4588
      %vm4657 = vweird.f32 %v4650
      %vm4658 = vmor %vm4656, %vm4657
      %v4659 = vsel %vm4658, %v4650, %v4655
      %v4660 = vrsqrt.pop %v4589
      %v4661 = vmul.f32 %v4660, %v4589
      %v4662 = vmul.f32 %v4661, %v4660
      %v4663 = vmul.f32 0.5, %v4662
      %v4664 = vsub.f32 1.5, %v4663
      %v4665 = vmul.f32 %v4660, %v4664
      %vm4666 = vweird.f32 %v4589
      %vm4667 = vweird.f32 %v4660
      %vm4668 = vmor %vm4666, %vm4667
      %v4669 = vsel %vm4668, %v4660, %v4665
      %v4670 = vmul.f32 %v4534, %v4599
      %v4671 = vmul.f32 %v4535, %v4609
      %v4672 = vmul.f32 %v4536, %v4619
      %v4673 = vmul.f32 %v4537, %v4629
      %v4674 = vmul.f32 %v4538, %v4639
      %v4675 = vmul.f32 %v4539, %v4649
      %v4676 = vmul.f32 %v4540, %v4659
      %v4677 = vmul.f32 %v4541, %v4669
      %v4678 = vld [vmem:[%s19] sm:$0x1]
      %v4680 = vperm.slane %v4678, 0
      %v4682 = vmul.f32 %v4670, %v4680
      %v4683 = vmul.f32 %v4671, %v4680
      %v4684 = vmul.f32 %v4672, %v4680
      %v4685 = vmul.f32 %v4673, %v4680
      %v4686 = vmul.f32 %v4674, %v4680
      %v4687 = vmul.f32 %v4675, %v4680
      %v4688 = vmul.f32 %v4676, %v4680
      %v4689 = vmul.f32 %v4677, %v4680
      %v4690 = vld [vmem:[%s20] sm:$0x1]
      %v4692 = vperm.slane %v4690, 0
      %v4694 = vadd.f32 %v4682, %v4692
      %v4695 = vadd.f32 %v4683, %v4692
      %v4696 = vadd.f32 %v4684, %v4692
      %v4697 = vadd.f32 %v4685, %v4692
      %v4698 = vadd.f32 %v4686, %v4692
      %v4699 = vadd.f32 %v4687, %v4692
      %v4700 = vadd.f32 %v4688, %v4692
      %v4701 = vadd.f32 %v4689, %v4692
      %v4702 = vld [vmem:[%s21] sm:$0xff]
      %v4703 = vld [vmem:[%s21 + $0x8] sm:$0xff]
      %v4704 = vpack.c.bf16 %v4695, %v4694
      %v4705 = vpack.c.bf16 %v4697, %v4696
      %v4706 = vpack.c.bf16 %v4699, %v4698
      %v4707 = vpack.c.bf16 %v4701, %v4700
      %v4708 = vpack.c.bf16 %v4703, %v4702
      %v4709 = vld [vmem:[%s22] sm:$0x1]
      %v4711 = vperm.slane %v4709, 0
      %v4714 = vsel %vm1922, %v4704, 0
      %v4717 = vsel %vm1922, %v4705, 0
      %v4720 = vsel %vm1922, %v4706, 0
      %v4723 = vsel %vm1922, %v4707, 0
      %4725 = vmatpush.bf16.msra.mxu0 0
      %4726 = vmatpush.bf16.msra.mxu0 0
      %4727 = vmatpush.bf16.msra.mxu0 0
      %4728 = vmatpush.bf16.msra.mxu0 0
      %4729 = vmatpush.bf16.msra.mxu0 0
      %4730 = vmatpush.bf16.msra.mxu0 0
      %4731 = vmatpush.bf16.msra.mxu0 0
      %4732 = vmatpush.bf16.msra.mxu0 %v4708
      %4733 = vmatmul.bf16.gmra.mxu0 %v4714
      %v4734 = vpop.f32.mrf.mxu0
      %v4735 = vadd.f32 %v4711, %v4734
      %v4736 = vpop.f32.mrf.mxu0
      %v4737 = vadd.f32 %v4711, %v4736
      %4738 = vmatmul.bf16.gmra.mxu0 %v4717
      %v4739 = vpop.f32.mrf.mxu0
      %v4740 = vadd.f32 %v4711, %v4739
      %v4741 = vpop.f32.mrf.mxu0
      %v4742 = vadd.f32 %v4711, %v4741
      %4743 = vmatmul.bf16.gmra.mxu0 %v4720
      %v4744 = vpop.f32.mrf.mxu0
      %v4745 = vadd.f32 %v4711, %v4744
      %v4746 = vpop.f32.mrf.mxu0
      %v4747 = vadd.f32 %v4711, %v4746
      %4748 = vmatmul.bf16.gmra.mxu0 %v4723
      %v4749 = vpop.f32.mrf.mxu0
      %v4750 = vadd.f32 %v4711, %v4749
      %v4751 = vpop.f32.mrf.mxu0
      %v4752 = vadd.f32 %v4711, %v4751
      %4753 = vdwg.mxu0
      %v4754 = vmax.f32 %v4735, 0.0
      %v4755 = vmax.f32 %v4737, 0.0
      %v4756 = vmax.f32 %v4740, 0.0
      %v4757 = vmax.f32 %v4742, 0.0
      %v4758 = vmax.f32 %v4745, 0.0
      %v4759 = vmax.f32 %v4747, 0.0
      %v4760 = vmax.f32 %v4750, 0.0
      %v4761 = vmax.f32 %v4752, 0.0
      %v4762 = vld [vmem:[%s23] sm:$0xff]
      %v4763 = vld [vmem:[%s23 + $0x8] sm:$0xff]
      %v4764 = vld [vmem:[%s23 + $0x10] sm:$0xff]
      %v4765 = vld [vmem:[%s23 + $0x18] sm:$0xff]
      %v4766 = vpack.c.bf16 %v4755, %v4754
      %v4767 = vpack.c.bf16 %v4757, %v4756
      %v4768 = vpack.c.bf16 %v4759, %v4758
      %v4769 = vpack.c.bf16 %v4761, %v4760
      %v4770 = vpack.c.bf16 %v4763, %v4762
      %v4771 = vpack.c.bf16 %v4765, %v4764
      %v4772 = vld [vmem:[%s24] sm:$0x1]
      %v4774 = vperm.slane %v4772, 0
      %v4777 = vsel %vm2256, %v4766, 0
      %v4780 = vsel %vm2256, %v4767, 0
      %v4783 = vsel %vm2256, %v4768, 0
      %v4786 = vsel %vm2256, %v4769, 0
      %4788 = vmatpush.bf16.msra.mxu0 0
      %4789 = vmatpush.bf16.msra.mxu0 0
      %4790 = vmatpush.bf16.msra.mxu0 0
      %4791 = vmatpush.bf16.msra.mxu0 0
      %4792 = vmatpush.bf16.msra.mxu0 0
      %4793 = vmatpush.bf16.msra.mxu0 0
      %4794 = vmatpush.bf16.msra.mxu0 %v4771
      %4795 = vmatpush.bf16.msra.mxu0 %v4770
      %4796 = vmatmul.bf16.gmra.mxu0 %v4777
      %v4797 = vpop.f32.mrf.mxu0
      %v4798 = vadd.f32 %v4774, %v4797
      %v4799 = vpop.f32.mrf.mxu0
      %v4800 = vadd.f32 %v4774, %v4799
      %4801 = vmatmul.bf16.gmra.mxu0 %v4780
      %v4802 = vpop.f32.mrf.mxu0
      %v4803 = vadd.f32 %v4774, %v4802
      %v4804 = vpop.f32.mrf.mxu0
      %v4805 = vadd.f32 %v4774, %v4804
      %4806 = vmatmul.bf16.gmra.mxu0 %v4783
      %v4807 = vpop.f32.mrf.mxu0
      %v4808 = vadd.f32 %v4774, %v4807
      %v4809 = vpop.f32.mrf.mxu0
      %v4810 = vadd.f32 %v4774, %v4809
      %4811 = vmatmul.bf16.gmra.mxu0 %v4786
      %v4812 = vpop.f32.mrf.mxu0
      %v4813 = vadd.f32 %v4774, %v4812
      %v4814 = vpop.f32.mrf.mxu0
      %v4815 = vadd.f32 %v4774, %v4814
      %4816 = vdwg.mxu0
      %v4817 = vadd.f32 %v4694, %v4798
      %v4818 = vadd.f32 %v4695, %v4800
      %v4819 = vadd.f32 %v4696, %v4803
      %v4820 = vadd.f32 %v4697, %v4805
      %v4821 = vadd.f32 %v4698, %v4808
      %v4822 = vadd.f32 %v4699, %v4810
      %v4823 = vadd.f32 %v4700, %v4813
      %v4824 = vadd.f32 %v4701, %v4815
      %v4825 = vsel %vm1922, %v4817, 0.0
      %4826 = vadd.xlane.f32.xlu0 %v4825
      %v4827 = vpop.xlane.xlu0 %4826
      %v4828 = vsel %vm1922, %v4818, 0.0
      %4829 = vadd.xlane.f32.xlu0 %v4828
      %v4830 = vpop.xlane.xlu0 %4829
      %v4831 = vsel %vm1922, %v4819, 0.0
      %4832 = vadd.xlane.f32.xlu0 %v4831
      %v4833 = vpop.xlane.xlu0 %4832
      %v4834 = vsel %vm1922, %v4820, 0.0
      %4835 = vadd.xlane.f32.xlu0 %v4834
      %v4836 = vpop.xlane.xlu0 %4835
      %v4837 = vsel %vm1922, %v4821, 0.0
      %4838 = vadd.xlane.f32.xlu0 %v4837
      %v4839 = vpop.xlane.xlu0 %4838
      %v4840 = vsel %vm1922, %v4822, 0.0
      %4841 = vadd.xlane.f32.xlu0 %v4840
      %v4842 = vpop.xlane.xlu0 %4841
      %v4843 = vsel %vm1922, %v4823, 0.0
      %4844 = vadd.xlane.f32.xlu0 %v4843
      %v4845 = vpop.xlane.xlu0 %4844
      %v4846 = vsel %vm1922, %v4824, 0.0
      %4847 = vadd.xlane.f32.xlu0 %v4846
      %v4848 = vpop.xlane.xlu0 %4847
      %v4849 = vmul.f32 %v4827, %v4525
      %v4850 = vmul.f32 %v4830, %v4525
      %v4851 = vmul.f32 %v4833, %v4525
      %v4852 = vmul.f32 %v4836, %v4525
      %v4853 = vmul.f32 %v4839, %v4525
      %v4854 = vmul.f32 %v4842, %v4525
      %v4855 = vmul.f32 %v4845, %v4525
      %v4856 = vmul.f32 %v4848, %v4525
      %v4857 = vsub.f32 %v4817, %v4849
      %v4858 = vsub.f32 %v4818, %v4850
      %v4859 = vsub.f32 %v4819, %v4851
      %v4860 = vsub.f32 %v4820, %v4852
      %v4861 = vsub.f32 %v4821, %v4853
      %v4862 = vsub.f32 %v4822, %v4854
      %v4863 = vsub.f32 %v4823, %v4855
      %v4864 = vsub.f32 %v4824, %v4856
      %v4865 = vmul.f32 %v4857, %v4857
      %v4866 = vmul.f32 %v4858, %v4858
      %v4867 = vmul.f32 %v4859, %v4859
      %v4868 = vmul.f32 %v4860, %v4860
      %v4869 = vmul.f32 %v4861, %v4861
      %v4870 = vmul.f32 %v4862, %v4862
      %v4871 = vmul.f32 %v4863, %v4863
      %v4872 = vmul.f32 %v4864, %v4864
      %v4873 = vsel %vm1922, %v4865, 0.0
      %4874 = vadd.xlane.f32.xlu0 %v4873
      %v4875 = vpop.xlane.xlu0 %4874
      %v4876 = vsel %vm1922, %v4866, 0.0
      %4877 = vadd.xlane.f32.xlu0 %v4876
      %v4878 = vpop.xlane.xlu0 %4877
      %v4879 = vsel %vm1922, %v4867, 0.0
      %4880 = vadd.xlane.f32.xlu0 %v4879
      %v4881 = vpop.xlane.xlu0 %4880
      %v4882 = vsel %vm1922, %v4868, 0.0
      %4883 = vadd.xlane.f32.xlu0 %v4882
      %v4884 = vpop.xlane.xlu0 %4883
      %v4885 = vsel %vm1922, %v4869, 0.0
      %4886 = vadd.xlane.f32.xlu0 %v4885
      %v4887 = vpop.xlane.xlu0 %4886
      %v4888 = vsel %vm1922, %v4870, 0.0
      %4889 = vadd.xlane.f32.xlu0 %v4888
      %v4890 = vpop.xlane.xlu0 %4889
      %v4891 = vsel %vm1922, %v4871, 0.0
      %4892 = vadd.xlane.f32.xlu0 %v4891
      %v4893 = vpop.xlane.xlu0 %4892
      %v4894 = vsel %vm1922, %v4872, 0.0
      %4895 = vadd.xlane.f32.xlu0 %v4894
      %v4896 = vpop.xlane.xlu0 %4895
      %v4897 = vmul.f32 %v4875, %v4525
      %v4898 = vmul.f32 %v4878, %v4525
      %v4899 = vmul.f32 %v4881, %v4525
      %v4900 = vmul.f32 %v4884, %v4525
      %v4901 = vmul.f32 %v4887, %v4525
      %v4902 = vmul.f32 %v4890, %v4525
      %v4903 = vmul.f32 %v4893, %v4525
      %v4904 = vmul.f32 %v4896, %v4525
      %v4905 = vadd.f32 %v4897, 1e-05
      %v4906 = vadd.f32 %v4898, 1e-05
      %v4907 = vadd.f32 %v4899, 1e-05
      %v4908 = vadd.f32 %v4900, 1e-05
      %v4909 = vadd.f32 %v4901, 1e-05
      %v4910 = vadd.f32 %v4902, 1e-05
      %v4911 = vadd.f32 %v4903, 1e-05
      %v4912 = vadd.f32 %v4904, 1e-05
      %v4913 = vrsqrt.pop %v4905
      %v4914 = vmul.f32 %v4913, %v4905
      %v4915 = vmul.f32 %v4914, %v4913
      %v4916 = vmul.f32 0.5, %v4915
      %v4917 = vsub.f32 1.5, %v4916
      %v4918 = vmul.f32 %v4913, %v4917
      %vm4919 = vweird.f32 %v4905
      %vm4920 = vweird.f32 %v4913
      %vm4921 = vmor %vm4919, %vm4920
      %v4922 = vsel %vm4921, %v4913, %v4918
      %v4923 = vrsqrt.pop %v4906
      %v4924 = vmul.f32 %v4923, %v4906
      %v4925 = vmul.f32 %v4924, %v4923
      %v4926 = vmul.f32 0.5, %v4925
      %v4927 = vsub.f32 1.5, %v4926
      %v4928 = vmul.f32 %v4923, %v4927
      %vm4929 = vweird.f32 %v4906
      %vm4930 = vweird.f32 %v4923
      %vm4931 = vmor %vm4929, %vm4930
      %v4932 = vsel %vm4931, %v4923, %v4928
      %v4933 = vrsqrt.pop %v4907
      %v4934 = vmul.f32 %v4933, %v4907
      %v4935 = vmul.f32 %v4934, %v4933
      %v4936 = vmul.f32 0.5, %v4935
      %v4937 = vsub.f32 1.5, %v4936
      %v4938 = vmul.f32 %v4933, %v4937
      %vm4939 = vweird.f32 %v4907
      %vm4940 = vweird.f32 %v4933
      %vm4941 = vmor %vm4939, %vm4940
      %v4942 = vsel %vm4941, %v4933, %v4938
      %v4943 = vrsqrt.pop %v4908
      %v4944 = vmul.f32 %v4943, %v4908
      %v4945 = vmul.f32 %v4944, %v4943
      %v4946 = vmul.f32 0.5, %v4945
      %v4947 = vsub.f32 1.5, %v4946
      %v4948 = vmul.f32 %v4943, %v4947
      %vm4949 = vweird.f32 %v4908
      %vm4950 = vweird.f32 %v4943
      %vm4951 = vmor %vm4949, %vm4950
      %v4952 = vsel %vm4951, %v4943, %v4948
      %v4953 = vrsqrt.pop %v4909
      %v4954 = vmul.f32 %v4953, %v4909
      %v4955 = vmul.f32 %v4954, %v4953
      %v4956 = vmul.f32 0.5, %v4955
      %v4957 = vsub.f32 1.5, %v4956
      %v4958 = vmul.f32 %v4953, %v4957
      %vm4959 = vweird.f32 %v4909
      %vm4960 = vweird.f32 %v4953
      %vm4961 = vmor %vm4959, %vm4960
      %v4962 = vsel %vm4961, %v4953, %v4958
      %v4963 = vrsqrt.pop %v4910
      %v4964 = vmul.f32 %v4963, %v4910
      %v4965 = vmul.f32 %v4964, %v4963
      %v4966 = vmul.f32 0.5, %v4965
      %v4967 = vsub.f32 1.5, %v4966
      %v4968 = vmul.f32 %v4963, %v4967
      %vm4969 = vweird.f32 %v4910
      %vm4970 = vweird.f32 %v4963
      %vm4971 = vmor %vm4969, %vm4970
      %v4972 = vsel %vm4971, %v4963, %v4968
      %v4973 = vrsqrt.pop %v4911
      %v4974 = vmul.f32 %v4973, %v4911
      %v4975 = vmul.f32 %v4974, %v4973
      %v4976 = vmul.f32 0.5, %v4975
      %v4977 = vsub.f32 1.5, %v4976
      %v4978 = vmul.f32 %v4973, %v4977
      %vm4979 = vweird.f32 %v4911
      %vm4980 = vweird.f32 %v4973
      %vm4981 = vmor %vm4979, %vm4980
      %v4982 = vsel %vm4981, %v4973, %v4978
      %v4983 = vrsqrt.pop %v4912
      %v4984 = vmul.f32 %v4983, %v4912
      %v4985 = vmul.f32 %v4984, %v4983
      %v4986 = vmul.f32 0.5, %v4985
      %v4987 = vsub.f32 1.5, %v4986
      %v4988 = vmul.f32 %v4983, %v4987
      %vm4989 = vweird.f32 %v4912
      %vm4990 = vweird.f32 %v4983
      %vm4991 = vmor %vm4989, %vm4990
      %v4992 = vsel %vm4991, %v4983, %v4988
      %v4993 = vmul.f32 %v4857, %v4922
      %v4994 = vmul.f32 %v4858, %v4932
      %v4995 = vmul.f32 %v4859, %v4942
      %v4996 = vmul.f32 %v4860, %v4952
      %v4997 = vmul.f32 %v4861, %v4962
      %v4998 = vmul.f32 %v4862, %v4972
      %v4999 = vmul.f32 %v4863, %v4982
      %v5000 = vmul.f32 %v4864, %v4992
      %v5001 = vld [vmem:[%s25] sm:$0x1]
      %v5003 = vperm.slane %v5001, 0
      %v5005 = vmul.f32 %v4993, %v5003
      %v5006 = vmul.f32 %v4994, %v5003
      %v5007 = vmul.f32 %v4995, %v5003
      %v5008 = vmul.f32 %v4996, %v5003
      %v5009 = vmul.f32 %v4997, %v5003
      %v5010 = vmul.f32 %v4998, %v5003
      %v5011 = vmul.f32 %v4999, %v5003
      %v5012 = vmul.f32 %v5000, %v5003
      %v5013 = vld [vmem:[%s26] sm:$0x1]
      %v5015 = vperm.slane %v5013, 0
      %v5017 = vadd.f32 %v5005, %v5015
      %v5018 = vadd.f32 %v5006, %v5015
      %v5019 = vadd.f32 %v5007, %v5015
      %v5020 = vadd.f32 %v5008, %v5015
      %v5021 = vadd.f32 %v5009, %v5015
      %v5022 = vadd.f32 %v5010, %v5015
      %v5023 = vadd.f32 %v5011, %v5015
      %v5024 = vadd.f32 %v5012, %v5015
      %5025 = vst.msk [vmem:[%s973] sm:$0xff] %vm1922, %v5017
      %5026 = vst.msk [vmem:[%s973 + $0x8] sm:$0xff] %vm1922, %v5018
      %5027 = vst.msk [vmem:[%s973 + $0x10] sm:$0xff] %vm1922, %v5019
      %5028 = vst.msk [vmem:[%s973 + $0x18] sm:$0xff] %vm1922, %v5020
      %5029 = vst.msk [vmem:[%s973 + $0x20] sm:$0xff] %vm1922, %v5021
      %5030 = vst.msk [vmem:[%s973 + $0x28] sm:$0xff] %vm1922, %v5022
      %5031 = vst.msk [vmem:[%s973 + $0x30] sm:$0xff] %vm1922, %v5023
      %5032 = vst.msk [vmem:[%s973 + $0x38] sm:$0xff] %vm1922, %v5024
      %v5033 = vadd.f32 %v4139, 1.0
      %v5034 = vadd.f32 %v4141, 1.0
      %v5035 = vadd.f32 %v4144, 1.0
      %v5036 = vadd.f32 %v4146, 1.0
      %v5037 = vadd.f32 %v4149, 1.0
      %v5038 = vadd.f32 %v4151, 1.0
      %v5039 = vadd.f32 %v4154, 1.0
      %v5040 = vadd.f32 %v4156, 1.0
      %v5041 = vmul.f32 %v1446, %v5033
      %v5042 = vmul.f32 %v1451, %v5034
      %v5043 = vmul.f32 %v1456, %v5035
      %v5044 = vmul.f32 %v1461, %v5036
      %v5045 = vmul.f32 %v1466, %v5037
      %v5046 = vmul.f32 %v1471, %v5038
      %v5047 = vmul.f32 %v1476, %v5039
      %v5048 = vmul.f32 %v1481, %v5040
      %v5049 = vadd.f32 %v2844, 1.0
      %v5050 = vadd.f32 %v2846, 1.0
      %v5051 = vadd.f32 %v2849, 1.0
      %v5052 = vadd.f32 %v2851, 1.0
      %v5053 = vadd.f32 %v2854, 1.0
      %v5054 = vadd.f32 %v2856, 1.0
      %v5055 = vadd.f32 %v2859, 1.0
      %v5056 = vadd.f32 %v2861, 1.0
      %5065 = vrot.lane.b32.xlu0 %v5049, 112
      %v5066 = vpop.permute.xlu0 %5065
      %5067 = vrot.lane.b32.xlu0 %v5050, 112
      %v5068 = vpop.permute.xlu0 %5067
      %5069 = vrot.lane.b32.xlu0 %v5051, 112
      %v5070 = vpop.permute.xlu0 %5069
      %5071 = vrot.lane.b32.xlu0 %v5052, 112
      %v5072 = vpop.permute.xlu0 %5071
      %5073 = vrot.lane.b32.xlu0 %v5053, 112
      %v5074 = vpop.permute.xlu0 %5073
      %5075 = vrot.lane.b32.xlu0 %v5054, 112
      %v5076 = vpop.permute.xlu0 %5075
      %5077 = vrot.lane.b32.xlu0 %v5055, 112
      %v5078 = vpop.permute.xlu0 %5077
      %5079 = vrot.lane.b32.xlu0 %v5056, 112
      %v5080 = vpop.permute.xlu0 %5079
      %v5089 = vmul.f32 %v5041, %v5066
      %v5090 = vmul.f32 %v5042, %v5068
      %v5091 = vmul.f32 %v5043, %v5070
      %v5092 = vmul.f32 %v5044, %v5072
      %v5093 = vmul.f32 %v5045, %v5074
      %v5094 = vmul.f32 %v5046, %v5076
      %v5095 = vmul.f32 %v5047, %v5078
      %v5096 = vmul.f32 %v5048, %v5080
      %v5097 = vadd.f32 %v2896, 1.0
      %v5098 = vadd.f32 %v2898, 1.0
      %v5099 = vadd.f32 %v2901, 1.0
      %v5100 = vadd.f32 %v2903, 1.0
      %v5101 = vadd.f32 %v2906, 1.0
      %v5102 = vadd.f32 %v2908, 1.0
      %v5103 = vadd.f32 %v2911, 1.0
      %v5104 = vadd.f32 %v2913, 1.0
      %v5105 = vmul.f32 %v5097, %v1884
      %v5106 = vmul.f32 %v5098, %v1888
      %v5107 = vmul.f32 %v5099, %v1892
      %v5108 = vmul.f32 %v5100, %v1896
      %v5109 = vmul.f32 %v5101, %v1900
      %v5110 = vmul.f32 %v5102, %v1904
      %v5111 = vmul.f32 %v5103, %v1908
      %v5112 = vmul.f32 %v5104, %v1912
      %v5113 = vadd.f32 %v5105, 1.0
      %v5114 = vadd.f32 %v5106, 1.0
      %v5115 = vadd.f32 %v5107, 1.0
      %v5116 = vadd.f32 %v5108, 1.0
      %v5117 = vadd.f32 %v5109, 1.0
      %v5118 = vadd.f32 %v5110, 1.0
      %v5119 = vadd.f32 %v5111, 1.0
      %v5120 = vadd.f32 %v5112, 1.0
      %5129 = vrot.lane.b32.xlu0 %v5113, 112
      %v5130 = vpop.permute.xlu0 %5129
      %5131 = vrot.lane.b32.xlu0 %v5114, 112
      %v5132 = vpop.permute.xlu0 %5131
      %5133 = vrot.lane.b32.xlu0 %v5115, 112
      %v5134 = vpop.permute.xlu0 %5133
      %5135 = vrot.lane.b32.xlu0 %v5116, 112
      %v5136 = vpop.permute.xlu0 %5135
      %5137 = vrot.lane.b32.xlu0 %v5117, 112
      %v5138 = vpop.permute.xlu0 %5137
      %5139 = vrot.lane.b32.xlu0 %v5118, 112
      %v5140 = vpop.permute.xlu0 %5139
      %5141 = vrot.lane.b32.xlu0 %v5119, 112
      %v5142 = vpop.permute.xlu0 %5141
      %5143 = vrot.lane.b32.xlu0 %v5120, 112
      %v5144 = vpop.permute.xlu0 %5143
      %v5153 = vmul.f32 %v5089, %v5130
      %v5154 = vmul.f32 %v5090, %v5132
      %v5155 = vmul.f32 %v5091, %v5134
      %v5156 = vmul.f32 %v5092, %v5136
      %v5157 = vmul.f32 %v5093, %v5138
      %v5158 = vmul.f32 %v5094, %v5140
      %v5159 = vmul.f32 %v5095, %v5142
      %v5160 = vmul.f32 %v5096, %v5144
      %v5161 = vperm.slane %v987, 1
      %v5162 = vmul.f32 %v4065, %v5161
      %v5163 = vsub.f32 1.0, %v987
      %v5164 = vmul.f32 %v5163, -1e+09
      %v5165 = vld [vmem:[%s15] sm:$0xf]
      %v5166 = vld [vmem:[%s16] sm:$0xf]
      %v5167 = vperm.slane %v5165, 0
      %5169 = vrot.lane.b32.xlu0 %v5167, 32
      %v5170 = vpop.permute.xlu0 %5169
      %v5172 = vmul.f32 %v985, %v5170
      %v5173 = vpack.c.bf16 %v5172, %v5172
      %v5174 = vpack.c.bf16 %v986, %v986
      %5176 = vrot.lane.b32.xlu0 %v5173, 96
      %v5177 = vpop.permute.xlu0 %5176
      %5179 = vrot.lane.b32.xlu0 %v5174, 96
      %v5180 = vpop.permute.xlu0 %5179
      %v5182 = vsel %vm1922, %v5177, 0
      %v5185 = vsel %vm1922, %v5180, 0
      %5187 = vmatpush.bf16.xpose.msra.mxu0 0
      %5188 = vmatpush.bf16.xpose.msra.mxu0 0
      %5189 = vmatpush.bf16.xpose.msra.mxu0 0
      %5190 = vmatpush.bf16.xpose.msra.mxu0 0
      %5191 = vmatpush.bf16.xpose.msra.mxu0 0
      %5192 = vmatpush.bf16.xpose.msra.mxu0 0
      %5193 = vmatpush.bf16.xpose.msra.mxu0 0
      %5194 = vmatpush.bf16.xpose.msra.mxu0 %v5185
      %5195 = vmatmul.bf16.gmra.mxu0 %v5182
      %v5196 = vpop.f32.mrf.mxu0
      %v5197 = vadd.f32 0.0, %v5196
      %v5198 = vpop.f32.mrf.mxu0
      %5199 = vdwg.mxu0
      %v5200 = vmul.f32 %v5197, 0.25
      %v5201 = vperm.slane %v5166, 0
      %5203 = vrot.lane.b32.xlu0 %v5201, 48
      %v5204 = vpop.permute.xlu0 %5203
      %v5206 = vmul.f32 %v985, %v5204
      %v5207 = vpack.c.bf16 %v5206, %v5206
      %5209 = vrot.lane.b32.xlu0 %v5207, 80
      %v5210 = vpop.permute.xlu0 %5209
      %v5212 = vsel %vm1922, %v5210, 0
      %5214 = vmatpush.bf16.xpose.msra.mxu0 0
      %5215 = vmatpush.bf16.xpose.msra.mxu0 0
      %5216 = vmatpush.bf16.xpose.msra.mxu0 0
      %5217 = vmatpush.bf16.xpose.msra.mxu0 0
      %5218 = vmatpush.bf16.xpose.msra.mxu0 0
      %5219 = vmatpush.bf16.xpose.msra.mxu0 0
      %5220 = vmatpush.bf16.xpose.msra.mxu0 0
      %5221 = vmatpush.bf16.xpose.msra.mxu0 %v5185
      %5222 = vmatmul.bf16.gmra.mxu0 %v5212
      %v5223 = vpop.f32.mrf.mxu0
      %v5224 = vadd.f32 0.0, %v5223
      %v5225 = vpop.f32.mrf.mxu0
      %5226 = vdwg.mxu0
      %v5227 = vmul.f32 %v5224, 0.25
      %5236 = vset.pattern.permute.xlu0 16
      %5237 = vperm.xlu0 %5236, %v5153
      %v5238 = vpop.permute.xlu0 %5237
      %5239 = vset.pattern.permute.xlu0 16
      %5240 = vperm.xlu0 %5239, %v5154
      %v5241 = vpop.permute.xlu0 %5240
      %5242 = vset.pattern.permute.xlu0 16
      %5243 = vperm.xlu0 %5242, %v5155
      %v5244 = vpop.permute.xlu0 %5243
      %5245 = vset.pattern.permute.xlu0 16
      %5246 = vperm.xlu0 %5245, %v5156
      %v5247 = vpop.permute.xlu0 %5246
      %5248 = vset.pattern.permute.xlu0 16
      %5249 = vperm.xlu0 %5248, %v5157
      %v5250 = vpop.permute.xlu0 %5249
      %5251 = vset.pattern.permute.xlu0 16
      %5252 = vperm.xlu0 %5251, %v5158
      %v5253 = vpop.permute.xlu0 %5252
      %5254 = vset.pattern.permute.xlu0 16
      %5255 = vperm.xlu0 %5254, %v5159
      %v5256 = vpop.permute.xlu0 %5255
      %5257 = vset.pattern.permute.xlu0 16
      %5258 = vperm.xlu0 %5257, %v5160
      %v5259 = vpop.permute.xlu0 %5258
      %v5260 = vlaneseq
      %v5261 = vand.u32 %v5260, 127
      %v5262 = vperm.slane %v5238, %v5261
      %v5263 = vperm.slane %v5241, %v5261
      %v5264 = vperm.slane %v5244, %v5261
      %v5265 = vperm.slane %v5247, %v5261
      %v5266 = vperm.slane %v5250, %v5261
      %v5267 = vperm.slane %v5253, %v5261
      %v5268 = vperm.slane %v5256, %v5261
      %v5269 = vperm.slane %v5259, %v5261
      %v5270 = vsel %vm2186, %v5263, %v5262
      %v5271 = vsel %vm2188, %v5264, %v5270
      %v5272 = vsel %vm2190, %v5265, %v5271
      %v5273 = vsel %vm2192, %v5266, %v5272
      %v5274 = vsel %vm2194, %v5267, %v5273
      %v5275 = vsel %vm2196, %v5268, %v5274
      %v5276 = vsel %vm2198, %v5269, %v5275
      %v5278 = vmul.f32 %v5200, %v5276
      %v5279 = vmul.f32 %v5227, %v5162
      %v5280 = vadd.f32 %v5278, %v5279
      %v5281 = vperm.slane %v5164, 0
      %v5282 = vadd.f32 %v5280, %v5281
      %vm5283 = vcmask 64512
      %v5284 = vsel %vm5283, %v5282, -inf
      %5285 = vmax.xlane.f32.xlu0 %v5284
      %v5286 = vpop.xlane.xlu0 %5285
      %v5287 = vsub.f32 %v5282, %v5286
      %v5288 = vmul.f32 %v5287, 1.442695
      %v5289 = vpow.pop %v5288
      %v5290 = vperm.slane %v987, 0
      %v5291 = vmul.f32 %v5289, %v5290
      %v5292 = vsel %vm5283, %v5291, 0.0
      %5293 = vadd.xlane.f32.xlu0 %v5292
      %v5294 = vpop.xlane.xlu0 %5293
      %vm5295 = vcmp.eq.f32.partialorder %v5294, 0.0
      %v5296 = vsel %vm5295, 1, 0
      %v5297 = vcvt.s32.f32 %v5296
      %v5298 = vadd.f32 %v5294, %v5297
      %v5299 = vrcp.pop %v5298
      %v5300 = vmul.f32 %v5298, %v5299
      %v5301 = vsub.f32 1.0, %v5300
      %v5302 = vmul.f32 %v5299, %v5301
      %v5303 = vadd.f32 %v5299, %v5302
      %vm5304 = vweird.f32 %v5298
      %vm5305 = vweird.f32 %v5299
      %vm5306 = vmor %vm5304, %vm5305
      %v5307 = vsel %vm5306, %v5299, %v5303
      %v5308 = vand.u32 2147483647, %v5298
      %vm5309 = vcmp.eq.f32.partialorder %v5308, 8.507059e+37
      %v5310 = vand.u32 %v5298, 2147483648
      %v5311 = vor.u32 1.1754944e-38, %v5310
      %v5312 = vsel %vm5309, %v5311, %v5307
      %v5313 = vmul.f32 %v5291, %v5312
      %v5314 = vpack.c.bf16 %v5313, %v5313
      %5315 = vrot.lane.b32.xlu0 %v5174, 80
      %v5316 = vpop.permute.xlu0 %5315
      %v5318 = vsel %vm5283, %v5314, 0
      %vm5320 = vcmask 1043456
      %v5322 = vsel %vm5320, %v5316, 0
      %5324 = vmatpush.bf16.msra.mxu0 0
      %5325 = vmatpush.bf16.msra.mxu0 0
      %5326 = vmatpush.bf16.msra.mxu0 0
      %5327 = vmatpush.bf16.msra.mxu0 0
      %5328 = vmatpush.bf16.msra.mxu0 0
      %5329 = vmatpush.bf16.msra.mxu0 0
      %5330 = vmatpush.bf16.msra.mxu0 0
      %5331 = vmatpush.bf16.msra.mxu0 %v5322
      %5332 = vmatmul.bf16.gmra.mxu0 %v5318
      %v5333 = vpop.f32.mrf.mxu0
      %v5334 = vadd.f32 0.0, %v5333
      %v5335 = vpop.f32.mrf.mxu0
      %5336 = vdwg.mxu0
      %v5337 = vperm.slane %v5165, 1
      %5339 = vrot.lane.b32.xlu0 %v5337, 32
      %v5340 = vpop.permute.xlu0 %5339
      %v5342 = vmul.f32 %v985, %v5340
      %v5343 = vpack.c.bf16 %v5342, %v5342
      %5345 = vrot.lane.b32.xlu0 %v5343, 96
      %v5346 = vpop.permute.xlu0 %5345
      %v5348 = vsel %vm1922, %v5346, 0
      %5350 = vmatpush.bf16.xpose.msra.mxu0 0
      %5351 = vmatpush.bf16.xpose.msra.mxu0 0
      %5352 = vmatpush.bf16.xpose.msra.mxu0 0
      %5353 = vmatpush.bf16.xpose.msra.mxu0 0
      %5354 = vmatpush.bf16.xpose.msra.mxu0 0
      %5355 = vmatpush.bf16.xpose.msra.mxu0 0
      %5356 = vmatpush.bf16.xpose.msra.mxu0 0
      %5357 = vmatpush.bf16.xpose.msra.mxu0 %v5185
      %5358 = vmatmul.bf16.gmra.mxu0 %v5348
      %v5359 = vpop.f32.mrf.mxu0
      %v5360 = vadd.f32 0.0, %v5359
      %v5361 = vpop.f32.mrf.mxu0
      %5362 = vdwg.mxu0
      %v5363 = vmul.f32 %v5360, 0.25
      %v5364 = vperm.slane %v5166, 1
      %5366 = vrot.lane.b32.xlu0 %v5364, 48
      %v5367 = vpop.permute.xlu0 %5366
      %v5369 = vmul.f32 %v985, %v5367
      %v5370 = vpack.c.bf16 %v5369, %v5369
      %5372 = vrot.lane.b32.xlu0 %v5370, 80
      %v5373 = vpop.permute.xlu0 %5372
      %v5375 = vsel %vm1922, %v5373, 0
      %5377 = vmatpush.bf16.xpose.msra.mxu0 0
      %5378 = vmatpush.bf16.xpose.msra.mxu0 0
      %5379 = vmatpush.bf16.xpose.msra.mxu0 0
      %5380 = vmatpush.bf16.xpose.msra.mxu0 0
      %5381 = vmatpush.bf16.xpose.msra.mxu0 0
      %5382 = vmatpush.bf16.xpose.msra.mxu0 0
      %5383 = vmatpush.bf16.xpose.msra.mxu0 0
      %5384 = vmatpush.bf16.xpose.msra.mxu0 %v5185
      %5385 = vmatmul.bf16.gmra.mxu0 %v5375
      %v5386 = vpop.f32.mrf.mxu0
      %v5387 = vadd.f32 0.0, %v5386
      %v5388 = vpop.f32.mrf.mxu0
      %5389 = vdwg.mxu0
      %v5390 = vmul.f32 %v5387, 0.25
      %5391 = vset.pattern.permute.xlu0 17
      %5392 = vperm.xlu0 %5391, %v5153
      %v5393 = vpop.permute.xlu0 %5392
      %5394 = vset.pattern.permute.xlu0 17
      %5395 = vperm.xlu0 %5394, %v5154
      %v5396 = vpop.permute.xlu0 %5395
      %5397 = vset.pattern.permute.xlu0 17
      %5398 = vperm.xlu0 %5397, %v5155
      %v5399 = vpop.permute.xlu0 %5398
      %5400 = vset.pattern.permute.xlu0 17
      %5401 = vperm.xlu0 %5400, %v5156
      %v5402 = vpop.permute.xlu0 %5401
      %5403 = vset.pattern.permute.xlu0 17
      %5404 = vperm.xlu0 %5403, %v5157
      %v5405 = vpop.permute.xlu0 %5404
      %5406 = vset.pattern.permute.xlu0 17
      %5407 = vperm.xlu0 %5406, %v5158
      %v5408 = vpop.permute.xlu0 %5407
      %5409 = vset.pattern.permute.xlu0 17
      %5410 = vperm.xlu0 %5409, %v5159
      %v5411 = vpop.permute.xlu0 %5410
      %5412 = vset.pattern.permute.xlu0 17
      %5413 = vperm.xlu0 %5412, %v5160
      %v5414 = vpop.permute.xlu0 %5413
      %v5415 = vperm.slane %v5393, %v5261
      %v5416 = vperm.slane %v5396, %v5261
      %v5417 = vperm.slane %v5399, %v5261
      %v5418 = vperm.slane %v5402, %v5261
      %v5419 = vperm.slane %v5405, %v5261
      %v5420 = vperm.slane %v5408, %v5261
      %v5421 = vperm.slane %v5411, %v5261
      %v5422 = vperm.slane %v5414, %v5261
      %v5423 = vsel %vm2186, %v5416, %v5415
      %v5424 = vsel %vm2188, %v5417, %v5423
      %v5425 = vsel %vm2190, %v5418, %v5424
      %v5426 = vsel %vm2192, %v5419, %v5425
      %v5427 = vsel %vm2194, %v5420, %v5426
      %v5428 = vsel %vm2196, %v5421, %v5427
      %v5429 = vsel %vm2198, %v5422, %v5428
      %v5431 = vmul.f32 %v5363, %v5429
      %v5432 = vmul.f32 %v5390, %v5162
      %v5433 = vadd.f32 %v5431, %v5432
      %v5434 = vadd.f32 %v5433, %v5281
      %v5435 = vsel %vm5283, %v5434, -inf
      %5436 = vmax.xlane.f32.xlu0 %v5435
      %v5437 = vpop.xlane.xlu0 %5436
      %v5438 = vsub.f32 %v5434, %v5437
      %v5439 = vmul.f32 %v5438, 1.442695
      %v5440 = vpow.pop %v5439
      %v5441 = vmul.f32 %v5440, %v5290
      %v5442 = vsel %vm5283, %v5441, 0.0
      %5443 = vadd.xlane.f32.xlu0 %v5442
      %v5444 = vpop.xlane.xlu0 %5443
      %vm5445 = vcmp.eq.f32.partialorder %v5444, 0.0
      %v5446 = vsel %vm5445, 1, 0
      %v5447 = vcvt.s32.f32 %v5446
      %v5448 = vadd.f32 %v5444, %v5447
      %v5449 = vrcp.pop %v5448
      %v5450 = vmul.f32 %v5448, %v5449
      %v5451 = vsub.f32 1.0, %v5450
      %v5452 = vmul.f32 %v5449, %v5451
      %v5453 = vadd.f32 %v5449, %v5452
      %vm5454 = vweird.f32 %v5448
      %vm5455 = vweird.f32 %v5449
      %vm5456 = vmor %vm5454, %vm5455
      %v5457 = vsel %vm5456, %v5449, %v5453
      %v5458 = vand.u32 2147483647, %v5448
      %vm5459 = vcmp.eq.f32.partialorder %v5458, 8.507059e+37
      %v5460 = vand.u32 %v5448, 2147483648
      %v5461 = vor.u32 1.1754944e-38, %v5460
      %v5462 = vsel %vm5459, %v5461, %v5457
      %v5463 = vmul.f32 %v5441, %v5462
      %v5464 = vpack.c.bf16 %v5463, %v5463
      %v5466 = vsel %vm5283, %v5464, 0
      %5468 = vmatpush.bf16.msra.mxu0 0
      %5469 = vmatpush.bf16.msra.mxu0 0
      %5470 = vmatpush.bf16.msra.mxu0 0
      %5471 = vmatpush.bf16.msra.mxu0 0
      %5472 = vmatpush.bf16.msra.mxu0 0
      %5473 = vmatpush.bf16.msra.mxu0 0
      %5474 = vmatpush.bf16.msra.mxu0 0
      %5475 = vmatpush.bf16.msra.mxu0 %v5322
      %5476 = vmatmul.bf16.gmra.mxu0 %v5466
      %v5477 = vpop.f32.mrf.mxu0
      %v5478 = vadd.f32 0.0, %v5477
      %v5479 = vpop.f32.mrf.mxu0
      %5480 = vdwg.mxu0
      %v5481 = vperm.slane %v5165, 2
      %5483 = vrot.lane.b32.xlu0 %v5481, 32
      %v5484 = vpop.permute.xlu0 %5483
      %v5486 = vmul.f32 %v985, %v5484
      %v5487 = vpack.c.bf16 %v5486, %v5486
      %5489 = vrot.lane.b32.xlu0 %v5487, 96
      %v5490 = vpop.permute.xlu0 %5489
      %v5492 = vsel %vm1922, %v5490, 0
      %5494 = vmatpush.bf16.xpose.msra.mxu0 0
      %5495 = vmatpush.bf16.xpose.msra.mxu0 0
      %5496 = vmatpush.bf16.xpose.msra.mxu0 0
      %5497 = vmatpush.bf16.xpose.msra.mxu0 0
      %5498 = vmatpush.bf16.xpose.msra.mxu0 0
      %5499 = vmatpush.bf16.xpose.msra.mxu0 0
      %5500 = vmatpush.bf16.xpose.msra.mxu0 0
      %5501 = vmatpush.bf16.xpose.msra.mxu0 %v5185
      %5502 = vmatmul.bf16.gmra.mxu0 %v5492
      %v5503 = vpop.f32.mrf.mxu0
      %v5504 = vadd.f32 0.0, %v5503
      %v5505 = vpop.f32.mrf.mxu0
      %5506 = vdwg.mxu0
      %v5507 = vmul.f32 %v5504, 0.25
      %v5508 = vperm.slane %v5166, 2
      %5510 = vrot.lane.b32.xlu0 %v5508, 48
      %v5511 = vpop.permute.xlu0 %5510
      %v5513 = vmul.f32 %v985, %v5511
      %v5514 = vpack.c.bf16 %v5513, %v5513
      %5516 = vrot.lane.b32.xlu0 %v5514, 80
      %v5517 = vpop.permute.xlu0 %5516
      %v5519 = vsel %vm1922, %v5517, 0
      %5521 = vmatpush.bf16.xpose.msra.mxu0 0
      %5522 = vmatpush.bf16.xpose.msra.mxu0 0
      %5523 = vmatpush.bf16.xpose.msra.mxu0 0
      %5524 = vmatpush.bf16.xpose.msra.mxu0 0
      %5525 = vmatpush.bf16.xpose.msra.mxu0 0
      %5526 = vmatpush.bf16.xpose.msra.mxu0 0
      %5527 = vmatpush.bf16.xpose.msra.mxu0 0
      %5528 = vmatpush.bf16.xpose.msra.mxu0 %v5185
      %5529 = vmatmul.bf16.gmra.mxu0 %v5519
      %v5530 = vpop.f32.mrf.mxu0
      %v5531 = vadd.f32 0.0, %v5530
      %v5532 = vpop.f32.mrf.mxu0
      %5533 = vdwg.mxu0
      %v5534 = vmul.f32 %v5531, 0.25
      %5535 = vset.pattern.permute.xlu0 18
      %5536 = vperm.xlu0 %5535, %v5153
      %v5537 = vpop.permute.xlu0 %5536
      %5538 = vset.pattern.permute.xlu0 18
      %5539 = vperm.xlu0 %5538, %v5154
      %v5540 = vpop.permute.xlu0 %5539
      %5541 = vset.pattern.permute.xlu0 18
      %5542 = vperm.xlu0 %5541, %v5155
      %v5543 = vpop.permute.xlu0 %5542
      %5544 = vset.pattern.permute.xlu0 18
      %5545 = vperm.xlu0 %5544, %v5156
      %v5546 = vpop.permute.xlu0 %5545
      %5547 = vset.pattern.permute.xlu0 18
      %5548 = vperm.xlu0 %5547, %v5157
      %v5549 = vpop.permute.xlu0 %5548
      %5550 = vset.pattern.permute.xlu0 18
      %5551 = vperm.xlu0 %5550, %v5158
      %v5552 = vpop.permute.xlu0 %5551
      %5553 = vset.pattern.permute.xlu0 18
      %5554 = vperm.xlu0 %5553, %v5159
      %v5555 = vpop.permute.xlu0 %5554
      %5556 = vset.pattern.permute.xlu0 18
      %5557 = vperm.xlu0 %5556, %v5160
      %v5558 = vpop.permute.xlu0 %5557
      %v5559 = vperm.slane %v5537, %v5261
      %v5560 = vperm.slane %v5540, %v5261
      %v5561 = vperm.slane %v5543, %v5261
      %v5562 = vperm.slane %v5546, %v5261
      %v5563 = vperm.slane %v5549, %v5261
      %v5564 = vperm.slane %v5552, %v5261
      %v5565 = vperm.slane %v5555, %v5261
      %v5566 = vperm.slane %v5558, %v5261
      %v5567 = vsel %vm2186, %v5560, %v5559
      %v5568 = vsel %vm2188, %v5561, %v5567
      %v5569 = vsel %vm2190, %v5562, %v5568
      %v5570 = vsel %vm2192, %v5563, %v5569
      %v5571 = vsel %vm2194, %v5564, %v5570
      %v5572 = vsel %vm2196, %v5565, %v5571
      %v5573 = vsel %vm2198, %v5566, %v5572
      %v5575 = vmul.f32 %v5507, %v5573
      %v5576 = vmul.f32 %v5534, %v5162
      %v5577 = vadd.f32 %v5575, %v5576
      %v5578 = vadd.f32 %v5577, %v5281
      %v5579 = vsel %vm5283, %v5578, -inf
      %5580 = vmax.xlane.f32.xlu0 %v5579
      %v5581 = vpop.xlane.xlu0 %5580
      %v5582 = vsub.f32 %v5578, %v5581
      %v5583 = vmul.f32 %v5582, 1.442695
      %v5584 = vpow.pop %v5583
      %v5585 = vmul.f32 %v5584, %v5290
      %v5586 = vsel %vm5283, %v5585, 0.0
      %5587 = vadd.xlane.f32.xlu0 %v5586
      %v5588 = vpop.xlane.xlu0 %5587
      %vm5589 = vcmp.eq.f32.partialorder %v5588, 0.0
      %v5590 = vsel %vm5589, 1, 0
      %v5591 = vcvt.s32.f32 %v5590
      %v5592 = vadd.f32 %v5588, %v5591
      %v5593 = vrcp.pop %v5592
      %v5594 = vmul.f32 %v5592, %v5593
      %v5595 = vsub.f32 1.0, %v5594
      %v5596 = vmul.f32 %v5593, %v5595
      %v5597 = vadd.f32 %v5593, %v5596
      %vm5598 = vweird.f32 %v5592
      %vm5599 = vweird.f32 %v5593
      %vm5600 = vmor %vm5598, %vm5599
      %v5601 = vsel %vm5600, %v5593, %v5597
      %v5602 = vand.u32 2147483647, %v5592
      %vm5603 = vcmp.eq.f32.partialorder %v5602, 8.507059e+37
      %v5604 = vand.u32 %v5592, 2147483648
      %v5605 = vor.u32 1.1754944e-38, %v5604
      %v5606 = vsel %vm5603, %v5605, %v5601
      %v5607 = vmul.f32 %v5585, %v5606
      %v5608 = vpack.c.bf16 %v5607, %v5607
      %v5610 = vsel %vm5283, %v5608, 0
      %5612 = vmatpush.bf16.msra.mxu0 0
      %5613 = vmatpush.bf16.msra.mxu0 0
      %5614 = vmatpush.bf16.msra.mxu0 0
      %5615 = vmatpush.bf16.msra.mxu0 0
      %5616 = vmatpush.bf16.msra.mxu0 0
      %5617 = vmatpush.bf16.msra.mxu0 0
      %5618 = vmatpush.bf16.msra.mxu0 0
      %5619 = vmatpush.bf16.msra.mxu0 %v5322
      %5620 = vmatmul.bf16.gmra.mxu0 %v5610
      %v5621 = vpop.f32.mrf.mxu0
      %v5622 = vadd.f32 0.0, %v5621
      %v5623 = vpop.f32.mrf.mxu0
      %5624 = vdwg.mxu0
      %v5625 = vperm.slane %v5165, 3
      %5627 = vrot.lane.b32.xlu0 %v5625, 32
      %v5628 = vpop.permute.xlu0 %5627
      %v5630 = vmul.f32 %v985, %v5628
      %v5631 = vpack.c.bf16 %v5630, %v5630
      %5633 = vrot.lane.b32.xlu0 %v5631, 96
      %v5634 = vpop.permute.xlu0 %5633
      %v5636 = vsel %vm1922, %v5634, 0
      %5638 = vmatpush.bf16.xpose.msra.mxu0 0
      %5639 = vmatpush.bf16.xpose.msra.mxu0 0
      %5640 = vmatpush.bf16.xpose.msra.mxu0 0
      %5641 = vmatpush.bf16.xpose.msra.mxu0 0
      %5642 = vmatpush.bf16.xpose.msra.mxu0 0
      %5643 = vmatpush.bf16.xpose.msra.mxu0 0
      %5644 = vmatpush.bf16.xpose.msra.mxu0 0
      %5645 = vmatpush.bf16.xpose.msra.mxu0 %v5185
      %5646 = vmatmul.bf16.gmra.mxu0 %v5636
      %v5647 = vpop.f32.mrf.mxu0
      %v5648 = vadd.f32 0.0, %v5647
      %v5649 = vpop.f32.mrf.mxu0
      %5650 = vdwg.mxu0
      %v5651 = vmul.f32 %v5648, 0.25
      %v5652 = vperm.slane %v5166, 3
      %5654 = vrot.lane.b32.xlu0 %v5652, 48
      %v5655 = vpop.permute.xlu0 %5654
      %v5657 = vmul.f32 %v985, %v5655
      %v5658 = vpack.c.bf16 %v5657, %v5657
      %5660 = vrot.lane.b32.xlu0 %v5658, 80
      %v5661 = vpop.permute.xlu0 %5660
      %v5663 = vsel %vm1922, %v5661, 0
      %5665 = vmatpush.bf16.xpose.msra.mxu0 0
      %5666 = vmatpush.bf16.xpose.msra.mxu0 0
      %5667 = vmatpush.bf16.xpose.msra.mxu0 0
      %5668 = vmatpush.bf16.xpose.msra.mxu0 0
      %5669 = vmatpush.bf16.xpose.msra.mxu0 0
      %5670 = vmatpush.bf16.xpose.msra.mxu0 0
      %5671 = vmatpush.bf16.xpose.msra.mxu0 0
      %5672 = vmatpush.bf16.xpose.msra.mxu0 %v5185
      %5673 = vmatmul.bf16.gmra.mxu0 %v5663
      %v5674 = vpop.f32.mrf.mxu0
      %v5675 = vadd.f32 0.0, %v5674
      %v5676 = vpop.f32.mrf.mxu0
      %5677 = vdwg.mxu0
      %v5678 = vmul.f32 %v5675, 0.25
      %5679 = vset.pattern.permute.xlu0 19
      %5680 = vperm.xlu0 %5679, %v5153
      %v5681 = vpop.permute.xlu0 %5680
      %5682 = vset.pattern.permute.xlu0 19
      %5683 = vperm.xlu0 %5682, %v5154
      %v5684 = vpop.permute.xlu0 %5683
      %5685 = vset.pattern.permute.xlu0 19
      %5686 = vperm.xlu0 %5685, %v5155
      %v5687 = vpop.permute.xlu0 %5686
      %5688 = vset.pattern.permute.xlu0 19
      %5689 = vperm.xlu0 %5688, %v5156
      %v5690 = vpop.permute.xlu0 %5689
      %5691 = vset.pattern.permute.xlu0 19
      %5692 = vperm.xlu0 %5691, %v5157
      %v5693 = vpop.permute.xlu0 %5692
      %5694 = vset.pattern.permute.xlu0 19
      %5695 = vperm.xlu0 %5694, %v5158
      %v5696 = vpop.permute.xlu0 %5695
      %5697 = vset.pattern.permute.xlu0 19
      %5698 = vperm.xlu0 %5697, %v5159
      %v5699 = vpop.permute.xlu0 %5698
      %5700 = vset.pattern.permute.xlu0 19
      %5701 = vperm.xlu0 %5700, %v5160
      %v5702 = vpop.permute.xlu0 %5701
      %v5703 = vperm.slane %v5681, %v5261
      %v5704 = vperm.slane %v5684, %v5261
      %v5705 = vperm.slane %v5687, %v5261
      %v5706 = vperm.slane %v5690, %v5261
      %v5707 = vperm.slane %v5693, %v5261
      %v5708 = vperm.slane %v5696, %v5261
      %v5709 = vperm.slane %v5699, %v5261
      %v5710 = vperm.slane %v5702, %v5261
      %v5711 = vsel %vm2186, %v5704, %v5703
      %v5712 = vsel %vm2188, %v5705, %v5711
      %v5713 = vsel %vm2190, %v5706, %v5712
      %v5714 = vsel %vm2192, %v5707, %v5713
      %v5715 = vsel %vm2194, %v5708, %v5714
      %v5716 = vsel %vm2196, %v5709, %v5715
      %v5717 = vsel %vm2198, %v5710, %v5716
      %v5719 = vmul.f32 %v5651, %v5717
      %v5720 = vmul.f32 %v5678, %v5162
      %v5721 = vadd.f32 %v5719, %v5720
      %v5722 = vadd.f32 %v5721, %v5281
      %v5723 = vsel %vm5283, %v5722, -inf
      %5724 = vmax.xlane.f32.xlu0 %v5723
      %v5725 = vpop.xlane.xlu0 %5724
      %v5726 = vsub.f32 %v5722, %v5725
      %v5727 = vmul.f32 %v5726, 1.442695
      %v5728 = vpow.pop %v5727
      %v5729 = vmul.f32 %v5728, %v5290
      %v5730 = vsel %vm5283, %v5729, 0.0
      %5731 = vadd.xlane.f32.xlu0 %v5730
      %v5732 = vpop.xlane.xlu0 %5731
      %vm5733 = vcmp.eq.f32.partialorder %v5732, 0.0
      %v5734 = vsel %vm5733, 1, 0
      %v5735 = vcvt.s32.f32 %v5734
      %v5736 = vadd.f32 %v5732, %v5735
      %v5737 = vrcp.pop %v5736
      %v5738 = vmul.f32 %v5736, %v5737
      %v5739 = vsub.f32 1.0, %v5738
      %v5740 = vmul.f32 %v5737, %v5739
      %v5741 = vadd.f32 %v5737, %v5740
      %vm5742 = vweird.f32 %v5736
      %vm5743 = vweird.f32 %v5737
      %vm5744 = vmor %vm5742, %vm5743
      %v5745 = vsel %vm5744, %v5737, %v5741
      %v5746 = vand.u32 2147483647, %v5736
      %vm5747 = vcmp.eq.f32.partialorder %v5746, 8.507059e+37
      %v5748 = vand.u32 %v5736, 2147483648
      %v5749 = vor.u32 1.1754944e-38, %v5748
      %v5750 = vsel %vm5747, %v5749, %v5745
      %v5751 = vmul.f32 %v5729, %v5750
      %v5752 = vpack.c.bf16 %v5751, %v5751
      %v5754 = vsel %vm5283, %v5752, 0
      %5756 = vmatpush.bf16.msra.mxu0 0
      %5757 = vmatpush.bf16.msra.mxu0 0
      %5758 = vmatpush.bf16.msra.mxu0 0
      %5759 = vmatpush.bf16.msra.mxu0 0
      %5760 = vmatpush.bf16.msra.mxu0 0
      %5761 = vmatpush.bf16.msra.mxu0 0
      %5762 = vmatpush.bf16.msra.mxu0 0
      %5763 = vmatpush.bf16.msra.mxu0 %v5322
      %5764 = vmatmul.bf16.gmra.mxu0 %v5754
      %v5765 = vpop.f32.mrf.mxu0
      %v5766 = vadd.f32 0.0, %v5765
      %v5767 = vpop.f32.mrf.mxu0
      %5768 = vdwg.mxu0
      %5770 = vrot.lane.b32.xlu0 %v5478, 16
      %v5771 = vpop.permute.xlu0 %5770
      %5774 = vrot.lane.b32.xlu0 %v5622, 32
      %v5775 = vpop.permute.xlu0 %5774
      %5778 = vrot.lane.b32.xlu0 %v5766, 48
      %v5779 = vpop.permute.xlu0 %5778
      %v5781 = vsel %vm1922, %v5334, %v5771
      %v5782 = vsel %vm2256, %v5781, %v5775
      %v5783 = vsel %vm2258, %v5782, %v5779
      %5785 = vrot.lane.b32.xlu0 %v3915, 126
      %v5786 = vpop.permute.xlu0 %5785
      %5789 = vrot.lane.b32.xlu0 %v4067, 126
      %v5790 = vpop.permute.xlu0 %5789
      %5793 = vrot.lane.b32.xlu0 %v4486, 70
      %v5794 = vpop.permute.xlu0 %5793
      %5797 = vrot.lane.b32.xlu0 %v3615, 6
      %v5798 = vpop.permute.xlu0 %5797
      %5801 = vrot.lane.b32.xlu0 %v2259, 86
      %v5802 = vpop.permute.xlu0 %5801
      %5805 = vrot.lane.b32.xlu0 %v2584, 22
      %v5806 = vpop.permute.xlu0 %5805
      %5809 = vrot.lane.b32.xlu0 %v2810, 86
      %v5810 = vpop.permute.xlu0 %5809
      %v5812 = vsel %vm3614, %v5783, %v5786
      %vm5813 = vcmask 547840
      %v5814 = vsel %vm5813, %v5812, %v5790
      %vm5815 = vcmask 572416
      %v5816 = vsel %vm5815, %v5814, %v5794
      %vm5817 = vcmask 48128
      %v5818 = vsel %vm5817, %v5794, %v5798
      %vm5819 = vcmask 703488
      %v5820 = vsel %vm5819, %v5818, %v5802
      %vm5821 = vcmask 179200
      %v5822 = vsel %vm5821, %v5802, %v5806
      %v5823 = vsel %vm5819, %v5822, %v5810
      %v5824 = vsel %vm5821, %v5810, 0.0
      %5825 = vst [vmem:[%s983] sm:$0xff] %v5816
      %5826 = vst [vmem:[%s983 + $0x8] sm:$0xff] %v5820
      %5827 = vst [vmem:[%s983 + $0x10] sm:$0xff] %v5823
      %5828 = vst [vmem:[%s983 + $0x18] sm:$0xff] %v5824
      %s5829 = smul.u32 8, %s45
      %p5830 = scmp.lt.s32.totalorder %s44, 1
      %s5831 = scalar_select %p5830, %s44, 1
      %p5832 = scmp.lt.s32.totalorder %s5829, 7
      %s5833 = scalar_select %p5832, %s5829, 7
      %s5834 = smul.addr %s5831, 8
      %s5835 = sadd.s32 %s5833, %s5834
      %s5836 = smul.addr %s5835, 8
      %s5837 = scalar_lea.vmem %s27, %s5836
      %p5838 = scmp.lt.s32.totalorder %s44, 1
      %s5839 = scalar_select %p5838, %s44, 1
      %p5840 = scmp.lt.s32.totalorder %s45, 0
      %s5841 = scalar_select %p5840, %s45, 0
      %s5842 = smul.addr %s5841, 4
      %s5843 = smul.addr %s5839, 4
      %s5844 = sadd.s32 %s5842, %s5843
      %s5845 = smul.addr %s5844, 8
      %s5846 = scalar_lea.vmem %s28, %s5845
      // Predicated region
      $region129: #{xey_transformer_layer.8} parent=127 // pred_check
        %p5847 = pneg %p668
      $region130: #{xey_transformer_layer.8} parent=127 // pred_check_branch
        %5849 = sbr.rel (%p5847) target = $region132
      $region131: #{xey_transformer_layer.8} parent=127 // pred_region
        %s5850 = smul.u32 8, %s45
      $region132: #{xey_transformer_layer.8} parent=127 // pred_fallthru
        _
      // Predicated region
      $region133: #{xey_transformer_layer.8} parent=127 // pred_check
        %p5851 = pneg %p696
      $region134: #{xey_transformer_layer.8} parent=127 // pred_check_branch
        %5853 = sbr.rel (%p5851) target = $region136
      $region135: #{xey_transformer_layer.8} parent=127 // pred_region
        _
      $region136: #{xey_transformer_layer.8} parent=127 // pred_fallthru
        _
    $region128: #{xey_transformer_layer.8} parent=5 // pred_fallthru
      _
    %p5854 = scmp.le.s32.totalorder 2, %s35
    // Predicated region
    $region137: #{xey_transformer_layer.8} parent=5 // pred_check
      %p5855 = pneg %p5854
    $region138: #{xey_transformer_layer.8} parent=5 // pred_check_branch
      %5857 = sbr.rel (%p5855) target = $region140
    $region139: #{xey_transformer_layer.8} parent=5 // pred_region
      %s5858 = ssub.s32 %s35, 2
      // Predicated region
      $region141: #{xey_transformer_layer.8} parent=139 // pred_check
        %p5859 = pneg %p674
      $region142: #{xey_transformer_layer.8} parent=139 // pred_check_branch
        %5861 = sbr.rel (%p5859) target = $region144
      $region143: #{xey_transformer_layer.8} parent=139 // pred_region
        %s5862 = smul.u32 8, %s47
        %p5863 = scmp.lt.s32.totalorder %s46, 1
        %s5864 = scalar_select %p5863, %s46, 1
        %p5865 = scmp.lt.s32.totalorder %s5862, 7
        %s5866 = scalar_select %p5865, %s5862, 7
        %s5867 = smul.addr %s5864, 8
        %s5868 = sadd.s32 %s5866, %s5867
        %s5869 = smul.addr %s5868, 8
        %s5870 = scalar_lea.vmem %s27, %s5869
      $region144: #{xey_transformer_layer.8} parent=139 // pred_fallthru
        _
      // Predicated region
      $region145: #{xey_transformer_layer.8} parent=139 // pred_check
        %p5871 = pneg %p702
      $region146: #{xey_transformer_layer.8} parent=139 // pred_check_branch
        %5873 = sbr.rel (%p5871) target = $region148
      $region147: #{xey_transformer_layer.8} parent=139 // pred_region
        %p5874 = scmp.lt.s32.totalorder %s46, 1
        %s5875 = scalar_select %p5874, %s46, 1
        %p5876 = scmp.lt.s32.totalorder %s47, 0
        %s5877 = scalar_select %p5876, %s47, 0
        %s5878 = smul.addr %s5877, 4
        %s5879 = smul.addr %s5875, 4
        %s5880 = sadd.s32 %s5878, %s5879
        %s5881 = smul.addr %s5880, 8
        %s5882 = scalar_lea.vmem %s28, %s5881
      $region148: #{xey_transformer_layer.8} parent=139 // pred_fallthru
        _
    $region140: #{xey_transformer_layer.8} parent=5 // pred_fallthru
      _
  $region6: #{xey_transformer_layer.8} parent=0 // loop_footer
    %s39 = sadd.s32 1, %s35
  $region7: #{xey_transformer_layer.8} parent=0 // loop_footer_branch
    %34 = sbr.rel target = $region3
  $region8: #{xey_transformer_layer.8} parent=0 // loop_exit
    _

</llo_original>
